<compile_context>
chip_gen: v7x
topology: tpu7x:2x2x1
jax: 0.10.0
libtpu: 0.0.40
codegen_flags: <defaults>
</compile_context>

<pallas_src>
import functools
import re

import jax
import jax.numpy as jnp
from jax import lax
from jax.experimental import pallas as pl
from jax.experimental.pallas import tpu as pltpu


# ---------------------------------------------------------------------------
# In-kernel helpers (operate on values / refs already resident in VMEM).
# ---------------------------------------------------------------------------
def _maxpool2x2(a, nb, h, w):
    """2x2 stride-2 max pool.  a: (nb*h*w, c), rows ordered (n, y, x).
    Returns (nb, h//2, w//2, c).  Requires h, w even."""
    c = a.shape[-1]
    a = jnp.max(a.reshape(nb * h * (w // 2), 2, c), axis=1)          # pool over w
    a = a.reshape(nb * (h // 2), 2 * (w // 2), c)                    # rows y=2i, 2i+1
    a = jnp.maximum(a[:, : w // 2, :], a[:, w // 2:, :])             # pool over h
    return a.reshape(nb, h // 2, w // 2, c)


def _store_padded(xp_ref, a):
    """Write a: (nb, hh, ww, C) into the zero-bordered scratch xp_ref:
    (nb, hh+2, ww+2, C).  Stores use full last-two-dim windows (aligned)."""
    nb, hh, ww, c = a.shape
    zc = jnp.zeros((nb, hh, 1, c), xp_ref.dtype)
    zr = jnp.zeros((nb, 1, ww + 2, c), xp_ref.dtype)
    xp_ref[:, 0:1, :, :] = zr                                        # top border
    xp_ref[:, hh + 1:hh + 2, :, :] = zr                              # bottom border
    xp_ref[:, 1:hh + 1, :, :] = jnp.concatenate(
        [zc, a.astype(xp_ref.dtype), zc], axis=2)                    # interior + L/R border


def _conv3x3_from_padded(xp_ref, w_ref, nb, h, w):
    """3x3 'same' conv as 9 shifted MXU dots (no im2col concatenation).
    xp_ref: (nb, h+2, w+2, Cin) zero-padded scratch, w_ref: (9, Cin, Cout) bf16.
    Returns (nb*h*w, Cout) f32."""
    cin = xp_ref.shape[-1]
    rows = nb * h * w
    acc = None
    for dy in range(3):
        for dx in range(3):
            tap = xp_ref[:, dy:dy + h, dx:dx + w, :].reshape(rows, cin)
            d = jnp.dot(tap.astype(jnp.bfloat16), w_ref[dy * 3 + dx],
                        preferred_element_type=jnp.float32)
            acc = d if acc is None else acc + d
    return acc


# ---------------------------------------------------------------------------
# The single fused kernel: conv1+pool -> conv2+pool -> conv3+GAP -> MLP head.
# ---------------------------------------------------------------------------
def _simple_cnn_kernel(p1_ref, cw1_ref, cb1_ref, cw2_ref, cb2_ref,
                       cw3_ref, cb3_ref, lw1_ref, lb1_ref, lw2_ref, lb2_ref,
                       o_ref, xp2_ref, xp3_ref, *, nb, h, w, act_dtype):
    h2, w2, h3, w3 = h // 2, w // 2, h // 4, w // 4
    c3 = cw3_ref.shape[-1]

    # ---- stage 1: conv 3->64 (im2col matmul, patches built in wrapper) + ReLU + pool
    a = jnp.dot(p1_ref[0], cw1_ref[...], preferred_element_type=jnp.float32)
    a = jnp.maximum(a + cb1_ref[...], 0.0).astype(act_dtype)        # (nb*h*w, 64)
    a = _maxpool2x2(a, nb, h, w)                                     # (nb, h2, w2, 64)

    # ---- stage 2: conv 64->128 (9 shifted dots from padded scratch) + ReLU + pool
    _store_padded(xp2_ref, a)
    a = _conv3x3_from_padded(xp2_ref, cw2_ref, nb, h2, w2)           # (nb*h2*w2, 128) f32
    a = jnp.maximum(a + cb2_ref[...], 0.0).astype(act_dtype)
    a = _maxpool2x2(a, nb, h2, w2)                                   # (nb, h3, w3, 128)

    # ---- stage 3: conv 128->256 + ReLU + global average pool
    _store_padded(xp3_ref, a)
    a = _conv3x3_from_padded(xp3_ref, cw3_ref, nb, h3, w3)           # (nb*h3*w3, 256) f32
    a = jnp.maximum(a + cb3_ref[...], 0.0)
    feats = jnp.sum(a.reshape(nb, h3 * w3, c3), axis=1) * (1.0 / (h3 * w3))

    # ---- MLP head: Linear(256,128) + ReLU + Linear(128, padded classes)
    hid = jnp.dot(feats.astype(jnp.bfloat16), lw1_ref[...],
                  preferred_element_type=jnp.float32)
    hid = jnp.maximum(hid + lb1_ref[...], 0.0)
    out = jnp.dot(hid.astype(jnp.bfloat16), lw2_ref[...],
                  preferred_element_type=jnp.float32)
    o_ref[0] = out + lb2_ref[...]                                    # (nb, padded_classes) f32


# ---------------------------------------------------------------------------
# Parameters.
# ---------------------------------------------------------------------------
def init_params(key, num_classes=1000, feature_dim=128):
    """Natural-layout f32 parameters (conv HWIO, linear (in, out))."""
    ks = jax.random.split(key, 10)

    def conv_w(k, cin, cout):
        fan_in = 9 * cin
        return jax.random.normal(k, (3, 3, cin, cout), jnp.float32) * (2.0 / fan_in) ** 0.5

    def lin_w(k, fin, fout):
        return jax.random.normal(k, (fin, fout), jnp.float32) * (2.0 / fin) ** 0.5

    return {
        "cw1": conv_w(ks[0], 3, 64),    "cb1": 0.01 * jax.random.normal(ks[1], (64,), jnp.float32),
        "cw2": conv_w(ks[2], 64, 128),  "cb2": 0.01 * jax.random.normal(ks[3], (128,), jnp.float32),
        "cw3": conv_w(ks[4], 128, 256), "cb3": 0.01 * jax.random.normal(ks[5], (256,), jnp.float32),
        "lw1": lin_w(ks[6], 256, feature_dim),
        "lb1": 0.01 * jax.random.normal(ks[7], (feature_dim,), jnp.float32),
        "lw2": lin_w(ks[8], feature_dim, num_classes),
        "lb2": 0.01 * jax.random.normal(ks[9], (num_classes,), jnp.float32),
    }


def prepare_params(params):
    """One-time conversion to kernel layout.  Conv1 -> (9*Cin, Cout) bf16 (im2col),
    conv2/3 -> (9, Cin, Cout) bf16 (per-tap), linear -> bf16, biases -> (1, C) f32.
    lw2/lb2 are lane-padded to a multiple of 128 classes here (not per call)."""
    def flat_conv1(wgt):
        kh, kw, cin, cout = wgt.shape
        return wgt.reshape(kh * kw * cin, cout).astype(jnp.bfloat16)

    def conv_taps(wgt):
        kh, kw, cin, cout = wgt.shape
        return wgt.reshape(kh * kw, cin, cout).astype(jnp.bfloat16)

    num_classes = params["lw2"].shape[1]
    cp = max(128, ((num_classes + 127) // 128) * 128)
    lw2 = jnp.pad(params["lw2"], ((0, 0), (0, cp - num_classes))).astype(jnp.bfloat16)
    lb2 = jnp.pad(params["lb2"].reshape(1, -1), ((0, 0), (0, cp - num_classes)))

    return {
        "cw1": flat_conv1(params["cw1"]), "cb1": params["cb1"].reshape(1, -1),
        "cw2": conv_taps(params["cw2"]),  "cb2": params["cb2"].reshape(1, -1),
        "cw3": conv_taps(params["cw3"]),  "cb3": params["cb3"].reshape(1, -1),
        "lw1": params["lw1"].astype(jnp.bfloat16), "lb1": params["lb1"].reshape(1, -1),
        "lw2": lw2, "lb2": lb2,
    }


# ---------------------------------------------------------------------------
# VMEM-budget-aware batch-tile selection.
# ---------------------------------------------------------------------------
_WEIGHT_RESERVE_BYTES = 4 << 20   # double-buffered resident weights + headroom


def _tpu_generation():
    try:
        kind = jax.devices()[0].device_kind.lower()
    except Exception:
        return 6
    m = re.search(r"v(\d+)", kind)
    return int(m.group(1)) if m else 6


def _per_sample_vmem_bytes(h, w, act_bytes):
    """Lane-padding-aware per-sample VMEM footprint inside the kernel."""
    h2, w2, h3, w3 = h // 2, w // 2, h // 4, w // 4
    lanes = 128
    b = 2 * h * w * lanes * 2                      # p1 input block (bf16, 27->128 lanes, x2 bufs)
    b += h * w * lanes * (4 + act_bytes)           # stage-1 f32 matmul result + act copy
    b += (h2 + 2) * (w2 + 2) * lanes * 4           # xp2 scratch (f32, 64->128 lane pad)
    b += h2 * w2 * lanes * (8 + 2 + act_bytes)     # stage-2 acc + relu (f32) + tap + pooled
    b += (h3 + 2) * (w3 + 2) * lanes * 4           # xp3 scratch (f32)
    b += h3 * w3 * 2 * lanes * 8                   # stage-3 acc + relu (f32, 256 lanes)
    b += h3 * w3 * lanes * 2                       # stage-3 tap (bf16)
    b += 2 * 1024 * 4                              # output block (x2 bufs)
    return (b * 5) // 4                            # 25% slack for relayout temporaries


def _select_batch_tile(n, h, w, gen):
    """Returns (nb, steps, vmem_limit_bytes, act_dtype)."""
    if gen >= 7:
        vmem_limit = 40 << 20          # v7x: 64 MiB physical VMEM per TC
    elif gen >= 4:
        vmem_limit = 80 << 20          # v4/v5/v6: 128 MiB VMEM
    else:
        vmem_limit = 12 << 20
    act_dtype = jnp.float32 if gen <= 5 else jnp.bfloat16   # v5e: no native bf16 VALU
    act_bytes = 4 if gen <= 5 else 2
    budget = max(1 << 20, (vmem_limit * 7) // 10 - _WEIGHT_RESERVE_BYTES)
    nb_max = max(1, min(64, budget // _per_sample_vmem_bytes(h, w, act_bytes)))
    min_steps = 2 if gen >= 7 else 1   # keep both v7x TCs busy & overlap input DMA
    steps = max(min_steps, -(-n // nb_max))
    nb = -(-n // steps)                # balanced tile; batch padded up to nb*steps
    steps = -(-n // nb)
    return nb, steps, vmem_limit, act_dtype


# ---------------------------------------------------------------------------
# Forward pass.
# ---------------------------------------------------------------------------
def simple_cnn_forward(kparams, x_nchw, *, num_classes):
    """x_nchw: (N, 3, H, W), same convention as the PyTorch module."""
    x = jnp.transpose(x_nchw, (0, 2, 3, 1)).astype(jnp.float32)      # -> NHWC
    n, h, w, cin = x.shape
    assert h % 4 == 0 and w % 4 == 0, "two 2x2 max-pools require H, W divisible by 4"
    # TODO(synk): PyTorch MaxPool2d floor behaviour for odd H/W is not replicated.

    gen = _tpu_generation()
    nb, steps, vmem_limit, act_dtype = _select_batch_tile(n, h, w, gen)
    n_pad = nb * steps

    c1 = kparams["cw2"].shape[1]       # 64
    c2 = kparams["cw3"].shape[1]       # 128
    cp = kparams["lw2"].shape[1]       # lane-padded classes

    # Stage-1 im2col in the wrapper (layout plumbing: Cin=3 is too lane-sparse
    # to build in-kernel).  The matmul stays in the kernel.
    xp = jnp.pad(x, ((0, 0), (1, 1), (1, 1), (0, 0)))
    p1 = jnp.concatenate(
        [xp[:, dy:dy + h, dx:dx + w, :] for dy in range(3) for dx in range(3)],
        axis=-1).reshape(n, h * w, 9 * cin).astype(jnp.bfloat16)
    if n_pad != n:
        p1 = jnp.pad(p1, ((0, n_pad - n), (0, 0), (0, 0)))
    p1 = p1.reshape(steps, nb * h * w, 9 * cin)

    def whole(arr):                    # weight resident in VMEM across all grid steps
        return pl.BlockSpec(arr.shape, lambda i, _nd=arr.ndim: (0,) * _nd)

    kern = functools.partial(_simple_cnn_kernel, nb=nb, h=h, w=w, act_dtype=act_dtype)

    out = pl.pallas_call(
        kern,
        out_shape=jax.ShapeDtypeStruct((steps, nb, cp), jnp.float32),
        grid_spec=pltpu.PrefetchScalarGridSpec(
            num_scalar_prefetch=0,
            grid=(steps,),
            in_specs=[
                pl.BlockSpec((1, nb * h * w, 9 * cin), lambda i: (i, 0, 0)),
                whole(kparams["cw1"]), whole(kparams["cb1"]),
                whole(kparams["cw2"]), whole(kparams["cb2"]),
                whole(kparams["cw3"]), whole(kparams["cb3"]),
                whole(kparams["lw1"]), whole(kparams["lb1"]),
                whole(kparams["lw2"]), whole(kparams["lb2"]),
            ],
            out_specs=pl.BlockSpec((1, nb, cp), lambda i: (i, 0, 0)),
            scratch_shapes=[
                pltpu.VMEM((nb, h // 2 + 2, w // 2 + 2, c1), jnp.float32),
                pltpu.VMEM((nb, h // 4 + 2, w // 4 + 2, c2), jnp.float32),
            ]),
        compiler_params=pltpu.CompilerParams(
            dimension_semantics=("parallel",),
            vmem_limit_bytes=vmem_limit),
    )(p1, kparams["cw1"], kparams["cb1"], kparams["cw2"], kparams["cb2"],
      kparams["cw3"], kparams["cb3"], kparams["lw1"], kparams["lb1"],
      kparams["lw2"], kparams["lb2"])

    return out.reshape(n_pad, cp)[:n, :num_classes]


# ---------------------------------------------------------------------------
# Pure-JAX f32 reference (mirrors the PyTorch module) for tolerance checks.
# ---------------------------------------------------------------------------
def reference_forward(params, x_nchw):
    x = jnp.transpose(x_nchw, (0, 2, 3, 1)).astype(jnp.float32)
    dn = ("NHWC", "HWIO", "NHWC")

    def conv_relu(a, wgt, b):
        y = lax.conv_general_dilated(a, wgt, (1, 1), "SAME", dimension_numbers=dn)
        return jnp.maximum(y + b, 0.0)

    def pool(a):
        return lax.reduce_window(a, -jnp.inf, lax.max, (1, 2, 2, 1), (1, 2, 2, 1), "VALID")

    a = pool(conv_relu(x, params["cw1"], params["cb1"]))
    a = pool(conv_relu(a, params["cw2"], params["cb2"]))
    a = conv_relu(a, params["cw3"], params["cb3"])
    feats = jnp.mean(a, axis=(1, 2))
    hid = jnp.maximum(feats @ params["lw1"] + params["lb1"], 0.0)
    return hid @ params["lw2"] + params["lb2"]


if __name__ == "__main__":
    key = jax.random.PRNGKey(0)
    pkey, xkey = jax.random.split(key)
    params = init_params(pkey, num_classes=1000, feature_dim=128)
    kparams = prepare_params(params)

    # Small input consistent with the module: batch=2, 3 channels, 16x16 spatial.
    x = jax.random.normal(xkey, (2, 3, 16, 16), jnp.float32)

    fwd = jax.jit(simple_cnn_forward, static_argnames=("num_classes",))
    out = jax.block_until_ready(fwd(kparams, x, num_classes=1000))
    assert out.shape == (2, 1000) and out.dtype == jnp.float32

    # bf16 weights/activations in the kernel -> expect ~1e-2 relative error.
    ref = reference_forward(params, x)
    rel_err = float(jnp.max(jnp.abs(out - ref)) / (jnp.max(jnp.abs(ref)) + 1e-6))
    assert rel_err < 5e-2, f"kernel deviates from f32 reference: rel-to-max err={rel_err:.3e}"

    print("KERNEL_OK")
</pallas_src>

<mosaic_0001>
module attributes {stable_mosaic.version = 11 : i64} {
  func.func @_simple_cnn_kernel(%arg0: i32, %arg1: memref<1x512x27xbf16, #tpu.memory_space<vmem>>, %arg2: memref<27x64xbf16, #tpu.memory_space<vmem>>, %arg3: memref<1x64xf32, #tpu.memory_space<vmem>>, %arg4: memref<9x64x128xbf16, #tpu.memory_space<vmem>>, %arg5: memref<1x128xf32, #tpu.memory_space<vmem>>, %arg6: memref<9x128x256xbf16, #tpu.memory_space<vmem>>, %arg7: memref<1x256xf32, #tpu.memory_space<vmem>>, %arg8: memref<256x128xbf16, #tpu.memory_space<vmem>>, %arg9: memref<1x128xf32, #tpu.memory_space<vmem>>, %arg10: memref<128x1024xbf16, #tpu.memory_space<vmem>>, %arg11: memref<1x1024xf32, #tpu.memory_space<vmem>>, %arg12: memref<1x2x1024xf32, #tpu.memory_space<vmem>>, %arg13: memref<2x10x10x64xf32, #tpu.memory_space<vmem>>, %arg14: memref<2x6x6x128xf32, #tpu.memory_space<vmem>>) attributes {dimension_semantics = [#tpu.dimension_semantics<parallel>], iteration_bounds = array<i64: 1>, scalar_prefetch = 0 : i64, scratch_operands = 2 : i64, tpu.core_type = #tpu.core_type<tc>, window_params = [{transform_indices = @transform_0, window_bounds = array<i64: 1, 512, 27>}, {pipeline_mode = #tpu.pipeline_mode<synchronous>, transform_indices = @transform_1, window_bounds = array<i64: 27, 64>}, {pipeline_mode = #tpu.pipeline_mode<synchronous>, transform_indices = @transform_2, window_bounds = array<i64: 1, 64>}, {pipeline_mode = #tpu.pipeline_mode<synchronous>, transform_indices = @transform_3, window_bounds = array<i64: 9, 64, 128>}, {pipeline_mode = #tpu.pipeline_mode<synchronous>, transform_indices = @transform_4, window_bounds = array<i64: 1, 128>}, {pipeline_mode = #tpu.pipeline_mode<synchronous>, transform_indices = @transform_5, window_bounds = array<i64: 9, 128, 256>}, {pipeline_mode = #tpu.pipeline_mode<synchronous>, transform_indices = @transform_6, window_bounds = array<i64: 1, 256>}, {pipeline_mode = #tpu.pipeline_mode<synchronous>, transform_indices = @transform_7, window_bounds = array<i64: 256, 128>}, {pipeline_mode = #tpu.pipeline_mode<synchronous>, transform_indices = @transform_8, window_bounds = array<i64: 1, 128>}, {pipeline_mode = #tpu.pipeline_mode<synchronous>, transform_indices = @transform_9, window_bounds = array<i64: 128, 1024>}, {pipeline_mode = #tpu.pipeline_mode<synchronous>, transform_indices = @transform_10, window_bounds = array<i64: 1, 1024>}, {transform_indices = @transform_11, window_bounds = array<i64: 1, 2, 1024>}]} {
    %c0 = arith.constant 0 : index
    %c0_0 = arith.constant 0 : index
    %c0_1 = arith.constant 0 : index
    %0 = vector.load %arg1[%c0, %c0_0, %c0_1] : memref<1x512x27xbf16, #tpu.memory_space<vmem>>, vector<1x512x27xbf16>
    %1 = vector.shape_cast %0 : vector<1x512x27xbf16> to vector<512x27xbf16>
    %c0_2 = arith.constant 0 : index
    %c0_3 = arith.constant 0 : index
    %2 = vector.load %arg2[%c0_2, %c0_3] : memref<27x64xbf16, #tpu.memory_space<vmem>>, vector<27x64xbf16>
    %cst = arith.constant dense<0.000000e+00> : vector<512x64xf32>
    %3 = tpu.matmul %1, %2, %cst {dimension_numbers = #tpu.dot_dimension_numbers<[1], [0], [0], [1], [0, 0, 1, 1], [], []>} : vector<512x27xbf16>, vector<27x64xbf16>, vector<512x64xf32> -> vector<512x64xf32>
    %c0_4 = arith.constant 0 : index
    %c0_5 = arith.constant 0 : index
    %4 = vector.load %arg3[%c0_4, %c0_5] : memref<1x64xf32, #tpu.memory_space<vmem>>, vector<1x64xf32>
    %5 = vector.broadcast %4 : vector<1x64xf32> to vector<512x64xf32>
    %6 = arith.addf %3, %5 : vector<512x64xf32>
    %cst_6 = arith.constant 0.000000e+00 : f32
    %7 = vector.broadcast %cst_6 : f32 to vector<512x64xf32>
    %8 = arith.maximumf %6, %7 : vector<512x64xf32>
    %9 = arith.truncf %8 : vector<512x64xf32> to vector<512x64xbf16>
    %10 = vector.shape_cast %9 : vector<512x64xbf16> to vector<256x2x64xbf16>
    %cst_7 = arith.constant dense<0xFF80> : vector<256x64xbf16>
    %11 = vector.multi_reduction <maximumf>, %10, %cst_7 [1] : vector<256x2x64xbf16> to vector<256x64xbf16>
    %12 = vector.shape_cast %11 : vector<256x64xbf16> to vector<16x16x64xbf16>
    %13 = vector.extract_strided_slice %12 {offsets = [0, 0, 0], sizes = [16, 8, 64], strides = [1, 1, 1]} : vector<16x16x64xbf16> to vector<16x8x64xbf16>
    %14 = vector.extract_strided_slice %12 {offsets = [0, 8, 0], sizes = [16, 8, 64], strides = [1, 1, 1]} : vector<16x16x64xbf16> to vector<16x8x64xbf16>
    %15 = arith.maximumf %13, %14 : vector<16x8x64xbf16>
    %16 = vector.shape_cast %15 : vector<16x8x64xbf16> to vector<2x8x8x64xbf16>
    %cst_8 = arith.constant 0.000000e+00 : f32
    %17 = vector.broadcast %cst_8 : f32 to vector<2x8x1x64xf32>
    %cst_9 = arith.constant 0.000000e+00 : f32
    %18 = vector.broadcast %cst_9 : f32 to vector<2x1x10x64xf32>
    %c0_10 = arith.constant 0 : index
    %c0_11 = arith.constant 0 : index
    %c0_12 = arith.constant 0 : index
    %c0_13 = arith.constant 0 : index
    %19 = vector.load %arg13[%c0_10, %c0_11, %c0_12, %c0_13] : memref<2x10x10x64xf32, #tpu.memory_space<vmem>>, vector<2x1x10x64xf32>
    tpu.vector_store %arg13[%c0_10, %c0_11, %c0_12, %c0_13], %18 {strides = array<i32>} : memref<2x10x10x64xf32, #tpu.memory_space<vmem>>, vector<2x1x10x64xf32>,
    %c0_14 = arith.constant 0 : index
    %c9 = arith.constant 9 : index
    %c0_15 = arith.constant 0 : index
    %c0_16 = arith.constant 0 : index
    %20 = vector.load %arg13[%c0_14, %c9, %c0_15, %c0_16] : memref<2x10x10x64xf32, #tpu.memory_space<vmem>>, vector<2x1x10x64xf32>
    tpu.vector_store %arg13[%c0_14, %c9, %c0_15, %c0_16], %18 {strides = array<i32>} : memref<2x10x10x64xf32, #tpu.memory_space<vmem>>, vector<2x1x10x64xf32>,
    %21 = arith.extf %16 : vector<2x8x8x64xbf16> to vector<2x8x8x64xf32>
    %22 = tpu.concatenate %17, %21, %17 in 2 : vector<2x8x1x64xf32>, vector<2x8x8x64xf32>, vector<2x8x1x64xf32> -> vector<2x8x10x64xf32>
    %c0_17 = arith.constant 0 : index
    %c1 = arith.constant 1 : index
    %c0_18 = arith.constant 0 : index
    %c0_19 = arith.constant 0 : index
    %23 = vector.load %arg13[%c0_17, %c1, %c0_18, %c0_19] : memref<2x10x10x64xf32, #tpu.memory_space<vmem>>, vector<2x8x10x64xf32>
    tpu.vector_store %arg13[%c0_17, %c1, %c0_18, %c0_19], %22 {strides = array<i32>} : memref<2x10x10x64xf32, #tpu.memory_space<vmem>>, vector<2x8x10x64xf32>,
    %c0_20 = arith.constant 0 : index
    %c0_21 = arith.constant 0 : index
    %c0_22 = arith.constant 0 : index
    %c0_23 = arith.constant 0 : index
    %24 = vector.load %arg13[%c0_20, %c0_21, %c0_22, %c0_23] : memref<2x10x10x64xf32, #tpu.memory_space<vmem>>, vector<2x8x8x64xf32>
    %25 = vector.shape_cast %24 : vector<2x8x8x64xf32> to vector<128x64xf32>
    %26 = arith.truncf %25 : vector<128x64xf32> to vector<128x64xbf16>
    %c0_24 = arith.constant 0 : index
    %c0_25 = arith.constant 0 : index
    %c0_26 = arith.constant 0 : index
    %27 = vector.load %arg4[%c0_24, %c0_25, %c0_26] : memref<9x64x128xbf16, #tpu.memory_space<vmem>>, vector<1x64x128xbf16>
    %28 = vector.shape_cast %27 : vector<1x64x128xbf16> to vector<64x128xbf16>
    %cst_27 = arith.constant dense<0.000000e+00> : vector<128x128xf32>
    %29 = tpu.matmul %26, %28, %cst_27 {dimension_numbers = #tpu.dot_dimension_numbers<[1], [0], [0], [1], [0, 0, 1, 1], [], []>} : vector<128x64xbf16>, vector<64x128xbf16>, vector<128x128xf32> -> vector<128x128xf32>
    %c0_28 = arith.constant 0 : index
    %c0_29 = arith.constant 0 : index
    %c1_30 = arith.constant 1 : index
    %c0_31 = arith.constant 0 : index
    %30 = vector.load %arg13[%c0_28, %c0_29, %c1_30, %c0_31] : memref<2x10x10x64xf32, #tpu.memory_space<vmem>>, vector<2x8x8x64xf32>
    %31 = vector.shape_cast %30 : vector<2x8x8x64xf32> to vector<128x64xf32>
    %32 = arith.truncf %31 : vector<128x64xf32> to vector<128x64xbf16>
    %c1_32 = arith.constant 1 : index
    %c0_33 = arith.constant 0 : index
    %c0_34 = arith.constant 0 : index
    %33 = vector.load %arg4[%c1_32, %c0_33, %c0_34] : memref<9x64x128xbf16, #tpu.memory_space<vmem>>, vector<1x64x128xbf16>
    %34 = vector.shape_cast %33 : vector<1x64x128xbf16> to vector<64x128xbf16>
    %cst_35 = arith.constant dense<0.000000e+00> : vector<128x128xf32>
    %35 = tpu.matmul %32, %34, %cst_35 {dimension_numbers = #tpu.dot_dimension_numbers<[1], [0], [0], [1], [0, 0, 1, 1], [], []>} : vector<128x64xbf16>, vector<64x128xbf16>, vector<128x128xf32> -> vector<128x128xf32>
    %36 = arith.addf %29, %35 : vector<128x128xf32>
    %c0_36 = arith.constant 0 : index
    %c0_37 = arith.constant 0 : index
    %c2 = arith.constant 2 : index
    %c0_38 = arith.constant 0 : index
    %37 = vector.load %arg13[%c0_36, %c0_37, %c2, %c0_38] : memref<2x10x10x64xf32, #tpu.memory_space<vmem>>, vector<2x8x8x64xf32>
    %38 = vector.shape_cast %37 : vector<2x8x8x64xf32> to vector<128x64xf32>
    %39 = arith.truncf %38 : vector<128x64xf32> to vector<128x64xbf16>
    %c2_39 = arith.constant 2 : index
    %c0_40 = arith.constant 0 : index
    %c0_41 = arith.constant 0 : index
    %40 = vector.load %arg4[%c2_39, %c0_40, %c0_41] : memref<9x64x128xbf16, #tpu.memory_space<vmem>>, vector<1x64x128xbf16>
    %41 = vector.shape_cast %40 : vector<1x64x128xbf16> to vector<64x128xbf16>
    %cst_42 = arith.constant dense<0.000000e+00> : vector<128x128xf32>
    %42 = tpu.matmul %39, %41, %cst_42 {dimension_numbers = #tpu.dot_dimension_numbers<[1], [0], [0], [1], [0, 0, 1, 1], [], []>} : vector<128x64xbf16>, vector<64x128xbf16>, vector<128x128xf32> -> vector<128x128xf32>
    %43 = arith.addf %36, %42 : vector<128x128xf32>
    %c0_43 = arith.constant 0 : index
    %c1_44 = arith.constant 1 : index
    %c0_45 = arith.constant 0 : index
    %c0_46 = arith.constant 0 : index
    %44 = vector.load %arg13[%c0_43, %c1_44, %c0_45, %c0_46] : memref<2x10x10x64xf32, #tpu.memory_space<vmem>>, vector<2x8x8x64xf32>
    %45 = vector.shape_cast %44 : vector<2x8x8x64xf32> to vector<128x64xf32>
    %46 = arith.truncf %45 : vector<128x64xf32> to vector<128x64xbf16>
    %c3 = arith.constant 3 : index
    %c0_47 = arith.constant 0 : index
    %c0_48 = arith.constant 0 : index
    %47 = vector.load %arg4[%c3, %c0_47, %c0_48] : memref<9x64x128xbf16, #tpu.memory_space<vmem>>, vector<1x64x128xbf16>
    %48 = vector.shape_cast %47 : vector<1x64x128xbf16> to vector<64x128xbf16>
    %cst_49 = arith.constant dense<0.000000e+00> : vector<128x128xf32>
    %49 = tpu.matmul %46, %48, %cst_49 {dimension_numbers = #tpu.dot_dimension_numbers<[1], [0], [0], [1], [0, 0, 1, 1], [], []>} : vector<128x64xbf16>, vector<64x128xbf16>, vector<128x128xf32> -> vector<128x128xf32>
    %50 = arith.addf %43, %49 : vector<128x128xf32>
    %c0_50 = arith.constant 0 : index
    %c1_51 = arith.constant 1 : index
    %c1_52 = arith.constant 1 : index
    %c0_53 = arith.constant 0 : index
    %51 = vector.load %arg13[%c0_50, %c1_51, %c1_52, %c0_53] : memref<2x10x10x64xf32, #tpu.memory_space<vmem>>, vector<2x8x8x64xf32>
    %52 = vector.shape_cast %51 : vector<2x8x8x64xf32> to vector<128x64xf32>
    %53 = arith.truncf %52 : vector<128x64xf32> to vector<128x64xbf16>
    %c4 = arith.constant 4 : index
    %c0_54 = arith.constant 0 : index
    %c0_55 = arith.constant 0 : index
    %54 = vector.load %arg4[%c4, %c0_54, %c0_55] : memref<9x64x128xbf16, #tpu.memory_space<vmem>>, vector<1x64x128xbf16>
    %55 = vector.shape_cast %54 : vector<1x64x128xbf16> to vector<64x128xbf16>
    %cst_56 = arith.constant dense<0.000000e+00> : vector<128x128xf32>
    %56 = tpu.matmul %53, %55, %cst_56 {dimension_numbers = #tpu.dot_dimension_numbers<[1], [0], [0], [1], [0, 0, 1, 1], [], []>} : vector<128x64xbf16>, vector<64x128xbf16>, vector<128x128xf32> -> vector<128x128xf32>
    %57 = arith.addf %50, %56 : vector<128x128xf32>
    %c0_57 = arith.constant 0 : index
    %c1_58 = arith.constant 1 : index
    %c2_59 = arith.constant 2 : index
    %c0_60 = arith.constant 0 : index
    %58 = vector.load %arg13[%c0_57, %c1_58, %c2_59, %c0_60] : memref<2x10x10x64xf32, #tpu.memory_space<vmem>>, vector<2x8x8x64xf32>
    %59 = vector.shape_cast %58 : vector<2x8x8x64xf32> to vector<128x64xf32>
    %60 = arith.truncf %59 : vector<128x64xf32> to vector<128x64xbf16>
    %c5 = arith.constant 5 : index
    %c0_61 = arith.constant 0 : index
    %c0_62 = arith.constant 0 : index
    %61 = vector.load %arg4[%c5, %c0_61, %c0_62] : memref<9x64x128xbf16, #tpu.memory_space<vmem>>, vector<1x64x128xbf16>
    %62 = vector.shape_cast %61 : vector<1x64x128xbf16> to vector<64x128xbf16>
    %cst_63 = arith.constant dense<0.000000e+00> : vector<128x128xf32>
    %63 = tpu.matmul %60, %62, %cst_63 {dimension_numbers = #tpu.dot_dimension_numbers<[1], [0], [0], [1], [0, 0, 1, 1], [], []>} : vector<128x64xbf16>, vector<64x128xbf16>, vector<128x128xf32> -> vector<128x128xf32>
    %64 = arith.addf %57, %63 : vector<128x128xf32>
    %c0_64 = arith.constant 0 : index
    %c2_65 = arith.constant 2 : index
    %c0_66 = arith.constant 0 : index
    %c0_67 = arith.constant 0 : index
    %65 = vector.load %arg13[%c0_64, %c2_65, %c0_66, %c0_67] : memref<2x10x10x64xf32, #tpu.memory_space<vmem>>, vector<2x8x8x64xf32>
    %66 = vector.shape_cast %65 : vector<2x8x8x64xf32> to vector<128x64xf32>
    %67 = arith.truncf %66 : vector<128x64xf32> to vector<128x64xbf16>
    %c6 = arith.constant 6 : index
    %c0_68 = arith.constant 0 : index
    %c0_69 = arith.constant 0 : index
    %68 = vector.load %arg4[%c6, %c0_68, %c0_69] : memref<9x64x128xbf16, #tpu.memory_space<vmem>>, vector<1x64x128xbf16>
    %69 = vector.shape_cast %68 : vector<1x64x128xbf16> to vector<64x128xbf16>
    %cst_70 = arith.constant dense<0.000000e+00> : vector<128x128xf32>
    %70 = tpu.matmul %67, %69, %cst_70 {dimension_numbers = #tpu.dot_dimension_numbers<[1], [0], [0], [1], [0, 0, 1, 1], [], []>} : vector<128x64xbf16>, vector<64x128xbf16>, vector<128x128xf32> -> vector<128x128xf32>
    %71 = arith.addf %64, %70 : vector<128x128xf32>
    %c0_71 = arith.constant 0 : index
    %c2_72 = arith.constant 2 : index
    %c1_73 = arith.constant 1 : index
    %c0_74 = arith.constant 0 : index
    %72 = vector.load %arg13[%c0_71, %c2_72, %c1_73, %c0_74] : memref<2x10x10x64xf32, #tpu.memory_space<vmem>>, vector<2x8x8x64xf32>
    %73 = vector.shape_cast %72 : vector<2x8x8x64xf32> to vector<128x64xf32>
    %74 = arith.truncf %73 : vector<128x64xf32> to vector<128x64xbf16>
    %c7 = arith.constant 7 : index
    %c0_75 = arith.constant 0 : index
    %c0_76 = arith.constant 0 : index
    %75 = vector.load %arg4[%c7, %c0_75, %c0_76] : memref<9x64x128xbf16, #tpu.memory_space<vmem>>, vector<1x64x128xbf16>
    %76 = vector.shape_cast %75 : vector<1x64x128xbf16> to vector<64x128xbf16>
    %cst_77 = arith.constant dense<0.000000e+00> : vector<128x128xf32>
    %77 = tpu.matmul %74, %76, %cst_77 {dimension_numbers = #tpu.dot_dimension_numbers<[1], [0], [0], [1], [0, 0, 1, 1], [], []>} : vector<128x64xbf16>, vector<64x128xbf16>, vector<128x128xf32> -> vector<128x128xf32>
    %78 = arith.addf %71, %77 : vector<128x128xf32>
    %c0_78 = arith.constant 0 : index
    %c2_79 = arith.constant 2 : index
    %c2_80 = arith.constant 2 : index
    %c0_81 = arith.constant 0 : index
    %79 = vector.load %arg13[%c0_78, %c2_79, %c2_80, %c0_81] : memref<2x10x10x64xf32, #tpu.memory_space<vmem>>, vector<2x8x8x64xf32>
    %80 = vector.shape_cast %79 : vector<2x8x8x64xf32> to vector<128x64xf32>
    %81 = arith.truncf %80 : vector<128x64xf32> to vector<128x64xbf16>
    %c8 = arith.constant 8 : index
    %c0_82 = arith.constant 0 : index
    %c0_83 = arith.constant 0 : index
    %82 = vector.load %arg4[%c8, %c0_82, %c0_83] : memref<9x64x128xbf16, #tpu.memory_space<vmem>>, vector<1x64x128xbf16>
    %83 = vector.shape_cast %82 : vector<1x64x128xbf16> to vector<64x128xbf16>
    %cst_84 = arith.constant dense<0.000000e+00> : vector<128x128xf32>
    %84 = tpu.matmul %81, %83, %cst_84 {dimension_numbers = #tpu.dot_dimension_numbers<[1], [0], [0], [1], [0, 0, 1, 1], [], []>} : vector<128x64xbf16>, vector<64x128xbf16>, vector<128x128xf32> -> vector<128x128xf32>
    %85 = arith.addf %78, %84 : vector<128x128xf32>
    %c0_85 = arith.constant 0 : index
    %c0_86 = arith.constant 0 : index
    %86 = vector.load %arg5[%c0_85, %c0_86] : memref<1x128xf32, #tpu.memory_space<vmem>>, vector<1x128xf32>
    %87 = vector.broadcast %86 : vector<1x128xf32> to vector<128x128xf32>
    %88 = arith.addf %85, %87 : vector<128x128xf32>
    %cst_87 = arith.constant 0.000000e+00 : f32
    %89 = vector.broadcast %cst_87 : f32 to vector<128x128xf32>
    %90 = arith.maximumf %88, %89 : vector<128x128xf32>
    %91 = arith.truncf %90 : vector<128x128xf32> to vector<128x128xbf16>
    %92 = vector.shape_cast %91 : vector<128x128xbf16> to vector<64x2x128xbf16>
    %cst_88 = arith.constant dense<0xFF80> : vector<64x128xbf16>
    %93 = vector.multi_reduction <maximumf>, %92, %cst_88 [1] : vector<64x2x128xbf16> to vector<64x128xbf16>
    %94 = vector.shape_cast %93 : vector<64x128xbf16> to vector<8x8x128xbf16>
    %95 = vector.extract_strided_slice %94 {offsets = [0, 0, 0], sizes = [8, 4, 128], strides = [1, 1, 1]} : vector<8x8x128xbf16> to vector<8x4x128xbf16>
    %96 = vector.extract_strided_slice %94 {offsets = [0, 4, 0], sizes = [8, 4, 128], strides = [1, 1, 1]} : vector<8x8x128xbf16> to vector<8x4x128xbf16>
    %97 = arith.maximumf %95, %96 : vector<8x4x128xbf16>
    %98 = vector.shape_cast %97 : vector<8x4x128xbf16> to vector<2x4x4x128xbf16>
    %cst_89 = arith.constant 0.000000e+00 : f32
    %99 = vector.broadcast %cst_89 : f32 to vector<2x4x1x128xf32>
    %cst_90 = arith.constant 0.000000e+00 : f32
    %100 = vector.broadcast %cst_90 : f32 to vector<2x1x6x128xf32>
    %c0_91 = arith.constant 0 : index
    %c0_92 = arith.constant 0 : index
    %c0_93 = arith.constant 0 : index
    %c0_94 = arith.constant 0 : index
    %101 = vector.load %arg14[%c0_91, %c0_92, %c0_93, %c0_94] : memref<2x6x6x128xf32, #tpu.memory_space<vmem>>, vector<2x1x6x128xf32>
    tpu.vector_store %arg14[%c0_91, %c0_92, %c0_93, %c0_94], %100 {strides = array<i32>} : memref<2x6x6x128xf32, #tpu.memory_space<vmem>>, vector<2x1x6x128xf32>,
    %c0_95 = arith.constant 0 : index
    %c5_96 = arith.constant 5 : index
    %c0_97 = arith.constant 0 : index
    %c0_98 = arith.constant 0 : index
    %102 = vector.load %arg14[%c0_95, %c5_96, %c0_97, %c0_98] : memref<2x6x6x128xf32, #tpu.memory_space<vmem>>, vector<2x1x6x128xf32>
    tpu.vector_store %arg14[%c0_95, %c5_96, %c0_97, %c0_98], %100 {strides = array<i32>} : memref<2x6x6x128xf32, #tpu.memory_space<vmem>>, vector<2x1x6x128xf32>,
    %103 = arith.extf %98 : vector<2x4x4x128xbf16> to vector<2x4x4x128xf32>
    %104 = tpu.concatenate %99, %103, %99 in 2 : vector<2x4x1x128xf32>, vector<2x4x4x128xf32>, vector<2x4x1x128xf32> -> vector<2x4x6x128xf32>
    %c0_99 = arith.constant 0 : index
    %c1_100 = arith.constant 1 : index
    %c0_101 = arith.constant 0 : index
    %c0_102 = arith.constant 0 : index
    %105 = vector.load %arg14[%c0_99, %c1_100, %c0_101, %c0_102] : memref<2x6x6x128xf32, #tpu.memory_space<vmem>>, vector<2x4x6x128xf32>
    tpu.vector_store %arg14[%c0_99, %c1_100, %c0_101, %c0_102], %104 {strides = array<i32>} : memref<2x6x6x128xf32, #tpu.memory_space<vmem>>, vector<2x4x6x128xf32>,
    %c0_103 = arith.constant 0 : index
    %c0_104 = arith.constant 0 : index
    %c0_105 = arith.constant 0 : index
    %c0_106 = arith.constant 0 : index
    %106 = vector.load %arg14[%c0_103, %c0_104, %c0_105, %c0_106] : memref<2x6x6x128xf32, #tpu.memory_space<vmem>>, vector<2x4x4x128xf32>
    %107 = vector.shape_cast %106 : vector<2x4x4x128xf32> to vector<32x128xf32>
    %108 = arith.truncf %107 : vector<32x128xf32> to vector<32x128xbf16>
    %c0_107 = arith.constant 0 : index
    %c0_108 = arith.constant 0 : index
    %c0_109 = arith.constant 0 : index
    %109 = vector.load %arg6[%c0_107, %c0_108, %c0_109] : memref<9x128x256xbf16, #tpu.memory_space<vmem>>, vector<1x128x256xbf16>
    %110 = vector.shape_cast %109 : vector<1x128x256xbf16> to vector<128x256xbf16>
    %cst_110 = arith.constant dense<0.000000e+00> : vector<32x256xf32>
    %111 = tpu.matmul %108, %110, %cst_110 {dimension_numbers = #tpu.dot_dimension_numbers<[1], [0], [0], [1], [0, 0, 1, 1], [], []>} : vector<32x128xbf16>, vector<128x256xbf16>, vector<32x256xf32> -> vector<32x256xf32>
    %c0_111 = arith.constant 0 : index
    %c0_112 = arith.constant 0 : index
    %c1_113 = arith.constant 1 : index
    %c0_114 = arith.constant 0 : index
    %112 = vector.load %arg14[%c0_111, %c0_112, %c1_113, %c0_114] : memref<2x6x6x128xf32, #tpu.memory_space<vmem>>, vector<2x4x4x128xf32>
    %113 = vector.shape_cast %112 : vector<2x4x4x128xf32> to vector<32x128xf32>
    %114 = arith.truncf %113 : vector<32x128xf32> to vector<32x128xbf16>
    %c1_115 = arith.constant 1 : index
    %c0_116 = arith.constant 0 : index
    %c0_117 = arith.constant 0 : index
    %115 = vector.load %arg6[%c1_115, %c0_116, %c0_117] : memref<9x128x256xbf16, #tpu.memory_space<vmem>>, vector<1x128x256xbf16>
    %116 = vector.shape_cast %115 : vector<1x128x256xbf16> to vector<128x256xbf16>
    %cst_118 = arith.constant dense<0.000000e+00> : vector<32x256xf32>
    %117 = tpu.matmul %114, %116, %cst_118 {dimension_numbers = #tpu.dot_dimension_numbers<[1], [0], [0], [1], [0, 0, 1, 1], [], []>} : vector<32x128xbf16>, vector<128x256xbf16>, vector<32x256xf32> -> vector<32x256xf32>
    %118 = arith.addf %111, %117 : vector<32x256xf32>
    %c0_119 = arith.constant 0 : index
    %c0_120 = arith.constant 0 : index
    %c2_121 = arith.constant 2 : index
    %c0_122 = arith.constant 0 : index
    %119 = vector.load %arg14[%c0_119, %c0_120, %c2_121, %c0_122] : memref<2x6x6x128xf32, #tpu.memory_space<vmem>>, vector<2x4x4x128xf32>
    %120 = vector.shape_cast %119 : vector<2x4x4x128xf32> to vector<32x128xf32>
    %121 = arith.truncf %120 : vector<32x128xf32> to vector<32x128xbf16>
    %c2_123 = arith.constant 2 : index
    %c0_124 = arith.constant 0 : index
    %c0_125 = arith.constant 0 : index
    %122 = vector.load %arg6[%c2_123, %c0_124, %c0_125] : memref<9x128x256xbf16, #tpu.memory_space<vmem>>, vector<1x128x256xbf16>
    %123 = vector.shape_cast %122 : vector<1x128x256xbf16> to vector<128x256xbf16>
    %cst_126 = arith.constant dense<0.000000e+00> : vector<32x256xf32>
    %124 = tpu.matmul %121, %123, %cst_126 {dimension_numbers = #tpu.dot_dimension_numbers<[1], [0], [0], [1], [0, 0, 1, 1], [], []>} : vector<32x128xbf16>, vector<128x256xbf16>, vector<32x256xf32> -> vector<32x256xf32>
    %125 = arith.addf %118, %124 : vector<32x256xf32>
    %c0_127 = arith.constant 0 : index
    %c1_128 = arith.constant 1 : index
    %c0_129 = arith.constant 0 : index
    %c0_130 = arith.constant 0 : index
    %126 = vector.load %arg14[%c0_127, %c1_128, %c0_129, %c0_130] : memref<2x6x6x128xf32, #tpu.memory_space<vmem>>, vector<2x4x4x128xf32>
    %127 = vector.shape_cast %126 : vector<2x4x4x128xf32> to vector<32x128xf32>
    %128 = arith.truncf %127 : vector<32x128xf32> to vector<32x128xbf16>
    %c3_131 = arith.constant 3 : index
    %c0_132 = arith.constant 0 : index
    %c0_133 = arith.constant 0 : index
    %129 = vector.load %arg6[%c3_131, %c0_132, %c0_133] : memref<9x128x256xbf16, #tpu.memory_space<vmem>>, vector<1x128x256xbf16>
    %130 = vector.shape_cast %129 : vector<1x128x256xbf16> to vector<128x256xbf16>
    %cst_134 = arith.constant dense<0.000000e+00> : vector<32x256xf32>
    %131 = tpu.matmul %128, %130, %cst_134 {dimension_numbers = #tpu.dot_dimension_numbers<[1], [0], [0], [1], [0, 0, 1, 1], [], []>} : vector<32x128xbf16>, vector<128x256xbf16>, vector<32x256xf32> -> vector<32x256xf32>
    %132 = arith.addf %125, %131 : vector<32x256xf32>
    %c0_135 = arith.constant 0 : index
    %c1_136 = arith.constant 1 : index
    %c1_137 = arith.constant 1 : index
    %c0_138 = arith.constant 0 : index
    %133 = vector.load %arg14[%c0_135, %c1_136, %c1_137, %c0_138] : memref<2x6x6x128xf32, #tpu.memory_space<vmem>>, vector<2x4x4x128xf32>
    %134 = vector.shape_cast %133 : vector<2x4x4x128xf32> to vector<32x128xf32>
    %135 = arith.truncf %134 : vector<32x128xf32> to vector<32x128xbf16>
    %c4_139 = arith.constant 4 : index
    %c0_140 = arith.constant 0 : index
    %c0_141 = arith.constant 0 : index
    %136 = vector.load %arg6[%c4_139, %c0_140, %c0_141] : memref<9x128x256xbf16, #tpu.memory_space<vmem>>, vector<1x128x256xbf16>
    %137 = vector.shape_cast %136 : vector<1x128x256xbf16> to vector<128x256xbf16>
    %cst_142 = arith.constant dense<0.000000e+00> : vector<32x256xf32>
    %138 = tpu.matmul %135, %137, %cst_142 {dimension_numbers = #tpu.dot_dimension_numbers<[1], [0], [0], [1], [0, 0, 1, 1], [], []>} : vector<32x128xbf16>, vector<128x256xbf16>, vector<32x256xf32> -> vector<32x256xf32>
    %139 = arith.addf %132, %138 : vector<32x256xf32>
    %c0_143 = arith.constant 0 : index
    %c1_144 = arith.constant 1 : index
    %c2_145 = arith.constant 2 : index
    %c0_146 = arith.constant 0 : index
    %140 = vector.load %arg14[%c0_143, %c1_144, %c2_145, %c0_146] : memref<2x6x6x128xf32, #tpu.memory_space<vmem>>, vector<2x4x4x128xf32>
    %141 = vector.shape_cast %140 : vector<2x4x4x128xf32> to vector<32x128xf32>
    %142 = arith.truncf %141 : vector<32x128xf32> to vector<32x128xbf16>
    %c5_147 = arith.constant 5 : index
    %c0_148 = arith.constant 0 : index
    %c0_149 = arith.constant 0 : index
    %143 = vector.load %arg6[%c5_147, %c0_148, %c0_149] : memref<9x128x256xbf16, #tpu.memory_space<vmem>>, vector<1x128x256xbf16>
    %144 = vector.shape_cast %143 : vector<1x128x256xbf16> to vector<128x256xbf16>
    %cst_150 = arith.constant dense<0.000000e+00> : vector<32x256xf32>
    %145 = tpu.matmul %142, %144, %cst_150 {dimension_numbers = #tpu.dot_dimension_numbers<[1], [0], [0], [1], [0, 0, 1, 1], [], []>} : vector<32x128xbf16>, vector<128x256xbf16>, vector<32x256xf32> -> vector<32x256xf32>
    %146 = arith.addf %139, %145 : vector<32x256xf32>
    %c0_151 = arith.constant 0 : index
    %c2_152 = arith.constant 2 : index
    %c0_153 = arith.constant 0 : index
    %c0_154 = arith.constant 0 : index
    %147 = vector.load %arg14[%c0_151, %c2_152, %c0_153, %c0_154] : memref<2x6x6x128xf32, #tpu.memory_space<vmem>>, vector<2x4x4x128xf32>
    %148 = vector.shape_cast %147 : vector<2x4x4x128xf32> to vector<32x128xf32>
    %149 = arith.truncf %148 : vector<32x128xf32> to vector<32x128xbf16>
    %c6_155 = arith.constant 6 : index
    %c0_156 = arith.constant 0 : index
    %c0_157 = arith.constant 0 : index
    %150 = vector.load %arg6[%c6_155, %c0_156, %c0_157] : memref<9x128x256xbf16, #tpu.memory_space<vmem>>, vector<1x128x256xbf16>
    %151 = vector.shape_cast %150 : vector<1x128x256xbf16> to vector<128x256xbf16>
    %cst_158 = arith.constant dense<0.000000e+00> : vector<32x256xf32>
    %152 = tpu.matmul %149, %151, %cst_158 {dimension_numbers = #tpu.dot_dimension_numbers<[1], [0], [0], [1], [0, 0, 1, 1], [], []>} : vector<32x128xbf16>, vector<128x256xbf16>, vector<32x256xf32> -> vector<32x256xf32>
    %153 = arith.addf %146, %152 : vector<32x256xf32>
    %c0_159 = arith.constant 0 : index
    %c2_160 = arith.constant 2 : index
    %c1_161 = arith.constant 1 : index
    %c0_162 = arith.constant 0 : index
    %154 = vector.load %arg14[%c0_159, %c2_160, %c1_161, %c0_162] : memref<2x6x6x128xf32, #tpu.memory_space<vmem>>, vector<2x4x4x128xf32>
    %155 = vector.shape_cast %154 : vector<2x4x4x128xf32> to vector<32x128xf32>
    %156 = arith.truncf %155 : vector<32x128xf32> to vector<32x128xbf16>
    %c7_163 = arith.constant 7 : index
    %c0_164 = arith.constant 0 : index
    %c0_165 = arith.constant 0 : index
    %157 = vector.load %arg6[%c7_163, %c0_164, %c0_165] : memref<9x128x256xbf16, #tpu.memory_space<vmem>>, vector<1x128x256xbf16>
    %158 = vector.shape_cast %157 : vector<1x128x256xbf16> to vector<128x256xbf16>
    %cst_166 = arith.constant dense<0.000000e+00> : vector<32x256xf32>
    %159 = tpu.matmul %156, %158, %cst_166 {dimension_numbers = #tpu.dot_dimension_numbers<[1], [0], [0], [1], [0, 0, 1, 1], [], []>} : vector<32x128xbf16>, vector<128x256xbf16>, vector<32x256xf32> -> vector<32x256xf32>
    %160 = arith.addf %153, %159 : vector<32x256xf32>
    %c0_167 = arith.constant 0 : index
    %c2_168 = arith.constant 2 : index
    %c2_169 = arith.constant 2 : index
    %c0_170 = arith.constant 0 : index
    %161 = vector.load %arg14[%c0_167, %c2_168, %c2_169, %c0_170] : memref<2x6x6x128xf32, #tpu.memory_space<vmem>>, vector<2x4x4x128xf32>
    %162 = vector.shape_cast %161 : vector<2x4x4x128xf32> to vector<32x128xf32>
    %163 = arith.truncf %162 : vector<32x128xf32> to vector<32x128xbf16>
    %c8_171 = arith.constant 8 : index
    %c0_172 = arith.constant 0 : index
    %c0_173 = arith.constant 0 : index
    %164 = vector.load %arg6[%c8_171, %c0_172, %c0_173] : memref<9x128x256xbf16, #tpu.memory_space<vmem>>, vector<1x128x256xbf16>
    %165 = vector.shape_cast %164 : vector<1x128x256xbf16> to vector<128x256xbf16>
    %cst_174 = arith.constant dense<0.000000e+00> : vector<32x256xf32>
    %166 = tpu.matmul %163, %165, %cst_174 {dimension_numbers = #tpu.dot_dimension_numbers<[1], [0], [0], [1], [0, 0, 1, 1], [], []>} : vector<32x128xbf16>, vector<128x256xbf16>, vector<32x256xf32> -> vector<32x256xf32>
    %167 = arith.addf %160, %166 : vector<32x256xf32>
    %c0_175 = arith.constant 0 : index
    %c0_176 = arith.constant 0 : index
    %168 = vector.load %arg7[%c0_175, %c0_176] : memref<1x256xf32, #tpu.memory_space<vmem>>, vector<1x256xf32>
    %169 = vector.broadcast %168 : vector<1x256xf32> to vector<32x256xf32>
    %170 = arith.addf %167, %169 : vector<32x256xf32>
    %cst_177 = arith.constant 0.000000e+00 : f32
    %171 = vector.broadcast %cst_177 : f32 to vector<32x256xf32>
    %172 = arith.maximumf %170, %171 : vector<32x256xf32>
    %173 = vector.shape_cast %172 : vector<32x256xf32> to vector<2x16x256xf32>
    %cst_178 = arith.constant dense<0.000000e+00> : vector<2x256xf32>
    %174 = vector.multi_reduction <add>, %173, %cst_178 [1] : vector<2x16x256xf32> to vector<2x256xf32>
    %cst_179 = arith.constant 6.250000e-02 : f32
    %175 = vector.broadcast %cst_179 : f32 to vector<2x256xf32>
    %176 = arith.mulf %174, %175 : vector<2x256xf32>
    %177 = arith.truncf %176 : vector<2x256xf32> to vector<2x256xbf16>
    %c0_180 = arith.constant 0 : index
    %c0_181 = arith.constant 0 : index
    %178 = vector.load %arg8[%c0_180, %c0_181] : memref<256x128xbf16, #tpu.memory_space<vmem>>, vector<256x128xbf16>
    %cst_182 = arith.constant dense<0.000000e+00> : vector<2x128xf32>
    %179 = tpu.matmul %177, %178, %cst_182 {dimension_numbers = #tpu.dot_dimension_numbers<[1], [0], [0], [1], [0, 0, 1, 1], [], []>} : vector<2x256xbf16>, vector<256x128xbf16>, vector<2x128xf32> -> vector<2x128xf32>
    %c0_183 = arith.constant 0 : index
    %c0_184 = arith.constant 0 : index
    %180 = vector.load %arg9[%c0_183, %c0_184] : memref<1x128xf32, #tpu.memory_space<vmem>>, vector<1x128xf32>
    %181 = vector.broadcast %180 : vector<1x128xf32> to vector<2x128xf32>
    %182 = arith.addf %179, %181 : vector<2x128xf32>
    %cst_185 = arith.constant 0.000000e+00 : f32
    %183 = vector.broadcast %cst_185 : f32 to vector<2x128xf32>
    %184 = arith.maximumf %182, %183 : vector<2x128xf32>
    %185 = arith.truncf %184 : vector<2x128xf32> to vector<2x128xbf16>
    %c0_186 = arith.constant 0 : index
    %c0_187 = arith.constant 0 : index
    %186 = vector.load %arg10[%c0_186, %c0_187] : memref<128x1024xbf16, #tpu.memory_space<vmem>>, vector<128x1024xbf16>
    %cst_188 = arith.constant dense<0.000000e+00> : vector<2x1024xf32>
    %187 = tpu.matmul %185, %186, %cst_188 {dimension_numbers = #tpu.dot_dimension_numbers<[1], [0], [0], [1], [0, 0, 1, 1], [], []>} : vector<2x128xbf16>, vector<128x1024xbf16>, vector<2x1024xf32> -> vector<2x1024xf32>
    %c0_189 = arith.constant 0 : index
    %c0_190 = arith.constant 0 : index
    %188 = vector.load %arg11[%c0_189, %c0_190] : memref<1x1024xf32, #tpu.memory_space<vmem>>, vector<1x1024xf32>
    %189 = vector.broadcast %188 : vector<1x1024xf32> to vector<2x1024xf32>
    %190 = arith.addf %187, %189 : vector<2x1024xf32>
    %c0_191 = arith.constant 0 : index
    %c0_192 = arith.constant 0 : index
    %c0_193 = arith.constant 0 : index
    %191 = vector.load %arg12[%c0_191, %c0_192, %c0_193] : memref<1x2x1024xf32, #tpu.memory_space<vmem>>, vector<1x2x1024xf32>
    %192 = vector.shape_cast %191 : vector<1x2x1024xf32> to vector<2x1024xf32>
    %193 = vector.shape_cast %190 : vector<2x1024xf32> to vector<1x2x1024xf32>
    tpu.vector_store %arg12[%c0_191, %c0_192, %c0_193], %193 {strides = array<i32>} : memref<1x2x1024xf32, #tpu.memory_space<vmem>>, vector<1x2x1024xf32>,
    return
  }
  func.func @transform_0(%arg0: i32) -> (i32, i32, i32) {
    %c0_i32 = arith.constant 0 : i32
    %c0_i32_0 = arith.constant 0 : i32
    %c0_i32_1 = arith.constant 0 : i32
    return %arg0, %c0_i32, %c0_i32_0 : i32, i32, i32
  }
  func.func @transform_1(%arg0: i32) -> (i32, i32) {
    %c0_i32 = arith.constant 0 : i32
    %c0_i32_0 = arith.constant 0 : i32
    %c0_i32_1 = arith.constant 0 : i32
    return %c0_i32, %c0_i32_0 : i32, i32
  }
  func.func @transform_2(%arg0: i32) -> (i32, i32) {
    %c0_i32 = arith.constant 0 : i32
    %c0_i32_0 = arith.constant 0 : i32
    %c0_i32_1 = arith.constant 0 : i32
    return %c0_i32, %c0_i32_0 : i32, i32
  }
  func.func @transform_3(%arg0: i32) -> (i32, i32, i32) {
    %c0_i32 = arith.constant 0 : i32
    %c0_i32_0 = arith.constant 0 : i32
    %c0_i32_1 = arith.constant 0 : i32
    %c0_i32_2 = arith.constant 0 : i32
    return %c0_i32, %c0_i32_0, %c0_i32_1 : i32, i32, i32
  }
  func.func @transform_4(%arg0: i32) -> (i32, i32) {
    %c0_i32 = arith.constant 0 : i32
    %c0_i32_0 = arith.constant 0 : i32
    %c0_i32_1 = arith.constant 0 : i32
    return %c0_i32, %c0_i32_0 : i32, i32
  }
  func.func @transform_5(%arg0: i32) -> (i32, i32, i32) {
    %c0_i32 = arith.constant 0 : i32
    %c0_i32_0 = arith.constant 0 : i32
    %c0_i32_1 = arith.constant 0 : i32
    %c0_i32_2 = arith.constant 0 : i32
    return %c0_i32, %c0_i32_0, %c0_i32_1 : i32, i32, i32
  }
  func.func @transform_6(%arg0: i32) -> (i32, i32) {
    %c0_i32 = arith.constant 0 : i32
    %c0_i32_0 = arith.constant 0 : i32
    %c0_i32_1 = arith.constant 0 : i32
    return %c0_i32, %c0_i32_0 : i32, i32
  }
  func.func @transform_7(%arg0: i32) -> (i32, i32) {
    %c0_i32 = arith.constant 0 : i32
    %c0_i32_0 = arith.constant 0 : i32
    %c0_i32_1 = arith.constant 0 : i32
    return %c0_i32, %c0_i32_0 : i32, i32
  }
  func.func @transform_8(%arg0: i32) -> (i32, i32) {
    %c0_i32 = arith.constant 0 : i32
    %c0_i32_0 = arith.constant 0 : i32
    %c0_i32_1 = arith.constant 0 : i32
    return %c0_i32, %c0_i32_0 : i32, i32
  }
  func.func @transform_9(%arg0: i32) -> (i32, i32) {
    %c0_i32 = arith.constant 0 : i32
    %c0_i32_0 = arith.constant 0 : i32
    %c0_i32_1 = arith.constant 0 : i32
    return %c0_i32, %c0_i32_0 : i32, i32
  }
  func.func @transform_10(%arg0: i32) -> (i32, i32) {
    %c0_i32 = arith.constant 0 : i32
    %c0_i32_0 = arith.constant 0 : i32
    %c0_i32_1 = arith.constant 0 : i32
    return %c0_i32, %c0_i32_0 : i32, i32
  }
  func.func @transform_11(%arg0: i32) -> (i32, i32, i32) {
    %c0_i32 = arith.constant 0 : i32
    %c0_i32_0 = arith.constant 0 : i32
    %c0_i32_1 = arith.constant 0 : i32
    return %arg0, %c0_i32, %c0_i32_0 : i32, i32, i32
  }
}

</mosaic_0001>

<llo_original>
// kernel: simple_cnn_forward.1
$region0: #{simple_cnn_forward.1}
  #allocation0 [shape = 'u32[]', space=smem, size = 0x4, offset = 0x4, fixed_abs, tag = 'smem constant byte address 0x4 - core index']
  #allocation1 [shape = 'u32[144,128]{1,0:T(1,128)}', space=vmem, size = 0x12000, scoped, tag = 'internal scratch']
  #allocation2 [shape = 'f32[2,10,10,64]{3,2,1,0:T(8,128)}', space=vmem, size = 0x28000, scoped, tag = 'scratch operand']
  #allocation3 [shape = 'f32[2,6,6,128]{3,2,1,0:T(8,128)}', space=vmem, size = 0xc000, scoped, tag = 'scratch operand']
  %s0 = inlined_call_operand.hbm [shape: bf16[1,512,27], index: 0, kind: input, shape index: {}]
  %s1 = inlined_call_operand.hbm [shape: bf16[27,64], index: 1, kind: input, shape index: {}]
  %s2 = inlined_call_operand.hbm [shape: f32[1,64], index: 2, kind: input, shape index: {}]
  %s3 = inlined_call_operand.hbm [shape: bf16[9,64,128], index: 3, kind: input, shape index: {}]
  %s4 = inlined_call_operand.hbm [shape: f32[1,128], index: 4, kind: input, shape index: {}]
  %s5 = inlined_call_operand.hbm [shape: bf16[9,128,256], index: 5, kind: input, shape index: {}]
  %s6 = inlined_call_operand.hbm [shape: f32[1,256], index: 6, kind: input, shape index: {}]
  %s7 = inlined_call_operand.hbm [shape: bf16[256,128], index: 7, kind: input, shape index: {}]
  %s8 = inlined_call_operand.hbm [shape: f32[1,128], index: 8, kind: input, shape index: {}]
  %s9 = inlined_call_operand.hbm [shape: bf16[128,1024], index: 9, kind: input, shape index: {}]
  %s10 = inlined_call_operand.hbm [shape: f32[1,1024], index: 10, kind: input, shape index: {}]
  %s11 = inlined_call_operand.hbm [shape: f32[1,2,1024], index: 11, kind: output, shape index: {}]
  %s12 = sld [smem:[#allocation0]]
  $region98: #{simple_cnn_forward.1} parent=0
    _
  %s14 = ssub.s32 1, %s12
  %s15 = scalar_select 0, %s14, %s12
  $region1: #{simple_cnn_forward.1} parent=0
    #allocation4 [shape = 'u8[131072]{0}', space=vmem, size = 0x20000, scoped, tag = 'input window, operand 0, single buffered']
    #allocation5 [shape = 's32[1]{0}', space=sflag, size = 0x4, scoped, tag = 'scoped memory for simple_cnn_forward.1']
    #allocation6 [shape = 's32[1]{0}', space=sflag, size = 0x4, scoped, tag = 'scoped memory for simple_cnn_forward.1']
    #allocation7 [shape = 'u8[8192]{0}', space=vmem, size = 0x2000, scoped, tag = 'input window, operand 1, single buffered']
    #allocation8 [shape = 's32[1]{0}', space=sflag, size = 0x4, scoped, tag = 'scoped memory for simple_cnn_forward.1']
    #allocation9 [shape = 'u8[512]{0}', space=vmem, size = 0x400, scoped, tag = 'input window, operand 2, single buffered']
    #allocation10 [shape = 'u8[147456]{0}', space=vmem, size = 0x24000, scoped, tag = 'input window, operand 3, single buffered']
    #allocation11 [shape = 's32[1]{0}', space=sflag, size = 0x4, scoped, tag = 'scoped memory for simple_cnn_forward.1']
    #allocation12 [shape = 'u8[512]{0}', space=vmem, size = 0x400, scoped, tag = 'input window, operand 4, single buffered']
    #allocation13 [shape = 'u8[589824]{0}', space=vmem, size = 0x90000, scoped, tag = 'input window, operand 5, single buffered']
    #allocation14 [shape = 's32[1]{0}', space=sflag, size = 0x4, scoped, tag = 'scoped memory for simple_cnn_forward.1']
    #allocation15 [shape = 'u8[1024]{0}', space=vmem, size = 0x400, scoped, tag = 'input window, operand 6, single buffered']
    #allocation16 [shape = 'u8[65536]{0}', space=vmem, size = 0x10000, scoped, tag = 'input window, operand 7, single buffered']
    #allocation17 [shape = 's32[1]{0}', space=sflag, size = 0x4, scoped, tag = 'scoped memory for simple_cnn_forward.1']
    #allocation18 [shape = 'u8[512]{0}', space=vmem, size = 0x400, scoped, tag = 'input window, operand 8, single buffered']
    #allocation19 [shape = 'u8[262144]{0}', space=vmem, size = 0x40000, scoped, tag = 'input window, operand 9, single buffered']
    #allocation20 [shape = 's32[1]{0}', space=sflag, size = 0x4, scoped, tag = 'scoped memory for simple_cnn_forward.1']
    #allocation21 [shape = 'u8[4096]{0}', space=vmem, size = 0x1000, scoped, tag = 'input window, operand 10, single buffered']
    #allocation22 [shape = 'u8[8192]{0}', space=vmem, size = 0x2000, scoped, tag = 'output window, operand 0, single buffered']
    %16 = vsyncpa [#allocation5], 0
    %17 = vsyncpa [#allocation8], 0
    %18 = vsyncpa [#allocation11], 0
    %19 = vsyncpa [#allocation14], 0
    %20 = vsyncpa [#allocation17], 0
    %21 = vsyncpa [#allocation20], 0
    %22 = vsyncpa [#allocation6], 0
    // Predicated region
    $region2: #{simple_cnn_forward.1} parent=1 // pred_check
      _
    $region3: #{simple_cnn_forward.1} parent=1 // pred_check_branch
      %24 = sbr.rel (0) target = $region5
    $region4: #{simple_cnn_forward.1} parent=1 // pred_region
      %s26 = ssub.s32 4096, 4096
      %27 = vsyncadd [#allocation5], %s26
      %s28 = sshll.u32 [#allocation4], 4
      %s29 = int_to_ptr.vmem [resolvable:$true] %s28
      %34 = dma.hbm_to_vmem [thread:$0]  %s0, 4096, %s29, [#allocation5], 64, 64, 4
    $region5: #{simple_cnn_forward.1} parent=1 // pred_fallthru
      _
    // Predicated region
    $region6: #{simple_cnn_forward.1} parent=1 // pred_check
      _
    $region7: #{simple_cnn_forward.1} parent=1 // pred_check_branch
      %36 = sbr.rel (0) target = $region9
    $region8: #{simple_cnn_forward.1} parent=1 // pred_region
      %s38 = ssub.s32 256, 256
      %39 = vsyncadd [#allocation8], %s38
      %s40 = sshll.u32 [#allocation7], 4
      %s41 = int_to_ptr.vmem [resolvable:$true] %s40
      %46 = dma.hbm_to_vmem [thread:$0]  %s1, 256, %s41, [#allocation8], 64, 64, 4
    $region9: #{simple_cnn_forward.1} parent=1 // pred_fallthru
      _
    // Predicated region
    $region10: #{simple_cnn_forward.1} parent=1 // pred_check
      _
    $region11: #{simple_cnn_forward.1} parent=1 // pred_check_branch
      %48 = sbr.rel (0) target = $region13
    $region12: #{simple_cnn_forward.1} parent=1 // pred_region
      %s50 = ssub.s32 16, 16
      %51 = vsyncadd [#allocation8], %s50
      %s53 = sshll.u32 [#allocation9], 4
      %s54 = int_to_ptr.vmem [resolvable:$true] %s53
      %56 = dma.hbm_to_vmem [thread:$0]  %s2, 16, %s54, [#allocation8]
    $region13: #{simple_cnn_forward.1} parent=1 // pred_fallthru
      _
    // Predicated region
    $region14: #{simple_cnn_forward.1} parent=1 // pred_check
      _
    $region15: #{simple_cnn_forward.1} parent=1 // pred_check_branch
      %58 = sbr.rel (0) target = $region17
    $region16: #{simple_cnn_forward.1} parent=1 // pred_region
      %s60 = ssub.s32 4608, 4608
      %61 = vsyncadd [#allocation11], %s60
      %s62 = sshll.u32 [#allocation10], 4
      %s63 = int_to_ptr.vmem [resolvable:$true] %s62
      %68 = dma.hbm_to_vmem [thread:$0]  %s3, 4608, %s63, [#allocation11], 64, 64, 4
    $region17: #{simple_cnn_forward.1} parent=1 // pred_fallthru
      _
    // Predicated region
    $region18: #{simple_cnn_forward.1} parent=1 // pred_check
      _
    $region19: #{simple_cnn_forward.1} parent=1 // pred_check_branch
      %70 = sbr.rel (0) target = $region21
    $region20: #{simple_cnn_forward.1} parent=1 // pred_region
      %s72 = ssub.s32 16, 16
      %73 = vsyncadd [#allocation11], %s72
      %s75 = sshll.u32 [#allocation12], 4
      %s76 = int_to_ptr.vmem [resolvable:$true] %s75
      %78 = dma.hbm_to_vmem [thread:$0]  %s4, 16, %s76, [#allocation11]
    $region21: #{simple_cnn_forward.1} parent=1 // pred_fallthru
      _
    // Predicated region
    $region22: #{simple_cnn_forward.1} parent=1 // pred_check
      _
    $region23: #{simple_cnn_forward.1} parent=1 // pred_check_branch
      %80 = sbr.rel (0) target = $region25
    $region24: #{simple_cnn_forward.1} parent=1 // pred_region
      %s82 = ssub.s32 18432, 18432
      %83 = vsyncadd [#allocation14], %s82
      %s84 = sshll.u32 [#allocation13], 4
      %s85 = int_to_ptr.vmem [resolvable:$true] %s84
      %90 = dma.hbm_to_vmem [thread:$0]  %s5, 18432, %s85, [#allocation14], 128, 128, 8
    $region25: #{simple_cnn_forward.1} parent=1 // pred_fallthru
      _
    // Predicated region
    $region26: #{simple_cnn_forward.1} parent=1 // pred_check
      _
    $region27: #{simple_cnn_forward.1} parent=1 // pred_check_branch
      %92 = sbr.rel (0) target = $region29
    $region28: #{simple_cnn_forward.1} parent=1 // pred_region
      %s94 = ssub.s32 32, 32
      %95 = vsyncadd [#allocation14], %s94
      %s97 = sshll.u32 [#allocation15], 4
      %s98 = int_to_ptr.vmem [resolvable:$true] %s97
      %100 = dma.hbm_to_vmem [thread:$0]  %s6, 32, %s98, [#allocation14]
    $region29: #{simple_cnn_forward.1} parent=1 // pred_fallthru
      _
    // Predicated region
    $region30: #{simple_cnn_forward.1} parent=1 // pred_check
      _
    $region31: #{simple_cnn_forward.1} parent=1 // pred_check_branch
      %102 = sbr.rel (0) target = $region33
    $region32: #{simple_cnn_forward.1} parent=1 // pred_region
      %s104 = ssub.s32 2048, 2048
      %105 = vsyncadd [#allocation17], %s104
      %s106 = sshll.u32 [#allocation16], 4
      %s107 = int_to_ptr.vmem [resolvable:$true] %s106
      %112 = dma.hbm_to_vmem [thread:$0]  %s7, 2048, %s107, [#allocation17], 64, 64, 4
    $region33: #{simple_cnn_forward.1} parent=1 // pred_fallthru
      _
    // Predicated region
    $region34: #{simple_cnn_forward.1} parent=1 // pred_check
      _
    $region35: #{simple_cnn_forward.1} parent=1 // pred_check_branch
      %114 = sbr.rel (0) target = $region37
    $region36: #{simple_cnn_forward.1} parent=1 // pred_region
      %s116 = ssub.s32 16, 16
      %117 = vsyncadd [#allocation17], %s116
      %s119 = sshll.u32 [#allocation18], 4
      %s120 = int_to_ptr.vmem [resolvable:$true] %s119
      %122 = dma.hbm_to_vmem [thread:$0]  %s8, 16, %s120, [#allocation17]
    $region37: #{simple_cnn_forward.1} parent=1 // pred_fallthru
      _
    // Predicated region
    $region38: #{simple_cnn_forward.1} parent=1 // pred_check
      _
    $region39: #{simple_cnn_forward.1} parent=1 // pred_check_branch
      %124 = sbr.rel (0) target = $region41
    $region40: #{simple_cnn_forward.1} parent=1 // pred_region
      %s126 = ssub.s32 8192, 8192
      %127 = vsyncadd [#allocation20], %s126
      %s128 = sshll.u32 [#allocation19], 4
      %s129 = int_to_ptr.vmem [resolvable:$true] %s128
      %134 = dma.hbm_to_vmem [thread:$0]  %s9, 8192, %s129, [#allocation20], 512, 512, 32
    $region41: #{simple_cnn_forward.1} parent=1 // pred_fallthru
      _
    // Predicated region
    $region42: #{simple_cnn_forward.1} parent=1 // pred_check
      _
    $region43: #{simple_cnn_forward.1} parent=1 // pred_check_branch
      %136 = sbr.rel (0) target = $region45
    $region44: #{simple_cnn_forward.1} parent=1 // pred_region
      %s138 = ssub.s32 128, 128
      %139 = vsyncadd [#allocation20], %s138
      %s141 = sshll.u32 [#allocation21], 4
      %s142 = int_to_ptr.vmem [resolvable:$true] %s141
      %144 = dma.hbm_to_vmem [thread:$0]  %s10, 128, %s142, [#allocation20]
    $region45: #{simple_cnn_forward.1} parent=1 // pred_fallthru
      _
    // Predicated region
    $region46: #{simple_cnn_forward.1} parent=1 // pred_check
      _
    $region47: #{simple_cnn_forward.1} parent=1 // pred_check_branch
      %146 = sbr.rel (0) target = $region49
    $region48: #{simple_cnn_forward.1} parent=1 // pred_region
      %147 = dma.done [#allocation5], 4096
    $region49: #{simple_cnn_forward.1} parent=1 // pred_fallthru
      _
    // Predicated region
    $region50: #{simple_cnn_forward.1} parent=1 // pred_check
      _
    $region51: #{simple_cnn_forward.1} parent=1 // pred_check_branch
      %149 = sbr.rel (0) target = $region53
    $region52: #{simple_cnn_forward.1} parent=1 // pred_region
      %150 = dma.done [#allocation8], 256
    $region53: #{simple_cnn_forward.1} parent=1 // pred_fallthru
      _
    // Predicated region
    $region54: #{simple_cnn_forward.1} parent=1 // pred_check
      _
    $region55: #{simple_cnn_forward.1} parent=1 // pred_check_branch
      %152 = sbr.rel (0) target = $region57
    $region56: #{simple_cnn_forward.1} parent=1 // pred_region
      %153 = dma.done [#allocation8], 16
    $region57: #{simple_cnn_forward.1} parent=1 // pred_fallthru
      _
    // Predicated region
    $region58: #{simple_cnn_forward.1} parent=1 // pred_check
      _
    $region59: #{simple_cnn_forward.1} parent=1 // pred_check_branch
      %155 = sbr.rel (0) target = $region61
    $region60: #{simple_cnn_forward.1} parent=1 // pred_region
      %156 = dma.done [#allocation11], 4608
    $region61: #{simple_cnn_forward.1} parent=1 // pred_fallthru
      _
    // Predicated region
    $region62: #{simple_cnn_forward.1} parent=1 // pred_check
      _
    $region63: #{simple_cnn_forward.1} parent=1 // pred_check_branch
      %158 = sbr.rel (0) target = $region65
    $region64: #{simple_cnn_forward.1} parent=1 // pred_region
      %159 = dma.done [#allocation11], 16
    $region65: #{simple_cnn_forward.1} parent=1 // pred_fallthru
      _
    // Predicated region
    $region66: #{simple_cnn_forward.1} parent=1 // pred_check
      _
    $region67: #{simple_cnn_forward.1} parent=1 // pred_check_branch
      %161 = sbr.rel (0) target = $region69
    $region68: #{simple_cnn_forward.1} parent=1 // pred_region
      %162 = dma.done [#allocation14], 18432
    $region69: #{simple_cnn_forward.1} parent=1 // pred_fallthru
      _
    // Predicated region
    $region70: #{simple_cnn_forward.1} parent=1 // pred_check
      _
    $region71: #{simple_cnn_forward.1} parent=1 // pred_check_branch
      %164 = sbr.rel (0) target = $region73
    $region72: #{simple_cnn_forward.1} parent=1 // pred_region
      %165 = dma.done [#allocation14], 32
    $region73: #{simple_cnn_forward.1} parent=1 // pred_fallthru
      _
    // Predicated region
    $region74: #{simple_cnn_forward.1} parent=1 // pred_check
      _
    $region75: #{simple_cnn_forward.1} parent=1 // pred_check_branch
      %167 = sbr.rel (0) target = $region77
    $region76: #{simple_cnn_forward.1} parent=1 // pred_region
      %168 = dma.done [#allocation17], 2048
    $region77: #{simple_cnn_forward.1} parent=1 // pred_fallthru
      _
    // Predicated region
    $region78: #{simple_cnn_forward.1} parent=1 // pred_check
      _
    $region79: #{simple_cnn_forward.1} parent=1 // pred_check_branch
      %170 = sbr.rel (0) target = $region81
    $region80: #{simple_cnn_forward.1} parent=1 // pred_region
      %171 = dma.done [#allocation17], 16
    $region81: #{simple_cnn_forward.1} parent=1 // pred_fallthru
      _
    // Predicated region
    $region82: #{simple_cnn_forward.1} parent=1 // pred_check
      _
    $region83: #{simple_cnn_forward.1} parent=1 // pred_check_branch
      %173 = sbr.rel (0) target = $region85
    $region84: #{simple_cnn_forward.1} parent=1 // pred_region
      %174 = dma.done [#allocation20], 8192
    $region85: #{simple_cnn_forward.1} parent=1 // pred_fallthru
      _
    // Predicated region
    $region86: #{simple_cnn_forward.1} parent=1 // pred_check
      _
    $region87: #{simple_cnn_forward.1} parent=1 // pred_check_branch
      %176 = sbr.rel (0) target = $region89
    $region88: #{simple_cnn_forward.1} parent=1 // pred_region
      %177 = dma.done [#allocation20], 128
    $region89: #{simple_cnn_forward.1} parent=1 // pred_fallthru
      _
    %v180 = vld [vmem:[#allocation4] sm:$0xf]
    %v181 = vld [vmem:[#allocation4 + $0x4] sm:$0xf]
    %v182 = vld [vmem:[#allocation4 + $0x8] sm:$0xf]
    %v183 = vld [vmem:[#allocation4 + $0xc] sm:$0xf]
    %v184 = vld [vmem:[#allocation4 + $0x10] sm:$0xf]
    %v185 = vld [vmem:[#allocation4 + $0x14] sm:$0xf]
    %v186 = vld [vmem:[#allocation4 + $0x18] sm:$0xf]
    %v187 = vld [vmem:[#allocation4 + $0x1c] sm:$0xf]
    %v188 = vld [vmem:[#allocation4 + $0x20] sm:$0xf]
    %v189 = vld [vmem:[#allocation4 + $0x24] sm:$0xf]
    %v190 = vld [vmem:[#allocation4 + $0x28] sm:$0xf]
    %v191 = vld [vmem:[#allocation4 + $0x2c] sm:$0xf]
    %v192 = vld [vmem:[#allocation4 + $0x30] sm:$0xf]
    %v193 = vld [vmem:[#allocation4 + $0x34] sm:$0xf]
    %v194 = vld [vmem:[#allocation4 + $0x38] sm:$0xf]
    %v195 = vld [vmem:[#allocation4 + $0x3c] sm:$0xf]
    %v196 = vld [vmem:[#allocation4 + $0x40] sm:$0xf]
    %v197 = vld [vmem:[#allocation4 + $0x44] sm:$0xf]
    %v198 = vld [vmem:[#allocation4 + $0x48] sm:$0xf]
    %v199 = vld [vmem:[#allocation4 + $0x4c] sm:$0xf]
    %v200 = vld [vmem:[#allocation4 + $0x50] sm:$0xf]
    %v201 = vld [vmem:[#allocation4 + $0x54] sm:$0xf]
    %v202 = vld [vmem:[#allocation4 + $0x58] sm:$0xf]
    %v203 = vld [vmem:[#allocation4 + $0x5c] sm:$0xf]
    %v204 = vld [vmem:[#allocation4 + $0x60] sm:$0xf]
    %v205 = vld [vmem:[#allocation4 + $0x64] sm:$0xf]
    %v206 = vld [vmem:[#allocation4 + $0x68] sm:$0xf]
    %v207 = vld [vmem:[#allocation4 + $0x6c] sm:$0xf]
    %v208 = vld [vmem:[#allocation4 + $0x70] sm:$0xf]
    %v209 = vld [vmem:[#allocation4 + $0x74] sm:$0xf]
    %v210 = vld [vmem:[#allocation4 + $0x78] sm:$0xf]
    %v211 = vld [vmem:[#allocation4 + $0x7c] sm:$0xf]
    %v212 = vld [vmem:[#allocation4 + $0x80] sm:$0xf]
    %v213 = vld [vmem:[#allocation4 + $0x84] sm:$0xf]
    %v214 = vld [vmem:[#allocation4 + $0x88] sm:$0xf]
    %v215 = vld [vmem:[#allocation4 + $0x8c] sm:$0xf]
    %v216 = vld [vmem:[#allocation4 + $0x90] sm:$0xf]
    %v217 = vld [vmem:[#allocation4 + $0x94] sm:$0xf]
    %v218 = vld [vmem:[#allocation4 + $0x98] sm:$0xf]
    %v219 = vld [vmem:[#allocation4 + $0x9c] sm:$0xf]
    %v220 = vld [vmem:[#allocation4 + $0xa0] sm:$0xf]
    %v221 = vld [vmem:[#allocation4 + $0xa4] sm:$0xf]
    %v222 = vld [vmem:[#allocation4 + $0xa8] sm:$0xf]
    %v223 = vld [vmem:[#allocation4 + $0xac] sm:$0xf]
    %v224 = vld [vmem:[#allocation4 + $0xb0] sm:$0xf]
    %v225 = vld [vmem:[#allocation4 + $0xb4] sm:$0xf]
    %v226 = vld [vmem:[#allocation4 + $0xb8] sm:$0xf]
    %v227 = vld [vmem:[#allocation4 + $0xbc] sm:$0xf]
    %v228 = vld [vmem:[#allocation4 + $0xc0] sm:$0xf]
    %v229 = vld [vmem:[#allocation4 + $0xc4] sm:$0xf]
    %v230 = vld [vmem:[#allocation4 + $0xc8] sm:$0xf]
    %v231 = vld [vmem:[#allocation4 + $0xcc] sm:$0xf]
    %v232 = vld [vmem:[#allocation4 + $0xd0] sm:$0xf]
    %v233 = vld [vmem:[#allocation4 + $0xd4] sm:$0xf]
    %v234 = vld [vmem:[#allocation4 + $0xd8] sm:$0xf]
    %v235 = vld [vmem:[#allocation4 + $0xdc] sm:$0xf]
    %v236 = vld [vmem:[#allocation4 + $0xe0] sm:$0xf]
    %v237 = vld [vmem:[#allocation4 + $0xe4] sm:$0xf]
    %v238 = vld [vmem:[#allocation4 + $0xe8] sm:$0xf]
    %v239 = vld [vmem:[#allocation4 + $0xec] sm:$0xf]
    %v240 = vld [vmem:[#allocation4 + $0xf0] sm:$0xf]
    %v241 = vld [vmem:[#allocation4 + $0xf4] sm:$0xf]
    %v242 = vld [vmem:[#allocation4 + $0xf8] sm:$0xf]
    %v243 = vld [vmem:[#allocation4 + $0xfc] sm:$0xf]
    %v244 = vld [vmem:[#allocation7] sm:$0xf]
    %v245 = vld [vmem:[#allocation7 + $0x4] sm:$0xf]
    %v246 = vld [vmem:[#allocation7 + $0x8] sm:$0xf]
    %v247 = vld [vmem:[#allocation7 + $0xc] sm:$0x3]
    %v248 = vld [vmem:[#allocation9] sm:$0x1]
    %v250 = vlaneseq
    %v251 = vshrl.u32 %v250, 7
    %v252 = vsub.s32 0, %v251
    %v253 = vrot.slane %v248, %v252
    %v319 = vunpack.c.l.b16 %v180
    %v320 = vunpack.c.l.b16 %v181
    %v321 = vunpack.c.l.b16 %v182
    %v322 = vunpack.c.l.b16 %v183
    %v323 = vunpack.c.l.b16 %v184
    %v324 = vunpack.c.l.b16 %v185
    %v325 = vunpack.c.l.b16 %v186
    %v326 = vunpack.c.l.b16 %v187
    %v327 = vunpack.c.l.b16 %v188
    %v328 = vunpack.c.l.b16 %v189
    %v329 = vunpack.c.l.b16 %v190
    %v330 = vunpack.c.l.b16 %v191
    %v331 = vunpack.c.l.b16 %v192
    %v332 = vunpack.c.l.b16 %v193
    %v333 = vunpack.c.l.b16 %v194
    %v334 = vunpack.c.l.b16 %v195
    %v335 = vunpack.c.l.b16 %v196
    %v336 = vunpack.c.l.b16 %v197
    %v337 = vunpack.c.l.b16 %v198
    %v338 = vunpack.c.l.b16 %v199
    %v339 = vunpack.c.l.b16 %v200
    %v340 = vunpack.c.l.b16 %v201
    %v341 = vunpack.c.l.b16 %v202
    %v342 = vunpack.c.l.b16 %v203
    %v343 = vunpack.c.l.b16 %v204
    %v344 = vunpack.c.l.b16 %v205
    %v345 = vunpack.c.l.b16 %v206
    %v346 = vunpack.c.l.b16 %v207
    %v347 = vunpack.c.l.b16 %v208
    %v348 = vunpack.c.l.b16 %v209
    %v349 = vunpack.c.l.b16 %v210
    %v350 = vunpack.c.l.b16 %v211
    %v351 = vunpack.c.l.b16 %v212
    %v352 = vunpack.c.l.b16 %v213
    %v353 = vunpack.c.l.b16 %v214
    %v354 = vunpack.c.l.b16 %v215
    %v355 = vunpack.c.l.b16 %v216
    %v356 = vunpack.c.l.b16 %v217
    %v357 = vunpack.c.l.b16 %v218
    %v358 = vunpack.c.l.b16 %v219
    %v359 = vunpack.c.l.b16 %v220
    %v360 = vunpack.c.l.b16 %v221
    %v361 = vunpack.c.l.b16 %v222
    %v362 = vunpack.c.l.b16 %v223
    %v363 = vunpack.c.l.b16 %v224
    %v364 = vunpack.c.l.b16 %v225
    %v365 = vunpack.c.l.b16 %v226
    %v366 = vunpack.c.l.b16 %v227
    %v367 = vunpack.c.l.b16 %v228
    %v368 = vunpack.c.l.b16 %v229
    %v369 = vunpack.c.l.b16 %v230
    %v370 = vunpack.c.l.b16 %v231
    %v371 = vunpack.c.l.b16 %v232
    %v372 = vunpack.c.l.b16 %v233
    %v373 = vunpack.c.l.b16 %v234
    %v374 = vunpack.c.l.b16 %v235
    %v375 = vunpack.c.l.b16 %v236
    %v376 = vunpack.c.l.b16 %v237
    %v377 = vunpack.c.l.b16 %v238
    %v378 = vunpack.c.l.b16 %v239
    %v379 = vunpack.c.l.b16 %v240
    %v380 = vunpack.c.l.b16 %v241
    %v381 = vunpack.c.l.b16 %v242
    %v382 = vunpack.c.l.b16 %v243
    %v383 = vpack.c.b16 %v320, %v319
    %v384 = vpack.c.b16 %v322, %v321
    %v385 = vpack.c.b16 %v324, %v323
    %v386 = vpack.c.b16 %v326, %v325
    %v387 = vpack.c.b16 %v328, %v327
    %v388 = vpack.c.b16 %v330, %v329
    %v389 = vpack.c.b16 %v332, %v331
    %v390 = vpack.c.b16 %v334, %v333
    %v391 = vpack.c.b16 %v336, %v335
    %v392 = vpack.c.b16 %v338, %v337
    %v393 = vpack.c.b16 %v340, %v339
    %v394 = vpack.c.b16 %v342, %v341
    %v395 = vpack.c.b16 %v344, %v343
    %v396 = vpack.c.b16 %v346, %v345
    %v397 = vpack.c.b16 %v348, %v347
    %v398 = vpack.c.b16 %v350, %v349
    %v399 = vpack.c.b16 %v352, %v351
    %v400 = vpack.c.b16 %v354, %v353
    %v401 = vpack.c.b16 %v356, %v355
    %v402 = vpack.c.b16 %v358, %v357
    %v403 = vpack.c.b16 %v360, %v359
    %v404 = vpack.c.b16 %v362, %v361
    %v405 = vpack.c.b16 %v364, %v363
    %v406 = vpack.c.b16 %v366, %v365
    %v407 = vpack.c.b16 %v368, %v367
    %v408 = vpack.c.b16 %v370, %v369
    %v409 = vpack.c.b16 %v372, %v371
    %v410 = vpack.c.b16 %v374, %v373
    %v411 = vpack.c.b16 %v376, %v375
    %v412 = vpack.c.b16 %v378, %v377
    %v413 = vpack.c.b16 %v380, %v379
    %v414 = vpack.c.b16 %v382, %v381
    %v419 = vunpack.c.l.b16 %v244
    %v420 = vunpack.c.l.b16 %v245
    %v421 = vunpack.c.l.b16 %v246
    %v422 = vunpack.c.l.b16 %v247
    %v423 = vpack.c.b16 %v420, %v419
    %v424 = vpack.c.b16 %v422, %v421
    %vm426 = vcmask 220160
    %v428 = vsel %vm426, %v383, 0
    %v431 = vsel %vm426, %v384, 0
    %v434 = vsel %vm426, %v385, 0
    %v437 = vsel %vm426, %v386, 0
    %v440 = vsel %vm426, %v387, 0
    %v443 = vsel %vm426, %v388, 0
    %v446 = vsel %vm426, %v389, 0
    %v449 = vsel %vm426, %v390, 0
    %v452 = vsel %vm426, %v391, 0
    %v455 = vsel %vm426, %v392, 0
    %v458 = vsel %vm426, %v393, 0
    %v461 = vsel %vm426, %v394, 0
    %v464 = vsel %vm426, %v395, 0
    %v467 = vsel %vm426, %v396, 0
    %v470 = vsel %vm426, %v397, 0
    %v473 = vsel %vm426, %v398, 0
    %v476 = vsel %vm426, %v399, 0
    %v479 = vsel %vm426, %v400, 0
    %v482 = vsel %vm426, %v401, 0
    %v485 = vsel %vm426, %v402, 0
    %v488 = vsel %vm426, %v403, 0
    %v491 = vsel %vm426, %v404, 0
    %v494 = vsel %vm426, %v405, 0
    %v497 = vsel %vm426, %v406, 0
    %v500 = vsel %vm426, %v407, 0
    %v503 = vsel %vm426, %v408, 0
    %v506 = vsel %vm426, %v409, 0
    %v509 = vsel %vm426, %v410, 0
    %v512 = vsel %vm426, %v411, 0
    %v515 = vsel %vm426, %v412, 0
    %v518 = vsel %vm426, %v413, 0
    %v521 = vsel %vm426, %v414, 0
    %vm523 = vcmask 1044480
    %vm524 = vcmask 1045504
    %v525 = vsel %vm523, 4294967295, 65535
    %v526 = vsel %vm524, %v525, 0
    %v528 = vand.u32 %v424, %v526
    %530 = vmatprep.subr.bf16.mxu0 0
    %531 = vmatpush1.bf16.msra.mxu0 %v423
    %532 = vmatprep.subr.bf16.mxu0 0
    %533 = vmatpush1.bf16.msra.mxu0 %v528
    %534 = vmatprep.subr.bf16.mxu0 0
    %535 = vmatpush1.bf16.msra.mxu0 0
    %536 = vmatprep.subr.bf16.mxu0 0
    %537 = vmatpush1.bf16.msra.mxu0 0
    %538 = vmatprep.subr.bf16.mxu0 0
    %539 = vmatpush1.bf16.msra.mxu0 0
    %540 = vmatprep.subr.bf16.mxu0 0
    %541 = vmatpush1.bf16.msra.mxu0 0
    %542 = vmatprep.subr.bf16.mxu0 0
    %543 = vmatpush1.bf16.msra.mxu0 0
    %544 = vmatprep.subr.bf16.mxu0 0
    %545 = vmatpush1.bf16.msra.mxu0 0
    %546 = vmatprep.subr.bf16.mxu0 0
    %547 = vmatpush1.bf16.msra.mxu0 0
    %548 = vmatprep.subr.bf16.mxu0 0
    %549 = vmatpush1.bf16.msra.mxu0 0
    %550 = vmatprep.subr.bf16.mxu0 0
    %551 = vmatpush1.bf16.msra.mxu0 0
    %552 = vmatprep.subr.bf16.mxu0 0
    %553 = vmatpush1.bf16.msra.mxu0 0
    %554 = vmatprep.subr.bf16.mxu0 0
    %555 = vmatpush1.bf16.msra.mxu0 0
    %556 = vmatprep.subr.bf16.mxu0 0
    %557 = vmatpush1.bf16.msra.mxu0 0
    %558 = vmatprep.subr.bf16.mxu0 0
    %559 = vmatpush1.bf16.msra.mxu0 0
    %560 = vmatprep.subr.bf16.mxu0 0
    %561 = vmatpush1.bf16.msra.mxu0 0
    %562 = vmatprep.mubr.bf16.mxu0 0
    %563 = vmatmul.mubr.bf16.gmra.mrb[0].mxu0 %v428
    %v564 = vpop.f32.mrb[0].mxu0
    %v565 = vadd.f32 %v253, %v564
    %v566 = vpop.f32.mrb[0].mxu0
    %v567 = vpop.f32.mrb[0].mxu0
    %v568 = vadd.f32 %v253, %v567
    %v569 = vpop.f32.mrb[0].mxu0
    %570 = vmatprep.mubr.bf16.mxu0 0
    %571 = vmatmul.mubr.bf16.gmra.mrb[0].mxu0 %v431
    %v572 = vpop.f32.mrb[0].mxu0
    %v573 = vadd.f32 %v253, %v572
    %v574 = vpop.f32.mrb[0].mxu0
    %v575 = vpop.f32.mrb[0].mxu0
    %v576 = vadd.f32 %v253, %v575
    %v577 = vpop.f32.mrb[0].mxu0
    %578 = vmatprep.mubr.bf16.mxu0 0
    %579 = vmatmul.mubr.bf16.gmra.mrb[0].mxu0 %v434
    %v580 = vpop.f32.mrb[0].mxu0
    %v581 = vadd.f32 %v253, %v580
    %v582 = vpop.f32.mrb[0].mxu0
    %v583 = vpop.f32.mrb[0].mxu0
    %v584 = vadd.f32 %v253, %v583
    %v585 = vpop.f32.mrb[0].mxu0
    %586 = vmatprep.mubr.bf16.mxu0 0
    %587 = vmatmul.mubr.bf16.gmra.mrb[0].mxu0 %v437
    %v588 = vpop.f32.mrb[0].mxu0
    %v589 = vadd.f32 %v253, %v588
    %v590 = vpop.f32.mrb[0].mxu0
    %v591 = vpop.f32.mrb[0].mxu0
    %v592 = vadd.f32 %v253, %v591
    %v593 = vpop.f32.mrb[0].mxu0
    %594 = vmatprep.mubr.bf16.mxu0 0
    %595 = vmatmul.mubr.bf16.gmra.mrb[0].mxu0 %v440
    %v596 = vpop.f32.mrb[0].mxu0
    %v597 = vadd.f32 %v253, %v596
    %v598 = vpop.f32.mrb[0].mxu0
    %v599 = vpop.f32.mrb[0].mxu0
    %v600 = vadd.f32 %v253, %v599
    %v601 = vpop.f32.mrb[0].mxu0
    %602 = vmatprep.mubr.bf16.mxu0 0
    %603 = vmatmul.mubr.bf16.gmra.mrb[0].mxu0 %v443
    %v604 = vpop.f32.mrb[0].mxu0
    %v605 = vadd.f32 %v253, %v604
    %v606 = vpop.f32.mrb[0].mxu0
    %v607 = vpop.f32.mrb[0].mxu0
    %v608 = vadd.f32 %v253, %v607
    %v609 = vpop.f32.mrb[0].mxu0
    %610 = vmatprep.mubr.bf16.mxu0 0
    %611 = vmatmul.mubr.bf16.gmra.mrb[0].mxu0 %v446
    %v612 = vpop.f32.mrb[0].mxu0
    %v613 = vadd.f32 %v253, %v612
    %v614 = vpop.f32.mrb[0].mxu0
    %v615 = vpop.f32.mrb[0].mxu0
    %v616 = vadd.f32 %v253, %v615
    %v617 = vpop.f32.mrb[0].mxu0
    %618 = vmatprep.mubr.bf16.mxu0 0
    %619 = vmatmul.mubr.bf16.gmra.mrb[0].mxu0 %v449
    %v620 = vpop.f32.mrb[0].mxu0
    %v621 = vadd.f32 %v253, %v620
    %v622 = vpop.f32.mrb[0].mxu0
    %v623 = vpop.f32.mrb[0].mxu0
    %v624 = vadd.f32 %v253, %v623
    %v625 = vpop.f32.mrb[0].mxu0
    %626 = vmatprep.mubr.bf16.mxu0 0
    %627 = vmatmul.mubr.bf16.gmra.mrb[0].mxu0 %v452
    %v628 = vpop.f32.mrb[0].mxu0
    %v629 = vadd.f32 %v253, %v628
    %v630 = vpop.f32.mrb[0].mxu0
    %v631 = vpop.f32.mrb[0].mxu0
    %v632 = vadd.f32 %v253, %v631
    %v633 = vpop.f32.mrb[0].mxu0
    %634 = vmatprep.mubr.bf16.mxu0 0
    %635 = vmatmul.mubr.bf16.gmra.mrb[0].mxu0 %v455
    %v636 = vpop.f32.mrb[0].mxu0
    %v637 = vadd.f32 %v253, %v636
    %v638 = vpop.f32.mrb[0].mxu0
    %v639 = vpop.f32.mrb[0].mxu0
    %v640 = vadd.f32 %v253, %v639
    %v641 = vpop.f32.mrb[0].mxu0
    %642 = vmatprep.mubr.bf16.mxu0 0
    %643 = vmatmul.mubr.bf16.gmra.mrb[0].mxu0 %v458
    %v644 = vpop.f32.mrb[0].mxu0
    %v645 = vadd.f32 %v253, %v644
    %v646 = vpop.f32.mrb[0].mxu0
    %v647 = vpop.f32.mrb[0].mxu0
    %v648 = vadd.f32 %v253, %v647
    %v649 = vpop.f32.mrb[0].mxu0
    %650 = vmatprep.mubr.bf16.mxu0 0
    %651 = vmatmul.mubr.bf16.gmra.mrb[0].mxu0 %v461
    %v652 = vpop.f32.mrb[0].mxu0
    %v653 = vadd.f32 %v253, %v652
    %v654 = vpop.f32.mrb[0].mxu0
    %v655 = vpop.f32.mrb[0].mxu0
    %v656 = vadd.f32 %v253, %v655
    %v657 = vpop.f32.mrb[0].mxu0
    %658 = vmatprep.mubr.bf16.mxu0 0
    %659 = vmatmul.mubr.bf16.gmra.mrb[0].mxu0 %v464
    %v660 = vpop.f32.mrb[0].mxu0
    %v661 = vadd.f32 %v253, %v660
    %v662 = vpop.f32.mrb[0].mxu0
    %v663 = vpop.f32.mrb[0].mxu0
    %v664 = vadd.f32 %v253, %v663
    %v665 = vpop.f32.mrb[0].mxu0
    %666 = vmatprep.mubr.bf16.mxu0 0
    %667 = vmatmul.mubr.bf16.gmra.mrb[0].mxu0 %v467
    %v668 = vpop.f32.mrb[0].mxu0
    %v669 = vadd.f32 %v253, %v668
    %v670 = vpop.f32.mrb[0].mxu0
    %v671 = vpop.f32.mrb[0].mxu0
    %v672 = vadd.f32 %v253, %v671
    %v673 = vpop.f32.mrb[0].mxu0
    %674 = vmatprep.mubr.bf16.mxu0 0
    %675 = vmatmul.mubr.bf16.gmra.mrb[0].mxu0 %v470
    %v676 = vpop.f32.mrb[0].mxu0
    %v677 = vadd.f32 %v253, %v676
    %v678 = vpop.f32.mrb[0].mxu0
    %v679 = vpop.f32.mrb[0].mxu0
    %v680 = vadd.f32 %v253, %v679
    %v681 = vpop.f32.mrb[0].mxu0
    %682 = vmatprep.mubr.bf16.mxu0 0
    %683 = vmatmul.mubr.bf16.gmra.mrb[0].mxu0 %v473
    %v684 = vpop.f32.mrb[0].mxu0
    %v685 = vadd.f32 %v253, %v684
    %v686 = vpop.f32.mrb[0].mxu0
    %v687 = vpop.f32.mrb[0].mxu0
    %v688 = vadd.f32 %v253, %v687
    %v689 = vpop.f32.mrb[0].mxu0
    %690 = vmatprep.mubr.bf16.mxu0 0
    %691 = vmatmul.mubr.bf16.gmra.mrb[0].mxu0 %v476
    %v692 = vpop.f32.mrb[0].mxu0
    %v693 = vadd.f32 %v253, %v692
    %v694 = vpop.f32.mrb[0].mxu0
    %v695 = vpop.f32.mrb[0].mxu0
    %v696 = vadd.f32 %v253, %v695
    %v697 = vpop.f32.mrb[0].mxu0
    %698 = vmatprep.mubr.bf16.mxu0 0
    %699 = vmatmul.mubr.bf16.gmra.mrb[0].mxu0 %v479
    %v700 = vpop.f32.mrb[0].mxu0
    %v701 = vadd.f32 %v253, %v700
    %v702 = vpop.f32.mrb[0].mxu0
    %v703 = vpop.f32.mrb[0].mxu0
    %v704 = vadd.f32 %v253, %v703
    %v705 = vpop.f32.mrb[0].mxu0
    %706 = vmatprep.mubr.bf16.mxu0 0
    %707 = vmatmul.mubr.bf16.gmra.mrb[0].mxu0 %v482
    %v708 = vpop.f32.mrb[0].mxu0
    %v709 = vadd.f32 %v253, %v708
    %v710 = vpop.f32.mrb[0].mxu0
    %v711 = vpop.f32.mrb[0].mxu0
    %v712 = vadd.f32 %v253, %v711
    %v713 = vpop.f32.mrb[0].mxu0
    %714 = vmatprep.mubr.bf16.mxu0 0
    %715 = vmatmul.mubr.bf16.gmra.mrb[0].mxu0 %v485
    %v716 = vpop.f32.mrb[0].mxu0
    %v717 = vadd.f32 %v253, %v716
    %v718 = vpop.f32.mrb[0].mxu0
    %v719 = vpop.f32.mrb[0].mxu0
    %v720 = vadd.f32 %v253, %v719
    %v721 = vpop.f32.mrb[0].mxu0
    %722 = vmatprep.mubr.bf16.mxu0 0
    %723 = vmatmul.mubr.bf16.gmra.mrb[0].mxu0 %v488
    %v724 = vpop.f32.mrb[0].mxu0
    %v725 = vadd.f32 %v253, %v724
    %v726 = vpop.f32.mrb[0].mxu0
    %v727 = vpop.f32.mrb[0].mxu0
    %v728 = vadd.f32 %v253, %v727
    %v729 = vpop.f32.mrb[0].mxu0
    %730 = vmatprep.mubr.bf16.mxu0 0
    %731 = vmatmul.mubr.bf16.gmra.mrb[0].mxu0 %v491
    %v732 = vpop.f32.mrb[0].mxu0
    %v733 = vadd.f32 %v253, %v732
    %v734 = vpop.f32.mrb[0].mxu0
    %v735 = vpop.f32.mrb[0].mxu0
    %v736 = vadd.f32 %v253, %v735
    %v737 = vpop.f32.mrb[0].mxu0
    %738 = vmatprep.mubr.bf16.mxu0 0
    %739 = vmatmul.mubr.bf16.gmra.mrb[0].mxu0 %v494
    %v740 = vpop.f32.mrb[0].mxu0
    %v741 = vadd.f32 %v253, %v740
    %v742 = vpop.f32.mrb[0].mxu0
    %v743 = vpop.f32.mrb[0].mxu0
    %v744 = vadd.f32 %v253, %v743
    %v745 = vpop.f32.mrb[0].mxu0
    %746 = vmatprep.mubr.bf16.mxu0 0
    %747 = vmatmul.mubr.bf16.gmra.mrb[0].mxu0 %v497
    %v748 = vpop.f32.mrb[0].mxu0
    %v749 = vadd.f32 %v253, %v748
    %v750 = vpop.f32.mrb[0].mxu0
    %v751 = vpop.f32.mrb[0].mxu0
    %v752 = vadd.f32 %v253, %v751
    %v753 = vpop.f32.mrb[0].mxu0
    %754 = vmatprep.mubr.bf16.mxu0 0
    %755 = vmatmul.mubr.bf16.gmra.mrb[0].mxu0 %v500
    %v756 = vpop.f32.mrb[0].mxu0
    %v757 = vadd.f32 %v253, %v756
    %v758 = vpop.f32.mrb[0].mxu0
    %v759 = vpop.f32.mrb[0].mxu0
    %v760 = vadd.f32 %v253, %v759
    %v761 = vpop.f32.mrb[0].mxu0
    %762 = vmatprep.mubr.bf16.mxu0 0
    %763 = vmatmul.mubr.bf16.gmra.mrb[0].mxu0 %v503
    %v764 = vpop.f32.mrb[0].mxu0
    %v765 = vadd.f32 %v253, %v764
    %v766 = vpop.f32.mrb[0].mxu0
    %v767 = vpop.f32.mrb[0].mxu0
    %v768 = vadd.f32 %v253, %v767
    %v769 = vpop.f32.mrb[0].mxu0
    %770 = vmatprep.mubr.bf16.mxu0 0
    %771 = vmatmul.mubr.bf16.gmra.mrb[0].mxu0 %v506
    %v772 = vpop.f32.mrb[0].mxu0
    %v773 = vadd.f32 %v253, %v772
    %v774 = vpop.f32.mrb[0].mxu0
    %v775 = vpop.f32.mrb[0].mxu0
    %v776 = vadd.f32 %v253, %v775
    %v777 = vpop.f32.mrb[0].mxu0
    %778 = vmatprep.mubr.bf16.mxu0 0
    %779 = vmatmul.mubr.bf16.gmra.mrb[0].mxu0 %v509
    %v780 = vpop.f32.mrb[0].mxu0
    %v781 = vadd.f32 %v253, %v780
    %v782 = vpop.f32.mrb[0].mxu0
    %v783 = vpop.f32.mrb[0].mxu0
    %v784 = vadd.f32 %v253, %v783
    %v785 = vpop.f32.mrb[0].mxu0
    %786 = vmatprep.mubr.bf16.mxu0 0
    %787 = vmatmul.mubr.bf16.gmra.mrb[0].mxu0 %v512
    %v788 = vpop.f32.mrb[0].mxu0
    %v789 = vadd.f32 %v253, %v788
    %v790 = vpop.f32.mrb[0].mxu0
    %v791 = vpop.f32.mrb[0].mxu0
    %v792 = vadd.f32 %v253, %v791
    %v793 = vpop.f32.mrb[0].mxu0
    %794 = vmatprep.mubr.bf16.mxu0 0
    %795 = vmatmul.mubr.bf16.gmra.mrb[0].mxu0 %v515
    %v796 = vpop.f32.mrb[0].mxu0
    %v797 = vadd.f32 %v253, %v796
    %v798 = vpop.f32.mrb[0].mxu0
    %v799 = vpop.f32.mrb[0].mxu0
    %v800 = vadd.f32 %v253, %v799
    %v801 = vpop.f32.mrb[0].mxu0
    %802 = vmatprep.mubr.bf16.mxu0 0
    %803 = vmatmul.mubr.bf16.gmra.mrb[0].mxu0 %v518
    %v804 = vpop.f32.mrb[0].mxu0
    %v805 = vadd.f32 %v253, %v804
    %v806 = vpop.f32.mrb[0].mxu0
    %v807 = vpop.f32.mrb[0].mxu0
    %v808 = vadd.f32 %v253, %v807
    %v809 = vpop.f32.mrb[0].mxu0
    %810 = vmatprep.mubr.bf16.mxu0 0
    %811 = vmatmul.mubr.bf16.gmra.mrb[0].mxu0 %v521
    %v812 = vpop.f32.mrb[0].mxu0
    %v813 = vadd.f32 %v253, %v812
    %v814 = vpop.f32.mrb[0].mxu0
    %v815 = vpop.f32.mrb[0].mxu0
    %v816 = vadd.f32 %v253, %v815
    %v817 = vpop.f32.mrb[0].mxu0
    %818 = vdwg.mxu0
    %v819 = vmax.f32 %v565, 0.0
    %v820 = vmax.f32 %v568, 0.0
    %v821 = vmax.f32 %v573, 0.0
    %v822 = vmax.f32 %v576, 0.0
    %v823 = vmax.f32 %v581, 0.0
    %v824 = vmax.f32 %v584, 0.0
    %v825 = vmax.f32 %v589, 0.0
    %v826 = vmax.f32 %v592, 0.0
    %v827 = vmax.f32 %v597, 0.0
    %v828 = vmax.f32 %v600, 0.0
    %v829 = vmax.f32 %v605, 0.0
    %v830 = vmax.f32 %v608, 0.0
    %v831 = vmax.f32 %v613, 0.0
    %v832 = vmax.f32 %v616, 0.0
    %v833 = vmax.f32 %v621, 0.0
    %v834 = vmax.f32 %v624, 0.0
    %v835 = vmax.f32 %v629, 0.0
    %v836 = vmax.f32 %v632, 0.0
    %v837 = vmax.f32 %v637, 0.0
    %v838 = vmax.f32 %v640, 0.0
    %v839 = vmax.f32 %v645, 0.0
    %v840 = vmax.f32 %v648, 0.0
    %v841 = vmax.f32 %v653, 0.0
    %v842 = vmax.f32 %v656, 0.0
    %v843 = vmax.f32 %v661, 0.0
    %v844 = vmax.f32 %v664, 0.0
    %v845 = vmax.f32 %v669, 0.0
    %v846 = vmax.f32 %v672, 0.0
    %v847 = vmax.f32 %v677, 0.0
    %v848 = vmax.f32 %v680, 0.0
    %v849 = vmax.f32 %v685, 0.0
    %v850 = vmax.f32 %v688, 0.0
    %v851 = vmax.f32 %v693, 0.0
    %v852 = vmax.f32 %v696, 0.0
    %v853 = vmax.f32 %v701, 0.0
    %v854 = vmax.f32 %v704, 0.0
    %v855 = vmax.f32 %v709, 0.0
    %v856 = vmax.f32 %v712, 0.0
    %v857 = vmax.f32 %v717, 0.0
    %v858 = vmax.f32 %v720, 0.0
    %v859 = vmax.f32 %v725, 0.0
    %v860 = vmax.f32 %v728, 0.0
    %v861 = vmax.f32 %v733, 0.0
    %v862 = vmax.f32 %v736, 0.0
    %v863 = vmax.f32 %v741, 0.0
    %v864 = vmax.f32 %v744, 0.0
    %v865 = vmax.f32 %v749, 0.0
    %v866 = vmax.f32 %v752, 0.0
    %v867 = vmax.f32 %v757, 0.0
    %v868 = vmax.f32 %v760, 0.0
    %v869 = vmax.f32 %v765, 0.0
    %v870 = vmax.f32 %v768, 0.0
    %v871 = vmax.f32 %v773, 0.0
    %v872 = vmax.f32 %v776, 0.0
    %v873 = vmax.f32 %v781, 0.0
    %v874 = vmax.f32 %v784, 0.0
    %v875 = vmax.f32 %v789, 0.0
    %v876 = vmax.f32 %v792, 0.0
    %v877 = vmax.f32 %v797, 0.0
    %v878 = vmax.f32 %v800, 0.0
    %v879 = vmax.f32 %v805, 0.0
    %v880 = vmax.f32 %v808, 0.0
    %v881 = vmax.f32 %v813, 0.0
    %v882 = vmax.f32 %v816, 0.0
    %v883 = vpack.c.bf16 %v820, %v819
    %v884 = vpack.c.bf16 %v822, %v821
    %v885 = vpack.c.bf16 %v824, %v823
    %v886 = vpack.c.bf16 %v826, %v825
    %v887 = vpack.c.bf16 %v828, %v827
    %v888 = vpack.c.bf16 %v830, %v829
    %v889 = vpack.c.bf16 %v832, %v831
    %v890 = vpack.c.bf16 %v834, %v833
    %v891 = vpack.c.bf16 %v836, %v835
    %v892 = vpack.c.bf16 %v838, %v837
    %v893 = vpack.c.bf16 %v840, %v839
    %v894 = vpack.c.bf16 %v842, %v841
    %v895 = vpack.c.bf16 %v844, %v843
    %v896 = vpack.c.bf16 %v846, %v845
    %v897 = vpack.c.bf16 %v848, %v847
    %v898 = vpack.c.bf16 %v850, %v849
    %v899 = vpack.c.bf16 %v852, %v851
    %v900 = vpack.c.bf16 %v854, %v853
    %v901 = vpack.c.bf16 %v856, %v855
    %v902 = vpack.c.bf16 %v858, %v857
    %v903 = vpack.c.bf16 %v860, %v859
    %v904 = vpack.c.bf16 %v862, %v861
    %v905 = vpack.c.bf16 %v864, %v863
    %v906 = vpack.c.bf16 %v866, %v865
    %v907 = vpack.c.bf16 %v868, %v867
    %v908 = vpack.c.bf16 %v870, %v869
    %v909 = vpack.c.bf16 %v872, %v871
    %v910 = vpack.c.bf16 %v874, %v873
    %v911 = vpack.c.bf16 %v876, %v875
    %v912 = vpack.c.bf16 %v878, %v877
    %v913 = vpack.c.bf16 %v880, %v879
    %v914 = vpack.c.bf16 %v882, %v881
    %v947 = vcombine.high %v883, %v883
    %v949 = vunpack.c.l.s4 1966171168
    %v950 = vunpack.c.0.s8 %v949
    %v951 = vlaneseq
    %v952 = vshrl.u32 %v951, 7
    %v953 = vsub.s32 %v950, %v952
    %v954 = vrot.slane %v883, %v953
    %v956 = vunpack.c.l.s4 1966171168
    %v957 = vunpack.c.0.s8 %v956
    %v958 = vlaneseq
    %v959 = vshrl.u32 %v958, 7
    %v960 = vsub.s32 %v957, %v959
    %v961 = vrot.slane %v947, %v960
    %v962 = vcombine.high %v954, %v954
    %v963 = vcombine.high %v961, %v961
    %v965 = vunpack.c.l.s4 1966171168
    %v966 = vunpack.c.0.s8 %v965
    %v967 = vlaneseq
    %v968 = vshrl.u32 %v967, 7
    %v969 = vsub.s32 %v966, %v968
    %v970 = vrot.slane %v954, %v969
    %v972 = vunpack.c.l.s4 1966171168
    %v973 = vunpack.c.0.s8 %v972
    %v974 = vlaneseq
    %v975 = vshrl.u32 %v974, 7
    %v976 = vsub.s32 %v973, %v975
    %v977 = vrot.slane %v961, %v976
    %v979 = vunpack.c.l.s4 1966171168
    %v980 = vunpack.c.0.s8 %v979
    %v981 = vlaneseq
    %v982 = vshrl.u32 %v981, 7
    %v983 = vsub.s32 %v980, %v982
    %v984 = vrot.slane %v962, %v983
    %v986 = vunpack.c.l.s4 1966171168
    %v987 = vunpack.c.0.s8 %v986
    %v988 = vlaneseq
    %v989 = vshrl.u32 %v988, 7
    %v990 = vsub.s32 %v987, %v989
    %v991 = vrot.slane %v963, %v990
    %v992 = vcombine.high %v970, %v970
    %v993 = vcombine.high %v977, %v977
    %v994 = vcombine.high %v984, %v984
    %v995 = vcombine.high %v991, %v991
    %v996 = vcombine.high %v884, %v884
    %v998 = vunpack.c.l.s4 1966171168
    %v999 = vunpack.c.0.s8 %v998
    %v1000 = vlaneseq
    %v1001 = vshrl.u32 %v1000, 7
    %v1002 = vsub.s32 %v999, %v1001
    %v1003 = vrot.slane %v884, %v1002
    %v1005 = vunpack.c.l.s4 1966171168
    %v1006 = vunpack.c.0.s8 %v1005
    %v1007 = vlaneseq
    %v1008 = vshrl.u32 %v1007, 7
    %v1009 = vsub.s32 %v1006, %v1008
    %v1010 = vrot.slane %v996, %v1009
    %v1011 = vcombine.high %v1003, %v1003
    %v1012 = vcombine.high %v1010, %v1010
    %v1014 = vunpack.c.l.s4 1966171168
    %v1015 = vunpack.c.0.s8 %v1014
    %v1016 = vlaneseq
    %v1017 = vshrl.u32 %v1016, 7
    %v1018 = vsub.s32 %v1015, %v1017
    %v1019 = vrot.slane %v1003, %v1018
    %v1021 = vunpack.c.l.s4 1966171168
    %v1022 = vunpack.c.0.s8 %v1021
    %v1023 = vlaneseq
    %v1024 = vshrl.u32 %v1023, 7
    %v1025 = vsub.s32 %v1022, %v1024
    %v1026 = vrot.slane %v1010, %v1025
    %v1028 = vunpack.c.l.s4 1966171168
    %v1029 = vunpack.c.0.s8 %v1028
    %v1030 = vlaneseq
    %v1031 = vshrl.u32 %v1030, 7
    %v1032 = vsub.s32 %v1029, %v1031
    %v1033 = vrot.slane %v1011, %v1032
    %v1035 = vunpack.c.l.s4 1966171168
    %v1036 = vunpack.c.0.s8 %v1035
    %v1037 = vlaneseq
    %v1038 = vshrl.u32 %v1037, 7
    %v1039 = vsub.s32 %v1036, %v1038
    %v1040 = vrot.slane %v1012, %v1039
    %v1041 = vcombine.high %v1019, %v1019
    %v1042 = vcombine.high %v1026, %v1026
    %v1043 = vcombine.high %v1033, %v1033
    %v1044 = vcombine.high %v1040, %v1040
    %v1045 = vcombine.high %v885, %v885
    %v1047 = vunpack.c.l.s4 1966171168
    %v1048 = vunpack.c.0.s8 %v1047
    %v1049 = vlaneseq
    %v1050 = vshrl.u32 %v1049, 7
    %v1051 = vsub.s32 %v1048, %v1050
    %v1052 = vrot.slane %v885, %v1051
    %v1054 = vunpack.c.l.s4 1966171168
    %v1055 = vunpack.c.0.s8 %v1054
    %v1056 = vlaneseq
    %v1057 = vshrl.u32 %v1056, 7
    %v1058 = vsub.s32 %v1055, %v1057
    %v1059 = vrot.slane %v1045, %v1058
    %v1060 = vcombine.high %v1052, %v1052
    %v1061 = vcombine.high %v1059, %v1059
    %v1063 = vunpack.c.l.s4 1966171168
    %v1064 = vunpack.c.0.s8 %v1063
    %v1065 = vlaneseq
    %v1066 = vshrl.u32 %v1065, 7
    %v1067 = vsub.s32 %v1064, %v1066
    %v1068 = vrot.slane %v1052, %v1067
    %v1070 = vunpack.c.l.s4 1966171168
    %v1071 = vunpack.c.0.s8 %v1070
    %v1072 = vlaneseq
    %v1073 = vshrl.u32 %v1072, 7
    %v1074 = vsub.s32 %v1071, %v1073
    %v1075 = vrot.slane %v1059, %v1074
    %v1077 = vunpack.c.l.s4 1966171168
    %v1078 = vunpack.c.0.s8 %v1077
    %v1079 = vlaneseq
    %v1080 = vshrl.u32 %v1079, 7
    %v1081 = vsub.s32 %v1078, %v1080
    %v1082 = vrot.slane %v1060, %v1081
    %v1084 = vunpack.c.l.s4 1966171168
    %v1085 = vunpack.c.0.s8 %v1084
    %v1086 = vlaneseq
    %v1087 = vshrl.u32 %v1086, 7
    %v1088 = vsub.s32 %v1085, %v1087
    %v1089 = vrot.slane %v1061, %v1088
    %v1090 = vcombine.high %v1068, %v1068
    %v1091 = vcombine.high %v1075, %v1075
    %v1092 = vcombine.high %v1082, %v1082
    %v1093 = vcombine.high %v1089, %v1089
    %v1094 = vcombine.high %v886, %v886
    %v1096 = vunpack.c.l.s4 1966171168
    %v1097 = vunpack.c.0.s8 %v1096
    %v1098 = vlaneseq
    %v1099 = vshrl.u32 %v1098, 7
    %v1100 = vsub.s32 %v1097, %v1099
    %v1101 = vrot.slane %v886, %v1100
    %v1103 = vunpack.c.l.s4 1966171168
    %v1104 = vunpack.c.0.s8 %v1103
    %v1105 = vlaneseq
    %v1106 = vshrl.u32 %v1105, 7
    %v1107 = vsub.s32 %v1104, %v1106
    %v1108 = vrot.slane %v1094, %v1107
    %v1109 = vcombine.high %v1101, %v1101
    %v1110 = vcombine.high %v1108, %v1108
    %v1112 = vunpack.c.l.s4 1966171168
    %v1113 = vunpack.c.0.s8 %v1112
    %v1114 = vlaneseq
    %v1115 = vshrl.u32 %v1114, 7
    %v1116 = vsub.s32 %v1113, %v1115
    %v1117 = vrot.slane %v1101, %v1116
    %v1119 = vunpack.c.l.s4 1966171168
    %v1120 = vunpack.c.0.s8 %v1119
    %v1121 = vlaneseq
    %v1122 = vshrl.u32 %v1121, 7
    %v1123 = vsub.s32 %v1120, %v1122
    %v1124 = vrot.slane %v1108, %v1123
    %v1126 = vunpack.c.l.s4 1966171168
    %v1127 = vunpack.c.0.s8 %v1126
    %v1128 = vlaneseq
    %v1129 = vshrl.u32 %v1128, 7
    %v1130 = vsub.s32 %v1127, %v1129
    %v1131 = vrot.slane %v1109, %v1130
    %v1133 = vunpack.c.l.s4 1966171168
    %v1134 = vunpack.c.0.s8 %v1133
    %v1135 = vlaneseq
    %v1136 = vshrl.u32 %v1135, 7
    %v1137 = vsub.s32 %v1134, %v1136
    %v1138 = vrot.slane %v1110, %v1137
    %v1139 = vcombine.high %v1117, %v1117
    %v1140 = vcombine.high %v1124, %v1124
    %v1141 = vcombine.high %v1131, %v1131
    %v1142 = vcombine.high %v1138, %v1138
    %v1143 = vcombine.high %v887, %v887
    %v1145 = vunpack.c.l.s4 1966171168
    %v1146 = vunpack.c.0.s8 %v1145
    %v1147 = vlaneseq
    %v1148 = vshrl.u32 %v1147, 7
    %v1149 = vsub.s32 %v1146, %v1148
    %v1150 = vrot.slane %v887, %v1149
    %v1152 = vunpack.c.l.s4 1966171168
    %v1153 = vunpack.c.0.s8 %v1152
    %v1154 = vlaneseq
    %v1155 = vshrl.u32 %v1154, 7
    %v1156 = vsub.s32 %v1153, %v1155
    %v1157 = vrot.slane %v1143, %v1156
    %v1158 = vcombine.high %v1150, %v1150
    %v1159 = vcombine.high %v1157, %v1157
    %v1161 = vunpack.c.l.s4 1966171168
    %v1162 = vunpack.c.0.s8 %v1161
    %v1163 = vlaneseq
    %v1164 = vshrl.u32 %v1163, 7
    %v1165 = vsub.s32 %v1162, %v1164
    %v1166 = vrot.slane %v1150, %v1165
    %v1168 = vunpack.c.l.s4 1966171168
    %v1169 = vunpack.c.0.s8 %v1168
    %v1170 = vlaneseq
    %v1171 = vshrl.u32 %v1170, 7
    %v1172 = vsub.s32 %v1169, %v1171
    %v1173 = vrot.slane %v1157, %v1172
    %v1175 = vunpack.c.l.s4 1966171168
    %v1176 = vunpack.c.0.s8 %v1175
    %v1177 = vlaneseq
    %v1178 = vshrl.u32 %v1177, 7
    %v1179 = vsub.s32 %v1176, %v1178
    %v1180 = vrot.slane %v1158, %v1179
    %v1182 = vunpack.c.l.s4 1966171168
    %v1183 = vunpack.c.0.s8 %v1182
    %v1184 = vlaneseq
    %v1185 = vshrl.u32 %v1184, 7
    %v1186 = vsub.s32 %v1183, %v1185
    %v1187 = vrot.slane %v1159, %v1186
    %v1188 = vcombine.high %v1166, %v1166
    %v1189 = vcombine.high %v1173, %v1173
    %v1190 = vcombine.high %v1180, %v1180
    %v1191 = vcombine.high %v1187, %v1187
    %v1192 = vcombine.high %v888, %v888
    %v1194 = vunpack.c.l.s4 1966171168
    %v1195 = vunpack.c.0.s8 %v1194
    %v1196 = vlaneseq
    %v1197 = vshrl.u32 %v1196, 7
    %v1198 = vsub.s32 %v1195, %v1197
    %v1199 = vrot.slane %v888, %v1198
    %v1201 = vunpack.c.l.s4 1966171168
    %v1202 = vunpack.c.0.s8 %v1201
    %v1203 = vlaneseq
    %v1204 = vshrl.u32 %v1203, 7
    %v1205 = vsub.s32 %v1202, %v1204
    %v1206 = vrot.slane %v1192, %v1205
    %v1207 = vcombine.high %v1199, %v1199
    %v1208 = vcombine.high %v1206, %v1206
    %v1210 = vunpack.c.l.s4 1966171168
    %v1211 = vunpack.c.0.s8 %v1210
    %v1212 = vlaneseq
    %v1213 = vshrl.u32 %v1212, 7
    %v1214 = vsub.s32 %v1211, %v1213
    %v1215 = vrot.slane %v1199, %v1214
    %v1217 = vunpack.c.l.s4 1966171168
    %v1218 = vunpack.c.0.s8 %v1217
    %v1219 = vlaneseq
    %v1220 = vshrl.u32 %v1219, 7
    %v1221 = vsub.s32 %v1218, %v1220
    %v1222 = vrot.slane %v1206, %v1221
    %v1224 = vunpack.c.l.s4 1966171168
    %v1225 = vunpack.c.0.s8 %v1224
    %v1226 = vlaneseq
    %v1227 = vshrl.u32 %v1226, 7
    %v1228 = vsub.s32 %v1225, %v1227
    %v1229 = vrot.slane %v1207, %v1228
    %v1231 = vunpack.c.l.s4 1966171168
    %v1232 = vunpack.c.0.s8 %v1231
    %v1233 = vlaneseq
    %v1234 = vshrl.u32 %v1233, 7
    %v1235 = vsub.s32 %v1232, %v1234
    %v1236 = vrot.slane %v1208, %v1235
    %v1237 = vcombine.high %v1215, %v1215
    %v1238 = vcombine.high %v1222, %v1222
    %v1239 = vcombine.high %v1229, %v1229
    %v1240 = vcombine.high %v1236, %v1236
    %v1241 = vcombine.high %v889, %v889
    %v1243 = vunpack.c.l.s4 1966171168
    %v1244 = vunpack.c.0.s8 %v1243
    %v1245 = vlaneseq
    %v1246 = vshrl.u32 %v1245, 7
    %v1247 = vsub.s32 %v1244, %v1246
    %v1248 = vrot.slane %v889, %v1247
    %v1250 = vunpack.c.l.s4 1966171168
    %v1251 = vunpack.c.0.s8 %v1250
    %v1252 = vlaneseq
    %v1253 = vshrl.u32 %v1252, 7
    %v1254 = vsub.s32 %v1251, %v1253
    %v1255 = vrot.slane %v1241, %v1254
    %v1256 = vcombine.high %v1248, %v1248
    %v1257 = vcombine.high %v1255, %v1255
    %v1259 = vunpack.c.l.s4 1966171168
    %v1260 = vunpack.c.0.s8 %v1259
    %v1261 = vlaneseq
    %v1262 = vshrl.u32 %v1261, 7
    %v1263 = vsub.s32 %v1260, %v1262
    %v1264 = vrot.slane %v1248, %v1263
    %v1266 = vunpack.c.l.s4 1966171168
    %v1267 = vunpack.c.0.s8 %v1266
    %v1268 = vlaneseq
    %v1269 = vshrl.u32 %v1268, 7
    %v1270 = vsub.s32 %v1267, %v1269
    %v1271 = vrot.slane %v1255, %v1270
    %v1273 = vunpack.c.l.s4 1966171168
    %v1274 = vunpack.c.0.s8 %v1273
    %v1275 = vlaneseq
    %v1276 = vshrl.u32 %v1275, 7
    %v1277 = vsub.s32 %v1274, %v1276
    %v1278 = vrot.slane %v1256, %v1277
    %v1280 = vunpack.c.l.s4 1966171168
    %v1281 = vunpack.c.0.s8 %v1280
    %v1282 = vlaneseq
    %v1283 = vshrl.u32 %v1282, 7
    %v1284 = vsub.s32 %v1281, %v1283
    %v1285 = vrot.slane %v1257, %v1284
    %v1286 = vcombine.high %v1264, %v1264
    %v1287 = vcombine.high %v1271, %v1271
    %v1288 = vcombine.high %v1278, %v1278
    %v1289 = vcombine.high %v1285, %v1285
    %v1290 = vcombine.high %v890, %v890
    %v1292 = vunpack.c.l.s4 1966171168
    %v1293 = vunpack.c.0.s8 %v1292
    %v1294 = vlaneseq
    %v1295 = vshrl.u32 %v1294, 7
    %v1296 = vsub.s32 %v1293, %v1295
    %v1297 = vrot.slane %v890, %v1296
    %v1299 = vunpack.c.l.s4 1966171168
    %v1300 = vunpack.c.0.s8 %v1299
    %v1301 = vlaneseq
    %v1302 = vshrl.u32 %v1301, 7
    %v1303 = vsub.s32 %v1300, %v1302
    %v1304 = vrot.slane %v1290, %v1303
    %v1305 = vcombine.high %v1297, %v1297
    %v1306 = vcombine.high %v1304, %v1304
    %v1308 = vunpack.c.l.s4 1966171168
    %v1309 = vunpack.c.0.s8 %v1308
    %v1310 = vlaneseq
    %v1311 = vshrl.u32 %v1310, 7
    %v1312 = vsub.s32 %v1309, %v1311
    %v1313 = vrot.slane %v1297, %v1312
    %v1315 = vunpack.c.l.s4 1966171168
    %v1316 = vunpack.c.0.s8 %v1315
    %v1317 = vlaneseq
    %v1318 = vshrl.u32 %v1317, 7
    %v1319 = vsub.s32 %v1316, %v1318
    %v1320 = vrot.slane %v1304, %v1319
    %v1322 = vunpack.c.l.s4 1966171168
    %v1323 = vunpack.c.0.s8 %v1322
    %v1324 = vlaneseq
    %v1325 = vshrl.u32 %v1324, 7
    %v1326 = vsub.s32 %v1323, %v1325
    %v1327 = vrot.slane %v1305, %v1326
    %v1329 = vunpack.c.l.s4 1966171168
    %v1330 = vunpack.c.0.s8 %v1329
    %v1331 = vlaneseq
    %v1332 = vshrl.u32 %v1331, 7
    %v1333 = vsub.s32 %v1330, %v1332
    %v1334 = vrot.slane %v1306, %v1333
    %v1335 = vcombine.high %v1313, %v1313
    %v1336 = vcombine.high %v1320, %v1320
    %v1337 = vcombine.high %v1327, %v1327
    %v1338 = vcombine.high %v1334, %v1334
    %v1339 = vcombine.high %v891, %v891
    %v1341 = vunpack.c.l.s4 1966171168
    %v1342 = vunpack.c.0.s8 %v1341
    %v1343 = vlaneseq
    %v1344 = vshrl.u32 %v1343, 7
    %v1345 = vsub.s32 %v1342, %v1344
    %v1346 = vrot.slane %v891, %v1345
    %v1348 = vunpack.c.l.s4 1966171168
    %v1349 = vunpack.c.0.s8 %v1348
    %v1350 = vlaneseq
    %v1351 = vshrl.u32 %v1350, 7
    %v1352 = vsub.s32 %v1349, %v1351
    %v1353 = vrot.slane %v1339, %v1352
    %v1354 = vcombine.high %v1346, %v1346
    %v1355 = vcombine.high %v1353, %v1353
    %v1357 = vunpack.c.l.s4 1966171168
    %v1358 = vunpack.c.0.s8 %v1357
    %v1359 = vlaneseq
    %v1360 = vshrl.u32 %v1359, 7
    %v1361 = vsub.s32 %v1358, %v1360
    %v1362 = vrot.slane %v1346, %v1361
    %v1364 = vunpack.c.l.s4 1966171168
    %v1365 = vunpack.c.0.s8 %v1364
    %v1366 = vlaneseq
    %v1367 = vshrl.u32 %v1366, 7
    %v1368 = vsub.s32 %v1365, %v1367
    %v1369 = vrot.slane %v1353, %v1368
    %v1371 = vunpack.c.l.s4 1966171168
    %v1372 = vunpack.c.0.s8 %v1371
    %v1373 = vlaneseq
    %v1374 = vshrl.u32 %v1373, 7
    %v1375 = vsub.s32 %v1372, %v1374
    %v1376 = vrot.slane %v1354, %v1375
    %v1378 = vunpack.c.l.s4 1966171168
    %v1379 = vunpack.c.0.s8 %v1378
    %v1380 = vlaneseq
    %v1381 = vshrl.u32 %v1380, 7
    %v1382 = vsub.s32 %v1379, %v1381
    %v1383 = vrot.slane %v1355, %v1382
    %v1384 = vcombine.high %v1362, %v1362
    %v1385 = vcombine.high %v1369, %v1369
    %v1386 = vcombine.high %v1376, %v1376
    %v1387 = vcombine.high %v1383, %v1383
    %v1388 = vcombine.high %v892, %v892
    %v1390 = vunpack.c.l.s4 1966171168
    %v1391 = vunpack.c.0.s8 %v1390
    %v1392 = vlaneseq
    %v1393 = vshrl.u32 %v1392, 7
    %v1394 = vsub.s32 %v1391, %v1393
    %v1395 = vrot.slane %v892, %v1394
    %v1397 = vunpack.c.l.s4 1966171168
    %v1398 = vunpack.c.0.s8 %v1397
    %v1399 = vlaneseq
    %v1400 = vshrl.u32 %v1399, 7
    %v1401 = vsub.s32 %v1398, %v1400
    %v1402 = vrot.slane %v1388, %v1401
    %v1403 = vcombine.high %v1395, %v1395
    %v1404 = vcombine.high %v1402, %v1402
    %v1406 = vunpack.c.l.s4 1966171168
    %v1407 = vunpack.c.0.s8 %v1406
    %v1408 = vlaneseq
    %v1409 = vshrl.u32 %v1408, 7
    %v1410 = vsub.s32 %v1407, %v1409
    %v1411 = vrot.slane %v1395, %v1410
    %v1413 = vunpack.c.l.s4 1966171168
    %v1414 = vunpack.c.0.s8 %v1413
    %v1415 = vlaneseq
    %v1416 = vshrl.u32 %v1415, 7
    %v1417 = vsub.s32 %v1414, %v1416
    %v1418 = vrot.slane %v1402, %v1417
    %v1420 = vunpack.c.l.s4 1966171168
    %v1421 = vunpack.c.0.s8 %v1420
    %v1422 = vlaneseq
    %v1423 = vshrl.u32 %v1422, 7
    %v1424 = vsub.s32 %v1421, %v1423
    %v1425 = vrot.slane %v1403, %v1424
    %v1427 = vunpack.c.l.s4 1966171168
    %v1428 = vunpack.c.0.s8 %v1427
    %v1429 = vlaneseq
    %v1430 = vshrl.u32 %v1429, 7
    %v1431 = vsub.s32 %v1428, %v1430
    %v1432 = vrot.slane %v1404, %v1431
    %v1433 = vcombine.high %v1411, %v1411
    %v1434 = vcombine.high %v1418, %v1418
    %v1435 = vcombine.high %v1425, %v1425
    %v1436 = vcombine.high %v1432, %v1432
    %v1437 = vcombine.high %v893, %v893
    %v1439 = vunpack.c.l.s4 1966171168
    %v1440 = vunpack.c.0.s8 %v1439
    %v1441 = vlaneseq
    %v1442 = vshrl.u32 %v1441, 7
    %v1443 = vsub.s32 %v1440, %v1442
    %v1444 = vrot.slane %v893, %v1443
    %v1446 = vunpack.c.l.s4 1966171168
    %v1447 = vunpack.c.0.s8 %v1446
    %v1448 = vlaneseq
    %v1449 = vshrl.u32 %v1448, 7
    %v1450 = vsub.s32 %v1447, %v1449
    %v1451 = vrot.slane %v1437, %v1450
    %v1452 = vcombine.high %v1444, %v1444
    %v1453 = vcombine.high %v1451, %v1451
    %v1455 = vunpack.c.l.s4 1966171168
    %v1456 = vunpack.c.0.s8 %v1455
    %v1457 = vlaneseq
    %v1458 = vshrl.u32 %v1457, 7
    %v1459 = vsub.s32 %v1456, %v1458
    %v1460 = vrot.slane %v1444, %v1459
    %v1462 = vunpack.c.l.s4 1966171168
    %v1463 = vunpack.c.0.s8 %v1462
    %v1464 = vlaneseq
    %v1465 = vshrl.u32 %v1464, 7
    %v1466 = vsub.s32 %v1463, %v1465
    %v1467 = vrot.slane %v1451, %v1466
    %v1469 = vunpack.c.l.s4 1966171168
    %v1470 = vunpack.c.0.s8 %v1469
    %v1471 = vlaneseq
    %v1472 = vshrl.u32 %v1471, 7
    %v1473 = vsub.s32 %v1470, %v1472
    %v1474 = vrot.slane %v1452, %v1473
    %v1476 = vunpack.c.l.s4 1966171168
    %v1477 = vunpack.c.0.s8 %v1476
    %v1478 = vlaneseq
    %v1479 = vshrl.u32 %v1478, 7
    %v1480 = vsub.s32 %v1477, %v1479
    %v1481 = vrot.slane %v1453, %v1480
    %v1482 = vcombine.high %v1460, %v1460
    %v1483 = vcombine.high %v1467, %v1467
    %v1484 = vcombine.high %v1474, %v1474
    %v1485 = vcombine.high %v1481, %v1481
    %v1486 = vcombine.high %v894, %v894
    %v1488 = vunpack.c.l.s4 1966171168
    %v1489 = vunpack.c.0.s8 %v1488
    %v1490 = vlaneseq
    %v1491 = vshrl.u32 %v1490, 7
    %v1492 = vsub.s32 %v1489, %v1491
    %v1493 = vrot.slane %v894, %v1492
    %v1495 = vunpack.c.l.s4 1966171168
    %v1496 = vunpack.c.0.s8 %v1495
    %v1497 = vlaneseq
    %v1498 = vshrl.u32 %v1497, 7
    %v1499 = vsub.s32 %v1496, %v1498
    %v1500 = vrot.slane %v1486, %v1499
    %v1501 = vcombine.high %v1493, %v1493
    %v1502 = vcombine.high %v1500, %v1500
    %v1504 = vunpack.c.l.s4 1966171168
    %v1505 = vunpack.c.0.s8 %v1504
    %v1506 = vlaneseq
    %v1507 = vshrl.u32 %v1506, 7
    %v1508 = vsub.s32 %v1505, %v1507
    %v1509 = vrot.slane %v1493, %v1508
    %v1511 = vunpack.c.l.s4 1966171168
    %v1512 = vunpack.c.0.s8 %v1511
    %v1513 = vlaneseq
    %v1514 = vshrl.u32 %v1513, 7
    %v1515 = vsub.s32 %v1512, %v1514
    %v1516 = vrot.slane %v1500, %v1515
    %v1518 = vunpack.c.l.s4 1966171168
    %v1519 = vunpack.c.0.s8 %v1518
    %v1520 = vlaneseq
    %v1521 = vshrl.u32 %v1520, 7
    %v1522 = vsub.s32 %v1519, %v1521
    %v1523 = vrot.slane %v1501, %v1522
    %v1525 = vunpack.c.l.s4 1966171168
    %v1526 = vunpack.c.0.s8 %v1525
    %v1527 = vlaneseq
    %v1528 = vshrl.u32 %v1527, 7
    %v1529 = vsub.s32 %v1526, %v1528
    %v1530 = vrot.slane %v1502, %v1529
    %v1531 = vcombine.high %v1509, %v1509
    %v1532 = vcombine.high %v1516, %v1516
    %v1533 = vcombine.high %v1523, %v1523
    %v1534 = vcombine.high %v1530, %v1530
    %v1535 = vcombine.high %v895, %v895
    %v1537 = vunpack.c.l.s4 1966171168
    %v1538 = vunpack.c.0.s8 %v1537
    %v1539 = vlaneseq
    %v1540 = vshrl.u32 %v1539, 7
    %v1541 = vsub.s32 %v1538, %v1540
    %v1542 = vrot.slane %v895, %v1541
    %v1544 = vunpack.c.l.s4 1966171168
    %v1545 = vunpack.c.0.s8 %v1544
    %v1546 = vlaneseq
    %v1547 = vshrl.u32 %v1546, 7
    %v1548 = vsub.s32 %v1545, %v1547
    %v1549 = vrot.slane %v1535, %v1548
    %v1550 = vcombine.high %v1542, %v1542
    %v1551 = vcombine.high %v1549, %v1549
    %v1553 = vunpack.c.l.s4 1966171168
    %v1554 = vunpack.c.0.s8 %v1553
    %v1555 = vlaneseq
    %v1556 = vshrl.u32 %v1555, 7
    %v1557 = vsub.s32 %v1554, %v1556
    %v1558 = vrot.slane %v1542, %v1557
    %v1560 = vunpack.c.l.s4 1966171168
    %v1561 = vunpack.c.0.s8 %v1560
    %v1562 = vlaneseq
    %v1563 = vshrl.u32 %v1562, 7
    %v1564 = vsub.s32 %v1561, %v1563
    %v1565 = vrot.slane %v1549, %v1564
    %v1567 = vunpack.c.l.s4 1966171168
    %v1568 = vunpack.c.0.s8 %v1567
    %v1569 = vlaneseq
    %v1570 = vshrl.u32 %v1569, 7
    %v1571 = vsub.s32 %v1568, %v1570
    %v1572 = vrot.slane %v1550, %v1571
    %v1574 = vunpack.c.l.s4 1966171168
    %v1575 = vunpack.c.0.s8 %v1574
    %v1576 = vlaneseq
    %v1577 = vshrl.u32 %v1576, 7
    %v1578 = vsub.s32 %v1575, %v1577
    %v1579 = vrot.slane %v1551, %v1578
    %v1580 = vcombine.high %v1558, %v1558
    %v1581 = vcombine.high %v1565, %v1565
    %v1582 = vcombine.high %v1572, %v1572
    %v1583 = vcombine.high %v1579, %v1579
    %v1584 = vcombine.high %v896, %v896
    %v1586 = vunpack.c.l.s4 1966171168
    %v1587 = vunpack.c.0.s8 %v1586
    %v1588 = vlaneseq
    %v1589 = vshrl.u32 %v1588, 7
    %v1590 = vsub.s32 %v1587, %v1589
    %v1591 = vrot.slane %v896, %v1590
    %v1593 = vunpack.c.l.s4 1966171168
    %v1594 = vunpack.c.0.s8 %v1593
    %v1595 = vlaneseq
    %v1596 = vshrl.u32 %v1595, 7
    %v1597 = vsub.s32 %v1594, %v1596
    %v1598 = vrot.slane %v1584, %v1597
    %v1599 = vcombine.high %v1591, %v1591
    %v1600 = vcombine.high %v1598, %v1598
    %v1602 = vunpack.c.l.s4 1966171168
    %v1603 = vunpack.c.0.s8 %v1602
    %v1604 = vlaneseq
    %v1605 = vshrl.u32 %v1604, 7
    %v1606 = vsub.s32 %v1603, %v1605
    %v1607 = vrot.slane %v1591, %v1606
    %v1609 = vunpack.c.l.s4 1966171168
    %v1610 = vunpack.c.0.s8 %v1609
    %v1611 = vlaneseq
    %v1612 = vshrl.u32 %v1611, 7
    %v1613 = vsub.s32 %v1610, %v1612
    %v1614 = vrot.slane %v1598, %v1613
    %v1616 = vunpack.c.l.s4 1966171168
    %v1617 = vunpack.c.0.s8 %v1616
    %v1618 = vlaneseq
    %v1619 = vshrl.u32 %v1618, 7
    %v1620 = vsub.s32 %v1617, %v1619
    %v1621 = vrot.slane %v1599, %v1620
    %v1623 = vunpack.c.l.s4 1966171168
    %v1624 = vunpack.c.0.s8 %v1623
    %v1625 = vlaneseq
    %v1626 = vshrl.u32 %v1625, 7
    %v1627 = vsub.s32 %v1624, %v1626
    %v1628 = vrot.slane %v1600, %v1627
    %v1629 = vcombine.high %v1607, %v1607
    %v1630 = vcombine.high %v1614, %v1614
    %v1631 = vcombine.high %v1621, %v1621
    %v1632 = vcombine.high %v1628, %v1628
    %v1633 = vcombine.high %v897, %v897
    %v1635 = vunpack.c.l.s4 1966171168
    %v1636 = vunpack.c.0.s8 %v1635
    %v1637 = vlaneseq
    %v1638 = vshrl.u32 %v1637, 7
    %v1639 = vsub.s32 %v1636, %v1638
    %v1640 = vrot.slane %v897, %v1639
    %v1642 = vunpack.c.l.s4 1966171168
    %v1643 = vunpack.c.0.s8 %v1642
    %v1644 = vlaneseq
    %v1645 = vshrl.u32 %v1644, 7
    %v1646 = vsub.s32 %v1643, %v1645
    %v1647 = vrot.slane %v1633, %v1646
    %v1648 = vcombine.high %v1640, %v1640
    %v1649 = vcombine.high %v1647, %v1647
    %v1651 = vunpack.c.l.s4 1966171168
    %v1652 = vunpack.c.0.s8 %v1651
    %v1653 = vlaneseq
    %v1654 = vshrl.u32 %v1653, 7
    %v1655 = vsub.s32 %v1652, %v1654
    %v1656 = vrot.slane %v1640, %v1655
    %v1658 = vunpack.c.l.s4 1966171168
    %v1659 = vunpack.c.0.s8 %v1658
    %v1660 = vlaneseq
    %v1661 = vshrl.u32 %v1660, 7
    %v1662 = vsub.s32 %v1659, %v1661
    %v1663 = vrot.slane %v1647, %v1662
    %v1665 = vunpack.c.l.s4 1966171168
    %v1666 = vunpack.c.0.s8 %v1665
    %v1667 = vlaneseq
    %v1668 = vshrl.u32 %v1667, 7
    %v1669 = vsub.s32 %v1666, %v1668
    %v1670 = vrot.slane %v1648, %v1669
    %v1672 = vunpack.c.l.s4 1966171168
    %v1673 = vunpack.c.0.s8 %v1672
    %v1674 = vlaneseq
    %v1675 = vshrl.u32 %v1674, 7
    %v1676 = vsub.s32 %v1673, %v1675
    %v1677 = vrot.slane %v1649, %v1676
    %v1678 = vcombine.high %v1656, %v1656
    %v1679 = vcombine.high %v1663, %v1663
    %v1680 = vcombine.high %v1670, %v1670
    %v1681 = vcombine.high %v1677, %v1677
    %v1682 = vcombine.high %v898, %v898
    %v1684 = vunpack.c.l.s4 1966171168
    %v1685 = vunpack.c.0.s8 %v1684
    %v1686 = vlaneseq
    %v1687 = vshrl.u32 %v1686, 7
    %v1688 = vsub.s32 %v1685, %v1687
    %v1689 = vrot.slane %v898, %v1688
    %v1691 = vunpack.c.l.s4 1966171168
    %v1692 = vunpack.c.0.s8 %v1691
    %v1693 = vlaneseq
    %v1694 = vshrl.u32 %v1693, 7
    %v1695 = vsub.s32 %v1692, %v1694
    %v1696 = vrot.slane %v1682, %v1695
    %v1697 = vcombine.high %v1689, %v1689
    %v1698 = vcombine.high %v1696, %v1696
    %v1700 = vunpack.c.l.s4 1966171168
    %v1701 = vunpack.c.0.s8 %v1700
    %v1702 = vlaneseq
    %v1703 = vshrl.u32 %v1702, 7
    %v1704 = vsub.s32 %v1701, %v1703
    %v1705 = vrot.slane %v1689, %v1704
    %v1707 = vunpack.c.l.s4 1966171168
    %v1708 = vunpack.c.0.s8 %v1707
    %v1709 = vlaneseq
    %v1710 = vshrl.u32 %v1709, 7
    %v1711 = vsub.s32 %v1708, %v1710
    %v1712 = vrot.slane %v1696, %v1711
    %v1714 = vunpack.c.l.s4 1966171168
    %v1715 = vunpack.c.0.s8 %v1714
    %v1716 = vlaneseq
    %v1717 = vshrl.u32 %v1716, 7
    %v1718 = vsub.s32 %v1715, %v1717
    %v1719 = vrot.slane %v1697, %v1718
    %v1721 = vunpack.c.l.s4 1966171168
    %v1722 = vunpack.c.0.s8 %v1721
    %v1723 = vlaneseq
    %v1724 = vshrl.u32 %v1723, 7
    %v1725 = vsub.s32 %v1722, %v1724
    %v1726 = vrot.slane %v1698, %v1725
    %v1727 = vcombine.high %v1705, %v1705
    %v1728 = vcombine.high %v1712, %v1712
    %v1729 = vcombine.high %v1719, %v1719
    %v1730 = vcombine.high %v1726, %v1726
    %v1731 = vcombine.high %v899, %v899
    %v1733 = vunpack.c.l.s4 1966171168
    %v1734 = vunpack.c.0.s8 %v1733
    %v1735 = vlaneseq
    %v1736 = vshrl.u32 %v1735, 7
    %v1737 = vsub.s32 %v1734, %v1736
    %v1738 = vrot.slane %v899, %v1737
    %v1740 = vunpack.c.l.s4 1966171168
    %v1741 = vunpack.c.0.s8 %v1740
    %v1742 = vlaneseq
    %v1743 = vshrl.u32 %v1742, 7
    %v1744 = vsub.s32 %v1741, %v1743
    %v1745 = vrot.slane %v1731, %v1744
    %v1746 = vcombine.high %v1738, %v1738
    %v1747 = vcombine.high %v1745, %v1745
    %v1749 = vunpack.c.l.s4 1966171168
    %v1750 = vunpack.c.0.s8 %v1749
    %v1751 = vlaneseq
    %v1752 = vshrl.u32 %v1751, 7
    %v1753 = vsub.s32 %v1750, %v1752
    %v1754 = vrot.slane %v1738, %v1753
    %v1756 = vunpack.c.l.s4 1966171168
    %v1757 = vunpack.c.0.s8 %v1756
    %v1758 = vlaneseq
    %v1759 = vshrl.u32 %v1758, 7
    %v1760 = vsub.s32 %v1757, %v1759
    %v1761 = vrot.slane %v1745, %v1760
    %v1763 = vunpack.c.l.s4 1966171168
    %v1764 = vunpack.c.0.s8 %v1763
    %v1765 = vlaneseq
    %v1766 = vshrl.u32 %v1765, 7
    %v1767 = vsub.s32 %v1764, %v1766
    %v1768 = vrot.slane %v1746, %v1767
    %v1770 = vunpack.c.l.s4 1966171168
    %v1771 = vunpack.c.0.s8 %v1770
    %v1772 = vlaneseq
    %v1773 = vshrl.u32 %v1772, 7
    %v1774 = vsub.s32 %v1771, %v1773
    %v1775 = vrot.slane %v1747, %v1774
    %v1776 = vcombine.high %v1754, %v1754
    %v1777 = vcombine.high %v1761, %v1761
    %v1778 = vcombine.high %v1768, %v1768
    %v1779 = vcombine.high %v1775, %v1775
    %v1780 = vcombine.high %v900, %v900
    %v1782 = vunpack.c.l.s4 1966171168
    %v1783 = vunpack.c.0.s8 %v1782
    %v1784 = vlaneseq
    %v1785 = vshrl.u32 %v1784, 7
    %v1786 = vsub.s32 %v1783, %v1785
    %v1787 = vrot.slane %v900, %v1786
    %v1789 = vunpack.c.l.s4 1966171168
    %v1790 = vunpack.c.0.s8 %v1789
    %v1791 = vlaneseq
    %v1792 = vshrl.u32 %v1791, 7
    %v1793 = vsub.s32 %v1790, %v1792
    %v1794 = vrot.slane %v1780, %v1793
    %v1795 = vcombine.high %v1787, %v1787
    %v1796 = vcombine.high %v1794, %v1794
    %v1798 = vunpack.c.l.s4 1966171168
    %v1799 = vunpack.c.0.s8 %v1798
    %v1800 = vlaneseq
    %v1801 = vshrl.u32 %v1800, 7
    %v1802 = vsub.s32 %v1799, %v1801
    %v1803 = vrot.slane %v1787, %v1802
    %v1805 = vunpack.c.l.s4 1966171168
    %v1806 = vunpack.c.0.s8 %v1805
    %v1807 = vlaneseq
    %v1808 = vshrl.u32 %v1807, 7
    %v1809 = vsub.s32 %v1806, %v1808
    %v1810 = vrot.slane %v1794, %v1809
    %v1812 = vunpack.c.l.s4 1966171168
    %v1813 = vunpack.c.0.s8 %v1812
    %v1814 = vlaneseq
    %v1815 = vshrl.u32 %v1814, 7
    %v1816 = vsub.s32 %v1813, %v1815
    %v1817 = vrot.slane %v1795, %v1816
    %v1819 = vunpack.c.l.s4 1966171168
    %v1820 = vunpack.c.0.s8 %v1819
    %v1821 = vlaneseq
    %v1822 = vshrl.u32 %v1821, 7
    %v1823 = vsub.s32 %v1820, %v1822
    %v1824 = vrot.slane %v1796, %v1823
    %v1825 = vcombine.high %v1803, %v1803
    %v1826 = vcombine.high %v1810, %v1810
    %v1827 = vcombine.high %v1817, %v1817
    %v1828 = vcombine.high %v1824, %v1824
    %v1829 = vcombine.high %v901, %v901
    %v1831 = vunpack.c.l.s4 1966171168
    %v1832 = vunpack.c.0.s8 %v1831
    %v1833 = vlaneseq
    %v1834 = vshrl.u32 %v1833, 7
    %v1835 = vsub.s32 %v1832, %v1834
    %v1836 = vrot.slane %v901, %v1835
    %v1838 = vunpack.c.l.s4 1966171168
    %v1839 = vunpack.c.0.s8 %v1838
    %v1840 = vlaneseq
    %v1841 = vshrl.u32 %v1840, 7
    %v1842 = vsub.s32 %v1839, %v1841
    %v1843 = vrot.slane %v1829, %v1842
    %v1844 = vcombine.high %v1836, %v1836
    %v1845 = vcombine.high %v1843, %v1843
    %v1847 = vunpack.c.l.s4 1966171168
    %v1848 = vunpack.c.0.s8 %v1847
    %v1849 = vlaneseq
    %v1850 = vshrl.u32 %v1849, 7
    %v1851 = vsub.s32 %v1848, %v1850
    %v1852 = vrot.slane %v1836, %v1851
    %v1854 = vunpack.c.l.s4 1966171168
    %v1855 = vunpack.c.0.s8 %v1854
    %v1856 = vlaneseq
    %v1857 = vshrl.u32 %v1856, 7
    %v1858 = vsub.s32 %v1855, %v1857
    %v1859 = vrot.slane %v1843, %v1858
    %v1861 = vunpack.c.l.s4 1966171168
    %v1862 = vunpack.c.0.s8 %v1861
    %v1863 = vlaneseq
    %v1864 = vshrl.u32 %v1863, 7
    %v1865 = vsub.s32 %v1862, %v1864
    %v1866 = vrot.slane %v1844, %v1865
    %v1868 = vunpack.c.l.s4 1966171168
    %v1869 = vunpack.c.0.s8 %v1868
    %v1870 = vlaneseq
    %v1871 = vshrl.u32 %v1870, 7
    %v1872 = vsub.s32 %v1869, %v1871
    %v1873 = vrot.slane %v1845, %v1872
    %v1874 = vcombine.high %v1852, %v1852
    %v1875 = vcombine.high %v1859, %v1859
    %v1876 = vcombine.high %v1866, %v1866
    %v1877 = vcombine.high %v1873, %v1873
    %v1878 = vcombine.high %v902, %v902
    %v1880 = vunpack.c.l.s4 1966171168
    %v1881 = vunpack.c.0.s8 %v1880
    %v1882 = vlaneseq
    %v1883 = vshrl.u32 %v1882, 7
    %v1884 = vsub.s32 %v1881, %v1883
    %v1885 = vrot.slane %v902, %v1884
    %v1887 = vunpack.c.l.s4 1966171168
    %v1888 = vunpack.c.0.s8 %v1887
    %v1889 = vlaneseq
    %v1890 = vshrl.u32 %v1889, 7
    %v1891 = vsub.s32 %v1888, %v1890
    %v1892 = vrot.slane %v1878, %v1891
    %v1893 = vcombine.high %v1885, %v1885
    %v1894 = vcombine.high %v1892, %v1892
    %v1896 = vunpack.c.l.s4 1966171168
    %v1897 = vunpack.c.0.s8 %v1896
    %v1898 = vlaneseq
    %v1899 = vshrl.u32 %v1898, 7
    %v1900 = vsub.s32 %v1897, %v1899
    %v1901 = vrot.slane %v1885, %v1900
    %v1903 = vunpack.c.l.s4 1966171168
    %v1904 = vunpack.c.0.s8 %v1903
    %v1905 = vlaneseq
    %v1906 = vshrl.u32 %v1905, 7
    %v1907 = vsub.s32 %v1904, %v1906
    %v1908 = vrot.slane %v1892, %v1907
    %v1910 = vunpack.c.l.s4 1966171168
    %v1911 = vunpack.c.0.s8 %v1910
    %v1912 = vlaneseq
    %v1913 = vshrl.u32 %v1912, 7
    %v1914 = vsub.s32 %v1911, %v1913
    %v1915 = vrot.slane %v1893, %v1914
    %v1917 = vunpack.c.l.s4 1966171168
    %v1918 = vunpack.c.0.s8 %v1917
    %v1919 = vlaneseq
    %v1920 = vshrl.u32 %v1919, 7
    %v1921 = vsub.s32 %v1918, %v1920
    %v1922 = vrot.slane %v1894, %v1921
    %v1923 = vcombine.high %v1901, %v1901
    %v1924 = vcombine.high %v1908, %v1908
    %v1925 = vcombine.high %v1915, %v1915
    %v1926 = vcombine.high %v1922, %v1922
    %v1927 = vcombine.high %v903, %v903
    %v1929 = vunpack.c.l.s4 1966171168
    %v1930 = vunpack.c.0.s8 %v1929
    %v1931 = vlaneseq
    %v1932 = vshrl.u32 %v1931, 7
    %v1933 = vsub.s32 %v1930, %v1932
    %v1934 = vrot.slane %v903, %v1933
    %v1936 = vunpack.c.l.s4 1966171168
    %v1937 = vunpack.c.0.s8 %v1936
    %v1938 = vlaneseq
    %v1939 = vshrl.u32 %v1938, 7
    %v1940 = vsub.s32 %v1937, %v1939
    %v1941 = vrot.slane %v1927, %v1940
    %v1942 = vcombine.high %v1934, %v1934
    %v1943 = vcombine.high %v1941, %v1941
    %v1945 = vunpack.c.l.s4 1966171168
    %v1946 = vunpack.c.0.s8 %v1945
    %v1947 = vlaneseq
    %v1948 = vshrl.u32 %v1947, 7
    %v1949 = vsub.s32 %v1946, %v1948
    %v1950 = vrot.slane %v1934, %v1949
    %v1952 = vunpack.c.l.s4 1966171168
    %v1953 = vunpack.c.0.s8 %v1952
    %v1954 = vlaneseq
    %v1955 = vshrl.u32 %v1954, 7
    %v1956 = vsub.s32 %v1953, %v1955
    %v1957 = vrot.slane %v1941, %v1956
    %v1959 = vunpack.c.l.s4 1966171168
    %v1960 = vunpack.c.0.s8 %v1959
    %v1961 = vlaneseq
    %v1962 = vshrl.u32 %v1961, 7
    %v1963 = vsub.s32 %v1960, %v1962
    %v1964 = vrot.slane %v1942, %v1963
    %v1966 = vunpack.c.l.s4 1966171168
    %v1967 = vunpack.c.0.s8 %v1966
    %v1968 = vlaneseq
    %v1969 = vshrl.u32 %v1968, 7
    %v1970 = vsub.s32 %v1967, %v1969
    %v1971 = vrot.slane %v1943, %v1970
    %v1972 = vcombine.high %v1950, %v1950
    %v1973 = vcombine.high %v1957, %v1957
    %v1974 = vcombine.high %v1964, %v1964
    %v1975 = vcombine.high %v1971, %v1971
    %v1976 = vcombine.high %v904, %v904
    %v1978 = vunpack.c.l.s4 1966171168
    %v1979 = vunpack.c.0.s8 %v1978
    %v1980 = vlaneseq
    %v1981 = vshrl.u32 %v1980, 7
    %v1982 = vsub.s32 %v1979, %v1981
    %v1983 = vrot.slane %v904, %v1982
    %v1985 = vunpack.c.l.s4 1966171168
    %v1986 = vunpack.c.0.s8 %v1985
    %v1987 = vlaneseq
    %v1988 = vshrl.u32 %v1987, 7
    %v1989 = vsub.s32 %v1986, %v1988
    %v1990 = vrot.slane %v1976, %v1989
    %v1991 = vcombine.high %v1983, %v1983
    %v1992 = vcombine.high %v1990, %v1990
    %v1994 = vunpack.c.l.s4 1966171168
    %v1995 = vunpack.c.0.s8 %v1994
    %v1996 = vlaneseq
    %v1997 = vshrl.u32 %v1996, 7
    %v1998 = vsub.s32 %v1995, %v1997
    %v1999 = vrot.slane %v1983, %v1998
    %v2001 = vunpack.c.l.s4 1966171168
    %v2002 = vunpack.c.0.s8 %v2001
    %v2003 = vlaneseq
    %v2004 = vshrl.u32 %v2003, 7
    %v2005 = vsub.s32 %v2002, %v2004
    %v2006 = vrot.slane %v1990, %v2005
    %v2008 = vunpack.c.l.s4 1966171168
    %v2009 = vunpack.c.0.s8 %v2008
    %v2010 = vlaneseq
    %v2011 = vshrl.u32 %v2010, 7
    %v2012 = vsub.s32 %v2009, %v2011
    %v2013 = vrot.slane %v1991, %v2012
    %v2015 = vunpack.c.l.s4 1966171168
    %v2016 = vunpack.c.0.s8 %v2015
    %v2017 = vlaneseq
    %v2018 = vshrl.u32 %v2017, 7
    %v2019 = vsub.s32 %v2016, %v2018
    %v2020 = vrot.slane %v1992, %v2019
    %v2021 = vcombine.high %v1999, %v1999
    %v2022 = vcombine.high %v2006, %v2006
    %v2023 = vcombine.high %v2013, %v2013
    %v2024 = vcombine.high %v2020, %v2020
    %v2025 = vcombine.high %v905, %v905
    %v2027 = vunpack.c.l.s4 1966171168
    %v2028 = vunpack.c.0.s8 %v2027
    %v2029 = vlaneseq
    %v2030 = vshrl.u32 %v2029, 7
    %v2031 = vsub.s32 %v2028, %v2030
    %v2032 = vrot.slane %v905, %v2031
    %v2034 = vunpack.c.l.s4 1966171168
    %v2035 = vunpack.c.0.s8 %v2034
    %v2036 = vlaneseq
    %v2037 = vshrl.u32 %v2036, 7
    %v2038 = vsub.s32 %v2035, %v2037
    %v2039 = vrot.slane %v2025, %v2038
    %v2040 = vcombine.high %v2032, %v2032
    %v2041 = vcombine.high %v2039, %v2039
    %v2043 = vunpack.c.l.s4 1966171168
    %v2044 = vunpack.c.0.s8 %v2043
    %v2045 = vlaneseq
    %v2046 = vshrl.u32 %v2045, 7
    %v2047 = vsub.s32 %v2044, %v2046
    %v2048 = vrot.slane %v2032, %v2047
    %v2050 = vunpack.c.l.s4 1966171168
    %v2051 = vunpack.c.0.s8 %v2050
    %v2052 = vlaneseq
    %v2053 = vshrl.u32 %v2052, 7
    %v2054 = vsub.s32 %v2051, %v2053
    %v2055 = vrot.slane %v2039, %v2054
    %v2057 = vunpack.c.l.s4 1966171168
    %v2058 = vunpack.c.0.s8 %v2057
    %v2059 = vlaneseq
    %v2060 = vshrl.u32 %v2059, 7
    %v2061 = vsub.s32 %v2058, %v2060
    %v2062 = vrot.slane %v2040, %v2061
    %v2064 = vunpack.c.l.s4 1966171168
    %v2065 = vunpack.c.0.s8 %v2064
    %v2066 = vlaneseq
    %v2067 = vshrl.u32 %v2066, 7
    %v2068 = vsub.s32 %v2065, %v2067
    %v2069 = vrot.slane %v2041, %v2068
    %v2070 = vcombine.high %v2048, %v2048
    %v2071 = vcombine.high %v2055, %v2055
    %v2072 = vcombine.high %v2062, %v2062
    %v2073 = vcombine.high %v2069, %v2069
    %v2074 = vcombine.high %v906, %v906
    %v2076 = vunpack.c.l.s4 1966171168
    %v2077 = vunpack.c.0.s8 %v2076
    %v2078 = vlaneseq
    %v2079 = vshrl.u32 %v2078, 7
    %v2080 = vsub.s32 %v2077, %v2079
    %v2081 = vrot.slane %v906, %v2080
    %v2083 = vunpack.c.l.s4 1966171168
    %v2084 = vunpack.c.0.s8 %v2083
    %v2085 = vlaneseq
    %v2086 = vshrl.u32 %v2085, 7
    %v2087 = vsub.s32 %v2084, %v2086
    %v2088 = vrot.slane %v2074, %v2087
    %v2089 = vcombine.high %v2081, %v2081
    %v2090 = vcombine.high %v2088, %v2088
    %v2092 = vunpack.c.l.s4 1966171168
    %v2093 = vunpack.c.0.s8 %v2092
    %v2094 = vlaneseq
    %v2095 = vshrl.u32 %v2094, 7
    %v2096 = vsub.s32 %v2093, %v2095
    %v2097 = vrot.slane %v2081, %v2096
    %v2099 = vunpack.c.l.s4 1966171168
    %v2100 = vunpack.c.0.s8 %v2099
    %v2101 = vlaneseq
    %v2102 = vshrl.u32 %v2101, 7
    %v2103 = vsub.s32 %v2100, %v2102
    %v2104 = vrot.slane %v2088, %v2103
    %v2106 = vunpack.c.l.s4 1966171168
    %v2107 = vunpack.c.0.s8 %v2106
    %v2108 = vlaneseq
    %v2109 = vshrl.u32 %v2108, 7
    %v2110 = vsub.s32 %v2107, %v2109
    %v2111 = vrot.slane %v2089, %v2110
    %v2113 = vunpack.c.l.s4 1966171168
    %v2114 = vunpack.c.0.s8 %v2113
    %v2115 = vlaneseq
    %v2116 = vshrl.u32 %v2115, 7
    %v2117 = vsub.s32 %v2114, %v2116
    %v2118 = vrot.slane %v2090, %v2117
    %v2119 = vcombine.high %v2097, %v2097
    %v2120 = vcombine.high %v2104, %v2104
    %v2121 = vcombine.high %v2111, %v2111
    %v2122 = vcombine.high %v2118, %v2118
    %v2123 = vcombine.high %v907, %v907
    %v2125 = vunpack.c.l.s4 1966171168
    %v2126 = vunpack.c.0.s8 %v2125
    %v2127 = vlaneseq
    %v2128 = vshrl.u32 %v2127, 7
    %v2129 = vsub.s32 %v2126, %v2128
    %v2130 = vrot.slane %v907, %v2129
    %v2132 = vunpack.c.l.s4 1966171168
    %v2133 = vunpack.c.0.s8 %v2132
    %v2134 = vlaneseq
    %v2135 = vshrl.u32 %v2134, 7
    %v2136 = vsub.s32 %v2133, %v2135
    %v2137 = vrot.slane %v2123, %v2136
    %v2138 = vcombine.high %v2130, %v2130
    %v2139 = vcombine.high %v2137, %v2137
    %v2141 = vunpack.c.l.s4 1966171168
    %v2142 = vunpack.c.0.s8 %v2141
    %v2143 = vlaneseq
    %v2144 = vshrl.u32 %v2143, 7
    %v2145 = vsub.s32 %v2142, %v2144
    %v2146 = vrot.slane %v2130, %v2145
    %v2148 = vunpack.c.l.s4 1966171168
    %v2149 = vunpack.c.0.s8 %v2148
    %v2150 = vlaneseq
    %v2151 = vshrl.u32 %v2150, 7
    %v2152 = vsub.s32 %v2149, %v2151
    %v2153 = vrot.slane %v2137, %v2152
    %v2155 = vunpack.c.l.s4 1966171168
    %v2156 = vunpack.c.0.s8 %v2155
    %v2157 = vlaneseq
    %v2158 = vshrl.u32 %v2157, 7
    %v2159 = vsub.s32 %v2156, %v2158
    %v2160 = vrot.slane %v2138, %v2159
    %v2162 = vunpack.c.l.s4 1966171168
    %v2163 = vunpack.c.0.s8 %v2162
    %v2164 = vlaneseq
    %v2165 = vshrl.u32 %v2164, 7
    %v2166 = vsub.s32 %v2163, %v2165
    %v2167 = vrot.slane %v2139, %v2166
    %v2168 = vcombine.high %v2146, %v2146
    %v2169 = vcombine.high %v2153, %v2153
    %v2170 = vcombine.high %v2160, %v2160
    %v2171 = vcombine.high %v2167, %v2167
    %v2172 = vcombine.high %v908, %v908
    %v2174 = vunpack.c.l.s4 1966171168
    %v2175 = vunpack.c.0.s8 %v2174
    %v2176 = vlaneseq
    %v2177 = vshrl.u32 %v2176, 7
    %v2178 = vsub.s32 %v2175, %v2177
    %v2179 = vrot.slane %v908, %v2178
    %v2181 = vunpack.c.l.s4 1966171168
    %v2182 = vunpack.c.0.s8 %v2181
    %v2183 = vlaneseq
    %v2184 = vshrl.u32 %v2183, 7
    %v2185 = vsub.s32 %v2182, %v2184
    %v2186 = vrot.slane %v2172, %v2185
    %v2187 = vcombine.high %v2179, %v2179
    %v2188 = vcombine.high %v2186, %v2186
    %v2190 = vunpack.c.l.s4 1966171168
    %v2191 = vunpack.c.0.s8 %v2190
    %v2192 = vlaneseq
    %v2193 = vshrl.u32 %v2192, 7
    %v2194 = vsub.s32 %v2191, %v2193
    %v2195 = vrot.slane %v2179, %v2194
    %v2197 = vunpack.c.l.s4 1966171168
    %v2198 = vunpack.c.0.s8 %v2197
    %v2199 = vlaneseq
    %v2200 = vshrl.u32 %v2199, 7
    %v2201 = vsub.s32 %v2198, %v2200
    %v2202 = vrot.slane %v2186, %v2201
    %v2204 = vunpack.c.l.s4 1966171168
    %v2205 = vunpack.c.0.s8 %v2204
    %v2206 = vlaneseq
    %v2207 = vshrl.u32 %v2206, 7
    %v2208 = vsub.s32 %v2205, %v2207
    %v2209 = vrot.slane %v2187, %v2208
    %v2211 = vunpack.c.l.s4 1966171168
    %v2212 = vunpack.c.0.s8 %v2211
    %v2213 = vlaneseq
    %v2214 = vshrl.u32 %v2213, 7
    %v2215 = vsub.s32 %v2212, %v2214
    %v2216 = vrot.slane %v2188, %v2215
    %v2217 = vcombine.high %v2195, %v2195
    %v2218 = vcombine.high %v2202, %v2202
    %v2219 = vcombine.high %v2209, %v2209
    %v2220 = vcombine.high %v2216, %v2216
    %v2221 = vcombine.high %v909, %v909
    %v2223 = vunpack.c.l.s4 1966171168
    %v2224 = vunpack.c.0.s8 %v2223
    %v2225 = vlaneseq
    %v2226 = vshrl.u32 %v2225, 7
    %v2227 = vsub.s32 %v2224, %v2226
    %v2228 = vrot.slane %v909, %v2227
    %v2230 = vunpack.c.l.s4 1966171168
    %v2231 = vunpack.c.0.s8 %v2230
    %v2232 = vlaneseq
    %v2233 = vshrl.u32 %v2232, 7
    %v2234 = vsub.s32 %v2231, %v2233
    %v2235 = vrot.slane %v2221, %v2234
    %v2236 = vcombine.high %v2228, %v2228
    %v2237 = vcombine.high %v2235, %v2235
    %v2239 = vunpack.c.l.s4 1966171168
    %v2240 = vunpack.c.0.s8 %v2239
    %v2241 = vlaneseq
    %v2242 = vshrl.u32 %v2241, 7
    %v2243 = vsub.s32 %v2240, %v2242
    %v2244 = vrot.slane %v2228, %v2243
    %v2246 = vunpack.c.l.s4 1966171168
    %v2247 = vunpack.c.0.s8 %v2246
    %v2248 = vlaneseq
    %v2249 = vshrl.u32 %v2248, 7
    %v2250 = vsub.s32 %v2247, %v2249
    %v2251 = vrot.slane %v2235, %v2250
    %v2253 = vunpack.c.l.s4 1966171168
    %v2254 = vunpack.c.0.s8 %v2253
    %v2255 = vlaneseq
    %v2256 = vshrl.u32 %v2255, 7
    %v2257 = vsub.s32 %v2254, %v2256
    %v2258 = vrot.slane %v2236, %v2257
    %v2260 = vunpack.c.l.s4 1966171168
    %v2261 = vunpack.c.0.s8 %v2260
    %v2262 = vlaneseq
    %v2263 = vshrl.u32 %v2262, 7
    %v2264 = vsub.s32 %v2261, %v2263
    %v2265 = vrot.slane %v2237, %v2264
    %v2266 = vcombine.high %v2244, %v2244
    %v2267 = vcombine.high %v2251, %v2251
    %v2268 = vcombine.high %v2258, %v2258
    %v2269 = vcombine.high %v2265, %v2265
    %v2270 = vcombine.high %v910, %v910
    %v2272 = vunpack.c.l.s4 1966171168
    %v2273 = vunpack.c.0.s8 %v2272
    %v2274 = vlaneseq
    %v2275 = vshrl.u32 %v2274, 7
    %v2276 = vsub.s32 %v2273, %v2275
    %v2277 = vrot.slane %v910, %v2276
    %v2279 = vunpack.c.l.s4 1966171168
    %v2280 = vunpack.c.0.s8 %v2279
    %v2281 = vlaneseq
    %v2282 = vshrl.u32 %v2281, 7
    %v2283 = vsub.s32 %v2280, %v2282
    %v2284 = vrot.slane %v2270, %v2283
    %v2285 = vcombine.high %v2277, %v2277
    %v2286 = vcombine.high %v2284, %v2284
    %v2288 = vunpack.c.l.s4 1966171168
    %v2289 = vunpack.c.0.s8 %v2288
    %v2290 = vlaneseq
    %v2291 = vshrl.u32 %v2290, 7
    %v2292 = vsub.s32 %v2289, %v2291
    %v2293 = vrot.slane %v2277, %v2292
    %v2295 = vunpack.c.l.s4 1966171168
    %v2296 = vunpack.c.0.s8 %v2295
    %v2297 = vlaneseq
    %v2298 = vshrl.u32 %v2297, 7
    %v2299 = vsub.s32 %v2296, %v2298
    %v2300 = vrot.slane %v2284, %v2299
    %v2302 = vunpack.c.l.s4 1966171168
    %v2303 = vunpack.c.0.s8 %v2302
    %v2304 = vlaneseq
    %v2305 = vshrl.u32 %v2304, 7
    %v2306 = vsub.s32 %v2303, %v2305
    %v2307 = vrot.slane %v2285, %v2306
    %v2309 = vunpack.c.l.s4 1966171168
    %v2310 = vunpack.c.0.s8 %v2309
    %v2311 = vlaneseq
    %v2312 = vshrl.u32 %v2311, 7
    %v2313 = vsub.s32 %v2310, %v2312
    %v2314 = vrot.slane %v2286, %v2313
    %v2315 = vcombine.high %v2293, %v2293
    %v2316 = vcombine.high %v2300, %v2300
    %v2317 = vcombine.high %v2307, %v2307
    %v2318 = vcombine.high %v2314, %v2314
    %v2319 = vcombine.high %v911, %v911
    %v2321 = vunpack.c.l.s4 1966171168
    %v2322 = vunpack.c.0.s8 %v2321
    %v2323 = vlaneseq
    %v2324 = vshrl.u32 %v2323, 7
    %v2325 = vsub.s32 %v2322, %v2324
    %v2326 = vrot.slane %v911, %v2325
    %v2328 = vunpack.c.l.s4 1966171168
    %v2329 = vunpack.c.0.s8 %v2328
    %v2330 = vlaneseq
    %v2331 = vshrl.u32 %v2330, 7
    %v2332 = vsub.s32 %v2329, %v2331
    %v2333 = vrot.slane %v2319, %v2332
    %v2334 = vcombine.high %v2326, %v2326
    %v2335 = vcombine.high %v2333, %v2333
    %v2337 = vunpack.c.l.s4 1966171168
    %v2338 = vunpack.c.0.s8 %v2337
    %v2339 = vlaneseq
    %v2340 = vshrl.u32 %v2339, 7
    %v2341 = vsub.s32 %v2338, %v2340
    %v2342 = vrot.slane %v2326, %v2341
    %v2344 = vunpack.c.l.s4 1966171168
    %v2345 = vunpack.c.0.s8 %v2344
    %v2346 = vlaneseq
    %v2347 = vshrl.u32 %v2346, 7
    %v2348 = vsub.s32 %v2345, %v2347
    %v2349 = vrot.slane %v2333, %v2348
    %v2351 = vunpack.c.l.s4 1966171168
    %v2352 = vunpack.c.0.s8 %v2351
    %v2353 = vlaneseq
    %v2354 = vshrl.u32 %v2353, 7
    %v2355 = vsub.s32 %v2352, %v2354
    %v2356 = vrot.slane %v2334, %v2355
    %v2358 = vunpack.c.l.s4 1966171168
    %v2359 = vunpack.c.0.s8 %v2358
    %v2360 = vlaneseq
    %v2361 = vshrl.u32 %v2360, 7
    %v2362 = vsub.s32 %v2359, %v2361
    %v2363 = vrot.slane %v2335, %v2362
    %v2364 = vcombine.high %v2342, %v2342
    %v2365 = vcombine.high %v2349, %v2349
    %v2366 = vcombine.high %v2356, %v2356
    %v2367 = vcombine.high %v2363, %v2363
    %v2368 = vcombine.high %v912, %v912
    %v2370 = vunpack.c.l.s4 1966171168
    %v2371 = vunpack.c.0.s8 %v2370
    %v2372 = vlaneseq
    %v2373 = vshrl.u32 %v2372, 7
    %v2374 = vsub.s32 %v2371, %v2373
    %v2375 = vrot.slane %v912, %v2374
    %v2377 = vunpack.c.l.s4 1966171168
    %v2378 = vunpack.c.0.s8 %v2377
    %v2379 = vlaneseq
    %v2380 = vshrl.u32 %v2379, 7
    %v2381 = vsub.s32 %v2378, %v2380
    %v2382 = vrot.slane %v2368, %v2381
    %v2383 = vcombine.high %v2375, %v2375
    %v2384 = vcombine.high %v2382, %v2382
    %v2386 = vunpack.c.l.s4 1966171168
    %v2387 = vunpack.c.0.s8 %v2386
    %v2388 = vlaneseq
    %v2389 = vshrl.u32 %v2388, 7
    %v2390 = vsub.s32 %v2387, %v2389
    %v2391 = vrot.slane %v2375, %v2390
    %v2393 = vunpack.c.l.s4 1966171168
    %v2394 = vunpack.c.0.s8 %v2393
    %v2395 = vlaneseq
    %v2396 = vshrl.u32 %v2395, 7
    %v2397 = vsub.s32 %v2394, %v2396
    %v2398 = vrot.slane %v2382, %v2397
    %v2400 = vunpack.c.l.s4 1966171168
    %v2401 = vunpack.c.0.s8 %v2400
    %v2402 = vlaneseq
    %v2403 = vshrl.u32 %v2402, 7
    %v2404 = vsub.s32 %v2401, %v2403
    %v2405 = vrot.slane %v2383, %v2404
    %v2407 = vunpack.c.l.s4 1966171168
    %v2408 = vunpack.c.0.s8 %v2407
    %v2409 = vlaneseq
    %v2410 = vshrl.u32 %v2409, 7
    %v2411 = vsub.s32 %v2408, %v2410
    %v2412 = vrot.slane %v2384, %v2411
    %v2413 = vcombine.high %v2391, %v2391
    %v2414 = vcombine.high %v2398, %v2398
    %v2415 = vcombine.high %v2405, %v2405
    %v2416 = vcombine.high %v2412, %v2412
    %v2417 = vcombine.high %v913, %v913
    %v2419 = vunpack.c.l.s4 1966171168
    %v2420 = vunpack.c.0.s8 %v2419
    %v2421 = vlaneseq
    %v2422 = vshrl.u32 %v2421, 7
    %v2423 = vsub.s32 %v2420, %v2422
    %v2424 = vrot.slane %v913, %v2423
    %v2426 = vunpack.c.l.s4 1966171168
    %v2427 = vunpack.c.0.s8 %v2426
    %v2428 = vlaneseq
    %v2429 = vshrl.u32 %v2428, 7
    %v2430 = vsub.s32 %v2427, %v2429
    %v2431 = vrot.slane %v2417, %v2430
    %v2432 = vcombine.high %v2424, %v2424
    %v2433 = vcombine.high %v2431, %v2431
    %v2435 = vunpack.c.l.s4 1966171168
    %v2436 = vunpack.c.0.s8 %v2435
    %v2437 = vlaneseq
    %v2438 = vshrl.u32 %v2437, 7
    %v2439 = vsub.s32 %v2436, %v2438
    %v2440 = vrot.slane %v2424, %v2439
    %v2442 = vunpack.c.l.s4 1966171168
    %v2443 = vunpack.c.0.s8 %v2442
    %v2444 = vlaneseq
    %v2445 = vshrl.u32 %v2444, 7
    %v2446 = vsub.s32 %v2443, %v2445
    %v2447 = vrot.slane %v2431, %v2446
    %v2449 = vunpack.c.l.s4 1966171168
    %v2450 = vunpack.c.0.s8 %v2449
    %v2451 = vlaneseq
    %v2452 = vshrl.u32 %v2451, 7
    %v2453 = vsub.s32 %v2450, %v2452
    %v2454 = vrot.slane %v2432, %v2453
    %v2456 = vunpack.c.l.s4 1966171168
    %v2457 = vunpack.c.0.s8 %v2456
    %v2458 = vlaneseq
    %v2459 = vshrl.u32 %v2458, 7
    %v2460 = vsub.s32 %v2457, %v2459
    %v2461 = vrot.slane %v2433, %v2460
    %v2462 = vcombine.high %v2440, %v2440
    %v2463 = vcombine.high %v2447, %v2447
    %v2464 = vcombine.high %v2454, %v2454
    %v2465 = vcombine.high %v2461, %v2461
    %v2466 = vcombine.high %v914, %v914
    %v2468 = vunpack.c.l.s4 1966171168
    %v2469 = vunpack.c.0.s8 %v2468
    %v2470 = vlaneseq
    %v2471 = vshrl.u32 %v2470, 7
    %v2472 = vsub.s32 %v2469, %v2471
    %v2473 = vrot.slane %v914, %v2472
    %v2475 = vunpack.c.l.s4 1966171168
    %v2476 = vunpack.c.0.s8 %v2475
    %v2477 = vlaneseq
    %v2478 = vshrl.u32 %v2477, 7
    %v2479 = vsub.s32 %v2476, %v2478
    %v2480 = vrot.slane %v2466, %v2479
    %v2481 = vcombine.high %v2473, %v2473
    %v2482 = vcombine.high %v2480, %v2480
    %v2484 = vunpack.c.l.s4 1966171168
    %v2485 = vunpack.c.0.s8 %v2484
    %v2486 = vlaneseq
    %v2487 = vshrl.u32 %v2486, 7
    %v2488 = vsub.s32 %v2485, %v2487
    %v2489 = vrot.slane %v2473, %v2488
    %v2491 = vunpack.c.l.s4 1966171168
    %v2492 = vunpack.c.0.s8 %v2491
    %v2493 = vlaneseq
    %v2494 = vshrl.u32 %v2493, 7
    %v2495 = vsub.s32 %v2492, %v2494
    %v2496 = vrot.slane %v2480, %v2495
    %v2498 = vunpack.c.l.s4 1966171168
    %v2499 = vunpack.c.0.s8 %v2498
    %v2500 = vlaneseq
    %v2501 = vshrl.u32 %v2500, 7
    %v2502 = vsub.s32 %v2499, %v2501
    %v2503 = vrot.slane %v2481, %v2502
    %v2505 = vunpack.c.l.s4 1966171168
    %v2506 = vunpack.c.0.s8 %v2505
    %v2507 = vlaneseq
    %v2508 = vshrl.u32 %v2507, 7
    %v2509 = vsub.s32 %v2506, %v2508
    %v2510 = vrot.slane %v2482, %v2509
    %v2511 = vcombine.high %v2489, %v2489
    %v2512 = vcombine.high %v2496, %v2496
    %v2513 = vcombine.high %v2503, %v2503
    %v2514 = vcombine.high %v2510, %v2510
    %vm2515 = vcmask 516096
    %v2518 = vsel %vm2515, %v970, 4286644096
    %v2520 = vunpack.i.l.bf16 %v2518
    %v2521 = vunpack.i.h.bf16 %v2518
    %v2522 = vmax.f32 %v2520, %v2521
    %v2523 = vrot.slane %v2522, 4
    %v2524 = vmax.f32 %v2522, %v2523
    %v2525 = vrot.slane %v2524, 2
    %v2526 = vmax.f32 %v2524, %v2525
    %v2527 = vrot.slane %v2526, 1
    %v2528 = vmax.f32 %v2526, %v2527
    %v2529 = vpack.i.bf16 %v2528, %v2528
    %v2531 = vsel %vm2515, %v984, 4286644096
    %v2533 = vunpack.i.l.bf16 %v2531
    %v2534 = vunpack.i.h.bf16 %v2531
    %v2535 = vmax.f32 %v2533, %v2534
    %v2536 = vrot.slane %v2535, 4
    %v2537 = vmax.f32 %v2535, %v2536
    %v2538 = vrot.slane %v2537, 2
    %v2539 = vmax.f32 %v2537, %v2538
    %v2540 = vrot.slane %v2539, 1
    %v2541 = vmax.f32 %v2539, %v2540
    %v2542 = vpack.i.bf16 %v2541, %v2541
    %v2544 = vsel %vm2515, %v992, 4286644096
    %v2546 = vunpack.i.l.bf16 %v2544
    %v2547 = vunpack.i.h.bf16 %v2544
    %v2548 = vmax.f32 %v2546, %v2547
    %v2549 = vrot.slane %v2548, 4
    %v2550 = vmax.f32 %v2548, %v2549
    %v2551 = vrot.slane %v2550, 2
    %v2552 = vmax.f32 %v2550, %v2551
    %v2553 = vrot.slane %v2552, 1
    %v2554 = vmax.f32 %v2552, %v2553
    %v2555 = vpack.i.bf16 %v2554, %v2554
    %v2557 = vsel %vm2515, %v994, 4286644096
    %v2559 = vunpack.i.l.bf16 %v2557
    %v2560 = vunpack.i.h.bf16 %v2557
    %v2561 = vmax.f32 %v2559, %v2560
    %v2562 = vrot.slane %v2561, 4
    %v2563 = vmax.f32 %v2561, %v2562
    %v2564 = vrot.slane %v2563, 2
    %v2565 = vmax.f32 %v2563, %v2564
    %v2566 = vrot.slane %v2565, 1
    %v2567 = vmax.f32 %v2565, %v2566
    %v2568 = vpack.i.bf16 %v2567, %v2567
    %v2570 = vsel %vm2515, %v977, 4286644096
    %v2572 = vunpack.i.l.bf16 %v2570
    %v2573 = vunpack.i.h.bf16 %v2570
    %v2574 = vmax.f32 %v2572, %v2573
    %v2575 = vrot.slane %v2574, 4
    %v2576 = vmax.f32 %v2574, %v2575
    %v2577 = vrot.slane %v2576, 2
    %v2578 = vmax.f32 %v2576, %v2577
    %v2579 = vrot.slane %v2578, 1
    %v2580 = vmax.f32 %v2578, %v2579
    %v2581 = vpack.i.bf16 %v2580, %v2580
    %v2583 = vsel %vm2515, %v991, 4286644096
    %v2585 = vunpack.i.l.bf16 %v2583
    %v2586 = vunpack.i.h.bf16 %v2583
    %v2587 = vmax.f32 %v2585, %v2586
    %v2588 = vrot.slane %v2587, 4
    %v2589 = vmax.f32 %v2587, %v2588
    %v2590 = vrot.slane %v2589, 2
    %v2591 = vmax.f32 %v2589, %v2590
    %v2592 = vrot.slane %v2591, 1
    %v2593 = vmax.f32 %v2591, %v2592
    %v2594 = vpack.i.bf16 %v2593, %v2593
    %v2596 = vsel %vm2515, %v993, 4286644096
    %v2598 = vunpack.i.l.bf16 %v2596
    %v2599 = vunpack.i.h.bf16 %v2596
    %v2600 = vmax.f32 %v2598, %v2599
    %v2601 = vrot.slane %v2600, 4
    %v2602 = vmax.f32 %v2600, %v2601
    %v2603 = vrot.slane %v2602, 2
    %v2604 = vmax.f32 %v2602, %v2603
    %v2605 = vrot.slane %v2604, 1
    %v2606 = vmax.f32 %v2604, %v2605
    %v2607 = vpack.i.bf16 %v2606, %v2606
    %v2609 = vsel %vm2515, %v995, 4286644096
    %v2611 = vunpack.i.l.bf16 %v2609
    %v2612 = vunpack.i.h.bf16 %v2609
    %v2613 = vmax.f32 %v2611, %v2612
    %v2614 = vrot.slane %v2613, 4
    %v2615 = vmax.f32 %v2613, %v2614
    %v2616 = vrot.slane %v2615, 2
    %v2617 = vmax.f32 %v2615, %v2616
    %v2618 = vrot.slane %v2617, 1
    %v2619 = vmax.f32 %v2617, %v2618
    %v2620 = vpack.i.bf16 %v2619, %v2619
    %v2622 = vsel %vm2515, %v1019, 4286644096
    %v2624 = vunpack.i.l.bf16 %v2622
    %v2625 = vunpack.i.h.bf16 %v2622
    %v2626 = vmax.f32 %v2624, %v2625
    %v2627 = vrot.slane %v2626, 4
    %v2628 = vmax.f32 %v2626, %v2627
    %v2629 = vrot.slane %v2628, 2
    %v2630 = vmax.f32 %v2628, %v2629
    %v2631 = vrot.slane %v2630, 1
    %v2632 = vmax.f32 %v2630, %v2631
    %v2633 = vpack.i.bf16 %v2632, %v2632
    %v2635 = vsel %vm2515, %v1033, 4286644096
    %v2637 = vunpack.i.l.bf16 %v2635
    %v2638 = vunpack.i.h.bf16 %v2635
    %v2639 = vmax.f32 %v2637, %v2638
    %v2640 = vrot.slane %v2639, 4
    %v2641 = vmax.f32 %v2639, %v2640
    %v2642 = vrot.slane %v2641, 2
    %v2643 = vmax.f32 %v2641, %v2642
    %v2644 = vrot.slane %v2643, 1
    %v2645 = vmax.f32 %v2643, %v2644
    %v2646 = vpack.i.bf16 %v2645, %v2645
    %v2648 = vsel %vm2515, %v1041, 4286644096
    %v2650 = vunpack.i.l.bf16 %v2648
    %v2651 = vunpack.i.h.bf16 %v2648
    %v2652 = vmax.f32 %v2650, %v2651
    %v2653 = vrot.slane %v2652, 4
    %v2654 = vmax.f32 %v2652, %v2653
    %v2655 = vrot.slane %v2654, 2
    %v2656 = vmax.f32 %v2654, %v2655
    %v2657 = vrot.slane %v2656, 1
    %v2658 = vmax.f32 %v2656, %v2657
    %v2659 = vpack.i.bf16 %v2658, %v2658
    %v2661 = vsel %vm2515, %v1043, 4286644096
    %v2663 = vunpack.i.l.bf16 %v2661
    %v2664 = vunpack.i.h.bf16 %v2661
    %v2665 = vmax.f32 %v2663, %v2664
    %v2666 = vrot.slane %v2665, 4
    %v2667 = vmax.f32 %v2665, %v2666
    %v2668 = vrot.slane %v2667, 2
    %v2669 = vmax.f32 %v2667, %v2668
    %v2670 = vrot.slane %v2669, 1
    %v2671 = vmax.f32 %v2669, %v2670
    %v2672 = vpack.i.bf16 %v2671, %v2671
    %v2674 = vsel %vm2515, %v1026, 4286644096
    %v2676 = vunpack.i.l.bf16 %v2674
    %v2677 = vunpack.i.h.bf16 %v2674
    %v2678 = vmax.f32 %v2676, %v2677
    %v2679 = vrot.slane %v2678, 4
    %v2680 = vmax.f32 %v2678, %v2679
    %v2681 = vrot.slane %v2680, 2
    %v2682 = vmax.f32 %v2680, %v2681
    %v2683 = vrot.slane %v2682, 1
    %v2684 = vmax.f32 %v2682, %v2683
    %v2685 = vpack.i.bf16 %v2684, %v2684
    %v2687 = vsel %vm2515, %v1040, 4286644096
    %v2689 = vunpack.i.l.bf16 %v2687
    %v2690 = vunpack.i.h.bf16 %v2687
    %v2691 = vmax.f32 %v2689, %v2690
    %v2692 = vrot.slane %v2691, 4
    %v2693 = vmax.f32 %v2691, %v2692
    %v2694 = vrot.slane %v2693, 2
    %v2695 = vmax.f32 %v2693, %v2694
    %v2696 = vrot.slane %v2695, 1
    %v2697 = vmax.f32 %v2695, %v2696
    %v2698 = vpack.i.bf16 %v2697, %v2697
    %v2700 = vsel %vm2515, %v1042, 4286644096
    %v2702 = vunpack.i.l.bf16 %v2700
    %v2703 = vunpack.i.h.bf16 %v2700
    %v2704 = vmax.f32 %v2702, %v2703
    %v2705 = vrot.slane %v2704, 4
    %v2706 = vmax.f32 %v2704, %v2705
    %v2707 = vrot.slane %v2706, 2
    %v2708 = vmax.f32 %v2706, %v2707
    %v2709 = vrot.slane %v2708, 1
    %v2710 = vmax.f32 %v2708, %v2709
    %v2711 = vpack.i.bf16 %v2710, %v2710
    %v2713 = vsel %vm2515, %v1044, 4286644096
    %v2715 = vunpack.i.l.bf16 %v2713
    %v2716 = vunpack.i.h.bf16 %v2713
    %v2717 = vmax.f32 %v2715, %v2716
    %v2718 = vrot.slane %v2717, 4
    %v2719 = vmax.f32 %v2717, %v2718
    %v2720 = vrot.slane %v2719, 2
    %v2721 = vmax.f32 %v2719, %v2720
    %v2722 = vrot.slane %v2721, 1
    %v2723 = vmax.f32 %v2721, %v2722
    %v2724 = vpack.i.bf16 %v2723, %v2723
    %v2726 = vsel %vm2515, %v1068, 4286644096
    %v2728 = vunpack.i.l.bf16 %v2726
    %v2729 = vunpack.i.h.bf16 %v2726
    %v2730 = vmax.f32 %v2728, %v2729
    %v2731 = vrot.slane %v2730, 4
    %v2732 = vmax.f32 %v2730, %v2731
    %v2733 = vrot.slane %v2732, 2
    %v2734 = vmax.f32 %v2732, %v2733
    %v2735 = vrot.slane %v2734, 1
    %v2736 = vmax.f32 %v2734, %v2735
    %v2737 = vpack.i.bf16 %v2736, %v2736
    %v2739 = vsel %vm2515, %v1082, 4286644096
    %v2741 = vunpack.i.l.bf16 %v2739
    %v2742 = vunpack.i.h.bf16 %v2739
    %v2743 = vmax.f32 %v2741, %v2742
    %v2744 = vrot.slane %v2743, 4
    %v2745 = vmax.f32 %v2743, %v2744
    %v2746 = vrot.slane %v2745, 2
    %v2747 = vmax.f32 %v2745, %v2746
    %v2748 = vrot.slane %v2747, 1
    %v2749 = vmax.f32 %v2747, %v2748
    %v2750 = vpack.i.bf16 %v2749, %v2749
    %v2752 = vsel %vm2515, %v1090, 4286644096
    %v2754 = vunpack.i.l.bf16 %v2752
    %v2755 = vunpack.i.h.bf16 %v2752
    %v2756 = vmax.f32 %v2754, %v2755
    %v2757 = vrot.slane %v2756, 4
    %v2758 = vmax.f32 %v2756, %v2757
    %v2759 = vrot.slane %v2758, 2
    %v2760 = vmax.f32 %v2758, %v2759
    %v2761 = vrot.slane %v2760, 1
    %v2762 = vmax.f32 %v2760, %v2761
    %v2763 = vpack.i.bf16 %v2762, %v2762
    %v2765 = vsel %vm2515, %v1092, 4286644096
    %v2767 = vunpack.i.l.bf16 %v2765
    %v2768 = vunpack.i.h.bf16 %v2765
    %v2769 = vmax.f32 %v2767, %v2768
    %v2770 = vrot.slane %v2769, 4
    %v2771 = vmax.f32 %v2769, %v2770
    %v2772 = vrot.slane %v2771, 2
    %v2773 = vmax.f32 %v2771, %v2772
    %v2774 = vrot.slane %v2773, 1
    %v2775 = vmax.f32 %v2773, %v2774
    %v2776 = vpack.i.bf16 %v2775, %v2775
    %v2778 = vsel %vm2515, %v1075, 4286644096
    %v2780 = vunpack.i.l.bf16 %v2778
    %v2781 = vunpack.i.h.bf16 %v2778
    %v2782 = vmax.f32 %v2780, %v2781
    %v2783 = vrot.slane %v2782, 4
    %v2784 = vmax.f32 %v2782, %v2783
    %v2785 = vrot.slane %v2784, 2
    %v2786 = vmax.f32 %v2784, %v2785
    %v2787 = vrot.slane %v2786, 1
    %v2788 = vmax.f32 %v2786, %v2787
    %v2789 = vpack.i.bf16 %v2788, %v2788
    %v2791 = vsel %vm2515, %v1089, 4286644096
    %v2793 = vunpack.i.l.bf16 %v2791
    %v2794 = vunpack.i.h.bf16 %v2791
    %v2795 = vmax.f32 %v2793, %v2794
    %v2796 = vrot.slane %v2795, 4
    %v2797 = vmax.f32 %v2795, %v2796
    %v2798 = vrot.slane %v2797, 2
    %v2799 = vmax.f32 %v2797, %v2798
    %v2800 = vrot.slane %v2799, 1
    %v2801 = vmax.f32 %v2799, %v2800
    %v2802 = vpack.i.bf16 %v2801, %v2801
    %v2804 = vsel %vm2515, %v1091, 4286644096
    %v2806 = vunpack.i.l.bf16 %v2804
    %v2807 = vunpack.i.h.bf16 %v2804
    %v2808 = vmax.f32 %v2806, %v2807
    %v2809 = vrot.slane %v2808, 4
    %v2810 = vmax.f32 %v2808, %v2809
    %v2811 = vrot.slane %v2810, 2
    %v2812 = vmax.f32 %v2810, %v2811
    %v2813 = vrot.slane %v2812, 1
    %v2814 = vmax.f32 %v2812, %v2813
    %v2815 = vpack.i.bf16 %v2814, %v2814
    %v2817 = vsel %vm2515, %v1093, 4286644096
    %v2819 = vunpack.i.l.bf16 %v2817
    %v2820 = vunpack.i.h.bf16 %v2817
    %v2821 = vmax.f32 %v2819, %v2820
    %v2822 = vrot.slane %v2821, 4
    %v2823 = vmax.f32 %v2821, %v2822
    %v2824 = vrot.slane %v2823, 2
    %v2825 = vmax.f32 %v2823, %v2824
    %v2826 = vrot.slane %v2825, 1
    %v2827 = vmax.f32 %v2825, %v2826
    %v2828 = vpack.i.bf16 %v2827, %v2827
    %v2830 = vsel %vm2515, %v1117, 4286644096
    %v2832 = vunpack.i.l.bf16 %v2830
    %v2833 = vunpack.i.h.bf16 %v2830
    %v2834 = vmax.f32 %v2832, %v2833
    %v2835 = vrot.slane %v2834, 4
    %v2836 = vmax.f32 %v2834, %v2835
    %v2837 = vrot.slane %v2836, 2
    %v2838 = vmax.f32 %v2836, %v2837
    %v2839 = vrot.slane %v2838, 1
    %v2840 = vmax.f32 %v2838, %v2839
    %v2841 = vpack.i.bf16 %v2840, %v2840
    %v2843 = vsel %vm2515, %v1131, 4286644096
    %v2845 = vunpack.i.l.bf16 %v2843
    %v2846 = vunpack.i.h.bf16 %v2843
    %v2847 = vmax.f32 %v2845, %v2846
    %v2848 = vrot.slane %v2847, 4
    %v2849 = vmax.f32 %v2847, %v2848
    %v2850 = vrot.slane %v2849, 2
    %v2851 = vmax.f32 %v2849, %v2850
    %v2852 = vrot.slane %v2851, 1
    %v2853 = vmax.f32 %v2851, %v2852
    %v2854 = vpack.i.bf16 %v2853, %v2853
    %v2856 = vsel %vm2515, %v1139, 4286644096
    %v2858 = vunpack.i.l.bf16 %v2856
    %v2859 = vunpack.i.h.bf16 %v2856
    %v2860 = vmax.f32 %v2858, %v2859
    %v2861 = vrot.slane %v2860, 4
    %v2862 = vmax.f32 %v2860, %v2861
    %v2863 = vrot.slane %v2862, 2
    %v2864 = vmax.f32 %v2862, %v2863
    %v2865 = vrot.slane %v2864, 1
    %v2866 = vmax.f32 %v2864, %v2865
    %v2867 = vpack.i.bf16 %v2866, %v2866
    %v2869 = vsel %vm2515, %v1141, 4286644096
    %v2871 = vunpack.i.l.bf16 %v2869
    %v2872 = vunpack.i.h.bf16 %v2869
    %v2873 = vmax.f32 %v2871, %v2872
    %v2874 = vrot.slane %v2873, 4
    %v2875 = vmax.f32 %v2873, %v2874
    %v2876 = vrot.slane %v2875, 2
    %v2877 = vmax.f32 %v2875, %v2876
    %v2878 = vrot.slane %v2877, 1
    %v2879 = vmax.f32 %v2877, %v2878
    %v2880 = vpack.i.bf16 %v2879, %v2879
    %v2882 = vsel %vm2515, %v1124, 4286644096
    %v2884 = vunpack.i.l.bf16 %v2882
    %v2885 = vunpack.i.h.bf16 %v2882
    %v2886 = vmax.f32 %v2884, %v2885
    %v2887 = vrot.slane %v2886, 4
    %v2888 = vmax.f32 %v2886, %v2887
    %v2889 = vrot.slane %v2888, 2
    %v2890 = vmax.f32 %v2888, %v2889
    %v2891 = vrot.slane %v2890, 1
    %v2892 = vmax.f32 %v2890, %v2891
    %v2893 = vpack.i.bf16 %v2892, %v2892
    %v2895 = vsel %vm2515, %v1138, 4286644096
    %v2897 = vunpack.i.l.bf16 %v2895
    %v2898 = vunpack.i.h.bf16 %v2895
    %v2899 = vmax.f32 %v2897, %v2898
    %v2900 = vrot.slane %v2899, 4
    %v2901 = vmax.f32 %v2899, %v2900
    %v2902 = vrot.slane %v2901, 2
    %v2903 = vmax.f32 %v2901, %v2902
    %v2904 = vrot.slane %v2903, 1
    %v2905 = vmax.f32 %v2903, %v2904
    %v2906 = vpack.i.bf16 %v2905, %v2905
    %v2908 = vsel %vm2515, %v1140, 4286644096
    %v2910 = vunpack.i.l.bf16 %v2908
    %v2911 = vunpack.i.h.bf16 %v2908
    %v2912 = vmax.f32 %v2910, %v2911
    %v2913 = vrot.slane %v2912, 4
    %v2914 = vmax.f32 %v2912, %v2913
    %v2915 = vrot.slane %v2914, 2
    %v2916 = vmax.f32 %v2914, %v2915
    %v2917 = vrot.slane %v2916, 1
    %v2918 = vmax.f32 %v2916, %v2917
    %v2919 = vpack.i.bf16 %v2918, %v2918
    %v2921 = vsel %vm2515, %v1142, 4286644096
    %v2923 = vunpack.i.l.bf16 %v2921
    %v2924 = vunpack.i.h.bf16 %v2921
    %v2925 = vmax.f32 %v2923, %v2924
    %v2926 = vrot.slane %v2925, 4
    %v2927 = vmax.f32 %v2925, %v2926
    %v2928 = vrot.slane %v2927, 2
    %v2929 = vmax.f32 %v2927, %v2928
    %v2930 = vrot.slane %v2929, 1
    %v2931 = vmax.f32 %v2929, %v2930
    %v2932 = vpack.i.bf16 %v2931, %v2931
    %v2934 = vsel %vm2515, %v1166, 4286644096
    %v2936 = vunpack.i.l.bf16 %v2934
    %v2937 = vunpack.i.h.bf16 %v2934
    %v2938 = vmax.f32 %v2936, %v2937
    %v2939 = vrot.slane %v2938, 4
    %v2940 = vmax.f32 %v2938, %v2939
    %v2941 = vrot.slane %v2940, 2
    %v2942 = vmax.f32 %v2940, %v2941
    %v2943 = vrot.slane %v2942, 1
    %v2944 = vmax.f32 %v2942, %v2943
    %v2945 = vpack.i.bf16 %v2944, %v2944
    %v2947 = vsel %vm2515, %v1180, 4286644096
    %v2949 = vunpack.i.l.bf16 %v2947
    %v2950 = vunpack.i.h.bf16 %v2947
    %v2951 = vmax.f32 %v2949, %v2950
    %v2952 = vrot.slane %v2951, 4
    %v2953 = vmax.f32 %v2951, %v2952
    %v2954 = vrot.slane %v2953, 2
    %v2955 = vmax.f32 %v2953, %v2954
    %v2956 = vrot.slane %v2955, 1
    %v2957 = vmax.f32 %v2955, %v2956
    %v2958 = vpack.i.bf16 %v2957, %v2957
    %v2960 = vsel %vm2515, %v1188, 4286644096
    %v2962 = vunpack.i.l.bf16 %v2960
    %v2963 = vunpack.i.h.bf16 %v2960
    %v2964 = vmax.f32 %v2962, %v2963
    %v2965 = vrot.slane %v2964, 4
    %v2966 = vmax.f32 %v2964, %v2965
    %v2967 = vrot.slane %v2966, 2
    %v2968 = vmax.f32 %v2966, %v2967
    %v2969 = vrot.slane %v2968, 1
    %v2970 = vmax.f32 %v2968, %v2969
    %v2971 = vpack.i.bf16 %v2970, %v2970
    %v2973 = vsel %vm2515, %v1190, 4286644096
    %v2975 = vunpack.i.l.bf16 %v2973
    %v2976 = vunpack.i.h.bf16 %v2973
    %v2977 = vmax.f32 %v2975, %v2976
    %v2978 = vrot.slane %v2977, 4
    %v2979 = vmax.f32 %v2977, %v2978
    %v2980 = vrot.slane %v2979, 2
    %v2981 = vmax.f32 %v2979, %v2980
    %v2982 = vrot.slane %v2981, 1
    %v2983 = vmax.f32 %v2981, %v2982
    %v2984 = vpack.i.bf16 %v2983, %v2983
    %v2986 = vsel %vm2515, %v1173, 4286644096
    %v2988 = vunpack.i.l.bf16 %v2986
    %v2989 = vunpack.i.h.bf16 %v2986
    %v2990 = vmax.f32 %v2988, %v2989
    %v2991 = vrot.slane %v2990, 4
    %v2992 = vmax.f32 %v2990, %v2991
    %v2993 = vrot.slane %v2992, 2
    %v2994 = vmax.f32 %v2992, %v2993
    %v2995 = vrot.slane %v2994, 1
    %v2996 = vmax.f32 %v2994, %v2995
    %v2997 = vpack.i.bf16 %v2996, %v2996
    %v2999 = vsel %vm2515, %v1187, 4286644096
    %v3001 = vunpack.i.l.bf16 %v2999
    %v3002 = vunpack.i.h.bf16 %v2999
    %v3003 = vmax.f32 %v3001, %v3002
    %v3004 = vrot.slane %v3003, 4
    %v3005 = vmax.f32 %v3003, %v3004
    %v3006 = vrot.slane %v3005, 2
    %v3007 = vmax.f32 %v3005, %v3006
    %v3008 = vrot.slane %v3007, 1
    %v3009 = vmax.f32 %v3007, %v3008
    %v3010 = vpack.i.bf16 %v3009, %v3009
    %v3012 = vsel %vm2515, %v1189, 4286644096
    %v3014 = vunpack.i.l.bf16 %v3012
    %v3015 = vunpack.i.h.bf16 %v3012
    %v3016 = vmax.f32 %v3014, %v3015
    %v3017 = vrot.slane %v3016, 4
    %v3018 = vmax.f32 %v3016, %v3017
    %v3019 = vrot.slane %v3018, 2
    %v3020 = vmax.f32 %v3018, %v3019
    %v3021 = vrot.slane %v3020, 1
    %v3022 = vmax.f32 %v3020, %v3021
    %v3023 = vpack.i.bf16 %v3022, %v3022
    %v3025 = vsel %vm2515, %v1191, 4286644096
    %v3027 = vunpack.i.l.bf16 %v3025
    %v3028 = vunpack.i.h.bf16 %v3025
    %v3029 = vmax.f32 %v3027, %v3028
    %v3030 = vrot.slane %v3029, 4
    %v3031 = vmax.f32 %v3029, %v3030
    %v3032 = vrot.slane %v3031, 2
    %v3033 = vmax.f32 %v3031, %v3032
    %v3034 = vrot.slane %v3033, 1
    %v3035 = vmax.f32 %v3033, %v3034
    %v3036 = vpack.i.bf16 %v3035, %v3035
    %v3038 = vsel %vm2515, %v1215, 4286644096
    %v3040 = vunpack.i.l.bf16 %v3038
    %v3041 = vunpack.i.h.bf16 %v3038
    %v3042 = vmax.f32 %v3040, %v3041
    %v3043 = vrot.slane %v3042, 4
    %v3044 = vmax.f32 %v3042, %v3043
    %v3045 = vrot.slane %v3044, 2
    %v3046 = vmax.f32 %v3044, %v3045
    %v3047 = vrot.slane %v3046, 1
    %v3048 = vmax.f32 %v3046, %v3047
    %v3049 = vpack.i.bf16 %v3048, %v3048
    %v3051 = vsel %vm2515, %v1229, 4286644096
    %v3053 = vunpack.i.l.bf16 %v3051
    %v3054 = vunpack.i.h.bf16 %v3051
    %v3055 = vmax.f32 %v3053, %v3054
    %v3056 = vrot.slane %v3055, 4
    %v3057 = vmax.f32 %v3055, %v3056
    %v3058 = vrot.slane %v3057, 2
    %v3059 = vmax.f32 %v3057, %v3058
    %v3060 = vrot.slane %v3059, 1
    %v3061 = vmax.f32 %v3059, %v3060
    %v3062 = vpack.i.bf16 %v3061, %v3061
    %v3064 = vsel %vm2515, %v1237, 4286644096
    %v3066 = vunpack.i.l.bf16 %v3064
    %v3067 = vunpack.i.h.bf16 %v3064
    %v3068 = vmax.f32 %v3066, %v3067
    %v3069 = vrot.slane %v3068, 4
    %v3070 = vmax.f32 %v3068, %v3069
    %v3071 = vrot.slane %v3070, 2
    %v3072 = vmax.f32 %v3070, %v3071
    %v3073 = vrot.slane %v3072, 1
    %v3074 = vmax.f32 %v3072, %v3073
    %v3075 = vpack.i.bf16 %v3074, %v3074
    %v3077 = vsel %vm2515, %v1239, 4286644096
    %v3079 = vunpack.i.l.bf16 %v3077
    %v3080 = vunpack.i.h.bf16 %v3077
    %v3081 = vmax.f32 %v3079, %v3080
    %v3082 = vrot.slane %v3081, 4
    %v3083 = vmax.f32 %v3081, %v3082
    %v3084 = vrot.slane %v3083, 2
    %v3085 = vmax.f32 %v3083, %v3084
    %v3086 = vrot.slane %v3085, 1
    %v3087 = vmax.f32 %v3085, %v3086
    %v3088 = vpack.i.bf16 %v3087, %v3087
    %v3090 = vsel %vm2515, %v1222, 4286644096
    %v3092 = vunpack.i.l.bf16 %v3090
    %v3093 = vunpack.i.h.bf16 %v3090
    %v3094 = vmax.f32 %v3092, %v3093
    %v3095 = vrot.slane %v3094, 4
    %v3096 = vmax.f32 %v3094, %v3095
    %v3097 = vrot.slane %v3096, 2
    %v3098 = vmax.f32 %v3096, %v3097
    %v3099 = vrot.slane %v3098, 1
    %v3100 = vmax.f32 %v3098, %v3099
    %v3101 = vpack.i.bf16 %v3100, %v3100
    %v3103 = vsel %vm2515, %v1236, 4286644096
    %v3105 = vunpack.i.l.bf16 %v3103
    %v3106 = vunpack.i.h.bf16 %v3103
    %v3107 = vmax.f32 %v3105, %v3106
    %v3108 = vrot.slane %v3107, 4
    %v3109 = vmax.f32 %v3107, %v3108
    %v3110 = vrot.slane %v3109, 2
    %v3111 = vmax.f32 %v3109, %v3110
    %v3112 = vrot.slane %v3111, 1
    %v3113 = vmax.f32 %v3111, %v3112
    %v3114 = vpack.i.bf16 %v3113, %v3113
    %v3116 = vsel %vm2515, %v1238, 4286644096
    %v3118 = vunpack.i.l.bf16 %v3116
    %v3119 = vunpack.i.h.bf16 %v3116
    %v3120 = vmax.f32 %v3118, %v3119
    %v3121 = vrot.slane %v3120, 4
    %v3122 = vmax.f32 %v3120, %v3121
    %v3123 = vrot.slane %v3122, 2
    %v3124 = vmax.f32 %v3122, %v3123
    %v3125 = vrot.slane %v3124, 1
    %v3126 = vmax.f32 %v3124, %v3125
    %v3127 = vpack.i.bf16 %v3126, %v3126
    %v3129 = vsel %vm2515, %v1240, 4286644096
    %v3131 = vunpack.i.l.bf16 %v3129
    %v3132 = vunpack.i.h.bf16 %v3129
    %v3133 = vmax.f32 %v3131, %v3132
    %v3134 = vrot.slane %v3133, 4
    %v3135 = vmax.f32 %v3133, %v3134
    %v3136 = vrot.slane %v3135, 2
    %v3137 = vmax.f32 %v3135, %v3136
    %v3138 = vrot.slane %v3137, 1
    %v3139 = vmax.f32 %v3137, %v3138
    %v3140 = vpack.i.bf16 %v3139, %v3139
    %v3142 = vsel %vm2515, %v1264, 4286644096
    %v3144 = vunpack.i.l.bf16 %v3142
    %v3145 = vunpack.i.h.bf16 %v3142
    %v3146 = vmax.f32 %v3144, %v3145
    %v3147 = vrot.slane %v3146, 4
    %v3148 = vmax.f32 %v3146, %v3147
    %v3149 = vrot.slane %v3148, 2
    %v3150 = vmax.f32 %v3148, %v3149
    %v3151 = vrot.slane %v3150, 1
    %v3152 = vmax.f32 %v3150, %v3151
    %v3153 = vpack.i.bf16 %v3152, %v3152
    %v3155 = vsel %vm2515, %v1278, 4286644096
    %v3157 = vunpack.i.l.bf16 %v3155
    %v3158 = vunpack.i.h.bf16 %v3155
    %v3159 = vmax.f32 %v3157, %v3158
    %v3160 = vrot.slane %v3159, 4
    %v3161 = vmax.f32 %v3159, %v3160
    %v3162 = vrot.slane %v3161, 2
    %v3163 = vmax.f32 %v3161, %v3162
    %v3164 = vrot.slane %v3163, 1
    %v3165 = vmax.f32 %v3163, %v3164
    %v3166 = vpack.i.bf16 %v3165, %v3165
    %v3168 = vsel %vm2515, %v1286, 4286644096
    %v3170 = vunpack.i.l.bf16 %v3168
    %v3171 = vunpack.i.h.bf16 %v3168
    %v3172 = vmax.f32 %v3170, %v3171
    %v3173 = vrot.slane %v3172, 4
    %v3174 = vmax.f32 %v3172, %v3173
    %v3175 = vrot.slane %v3174, 2
    %v3176 = vmax.f32 %v3174, %v3175
    %v3177 = vrot.slane %v3176, 1
    %v3178 = vmax.f32 %v3176, %v3177
    %v3179 = vpack.i.bf16 %v3178, %v3178
    %v3181 = vsel %vm2515, %v1288, 4286644096
    %v3183 = vunpack.i.l.bf16 %v3181
    %v3184 = vunpack.i.h.bf16 %v3181
    %v3185 = vmax.f32 %v3183, %v3184
    %v3186 = vrot.slane %v3185, 4
    %v3187 = vmax.f32 %v3185, %v3186
    %v3188 = vrot.slane %v3187, 2
    %v3189 = vmax.f32 %v3187, %v3188
    %v3190 = vrot.slane %v3189, 1
    %v3191 = vmax.f32 %v3189, %v3190
    %v3192 = vpack.i.bf16 %v3191, %v3191
    %v3194 = vsel %vm2515, %v1271, 4286644096
    %v3196 = vunpack.i.l.bf16 %v3194
    %v3197 = vunpack.i.h.bf16 %v3194
    %v3198 = vmax.f32 %v3196, %v3197
    %v3199 = vrot.slane %v3198, 4
    %v3200 = vmax.f32 %v3198, %v3199
    %v3201 = vrot.slane %v3200, 2
    %v3202 = vmax.f32 %v3200, %v3201
    %v3203 = vrot.slane %v3202, 1
    %v3204 = vmax.f32 %v3202, %v3203
    %v3205 = vpack.i.bf16 %v3204, %v3204
    %v3207 = vsel %vm2515, %v1285, 4286644096
    %v3209 = vunpack.i.l.bf16 %v3207
    %v3210 = vunpack.i.h.bf16 %v3207
    %v3211 = vmax.f32 %v3209, %v3210
    %v3212 = vrot.slane %v3211, 4
    %v3213 = vmax.f32 %v3211, %v3212
    %v3214 = vrot.slane %v3213, 2
    %v3215 = vmax.f32 %v3213, %v3214
    %v3216 = vrot.slane %v3215, 1
    %v3217 = vmax.f32 %v3215, %v3216
    %v3218 = vpack.i.bf16 %v3217, %v3217
    %v3220 = vsel %vm2515, %v1287, 4286644096
    %v3222 = vunpack.i.l.bf16 %v3220
    %v3223 = vunpack.i.h.bf16 %v3220
    %v3224 = vmax.f32 %v3222, %v3223
    %v3225 = vrot.slane %v3224, 4
    %v3226 = vmax.f32 %v3224, %v3225
    %v3227 = vrot.slane %v3226, 2
    %v3228 = vmax.f32 %v3226, %v3227
    %v3229 = vrot.slane %v3228, 1
    %v3230 = vmax.f32 %v3228, %v3229
    %v3231 = vpack.i.bf16 %v3230, %v3230
    %v3233 = vsel %vm2515, %v1289, 4286644096
    %v3235 = vunpack.i.l.bf16 %v3233
    %v3236 = vunpack.i.h.bf16 %v3233
    %v3237 = vmax.f32 %v3235, %v3236
    %v3238 = vrot.slane %v3237, 4
    %v3239 = vmax.f32 %v3237, %v3238
    %v3240 = vrot.slane %v3239, 2
    %v3241 = vmax.f32 %v3239, %v3240
    %v3242 = vrot.slane %v3241, 1
    %v3243 = vmax.f32 %v3241, %v3242
    %v3244 = vpack.i.bf16 %v3243, %v3243
    %v3246 = vsel %vm2515, %v1313, 4286644096
    %v3248 = vunpack.i.l.bf16 %v3246
    %v3249 = vunpack.i.h.bf16 %v3246
    %v3250 = vmax.f32 %v3248, %v3249
    %v3251 = vrot.slane %v3250, 4
    %v3252 = vmax.f32 %v3250, %v3251
    %v3253 = vrot.slane %v3252, 2
    %v3254 = vmax.f32 %v3252, %v3253
    %v3255 = vrot.slane %v3254, 1
    %v3256 = vmax.f32 %v3254, %v3255
    %v3257 = vpack.i.bf16 %v3256, %v3256
    %v3259 = vsel %vm2515, %v1327, 4286644096
    %v3261 = vunpack.i.l.bf16 %v3259
    %v3262 = vunpack.i.h.bf16 %v3259
    %v3263 = vmax.f32 %v3261, %v3262
    %v3264 = vrot.slane %v3263, 4
    %v3265 = vmax.f32 %v3263, %v3264
    %v3266 = vrot.slane %v3265, 2
    %v3267 = vmax.f32 %v3265, %v3266
    %v3268 = vrot.slane %v3267, 1
    %v3269 = vmax.f32 %v3267, %v3268
    %v3270 = vpack.i.bf16 %v3269, %v3269
    %v3272 = vsel %vm2515, %v1335, 4286644096
    %v3274 = vunpack.i.l.bf16 %v3272
    %v3275 = vunpack.i.h.bf16 %v3272
    %v3276 = vmax.f32 %v3274, %v3275
    %v3277 = vrot.slane %v3276, 4
    %v3278 = vmax.f32 %v3276, %v3277
    %v3279 = vrot.slane %v3278, 2
    %v3280 = vmax.f32 %v3278, %v3279
    %v3281 = vrot.slane %v3280, 1
    %v3282 = vmax.f32 %v3280, %v3281
    %v3283 = vpack.i.bf16 %v3282, %v3282
    %v3285 = vsel %vm2515, %v1337, 4286644096
    %v3287 = vunpack.i.l.bf16 %v3285
    %v3288 = vunpack.i.h.bf16 %v3285
    %v3289 = vmax.f32 %v3287, %v3288
    %v3290 = vrot.slane %v3289, 4
    %v3291 = vmax.f32 %v3289, %v3290
    %v3292 = vrot.slane %v3291, 2
    %v3293 = vmax.f32 %v3291, %v3292
    %v3294 = vrot.slane %v3293, 1
    %v3295 = vmax.f32 %v3293, %v3294
    %v3296 = vpack.i.bf16 %v3295, %v3295
    %v3298 = vsel %vm2515, %v1320, 4286644096
    %v3300 = vunpack.i.l.bf16 %v3298
    %v3301 = vunpack.i.h.bf16 %v3298
    %v3302 = vmax.f32 %v3300, %v3301
    %v3303 = vrot.slane %v3302, 4
    %v3304 = vmax.f32 %v3302, %v3303
    %v3305 = vrot.slane %v3304, 2
    %v3306 = vmax.f32 %v3304, %v3305
    %v3307 = vrot.slane %v3306, 1
    %v3308 = vmax.f32 %v3306, %v3307
    %v3309 = vpack.i.bf16 %v3308, %v3308
    %v3311 = vsel %vm2515, %v1334, 4286644096
    %v3313 = vunpack.i.l.bf16 %v3311
    %v3314 = vunpack.i.h.bf16 %v3311
    %v3315 = vmax.f32 %v3313, %v3314
    %v3316 = vrot.slane %v3315, 4
    %v3317 = vmax.f32 %v3315, %v3316
    %v3318 = vrot.slane %v3317, 2
    %v3319 = vmax.f32 %v3317, %v3318
    %v3320 = vrot.slane %v3319, 1
    %v3321 = vmax.f32 %v3319, %v3320
    %v3322 = vpack.i.bf16 %v3321, %v3321
    %v3324 = vsel %vm2515, %v1336, 4286644096
    %v3326 = vunpack.i.l.bf16 %v3324
    %v3327 = vunpack.i.h.bf16 %v3324
    %v3328 = vmax.f32 %v3326, %v3327
    %v3329 = vrot.slane %v3328, 4
    %v3330 = vmax.f32 %v3328, %v3329
    %v3331 = vrot.slane %v3330, 2
    %v3332 = vmax.f32 %v3330, %v3331
    %v3333 = vrot.slane %v3332, 1
    %v3334 = vmax.f32 %v3332, %v3333
    %v3335 = vpack.i.bf16 %v3334, %v3334
    %v3337 = vsel %vm2515, %v1338, 4286644096
    %v3339 = vunpack.i.l.bf16 %v3337
    %v3340 = vunpack.i.h.bf16 %v3337
    %v3341 = vmax.f32 %v3339, %v3340
    %v3342 = vrot.slane %v3341, 4
    %v3343 = vmax.f32 %v3341, %v3342
    %v3344 = vrot.slane %v3343, 2
    %v3345 = vmax.f32 %v3343, %v3344
    %v3346 = vrot.slane %v3345, 1
    %v3347 = vmax.f32 %v3345, %v3346
    %v3348 = vpack.i.bf16 %v3347, %v3347
    %v3350 = vsel %vm2515, %v1362, 4286644096
    %v3352 = vunpack.i.l.bf16 %v3350
    %v3353 = vunpack.i.h.bf16 %v3350
    %v3354 = vmax.f32 %v3352, %v3353
    %v3355 = vrot.slane %v3354, 4
    %v3356 = vmax.f32 %v3354, %v3355
    %v3357 = vrot.slane %v3356, 2
    %v3358 = vmax.f32 %v3356, %v3357
    %v3359 = vrot.slane %v3358, 1
    %v3360 = vmax.f32 %v3358, %v3359
    %v3361 = vpack.i.bf16 %v3360, %v3360
    %v3363 = vsel %vm2515, %v1376, 4286644096
    %v3365 = vunpack.i.l.bf16 %v3363
    %v3366 = vunpack.i.h.bf16 %v3363
    %v3367 = vmax.f32 %v3365, %v3366
    %v3368 = vrot.slane %v3367, 4
    %v3369 = vmax.f32 %v3367, %v3368
    %v3370 = vrot.slane %v3369, 2
    %v3371 = vmax.f32 %v3369, %v3370
    %v3372 = vrot.slane %v3371, 1
    %v3373 = vmax.f32 %v3371, %v3372
    %v3374 = vpack.i.bf16 %v3373, %v3373
    %v3376 = vsel %vm2515, %v1384, 4286644096
    %v3378 = vunpack.i.l.bf16 %v3376
    %v3379 = vunpack.i.h.bf16 %v3376
    %v3380 = vmax.f32 %v3378, %v3379
    %v3381 = vrot.slane %v3380, 4
    %v3382 = vmax.f32 %v3380, %v3381
    %v3383 = vrot.slane %v3382, 2
    %v3384 = vmax.f32 %v3382, %v3383
    %v3385 = vrot.slane %v3384, 1
    %v3386 = vmax.f32 %v3384, %v3385
    %v3387 = vpack.i.bf16 %v3386, %v3386
    %v3389 = vsel %vm2515, %v1386, 4286644096
    %v3391 = vunpack.i.l.bf16 %v3389
    %v3392 = vunpack.i.h.bf16 %v3389
    %v3393 = vmax.f32 %v3391, %v3392
    %v3394 = vrot.slane %v3393, 4
    %v3395 = vmax.f32 %v3393, %v3394
    %v3396 = vrot.slane %v3395, 2
    %v3397 = vmax.f32 %v3395, %v3396
    %v3398 = vrot.slane %v3397, 1
    %v3399 = vmax.f32 %v3397, %v3398
    %v3400 = vpack.i.bf16 %v3399, %v3399
    %v3402 = vsel %vm2515, %v1369, 4286644096
    %v3404 = vunpack.i.l.bf16 %v3402
    %v3405 = vunpack.i.h.bf16 %v3402
    %v3406 = vmax.f32 %v3404, %v3405
    %v3407 = vrot.slane %v3406, 4
    %v3408 = vmax.f32 %v3406, %v3407
    %v3409 = vrot.slane %v3408, 2
    %v3410 = vmax.f32 %v3408, %v3409
    %v3411 = vrot.slane %v3410, 1
    %v3412 = vmax.f32 %v3410, %v3411
    %v3413 = vpack.i.bf16 %v3412, %v3412
    %v3415 = vsel %vm2515, %v1383, 4286644096
    %v3417 = vunpack.i.l.bf16 %v3415
    %v3418 = vunpack.i.h.bf16 %v3415
    %v3419 = vmax.f32 %v3417, %v3418
    %v3420 = vrot.slane %v3419, 4
    %v3421 = vmax.f32 %v3419, %v3420
    %v3422 = vrot.slane %v3421, 2
    %v3423 = vmax.f32 %v3421, %v3422
    %v3424 = vrot.slane %v3423, 1
    %v3425 = vmax.f32 %v3423, %v3424
    %v3426 = vpack.i.bf16 %v3425, %v3425
    %v3428 = vsel %vm2515, %v1385, 4286644096
    %v3430 = vunpack.i.l.bf16 %v3428
    %v3431 = vunpack.i.h.bf16 %v3428
    %v3432 = vmax.f32 %v3430, %v3431
    %v3433 = vrot.slane %v3432, 4
    %v3434 = vmax.f32 %v3432, %v3433
    %v3435 = vrot.slane %v3434, 2
    %v3436 = vmax.f32 %v3434, %v3435
    %v3437 = vrot.slane %v3436, 1
    %v3438 = vmax.f32 %v3436, %v3437
    %v3439 = vpack.i.bf16 %v3438, %v3438
    %v3441 = vsel %vm2515, %v1387, 4286644096
    %v3443 = vunpack.i.l.bf16 %v3441
    %v3444 = vunpack.i.h.bf16 %v3441
    %v3445 = vmax.f32 %v3443, %v3444
    %v3446 = vrot.slane %v3445, 4
    %v3447 = vmax.f32 %v3445, %v3446
    %v3448 = vrot.slane %v3447, 2
    %v3449 = vmax.f32 %v3447, %v3448
    %v3450 = vrot.slane %v3449, 1
    %v3451 = vmax.f32 %v3449, %v3450
    %v3452 = vpack.i.bf16 %v3451, %v3451
    %v3454 = vsel %vm2515, %v1411, 4286644096
    %v3456 = vunpack.i.l.bf16 %v3454
    %v3457 = vunpack.i.h.bf16 %v3454
    %v3458 = vmax.f32 %v3456, %v3457
    %v3459 = vrot.slane %v3458, 4
    %v3460 = vmax.f32 %v3458, %v3459
    %v3461 = vrot.slane %v3460, 2
    %v3462 = vmax.f32 %v3460, %v3461
    %v3463 = vrot.slane %v3462, 1
    %v3464 = vmax.f32 %v3462, %v3463
    %v3465 = vpack.i.bf16 %v3464, %v3464
    %v3467 = vsel %vm2515, %v1425, 4286644096
    %v3469 = vunpack.i.l.bf16 %v3467
    %v3470 = vunpack.i.h.bf16 %v3467
    %v3471 = vmax.f32 %v3469, %v3470
    %v3472 = vrot.slane %v3471, 4
    %v3473 = vmax.f32 %v3471, %v3472
    %v3474 = vrot.slane %v3473, 2
    %v3475 = vmax.f32 %v3473, %v3474
    %v3476 = vrot.slane %v3475, 1
    %v3477 = vmax.f32 %v3475, %v3476
    %v3478 = vpack.i.bf16 %v3477, %v3477
    %v3480 = vsel %vm2515, %v1433, 4286644096
    %v3482 = vunpack.i.l.bf16 %v3480
    %v3483 = vunpack.i.h.bf16 %v3480
    %v3484 = vmax.f32 %v3482, %v3483
    %v3485 = vrot.slane %v3484, 4
    %v3486 = vmax.f32 %v3484, %v3485
    %v3487 = vrot.slane %v3486, 2
    %v3488 = vmax.f32 %v3486, %v3487
    %v3489 = vrot.slane %v3488, 1
    %v3490 = vmax.f32 %v3488, %v3489
    %v3491 = vpack.i.bf16 %v3490, %v3490
    %v3493 = vsel %vm2515, %v1435, 4286644096
    %v3495 = vunpack.i.l.bf16 %v3493
    %v3496 = vunpack.i.h.bf16 %v3493
    %v3497 = vmax.f32 %v3495, %v3496
    %v3498 = vrot.slane %v3497, 4
    %v3499 = vmax.f32 %v3497, %v3498
    %v3500 = vrot.slane %v3499, 2
    %v3501 = vmax.f32 %v3499, %v3500
    %v3502 = vrot.slane %v3501, 1
    %v3503 = vmax.f32 %v3501, %v3502
    %v3504 = vpack.i.bf16 %v3503, %v3503
    %v3506 = vsel %vm2515, %v1418, 4286644096
    %v3508 = vunpack.i.l.bf16 %v3506
    %v3509 = vunpack.i.h.bf16 %v3506
    %v3510 = vmax.f32 %v3508, %v3509
    %v3511 = vrot.slane %v3510, 4
    %v3512 = vmax.f32 %v3510, %v3511
    %v3513 = vrot.slane %v3512, 2
    %v3514 = vmax.f32 %v3512, %v3513
    %v3515 = vrot.slane %v3514, 1
    %v3516 = vmax.f32 %v3514, %v3515
    %v3517 = vpack.i.bf16 %v3516, %v3516
    %v3519 = vsel %vm2515, %v1432, 4286644096
    %v3521 = vunpack.i.l.bf16 %v3519
    %v3522 = vunpack.i.h.bf16 %v3519
    %v3523 = vmax.f32 %v3521, %v3522
    %v3524 = vrot.slane %v3523, 4
    %v3525 = vmax.f32 %v3523, %v3524
    %v3526 = vrot.slane %v3525, 2
    %v3527 = vmax.f32 %v3525, %v3526
    %v3528 = vrot.slane %v3527, 1
    %v3529 = vmax.f32 %v3527, %v3528
    %v3530 = vpack.i.bf16 %v3529, %v3529
    %v3532 = vsel %vm2515, %v1434, 4286644096
    %v3534 = vunpack.i.l.bf16 %v3532
    %v3535 = vunpack.i.h.bf16 %v3532
    %v3536 = vmax.f32 %v3534, %v3535
    %v3537 = vrot.slane %v3536, 4
    %v3538 = vmax.f32 %v3536, %v3537
    %v3539 = vrot.slane %v3538, 2
    %v3540 = vmax.f32 %v3538, %v3539
    %v3541 = vrot.slane %v3540, 1
    %v3542 = vmax.f32 %v3540, %v3541
    %v3543 = vpack.i.bf16 %v3542, %v3542
    %v3545 = vsel %vm2515, %v1436, 4286644096
    %v3547 = vunpack.i.l.bf16 %v3545
    %v3548 = vunpack.i.h.bf16 %v3545
    %v3549 = vmax.f32 %v3547, %v3548
    %v3550 = vrot.slane %v3549, 4
    %v3551 = vmax.f32 %v3549, %v3550
    %v3552 = vrot.slane %v3551, 2
    %v3553 = vmax.f32 %v3551, %v3552
    %v3554 = vrot.slane %v3553, 1
    %v3555 = vmax.f32 %v3553, %v3554
    %v3556 = vpack.i.bf16 %v3555, %v3555
    %v3558 = vsel %vm2515, %v1460, 4286644096
    %v3560 = vunpack.i.l.bf16 %v3558
    %v3561 = vunpack.i.h.bf16 %v3558
    %v3562 = vmax.f32 %v3560, %v3561
    %v3563 = vrot.slane %v3562, 4
    %v3564 = vmax.f32 %v3562, %v3563
    %v3565 = vrot.slane %v3564, 2
    %v3566 = vmax.f32 %v3564, %v3565
    %v3567 = vrot.slane %v3566, 1
    %v3568 = vmax.f32 %v3566, %v3567
    %v3569 = vpack.i.bf16 %v3568, %v3568
    %v3571 = vsel %vm2515, %v1474, 4286644096
    %v3573 = vunpack.i.l.bf16 %v3571
    %v3574 = vunpack.i.h.bf16 %v3571
    %v3575 = vmax.f32 %v3573, %v3574
    %v3576 = vrot.slane %v3575, 4
    %v3577 = vmax.f32 %v3575, %v3576
    %v3578 = vrot.slane %v3577, 2
    %v3579 = vmax.f32 %v3577, %v3578
    %v3580 = vrot.slane %v3579, 1
    %v3581 = vmax.f32 %v3579, %v3580
    %v3582 = vpack.i.bf16 %v3581, %v3581
    %v3584 = vsel %vm2515, %v1482, 4286644096
    %v3586 = vunpack.i.l.bf16 %v3584
    %v3587 = vunpack.i.h.bf16 %v3584
    %v3588 = vmax.f32 %v3586, %v3587
    %v3589 = vrot.slane %v3588, 4
    %v3590 = vmax.f32 %v3588, %v3589
    %v3591 = vrot.slane %v3590, 2
    %v3592 = vmax.f32 %v3590, %v3591
    %v3593 = vrot.slane %v3592, 1
    %v3594 = vmax.f32 %v3592, %v3593
    %v3595 = vpack.i.bf16 %v3594, %v3594
    %v3597 = vsel %vm2515, %v1484, 4286644096
    %v3599 = vunpack.i.l.bf16 %v3597
    %v3600 = vunpack.i.h.bf16 %v3597
    %v3601 = vmax.f32 %v3599, %v3600
    %v3602 = vrot.slane %v3601, 4
    %v3603 = vmax.f32 %v3601, %v3602
    %v3604 = vrot.slane %v3603, 2
    %v3605 = vmax.f32 %v3603, %v3604
    %v3606 = vrot.slane %v3605, 1
    %v3607 = vmax.f32 %v3605, %v3606
    %v3608 = vpack.i.bf16 %v3607, %v3607
    %v3610 = vsel %vm2515, %v1467, 4286644096
    %v3612 = vunpack.i.l.bf16 %v3610
    %v3613 = vunpack.i.h.bf16 %v3610
    %v3614 = vmax.f32 %v3612, %v3613
    %v3615 = vrot.slane %v3614, 4
    %v3616 = vmax.f32 %v3614, %v3615
    %v3617 = vrot.slane %v3616, 2
    %v3618 = vmax.f32 %v3616, %v3617
    %v3619 = vrot.slane %v3618, 1
    %v3620 = vmax.f32 %v3618, %v3619
    %v3621 = vpack.i.bf16 %v3620, %v3620
    %v3623 = vsel %vm2515, %v1481, 4286644096
    %v3625 = vunpack.i.l.bf16 %v3623
    %v3626 = vunpack.i.h.bf16 %v3623
    %v3627 = vmax.f32 %v3625, %v3626
    %v3628 = vrot.slane %v3627, 4
    %v3629 = vmax.f32 %v3627, %v3628
    %v3630 = vrot.slane %v3629, 2
    %v3631 = vmax.f32 %v3629, %v3630
    %v3632 = vrot.slane %v3631, 1
    %v3633 = vmax.f32 %v3631, %v3632
    %v3634 = vpack.i.bf16 %v3633, %v3633
    %v3636 = vsel %vm2515, %v1483, 4286644096
    %v3638 = vunpack.i.l.bf16 %v3636
    %v3639 = vunpack.i.h.bf16 %v3636
    %v3640 = vmax.f32 %v3638, %v3639
    %v3641 = vrot.slane %v3640, 4
    %v3642 = vmax.f32 %v3640, %v3641
    %v3643 = vrot.slane %v3642, 2
    %v3644 = vmax.f32 %v3642, %v3643
    %v3645 = vrot.slane %v3644, 1
    %v3646 = vmax.f32 %v3644, %v3645
    %v3647 = vpack.i.bf16 %v3646, %v3646
    %v3649 = vsel %vm2515, %v1485, 4286644096
    %v3651 = vunpack.i.l.bf16 %v3649
    %v3652 = vunpack.i.h.bf16 %v3649
    %v3653 = vmax.f32 %v3651, %v3652
    %v3654 = vrot.slane %v3653, 4
    %v3655 = vmax.f32 %v3653, %v3654
    %v3656 = vrot.slane %v3655, 2
    %v3657 = vmax.f32 %v3655, %v3656
    %v3658 = vrot.slane %v3657, 1
    %v3659 = vmax.f32 %v3657, %v3658
    %v3660 = vpack.i.bf16 %v3659, %v3659
    %v3662 = vsel %vm2515, %v1509, 4286644096
    %v3664 = vunpack.i.l.bf16 %v3662
    %v3665 = vunpack.i.h.bf16 %v3662
    %v3666 = vmax.f32 %v3664, %v3665
    %v3667 = vrot.slane %v3666, 4
    %v3668 = vmax.f32 %v3666, %v3667
    %v3669 = vrot.slane %v3668, 2
    %v3670 = vmax.f32 %v3668, %v3669
    %v3671 = vrot.slane %v3670, 1
    %v3672 = vmax.f32 %v3670, %v3671
    %v3673 = vpack.i.bf16 %v3672, %v3672
    %v3675 = vsel %vm2515, %v1523, 4286644096
    %v3677 = vunpack.i.l.bf16 %v3675
    %v3678 = vunpack.i.h.bf16 %v3675
    %v3679 = vmax.f32 %v3677, %v3678
    %v3680 = vrot.slane %v3679, 4
    %v3681 = vmax.f32 %v3679, %v3680
    %v3682 = vrot.slane %v3681, 2
    %v3683 = vmax.f32 %v3681, %v3682
    %v3684 = vrot.slane %v3683, 1
    %v3685 = vmax.f32 %v3683, %v3684
    %v3686 = vpack.i.bf16 %v3685, %v3685
    %v3688 = vsel %vm2515, %v1531, 4286644096
    %v3690 = vunpack.i.l.bf16 %v3688
    %v3691 = vunpack.i.h.bf16 %v3688
    %v3692 = vmax.f32 %v3690, %v3691
    %v3693 = vrot.slane %v3692, 4
    %v3694 = vmax.f32 %v3692, %v3693
    %v3695 = vrot.slane %v3694, 2
    %v3696 = vmax.f32 %v3694, %v3695
    %v3697 = vrot.slane %v3696, 1
    %v3698 = vmax.f32 %v3696, %v3697
    %v3699 = vpack.i.bf16 %v3698, %v3698
    %v3701 = vsel %vm2515, %v1533, 4286644096
    %v3703 = vunpack.i.l.bf16 %v3701
    %v3704 = vunpack.i.h.bf16 %v3701
    %v3705 = vmax.f32 %v3703, %v3704
    %v3706 = vrot.slane %v3705, 4
    %v3707 = vmax.f32 %v3705, %v3706
    %v3708 = vrot.slane %v3707, 2
    %v3709 = vmax.f32 %v3707, %v3708
    %v3710 = vrot.slane %v3709, 1
    %v3711 = vmax.f32 %v3709, %v3710
    %v3712 = vpack.i.bf16 %v3711, %v3711
    %v3714 = vsel %vm2515, %v1516, 4286644096
    %v3716 = vunpack.i.l.bf16 %v3714
    %v3717 = vunpack.i.h.bf16 %v3714
    %v3718 = vmax.f32 %v3716, %v3717
    %v3719 = vrot.slane %v3718, 4
    %v3720 = vmax.f32 %v3718, %v3719
    %v3721 = vrot.slane %v3720, 2
    %v3722 = vmax.f32 %v3720, %v3721
    %v3723 = vrot.slane %v3722, 1
    %v3724 = vmax.f32 %v3722, %v3723
    %v3725 = vpack.i.bf16 %v3724, %v3724
    %v3727 = vsel %vm2515, %v1530, 4286644096
    %v3729 = vunpack.i.l.bf16 %v3727
    %v3730 = vunpack.i.h.bf16 %v3727
    %v3731 = vmax.f32 %v3729, %v3730
    %v3732 = vrot.slane %v3731, 4
    %v3733 = vmax.f32 %v3731, %v3732
    %v3734 = vrot.slane %v3733, 2
    %v3735 = vmax.f32 %v3733, %v3734
    %v3736 = vrot.slane %v3735, 1
    %v3737 = vmax.f32 %v3735, %v3736
    %v3738 = vpack.i.bf16 %v3737, %v3737
    %v3740 = vsel %vm2515, %v1532, 4286644096
    %v3742 = vunpack.i.l.bf16 %v3740
    %v3743 = vunpack.i.h.bf16 %v3740
    %v3744 = vmax.f32 %v3742, %v3743
    %v3745 = vrot.slane %v3744, 4
    %v3746 = vmax.f32 %v3744, %v3745
    %v3747 = vrot.slane %v3746, 2
    %v3748 = vmax.f32 %v3746, %v3747
    %v3749 = vrot.slane %v3748, 1
    %v3750 = vmax.f32 %v3748, %v3749
    %v3751 = vpack.i.bf16 %v3750, %v3750
    %v3753 = vsel %vm2515, %v1534, 4286644096
    %v3755 = vunpack.i.l.bf16 %v3753
    %v3756 = vunpack.i.h.bf16 %v3753
    %v3757 = vmax.f32 %v3755, %v3756
    %v3758 = vrot.slane %v3757, 4
    %v3759 = vmax.f32 %v3757, %v3758
    %v3760 = vrot.slane %v3759, 2
    %v3761 = vmax.f32 %v3759, %v3760
    %v3762 = vrot.slane %v3761, 1
    %v3763 = vmax.f32 %v3761, %v3762
    %v3764 = vpack.i.bf16 %v3763, %v3763
    %v3766 = vsel %vm2515, %v1558, 4286644096
    %v3768 = vunpack.i.l.bf16 %v3766
    %v3769 = vunpack.i.h.bf16 %v3766
    %v3770 = vmax.f32 %v3768, %v3769
    %v3771 = vrot.slane %v3770, 4
    %v3772 = vmax.f32 %v3770, %v3771
    %v3773 = vrot.slane %v3772, 2
    %v3774 = vmax.f32 %v3772, %v3773
    %v3775 = vrot.slane %v3774, 1
    %v3776 = vmax.f32 %v3774, %v3775
    %v3777 = vpack.i.bf16 %v3776, %v3776
    %v3779 = vsel %vm2515, %v1572, 4286644096
    %v3781 = vunpack.i.l.bf16 %v3779
    %v3782 = vunpack.i.h.bf16 %v3779
    %v3783 = vmax.f32 %v3781, %v3782
    %v3784 = vrot.slane %v3783, 4
    %v3785 = vmax.f32 %v3783, %v3784
    %v3786 = vrot.slane %v3785, 2
    %v3787 = vmax.f32 %v3785, %v3786
    %v3788 = vrot.slane %v3787, 1
    %v3789 = vmax.f32 %v3787, %v3788
    %v3790 = vpack.i.bf16 %v3789, %v3789
    %v3792 = vsel %vm2515, %v1580, 4286644096
    %v3794 = vunpack.i.l.bf16 %v3792
    %v3795 = vunpack.i.h.bf16 %v3792
    %v3796 = vmax.f32 %v3794, %v3795
    %v3797 = vrot.slane %v3796, 4
    %v3798 = vmax.f32 %v3796, %v3797
    %v3799 = vrot.slane %v3798, 2
    %v3800 = vmax.f32 %v3798, %v3799
    %v3801 = vrot.slane %v3800, 1
    %v3802 = vmax.f32 %v3800, %v3801
    %v3803 = vpack.i.bf16 %v3802, %v3802
    %v3805 = vsel %vm2515, %v1582, 4286644096
    %v3807 = vunpack.i.l.bf16 %v3805
    %v3808 = vunpack.i.h.bf16 %v3805
    %v3809 = vmax.f32 %v3807, %v3808
    %v3810 = vrot.slane %v3809, 4
    %v3811 = vmax.f32 %v3809, %v3810
    %v3812 = vrot.slane %v3811, 2
    %v3813 = vmax.f32 %v3811, %v3812
    %v3814 = vrot.slane %v3813, 1
    %v3815 = vmax.f32 %v3813, %v3814
    %v3816 = vpack.i.bf16 %v3815, %v3815
    %v3818 = vsel %vm2515, %v1565, 4286644096
    %v3820 = vunpack.i.l.bf16 %v3818
    %v3821 = vunpack.i.h.bf16 %v3818
    %v3822 = vmax.f32 %v3820, %v3821
    %v3823 = vrot.slane %v3822, 4
    %v3824 = vmax.f32 %v3822, %v3823
    %v3825 = vrot.slane %v3824, 2
    %v3826 = vmax.f32 %v3824, %v3825
    %v3827 = vrot.slane %v3826, 1
    %v3828 = vmax.f32 %v3826, %v3827
    %v3829 = vpack.i.bf16 %v3828, %v3828
    %v3831 = vsel %vm2515, %v1579, 4286644096
    %v3833 = vunpack.i.l.bf16 %v3831
    %v3834 = vunpack.i.h.bf16 %v3831
    %v3835 = vmax.f32 %v3833, %v3834
    %v3836 = vrot.slane %v3835, 4
    %v3837 = vmax.f32 %v3835, %v3836
    %v3838 = vrot.slane %v3837, 2
    %v3839 = vmax.f32 %v3837, %v3838
    %v3840 = vrot.slane %v3839, 1
    %v3841 = vmax.f32 %v3839, %v3840
    %v3842 = vpack.i.bf16 %v3841, %v3841
    %v3844 = vsel %vm2515, %v1581, 4286644096
    %v3846 = vunpack.i.l.bf16 %v3844
    %v3847 = vunpack.i.h.bf16 %v3844
    %v3848 = vmax.f32 %v3846, %v3847
    %v3849 = vrot.slane %v3848, 4
    %v3850 = vmax.f32 %v3848, %v3849
    %v3851 = vrot.slane %v3850, 2
    %v3852 = vmax.f32 %v3850, %v3851
    %v3853 = vrot.slane %v3852, 1
    %v3854 = vmax.f32 %v3852, %v3853
    %v3855 = vpack.i.bf16 %v3854, %v3854
    %v3857 = vsel %vm2515, %v1583, 4286644096
    %v3859 = vunpack.i.l.bf16 %v3857
    %v3860 = vunpack.i.h.bf16 %v3857
    %v3861 = vmax.f32 %v3859, %v3860
    %v3862 = vrot.slane %v3861, 4
    %v3863 = vmax.f32 %v3861, %v3862
    %v3864 = vrot.slane %v3863, 2
    %v3865 = vmax.f32 %v3863, %v3864
    %v3866 = vrot.slane %v3865, 1
    %v3867 = vmax.f32 %v3865, %v3866
    %v3868 = vpack.i.bf16 %v3867, %v3867
    %v3870 = vsel %vm2515, %v1607, 4286644096
    %v3872 = vunpack.i.l.bf16 %v3870
    %v3873 = vunpack.i.h.bf16 %v3870
    %v3874 = vmax.f32 %v3872, %v3873
    %v3875 = vrot.slane %v3874, 4
    %v3876 = vmax.f32 %v3874, %v3875
    %v3877 = vrot.slane %v3876, 2
    %v3878 = vmax.f32 %v3876, %v3877
    %v3879 = vrot.slane %v3878, 1
    %v3880 = vmax.f32 %v3878, %v3879
    %v3881 = vpack.i.bf16 %v3880, %v3880
    %v3883 = vsel %vm2515, %v1621, 4286644096
    %v3885 = vunpack.i.l.bf16 %v3883
    %v3886 = vunpack.i.h.bf16 %v3883
    %v3887 = vmax.f32 %v3885, %v3886
    %v3888 = vrot.slane %v3887, 4
    %v3889 = vmax.f32 %v3887, %v3888
    %v3890 = vrot.slane %v3889, 2
    %v3891 = vmax.f32 %v3889, %v3890
    %v3892 = vrot.slane %v3891, 1
    %v3893 = vmax.f32 %v3891, %v3892
    %v3894 = vpack.i.bf16 %v3893, %v3893
    %v3896 = vsel %vm2515, %v1629, 4286644096
    %v3898 = vunpack.i.l.bf16 %v3896
    %v3899 = vunpack.i.h.bf16 %v3896
    %v3900 = vmax.f32 %v3898, %v3899
    %v3901 = vrot.slane %v3900, 4
    %v3902 = vmax.f32 %v3900, %v3901
    %v3903 = vrot.slane %v3902, 2
    %v3904 = vmax.f32 %v3902, %v3903
    %v3905 = vrot.slane %v3904, 1
    %v3906 = vmax.f32 %v3904, %v3905
    %v3907 = vpack.i.bf16 %v3906, %v3906
    %v3909 = vsel %vm2515, %v1631, 4286644096
    %v3911 = vunpack.i.l.bf16 %v3909
    %v3912 = vunpack.i.h.bf16 %v3909
    %v3913 = vmax.f32 %v3911, %v3912
    %v3914 = vrot.slane %v3913, 4
    %v3915 = vmax.f32 %v3913, %v3914
    %v3916 = vrot.slane %v3915, 2
    %v3917 = vmax.f32 %v3915, %v3916
    %v3918 = vrot.slane %v3917, 1
    %v3919 = vmax.f32 %v3917, %v3918
    %v3920 = vpack.i.bf16 %v3919, %v3919
    %v3922 = vsel %vm2515, %v1614, 4286644096
    %v3924 = vunpack.i.l.bf16 %v3922
    %v3925 = vunpack.i.h.bf16 %v3922
    %v3926 = vmax.f32 %v3924, %v3925
    %v3927 = vrot.slane %v3926, 4
    %v3928 = vmax.f32 %v3926, %v3927
    %v3929 = vrot.slane %v3928, 2
    %v3930 = vmax.f32 %v3928, %v3929
    %v3931 = vrot.slane %v3930, 1
    %v3932 = vmax.f32 %v3930, %v3931
    %v3933 = vpack.i.bf16 %v3932, %v3932
    %v3935 = vsel %vm2515, %v1628, 4286644096
    %v3937 = vunpack.i.l.bf16 %v3935
    %v3938 = vunpack.i.h.bf16 %v3935
    %v3939 = vmax.f32 %v3937, %v3938
    %v3940 = vrot.slane %v3939, 4
    %v3941 = vmax.f32 %v3939, %v3940
    %v3942 = vrot.slane %v3941, 2
    %v3943 = vmax.f32 %v3941, %v3942
    %v3944 = vrot.slane %v3943, 1
    %v3945 = vmax.f32 %v3943, %v3944
    %v3946 = vpack.i.bf16 %v3945, %v3945
    %v3948 = vsel %vm2515, %v1630, 4286644096
    %v3950 = vunpack.i.l.bf16 %v3948
    %v3951 = vunpack.i.h.bf16 %v3948
    %v3952 = vmax.f32 %v3950, %v3951
    %v3953 = vrot.slane %v3952, 4
    %v3954 = vmax.f32 %v3952, %v3953
    %v3955 = vrot.slane %v3954, 2
    %v3956 = vmax.f32 %v3954, %v3955
    %v3957 = vrot.slane %v3956, 1
    %v3958 = vmax.f32 %v3956, %v3957
    %v3959 = vpack.i.bf16 %v3958, %v3958
    %v3961 = vsel %vm2515, %v1632, 4286644096
    %v3963 = vunpack.i.l.bf16 %v3961
    %v3964 = vunpack.i.h.bf16 %v3961
    %v3965 = vmax.f32 %v3963, %v3964
    %v3966 = vrot.slane %v3965, 4
    %v3967 = vmax.f32 %v3965, %v3966
    %v3968 = vrot.slane %v3967, 2
    %v3969 = vmax.f32 %v3967, %v3968
    %v3970 = vrot.slane %v3969, 1
    %v3971 = vmax.f32 %v3969, %v3970
    %v3972 = vpack.i.bf16 %v3971, %v3971
    %v3974 = vsel %vm2515, %v1656, 4286644096
    %v3976 = vunpack.i.l.bf16 %v3974
    %v3977 = vunpack.i.h.bf16 %v3974
    %v3978 = vmax.f32 %v3976, %v3977
    %v3979 = vrot.slane %v3978, 4
    %v3980 = vmax.f32 %v3978, %v3979
    %v3981 = vrot.slane %v3980, 2
    %v3982 = vmax.f32 %v3980, %v3981
    %v3983 = vrot.slane %v3982, 1
    %v3984 = vmax.f32 %v3982, %v3983
    %v3985 = vpack.i.bf16 %v3984, %v3984
    %v3987 = vsel %vm2515, %v1670, 4286644096
    %v3989 = vunpack.i.l.bf16 %v3987
    %v3990 = vunpack.i.h.bf16 %v3987
    %v3991 = vmax.f32 %v3989, %v3990
    %v3992 = vrot.slane %v3991, 4
    %v3993 = vmax.f32 %v3991, %v3992
    %v3994 = vrot.slane %v3993, 2
    %v3995 = vmax.f32 %v3993, %v3994
    %v3996 = vrot.slane %v3995, 1
    %v3997 = vmax.f32 %v3995, %v3996
    %v3998 = vpack.i.bf16 %v3997, %v3997
    %v4000 = vsel %vm2515, %v1678, 4286644096
    %v4002 = vunpack.i.l.bf16 %v4000
    %v4003 = vunpack.i.h.bf16 %v4000
    %v4004 = vmax.f32 %v4002, %v4003
    %v4005 = vrot.slane %v4004, 4
    %v4006 = vmax.f32 %v4004, %v4005
    %v4007 = vrot.slane %v4006, 2
    %v4008 = vmax.f32 %v4006, %v4007
    %v4009 = vrot.slane %v4008, 1
    %v4010 = vmax.f32 %v4008, %v4009
    %v4011 = vpack.i.bf16 %v4010, %v4010
    %v4013 = vsel %vm2515, %v1680, 4286644096
    %v4015 = vunpack.i.l.bf16 %v4013
    %v4016 = vunpack.i.h.bf16 %v4013
    %v4017 = vmax.f32 %v4015, %v4016
    %v4018 = vrot.slane %v4017, 4
    %v4019 = vmax.f32 %v4017, %v4018
    %v4020 = vrot.slane %v4019, 2
    %v4021 = vmax.f32 %v4019, %v4020
    %v4022 = vrot.slane %v4021, 1
    %v4023 = vmax.f32 %v4021, %v4022
    %v4024 = vpack.i.bf16 %v4023, %v4023
    %v4026 = vsel %vm2515, %v1663, 4286644096
    %v4028 = vunpack.i.l.bf16 %v4026
    %v4029 = vunpack.i.h.bf16 %v4026
    %v4030 = vmax.f32 %v4028, %v4029
    %v4031 = vrot.slane %v4030, 4
    %v4032 = vmax.f32 %v4030, %v4031
    %v4033 = vrot.slane %v4032, 2
    %v4034 = vmax.f32 %v4032, %v4033
    %v4035 = vrot.slane %v4034, 1
    %v4036 = vmax.f32 %v4034, %v4035
    %v4037 = vpack.i.bf16 %v4036, %v4036
    %v4039 = vsel %vm2515, %v1677, 4286644096
    %v4041 = vunpack.i.l.bf16 %v4039
    %v4042 = vunpack.i.h.bf16 %v4039
    %v4043 = vmax.f32 %v4041, %v4042
    %v4044 = vrot.slane %v4043, 4
    %v4045 = vmax.f32 %v4043, %v4044
    %v4046 = vrot.slane %v4045, 2
    %v4047 = vmax.f32 %v4045, %v4046
    %v4048 = vrot.slane %v4047, 1
    %v4049 = vmax.f32 %v4047, %v4048
    %v4050 = vpack.i.bf16 %v4049, %v4049
    %v4052 = vsel %vm2515, %v1679, 4286644096
    %v4054 = vunpack.i.l.bf16 %v4052
    %v4055 = vunpack.i.h.bf16 %v4052
    %v4056 = vmax.f32 %v4054, %v4055
    %v4057 = vrot.slane %v4056, 4
    %v4058 = vmax.f32 %v4056, %v4057
    %v4059 = vrot.slane %v4058, 2
    %v4060 = vmax.f32 %v4058, %v4059
    %v4061 = vrot.slane %v4060, 1
    %v4062 = vmax.f32 %v4060, %v4061
    %v4063 = vpack.i.bf16 %v4062, %v4062
    %v4065 = vsel %vm2515, %v1681, 4286644096
    %v4067 = vunpack.i.l.bf16 %v4065
    %v4068 = vunpack.i.h.bf16 %v4065
    %v4069 = vmax.f32 %v4067, %v4068
    %v4070 = vrot.slane %v4069, 4
    %v4071 = vmax.f32 %v4069, %v4070
    %v4072 = vrot.slane %v4071, 2
    %v4073 = vmax.f32 %v4071, %v4072
    %v4074 = vrot.slane %v4073, 1
    %v4075 = vmax.f32 %v4073, %v4074
    %v4076 = vpack.i.bf16 %v4075, %v4075
    %v4078 = vsel %vm2515, %v1705, 4286644096
    %v4080 = vunpack.i.l.bf16 %v4078
    %v4081 = vunpack.i.h.bf16 %v4078
    %v4082 = vmax.f32 %v4080, %v4081
    %v4083 = vrot.slane %v4082, 4
    %v4084 = vmax.f32 %v4082, %v4083
    %v4085 = vrot.slane %v4084, 2
    %v4086 = vmax.f32 %v4084, %v4085
    %v4087 = vrot.slane %v4086, 1
    %v4088 = vmax.f32 %v4086, %v4087
    %v4089 = vpack.i.bf16 %v4088, %v4088
    %v4091 = vsel %vm2515, %v1719, 4286644096
    %v4093 = vunpack.i.l.bf16 %v4091
    %v4094 = vunpack.i.h.bf16 %v4091
    %v4095 = vmax.f32 %v4093, %v4094
    %v4096 = vrot.slane %v4095, 4
    %v4097 = vmax.f32 %v4095, %v4096
    %v4098 = vrot.slane %v4097, 2
    %v4099 = vmax.f32 %v4097, %v4098
    %v4100 = vrot.slane %v4099, 1
    %v4101 = vmax.f32 %v4099, %v4100
    %v4102 = vpack.i.bf16 %v4101, %v4101
    %v4104 = vsel %vm2515, %v1727, 4286644096
    %v4106 = vunpack.i.l.bf16 %v4104
    %v4107 = vunpack.i.h.bf16 %v4104
    %v4108 = vmax.f32 %v4106, %v4107
    %v4109 = vrot.slane %v4108, 4
    %v4110 = vmax.f32 %v4108, %v4109
    %v4111 = vrot.slane %v4110, 2
    %v4112 = vmax.f32 %v4110, %v4111
    %v4113 = vrot.slane %v4112, 1
    %v4114 = vmax.f32 %v4112, %v4113
    %v4115 = vpack.i.bf16 %v4114, %v4114
    %v4117 = vsel %vm2515, %v1729, 4286644096
    %v4119 = vunpack.i.l.bf16 %v4117
    %v4120 = vunpack.i.h.bf16 %v4117
    %v4121 = vmax.f32 %v4119, %v4120
    %v4122 = vrot.slane %v4121, 4
    %v4123 = vmax.f32 %v4121, %v4122
    %v4124 = vrot.slane %v4123, 2
    %v4125 = vmax.f32 %v4123, %v4124
    %v4126 = vrot.slane %v4125, 1
    %v4127 = vmax.f32 %v4125, %v4126
    %v4128 = vpack.i.bf16 %v4127, %v4127
    %v4130 = vsel %vm2515, %v1712, 4286644096
    %v4132 = vunpack.i.l.bf16 %v4130
    %v4133 = vunpack.i.h.bf16 %v4130
    %v4134 = vmax.f32 %v4132, %v4133
    %v4135 = vrot.slane %v4134, 4
    %v4136 = vmax.f32 %v4134, %v4135
    %v4137 = vrot.slane %v4136, 2
    %v4138 = vmax.f32 %v4136, %v4137
    %v4139 = vrot.slane %v4138, 1
    %v4140 = vmax.f32 %v4138, %v4139
    %v4141 = vpack.i.bf16 %v4140, %v4140
    %v4143 = vsel %vm2515, %v1726, 4286644096
    %v4145 = vunpack.i.l.bf16 %v4143
    %v4146 = vunpack.i.h.bf16 %v4143
    %v4147 = vmax.f32 %v4145, %v4146
    %v4148 = vrot.slane %v4147, 4
    %v4149 = vmax.f32 %v4147, %v4148
    %v4150 = vrot.slane %v4149, 2
    %v4151 = vmax.f32 %v4149, %v4150
    %v4152 = vrot.slane %v4151, 1
    %v4153 = vmax.f32 %v4151, %v4152
    %v4154 = vpack.i.bf16 %v4153, %v4153
    %v4156 = vsel %vm2515, %v1728, 4286644096
    %v4158 = vunpack.i.l.bf16 %v4156
    %v4159 = vunpack.i.h.bf16 %v4156
    %v4160 = vmax.f32 %v4158, %v4159
    %v4161 = vrot.slane %v4160, 4
    %v4162 = vmax.f32 %v4160, %v4161
    %v4163 = vrot.slane %v4162, 2
    %v4164 = vmax.f32 %v4162, %v4163
    %v4165 = vrot.slane %v4164, 1
    %v4166 = vmax.f32 %v4164, %v4165
    %v4167 = vpack.i.bf16 %v4166, %v4166
    %v4169 = vsel %vm2515, %v1730, 4286644096
    %v4171 = vunpack.i.l.bf16 %v4169
    %v4172 = vunpack.i.h.bf16 %v4169
    %v4173 = vmax.f32 %v4171, %v4172
    %v4174 = vrot.slane %v4173, 4
    %v4175 = vmax.f32 %v4173, %v4174
    %v4176 = vrot.slane %v4175, 2
    %v4177 = vmax.f32 %v4175, %v4176
    %v4178 = vrot.slane %v4177, 1
    %v4179 = vmax.f32 %v4177, %v4178
    %v4180 = vpack.i.bf16 %v4179, %v4179
    %v4182 = vsel %vm2515, %v1754, 4286644096
    %v4184 = vunpack.i.l.bf16 %v4182
    %v4185 = vunpack.i.h.bf16 %v4182
    %v4186 = vmax.f32 %v4184, %v4185
    %v4187 = vrot.slane %v4186, 4
    %v4188 = vmax.f32 %v4186, %v4187
    %v4189 = vrot.slane %v4188, 2
    %v4190 = vmax.f32 %v4188, %v4189
    %v4191 = vrot.slane %v4190, 1
    %v4192 = vmax.f32 %v4190, %v4191
    %v4193 = vpack.i.bf16 %v4192, %v4192
    %v4195 = vsel %vm2515, %v1768, 4286644096
    %v4197 = vunpack.i.l.bf16 %v4195
    %v4198 = vunpack.i.h.bf16 %v4195
    %v4199 = vmax.f32 %v4197, %v4198
    %v4200 = vrot.slane %v4199, 4
    %v4201 = vmax.f32 %v4199, %v4200
    %v4202 = vrot.slane %v4201, 2
    %v4203 = vmax.f32 %v4201, %v4202
    %v4204 = vrot.slane %v4203, 1
    %v4205 = vmax.f32 %v4203, %v4204
    %v4206 = vpack.i.bf16 %v4205, %v4205
    %v4208 = vsel %vm2515, %v1776, 4286644096
    %v4210 = vunpack.i.l.bf16 %v4208
    %v4211 = vunpack.i.h.bf16 %v4208
    %v4212 = vmax.f32 %v4210, %v4211
    %v4213 = vrot.slane %v4212, 4
    %v4214 = vmax.f32 %v4212, %v4213
    %v4215 = vrot.slane %v4214, 2
    %v4216 = vmax.f32 %v4214, %v4215
    %v4217 = vrot.slane %v4216, 1
    %v4218 = vmax.f32 %v4216, %v4217
    %v4219 = vpack.i.bf16 %v4218, %v4218
    %v4221 = vsel %vm2515, %v1778, 4286644096
    %v4223 = vunpack.i.l.bf16 %v4221
    %v4224 = vunpack.i.h.bf16 %v4221
    %v4225 = vmax.f32 %v4223, %v4224
    %v4226 = vrot.slane %v4225, 4
    %v4227 = vmax.f32 %v4225, %v4226
    %v4228 = vrot.slane %v4227, 2
    %v4229 = vmax.f32 %v4227, %v4228
    %v4230 = vrot.slane %v4229, 1
    %v4231 = vmax.f32 %v4229, %v4230
    %v4232 = vpack.i.bf16 %v4231, %v4231
    %v4234 = vsel %vm2515, %v1761, 4286644096
    %v4236 = vunpack.i.l.bf16 %v4234
    %v4237 = vunpack.i.h.bf16 %v4234
    %v4238 = vmax.f32 %v4236, %v4237
    %v4239 = vrot.slane %v4238, 4
    %v4240 = vmax.f32 %v4238, %v4239
    %v4241 = vrot.slane %v4240, 2
    %v4242 = vmax.f32 %v4240, %v4241
    %v4243 = vrot.slane %v4242, 1
    %v4244 = vmax.f32 %v4242, %v4243
    %v4245 = vpack.i.bf16 %v4244, %v4244
    %v4247 = vsel %vm2515, %v1775, 4286644096
    %v4249 = vunpack.i.l.bf16 %v4247
    %v4250 = vunpack.i.h.bf16 %v4247
    %v4251 = vmax.f32 %v4249, %v4250
    %v4252 = vrot.slane %v4251, 4
    %v4253 = vmax.f32 %v4251, %v4252
    %v4254 = vrot.slane %v4253, 2
    %v4255 = vmax.f32 %v4253, %v4254
    %v4256 = vrot.slane %v4255, 1
    %v4257 = vmax.f32 %v4255, %v4256
    %v4258 = vpack.i.bf16 %v4257, %v4257
    %v4260 = vsel %vm2515, %v1777, 4286644096
    %v4262 = vunpack.i.l.bf16 %v4260
    %v4263 = vunpack.i.h.bf16 %v4260
    %v4264 = vmax.f32 %v4262, %v4263
    %v4265 = vrot.slane %v4264, 4
    %v4266 = vmax.f32 %v4264, %v4265
    %v4267 = vrot.slane %v4266, 2
    %v4268 = vmax.f32 %v4266, %v4267
    %v4269 = vrot.slane %v4268, 1
    %v4270 = vmax.f32 %v4268, %v4269
    %v4271 = vpack.i.bf16 %v4270, %v4270
    %v4273 = vsel %vm2515, %v1779, 4286644096
    %v4275 = vunpack.i.l.bf16 %v4273
    %v4276 = vunpack.i.h.bf16 %v4273
    %v4277 = vmax.f32 %v4275, %v4276
    %v4278 = vrot.slane %v4277, 4
    %v4279 = vmax.f32 %v4277, %v4278
    %v4280 = vrot.slane %v4279, 2
    %v4281 = vmax.f32 %v4279, %v4280
    %v4282 = vrot.slane %v4281, 1
    %v4283 = vmax.f32 %v4281, %v4282
    %v4284 = vpack.i.bf16 %v4283, %v4283
    %v4286 = vsel %vm2515, %v1803, 4286644096
    %v4288 = vunpack.i.l.bf16 %v4286
    %v4289 = vunpack.i.h.bf16 %v4286
    %v4290 = vmax.f32 %v4288, %v4289
    %v4291 = vrot.slane %v4290, 4
    %v4292 = vmax.f32 %v4290, %v4291
    %v4293 = vrot.slane %v4292, 2
    %v4294 = vmax.f32 %v4292, %v4293
    %v4295 = vrot.slane %v4294, 1
    %v4296 = vmax.f32 %v4294, %v4295
    %v4297 = vpack.i.bf16 %v4296, %v4296
    %v4299 = vsel %vm2515, %v1817, 4286644096
    %v4301 = vunpack.i.l.bf16 %v4299
    %v4302 = vunpack.i.h.bf16 %v4299
    %v4303 = vmax.f32 %v4301, %v4302
    %v4304 = vrot.slane %v4303, 4
    %v4305 = vmax.f32 %v4303, %v4304
    %v4306 = vrot.slane %v4305, 2
    %v4307 = vmax.f32 %v4305, %v4306
    %v4308 = vrot.slane %v4307, 1
    %v4309 = vmax.f32 %v4307, %v4308
    %v4310 = vpack.i.bf16 %v4309, %v4309
    %v4312 = vsel %vm2515, %v1825, 4286644096
    %v4314 = vunpack.i.l.bf16 %v4312
    %v4315 = vunpack.i.h.bf16 %v4312
    %v4316 = vmax.f32 %v4314, %v4315
    %v4317 = vrot.slane %v4316, 4
    %v4318 = vmax.f32 %v4316, %v4317
    %v4319 = vrot.slane %v4318, 2
    %v4320 = vmax.f32 %v4318, %v4319
    %v4321 = vrot.slane %v4320, 1
    %v4322 = vmax.f32 %v4320, %v4321
    %v4323 = vpack.i.bf16 %v4322, %v4322
    %v4325 = vsel %vm2515, %v1827, 4286644096
    %v4327 = vunpack.i.l.bf16 %v4325
    %v4328 = vunpack.i.h.bf16 %v4325
    %v4329 = vmax.f32 %v4327, %v4328
    %v4330 = vrot.slane %v4329, 4
    %v4331 = vmax.f32 %v4329, %v4330
    %v4332 = vrot.slane %v4331, 2
    %v4333 = vmax.f32 %v4331, %v4332
    %v4334 = vrot.slane %v4333, 1
    %v4335 = vmax.f32 %v4333, %v4334
    %v4336 = vpack.i.bf16 %v4335, %v4335
    %v4338 = vsel %vm2515, %v1810, 4286644096
    %v4340 = vunpack.i.l.bf16 %v4338
    %v4341 = vunpack.i.h.bf16 %v4338
    %v4342 = vmax.f32 %v4340, %v4341
    %v4343 = vrot.slane %v4342, 4
    %v4344 = vmax.f32 %v4342, %v4343
    %v4345 = vrot.slane %v4344, 2
    %v4346 = vmax.f32 %v4344, %v4345
    %v4347 = vrot.slane %v4346, 1
    %v4348 = vmax.f32 %v4346, %v4347
    %v4349 = vpack.i.bf16 %v4348, %v4348
    %v4351 = vsel %vm2515, %v1824, 4286644096
    %v4353 = vunpack.i.l.bf16 %v4351
    %v4354 = vunpack.i.h.bf16 %v4351
    %v4355 = vmax.f32 %v4353, %v4354
    %v4356 = vrot.slane %v4355, 4
    %v4357 = vmax.f32 %v4355, %v4356
    %v4358 = vrot.slane %v4357, 2
    %v4359 = vmax.f32 %v4357, %v4358
    %v4360 = vrot.slane %v4359, 1
    %v4361 = vmax.f32 %v4359, %v4360
    %v4362 = vpack.i.bf16 %v4361, %v4361
    %v4364 = vsel %vm2515, %v1826, 4286644096
    %v4366 = vunpack.i.l.bf16 %v4364
    %v4367 = vunpack.i.h.bf16 %v4364
    %v4368 = vmax.f32 %v4366, %v4367
    %v4369 = vrot.slane %v4368, 4
    %v4370 = vmax.f32 %v4368, %v4369
    %v4371 = vrot.slane %v4370, 2
    %v4372 = vmax.f32 %v4370, %v4371
    %v4373 = vrot.slane %v4372, 1
    %v4374 = vmax.f32 %v4372, %v4373
    %v4375 = vpack.i.bf16 %v4374, %v4374
    %v4377 = vsel %vm2515, %v1828, 4286644096
    %v4379 = vunpack.i.l.bf16 %v4377
    %v4380 = vunpack.i.h.bf16 %v4377
    %v4381 = vmax.f32 %v4379, %v4380
    %v4382 = vrot.slane %v4381, 4
    %v4383 = vmax.f32 %v4381, %v4382
    %v4384 = vrot.slane %v4383, 2
    %v4385 = vmax.f32 %v4383, %v4384
    %v4386 = vrot.slane %v4385, 1
    %v4387 = vmax.f32 %v4385, %v4386
    %v4388 = vpack.i.bf16 %v4387, %v4387
    %v4390 = vsel %vm2515, %v1852, 4286644096
    %v4392 = vunpack.i.l.bf16 %v4390
    %v4393 = vunpack.i.h.bf16 %v4390
    %v4394 = vmax.f32 %v4392, %v4393
    %v4395 = vrot.slane %v4394, 4
    %v4396 = vmax.f32 %v4394, %v4395
    %v4397 = vrot.slane %v4396, 2
    %v4398 = vmax.f32 %v4396, %v4397
    %v4399 = vrot.slane %v4398, 1
    %v4400 = vmax.f32 %v4398, %v4399
    %v4401 = vpack.i.bf16 %v4400, %v4400
    %v4403 = vsel %vm2515, %v1866, 4286644096
    %v4405 = vunpack.i.l.bf16 %v4403
    %v4406 = vunpack.i.h.bf16 %v4403
    %v4407 = vmax.f32 %v4405, %v4406
    %v4408 = vrot.slane %v4407, 4
    %v4409 = vmax.f32 %v4407, %v4408
    %v4410 = vrot.slane %v4409, 2
    %v4411 = vmax.f32 %v4409, %v4410
    %v4412 = vrot.slane %v4411, 1
    %v4413 = vmax.f32 %v4411, %v4412
    %v4414 = vpack.i.bf16 %v4413, %v4413
    %v4416 = vsel %vm2515, %v1874, 4286644096
    %v4418 = vunpack.i.l.bf16 %v4416
    %v4419 = vunpack.i.h.bf16 %v4416
    %v4420 = vmax.f32 %v4418, %v4419
    %v4421 = vrot.slane %v4420, 4
    %v4422 = vmax.f32 %v4420, %v4421
    %v4423 = vrot.slane %v4422, 2
    %v4424 = vmax.f32 %v4422, %v4423
    %v4425 = vrot.slane %v4424, 1
    %v4426 = vmax.f32 %v4424, %v4425
    %v4427 = vpack.i.bf16 %v4426, %v4426
    %v4429 = vsel %vm2515, %v1876, 4286644096
    %v4431 = vunpack.i.l.bf16 %v4429
    %v4432 = vunpack.i.h.bf16 %v4429
    %v4433 = vmax.f32 %v4431, %v4432
    %v4434 = vrot.slane %v4433, 4
    %v4435 = vmax.f32 %v4433, %v4434
    %v4436 = vrot.slane %v4435, 2
    %v4437 = vmax.f32 %v4435, %v4436
    %v4438 = vrot.slane %v4437, 1
    %v4439 = vmax.f32 %v4437, %v4438
    %v4440 = vpack.i.bf16 %v4439, %v4439
    %v4442 = vsel %vm2515, %v1859, 4286644096
    %v4444 = vunpack.i.l.bf16 %v4442
    %v4445 = vunpack.i.h.bf16 %v4442
    %v4446 = vmax.f32 %v4444, %v4445
    %v4447 = vrot.slane %v4446, 4
    %v4448 = vmax.f32 %v4446, %v4447
    %v4449 = vrot.slane %v4448, 2
    %v4450 = vmax.f32 %v4448, %v4449
    %v4451 = vrot.slane %v4450, 1
    %v4452 = vmax.f32 %v4450, %v4451
    %v4453 = vpack.i.bf16 %v4452, %v4452
    %v4455 = vsel %vm2515, %v1873, 4286644096
    %v4457 = vunpack.i.l.bf16 %v4455
    %v4458 = vunpack.i.h.bf16 %v4455
    %v4459 = vmax.f32 %v4457, %v4458
    %v4460 = vrot.slane %v4459, 4
    %v4461 = vmax.f32 %v4459, %v4460
    %v4462 = vrot.slane %v4461, 2
    %v4463 = vmax.f32 %v4461, %v4462
    %v4464 = vrot.slane %v4463, 1
    %v4465 = vmax.f32 %v4463, %v4464
    %v4466 = vpack.i.bf16 %v4465, %v4465
    %v4468 = vsel %vm2515, %v1875, 4286644096
    %v4470 = vunpack.i.l.bf16 %v4468
    %v4471 = vunpack.i.h.bf16 %v4468
    %v4472 = vmax.f32 %v4470, %v4471
    %v4473 = vrot.slane %v4472, 4
    %v4474 = vmax.f32 %v4472, %v4473
    %v4475 = vrot.slane %v4474, 2
    %v4476 = vmax.f32 %v4474, %v4475
    %v4477 = vrot.slane %v4476, 1
    %v4478 = vmax.f32 %v4476, %v4477
    %v4479 = vpack.i.bf16 %v4478, %v4478
    %v4481 = vsel %vm2515, %v1877, 4286644096
    %v4483 = vunpack.i.l.bf16 %v4481
    %v4484 = vunpack.i.h.bf16 %v4481
    %v4485 = vmax.f32 %v4483, %v4484
    %v4486 = vrot.slane %v4485, 4
    %v4487 = vmax.f32 %v4485, %v4486
    %v4488 = vrot.slane %v4487, 2
    %v4489 = vmax.f32 %v4487, %v4488
    %v4490 = vrot.slane %v4489, 1
    %v4491 = vmax.f32 %v4489, %v4490
    %v4492 = vpack.i.bf16 %v4491, %v4491
    %v4494 = vsel %vm2515, %v1901, 4286644096
    %v4496 = vunpack.i.l.bf16 %v4494
    %v4497 = vunpack.i.h.bf16 %v4494
    %v4498 = vmax.f32 %v4496, %v4497
    %v4499 = vrot.slane %v4498, 4
    %v4500 = vmax.f32 %v4498, %v4499
    %v4501 = vrot.slane %v4500, 2
    %v4502 = vmax.f32 %v4500, %v4501
    %v4503 = vrot.slane %v4502, 1
    %v4504 = vmax.f32 %v4502, %v4503
    %v4505 = vpack.i.bf16 %v4504, %v4504
    %v4507 = vsel %vm2515, %v1915, 4286644096
    %v4509 = vunpack.i.l.bf16 %v4507
    %v4510 = vunpack.i.h.bf16 %v4507
    %v4511 = vmax.f32 %v4509, %v4510
    %v4512 = vrot.slane %v4511, 4
    %v4513 = vmax.f32 %v4511, %v4512
    %v4514 = vrot.slane %v4513, 2
    %v4515 = vmax.f32 %v4513, %v4514
    %v4516 = vrot.slane %v4515, 1
    %v4517 = vmax.f32 %v4515, %v4516
    %v4518 = vpack.i.bf16 %v4517, %v4517
    %v4520 = vsel %vm2515, %v1923, 4286644096
    %v4522 = vunpack.i.l.bf16 %v4520
    %v4523 = vunpack.i.h.bf16 %v4520
    %v4524 = vmax.f32 %v4522, %v4523
    %v4525 = vrot.slane %v4524, 4
    %v4526 = vmax.f32 %v4524, %v4525
    %v4527 = vrot.slane %v4526, 2
    %v4528 = vmax.f32 %v4526, %v4527
    %v4529 = vrot.slane %v4528, 1
    %v4530 = vmax.f32 %v4528, %v4529
    %v4531 = vpack.i.bf16 %v4530, %v4530
    %v4533 = vsel %vm2515, %v1925, 4286644096
    %v4535 = vunpack.i.l.bf16 %v4533
    %v4536 = vunpack.i.h.bf16 %v4533
    %v4537 = vmax.f32 %v4535, %v4536
    %v4538 = vrot.slane %v4537, 4
    %v4539 = vmax.f32 %v4537, %v4538
    %v4540 = vrot.slane %v4539, 2
    %v4541 = vmax.f32 %v4539, %v4540
    %v4542 = vrot.slane %v4541, 1
    %v4543 = vmax.f32 %v4541, %v4542
    %v4544 = vpack.i.bf16 %v4543, %v4543
    %v4546 = vsel %vm2515, %v1908, 4286644096
    %v4548 = vunpack.i.l.bf16 %v4546
    %v4549 = vunpack.i.h.bf16 %v4546
    %v4550 = vmax.f32 %v4548, %v4549
    %v4551 = vrot.slane %v4550, 4
    %v4552 = vmax.f32 %v4550, %v4551
    %v4553 = vrot.slane %v4552, 2
    %v4554 = vmax.f32 %v4552, %v4553
    %v4555 = vrot.slane %v4554, 1
    %v4556 = vmax.f32 %v4554, %v4555
    %v4557 = vpack.i.bf16 %v4556, %v4556
    %v4559 = vsel %vm2515, %v1922, 4286644096
    %v4561 = vunpack.i.l.bf16 %v4559
    %v4562 = vunpack.i.h.bf16 %v4559
    %v4563 = vmax.f32 %v4561, %v4562
    %v4564 = vrot.slane %v4563, 4
    %v4565 = vmax.f32 %v4563, %v4564
    %v4566 = vrot.slane %v4565, 2
    %v4567 = vmax.f32 %v4565, %v4566
    %v4568 = vrot.slane %v4567, 1
    %v4569 = vmax.f32 %v4567, %v4568
    %v4570 = vpack.i.bf16 %v4569, %v4569
    %v4572 = vsel %vm2515, %v1924, 4286644096
    %v4574 = vunpack.i.l.bf16 %v4572
    %v4575 = vunpack.i.h.bf16 %v4572
    %v4576 = vmax.f32 %v4574, %v4575
    %v4577 = vrot.slane %v4576, 4
    %v4578 = vmax.f32 %v4576, %v4577
    %v4579 = vrot.slane %v4578, 2
    %v4580 = vmax.f32 %v4578, %v4579
    %v4581 = vrot.slane %v4580, 1
    %v4582 = vmax.f32 %v4580, %v4581
    %v4583 = vpack.i.bf16 %v4582, %v4582
    %v4585 = vsel %vm2515, %v1926, 4286644096
    %v4587 = vunpack.i.l.bf16 %v4585
    %v4588 = vunpack.i.h.bf16 %v4585
    %v4589 = vmax.f32 %v4587, %v4588
    %v4590 = vrot.slane %v4589, 4
    %v4591 = vmax.f32 %v4589, %v4590
    %v4592 = vrot.slane %v4591, 2
    %v4593 = vmax.f32 %v4591, %v4592
    %v4594 = vrot.slane %v4593, 1
    %v4595 = vmax.f32 %v4593, %v4594
    %v4596 = vpack.i.bf16 %v4595, %v4595
    %v4598 = vsel %vm2515, %v1950, 4286644096
    %v4600 = vunpack.i.l.bf16 %v4598
    %v4601 = vunpack.i.h.bf16 %v4598
    %v4602 = vmax.f32 %v4600, %v4601
    %v4603 = vrot.slane %v4602, 4
    %v4604 = vmax.f32 %v4602, %v4603
    %v4605 = vrot.slane %v4604, 2
    %v4606 = vmax.f32 %v4604, %v4605
    %v4607 = vrot.slane %v4606, 1
    %v4608 = vmax.f32 %v4606, %v4607
    %v4609 = vpack.i.bf16 %v4608, %v4608
    %v4611 = vsel %vm2515, %v1964, 4286644096
    %v4613 = vunpack.i.l.bf16 %v4611
    %v4614 = vunpack.i.h.bf16 %v4611
    %v4615 = vmax.f32 %v4613, %v4614
    %v4616 = vrot.slane %v4615, 4
    %v4617 = vmax.f32 %v4615, %v4616
    %v4618 = vrot.slane %v4617, 2
    %v4619 = vmax.f32 %v4617, %v4618
    %v4620 = vrot.slane %v4619, 1
    %v4621 = vmax.f32 %v4619, %v4620
    %v4622 = vpack.i.bf16 %v4621, %v4621
    %v4624 = vsel %vm2515, %v1972, 4286644096
    %v4626 = vunpack.i.l.bf16 %v4624
    %v4627 = vunpack.i.h.bf16 %v4624
    %v4628 = vmax.f32 %v4626, %v4627
    %v4629 = vrot.slane %v4628, 4
    %v4630 = vmax.f32 %v4628, %v4629
    %v4631 = vrot.slane %v4630, 2
    %v4632 = vmax.f32 %v4630, %v4631
    %v4633 = vrot.slane %v4632, 1
    %v4634 = vmax.f32 %v4632, %v4633
    %v4635 = vpack.i.bf16 %v4634, %v4634
    %v4637 = vsel %vm2515, %v1974, 4286644096
    %v4639 = vunpack.i.l.bf16 %v4637
    %v4640 = vunpack.i.h.bf16 %v4637
    %v4641 = vmax.f32 %v4639, %v4640
    %v4642 = vrot.slane %v4641, 4
    %v4643 = vmax.f32 %v4641, %v4642
    %v4644 = vrot.slane %v4643, 2
    %v4645 = vmax.f32 %v4643, %v4644
    %v4646 = vrot.slane %v4645, 1
    %v4647 = vmax.f32 %v4645, %v4646
    %v4648 = vpack.i.bf16 %v4647, %v4647
    %v4650 = vsel %vm2515, %v1957, 4286644096
    %v4652 = vunpack.i.l.bf16 %v4650
    %v4653 = vunpack.i.h.bf16 %v4650
    %v4654 = vmax.f32 %v4652, %v4653
    %v4655 = vrot.slane %v4654, 4
    %v4656 = vmax.f32 %v4654, %v4655
    %v4657 = vrot.slane %v4656, 2
    %v4658 = vmax.f32 %v4656, %v4657
    %v4659 = vrot.slane %v4658, 1
    %v4660 = vmax.f32 %v4658, %v4659
    %v4661 = vpack.i.bf16 %v4660, %v4660
    %v4663 = vsel %vm2515, %v1971, 4286644096
    %v4665 = vunpack.i.l.bf16 %v4663
    %v4666 = vunpack.i.h.bf16 %v4663
    %v4667 = vmax.f32 %v4665, %v4666
    %v4668 = vrot.slane %v4667, 4
    %v4669 = vmax.f32 %v4667, %v4668
    %v4670 = vrot.slane %v4669, 2
    %v4671 = vmax.f32 %v4669, %v4670
    %v4672 = vrot.slane %v4671, 1
    %v4673 = vmax.f32 %v4671, %v4672
    %v4674 = vpack.i.bf16 %v4673, %v4673
    %v4676 = vsel %vm2515, %v1973, 4286644096
    %v4678 = vunpack.i.l.bf16 %v4676
    %v4679 = vunpack.i.h.bf16 %v4676
    %v4680 = vmax.f32 %v4678, %v4679
    %v4681 = vrot.slane %v4680, 4
    %v4682 = vmax.f32 %v4680, %v4681
    %v4683 = vrot.slane %v4682, 2
    %v4684 = vmax.f32 %v4682, %v4683
    %v4685 = vrot.slane %v4684, 1
    %v4686 = vmax.f32 %v4684, %v4685
    %v4687 = vpack.i.bf16 %v4686, %v4686
    %v4689 = vsel %vm2515, %v1975, 4286644096
    %v4691 = vunpack.i.l.bf16 %v4689
    %v4692 = vunpack.i.h.bf16 %v4689
    %v4693 = vmax.f32 %v4691, %v4692
    %v4694 = vrot.slane %v4693, 4
    %v4695 = vmax.f32 %v4693, %v4694
    %v4696 = vrot.slane %v4695, 2
    %v4697 = vmax.f32 %v4695, %v4696
    %v4698 = vrot.slane %v4697, 1
    %v4699 = vmax.f32 %v4697, %v4698
    %v4700 = vpack.i.bf16 %v4699, %v4699
    %v4702 = vsel %vm2515, %v1999, 4286644096
    %v4704 = vunpack.i.l.bf16 %v4702
    %v4705 = vunpack.i.h.bf16 %v4702
    %v4706 = vmax.f32 %v4704, %v4705
    %v4707 = vrot.slane %v4706, 4
    %v4708 = vmax.f32 %v4706, %v4707
    %v4709 = vrot.slane %v4708, 2
    %v4710 = vmax.f32 %v4708, %v4709
    %v4711 = vrot.slane %v4710, 1
    %v4712 = vmax.f32 %v4710, %v4711
    %v4713 = vpack.i.bf16 %v4712, %v4712
    %v4715 = vsel %vm2515, %v2013, 4286644096
    %v4717 = vunpack.i.l.bf16 %v4715
    %v4718 = vunpack.i.h.bf16 %v4715
    %v4719 = vmax.f32 %v4717, %v4718
    %v4720 = vrot.slane %v4719, 4
    %v4721 = vmax.f32 %v4719, %v4720
    %v4722 = vrot.slane %v4721, 2
    %v4723 = vmax.f32 %v4721, %v4722
    %v4724 = vrot.slane %v4723, 1
    %v4725 = vmax.f32 %v4723, %v4724
    %v4726 = vpack.i.bf16 %v4725, %v4725
    %v4728 = vsel %vm2515, %v2021, 4286644096
    %v4730 = vunpack.i.l.bf16 %v4728
    %v4731 = vunpack.i.h.bf16 %v4728
    %v4732 = vmax.f32 %v4730, %v4731
    %v4733 = vrot.slane %v4732, 4
    %v4734 = vmax.f32 %v4732, %v4733
    %v4735 = vrot.slane %v4734, 2
    %v4736 = vmax.f32 %v4734, %v4735
    %v4737 = vrot.slane %v4736, 1
    %v4738 = vmax.f32 %v4736, %v4737
    %v4739 = vpack.i.bf16 %v4738, %v4738
    %v4741 = vsel %vm2515, %v2023, 4286644096
    %v4743 = vunpack.i.l.bf16 %v4741
    %v4744 = vunpack.i.h.bf16 %v4741
    %v4745 = vmax.f32 %v4743, %v4744
    %v4746 = vrot.slane %v4745, 4
    %v4747 = vmax.f32 %v4745, %v4746
    %v4748 = vrot.slane %v4747, 2
    %v4749 = vmax.f32 %v4747, %v4748
    %v4750 = vrot.slane %v4749, 1
    %v4751 = vmax.f32 %v4749, %v4750
    %v4752 = vpack.i.bf16 %v4751, %v4751
    %v4754 = vsel %vm2515, %v2006, 4286644096
    %v4756 = vunpack.i.l.bf16 %v4754
    %v4757 = vunpack.i.h.bf16 %v4754
    %v4758 = vmax.f32 %v4756, %v4757
    %v4759 = vrot.slane %v4758, 4
    %v4760 = vmax.f32 %v4758, %v4759
    %v4761 = vrot.slane %v4760, 2
    %v4762 = vmax.f32 %v4760, %v4761
    %v4763 = vrot.slane %v4762, 1
    %v4764 = vmax.f32 %v4762, %v4763
    %v4765 = vpack.i.bf16 %v4764, %v4764
    %v4767 = vsel %vm2515, %v2020, 4286644096
    %v4769 = vunpack.i.l.bf16 %v4767
    %v4770 = vunpack.i.h.bf16 %v4767
    %v4771 = vmax.f32 %v4769, %v4770
    %v4772 = vrot.slane %v4771, 4
    %v4773 = vmax.f32 %v4771, %v4772
    %v4774 = vrot.slane %v4773, 2
    %v4775 = vmax.f32 %v4773, %v4774
    %v4776 = vrot.slane %v4775, 1
    %v4777 = vmax.f32 %v4775, %v4776
    %v4778 = vpack.i.bf16 %v4777, %v4777
    %v4780 = vsel %vm2515, %v2022, 4286644096
    %v4782 = vunpack.i.l.bf16 %v4780
    %v4783 = vunpack.i.h.bf16 %v4780
    %v4784 = vmax.f32 %v4782, %v4783
    %v4785 = vrot.slane %v4784, 4
    %v4786 = vmax.f32 %v4784, %v4785
    %v4787 = vrot.slane %v4786, 2
    %v4788 = vmax.f32 %v4786, %v4787
    %v4789 = vrot.slane %v4788, 1
    %v4790 = vmax.f32 %v4788, %v4789
    %v4791 = vpack.i.bf16 %v4790, %v4790
    %v4793 = vsel %vm2515, %v2024, 4286644096
    %v4795 = vunpack.i.l.bf16 %v4793
    %v4796 = vunpack.i.h.bf16 %v4793
    %v4797 = vmax.f32 %v4795, %v4796
    %v4798 = vrot.slane %v4797, 4
    %v4799 = vmax.f32 %v4797, %v4798
    %v4800 = vrot.slane %v4799, 2
    %v4801 = vmax.f32 %v4799, %v4800
    %v4802 = vrot.slane %v4801, 1
    %v4803 = vmax.f32 %v4801, %v4802
    %v4804 = vpack.i.bf16 %v4803, %v4803
    %v4806 = vsel %vm2515, %v2048, 4286644096
    %v4808 = vunpack.i.l.bf16 %v4806
    %v4809 = vunpack.i.h.bf16 %v4806
    %v4810 = vmax.f32 %v4808, %v4809
    %v4811 = vrot.slane %v4810, 4
    %v4812 = vmax.f32 %v4810, %v4811
    %v4813 = vrot.slane %v4812, 2
    %v4814 = vmax.f32 %v4812, %v4813
    %v4815 = vrot.slane %v4814, 1
    %v4816 = vmax.f32 %v4814, %v4815
    %v4817 = vpack.i.bf16 %v4816, %v4816
    %v4819 = vsel %vm2515, %v2062, 4286644096
    %v4821 = vunpack.i.l.bf16 %v4819
    %v4822 = vunpack.i.h.bf16 %v4819
    %v4823 = vmax.f32 %v4821, %v4822
    %v4824 = vrot.slane %v4823, 4
    %v4825 = vmax.f32 %v4823, %v4824
    %v4826 = vrot.slane %v4825, 2
    %v4827 = vmax.f32 %v4825, %v4826
    %v4828 = vrot.slane %v4827, 1
    %v4829 = vmax.f32 %v4827, %v4828
    %v4830 = vpack.i.bf16 %v4829, %v4829
    %v4832 = vsel %vm2515, %v2070, 4286644096
    %v4834 = vunpack.i.l.bf16 %v4832
    %v4835 = vunpack.i.h.bf16 %v4832
    %v4836 = vmax.f32 %v4834, %v4835
    %v4837 = vrot.slane %v4836, 4
    %v4838 = vmax.f32 %v4836, %v4837
    %v4839 = vrot.slane %v4838, 2
    %v4840 = vmax.f32 %v4838, %v4839
    %v4841 = vrot.slane %v4840, 1
    %v4842 = vmax.f32 %v4840, %v4841
    %v4843 = vpack.i.bf16 %v4842, %v4842
    %v4845 = vsel %vm2515, %v2072, 4286644096
    %v4847 = vunpack.i.l.bf16 %v4845
    %v4848 = vunpack.i.h.bf16 %v4845
    %v4849 = vmax.f32 %v4847, %v4848
    %v4850 = vrot.slane %v4849, 4
    %v4851 = vmax.f32 %v4849, %v4850
    %v4852 = vrot.slane %v4851, 2
    %v4853 = vmax.f32 %v4851, %v4852
    %v4854 = vrot.slane %v4853, 1
    %v4855 = vmax.f32 %v4853, %v4854
    %v4856 = vpack.i.bf16 %v4855, %v4855
    %v4858 = vsel %vm2515, %v2055, 4286644096
    %v4860 = vunpack.i.l.bf16 %v4858
    %v4861 = vunpack.i.h.bf16 %v4858
    %v4862 = vmax.f32 %v4860, %v4861
    %v4863 = vrot.slane %v4862, 4
    %v4864 = vmax.f32 %v4862, %v4863
    %v4865 = vrot.slane %v4864, 2
    %v4866 = vmax.f32 %v4864, %v4865
    %v4867 = vrot.slane %v4866, 1
    %v4868 = vmax.f32 %v4866, %v4867
    %v4869 = vpack.i.bf16 %v4868, %v4868
    %v4871 = vsel %vm2515, %v2069, 4286644096
    %v4873 = vunpack.i.l.bf16 %v4871
    %v4874 = vunpack.i.h.bf16 %v4871
    %v4875 = vmax.f32 %v4873, %v4874
    %v4876 = vrot.slane %v4875, 4
    %v4877 = vmax.f32 %v4875, %v4876
    %v4878 = vrot.slane %v4877, 2
    %v4879 = vmax.f32 %v4877, %v4878
    %v4880 = vrot.slane %v4879, 1
    %v4881 = vmax.f32 %v4879, %v4880
    %v4882 = vpack.i.bf16 %v4881, %v4881
    %v4884 = vsel %vm2515, %v2071, 4286644096
    %v4886 = vunpack.i.l.bf16 %v4884
    %v4887 = vunpack.i.h.bf16 %v4884
    %v4888 = vmax.f32 %v4886, %v4887
    %v4889 = vrot.slane %v4888, 4
    %v4890 = vmax.f32 %v4888, %v4889
    %v4891 = vrot.slane %v4890, 2
    %v4892 = vmax.f32 %v4890, %v4891
    %v4893 = vrot.slane %v4892, 1
    %v4894 = vmax.f32 %v4892, %v4893
    %v4895 = vpack.i.bf16 %v4894, %v4894
    %v4897 = vsel %vm2515, %v2073, 4286644096
    %v4899 = vunpack.i.l.bf16 %v4897
    %v4900 = vunpack.i.h.bf16 %v4897
    %v4901 = vmax.f32 %v4899, %v4900
    %v4902 = vrot.slane %v4901, 4
    %v4903 = vmax.f32 %v4901, %v4902
    %v4904 = vrot.slane %v4903, 2
    %v4905 = vmax.f32 %v4903, %v4904
    %v4906 = vrot.slane %v4905, 1
    %v4907 = vmax.f32 %v4905, %v4906
    %v4908 = vpack.i.bf16 %v4907, %v4907
    %v4910 = vsel %vm2515, %v2097, 4286644096
    %v4912 = vunpack.i.l.bf16 %v4910
    %v4913 = vunpack.i.h.bf16 %v4910
    %v4914 = vmax.f32 %v4912, %v4913
    %v4915 = vrot.slane %v4914, 4
    %v4916 = vmax.f32 %v4914, %v4915
    %v4917 = vrot.slane %v4916, 2
    %v4918 = vmax.f32 %v4916, %v4917
    %v4919 = vrot.slane %v4918, 1
    %v4920 = vmax.f32 %v4918, %v4919
    %v4921 = vpack.i.bf16 %v4920, %v4920
    %v4923 = vsel %vm2515, %v2111, 4286644096
    %v4925 = vunpack.i.l.bf16 %v4923
    %v4926 = vunpack.i.h.bf16 %v4923
    %v4927 = vmax.f32 %v4925, %v4926
    %v4928 = vrot.slane %v4927, 4
    %v4929 = vmax.f32 %v4927, %v4928
    %v4930 = vrot.slane %v4929, 2
    %v4931 = vmax.f32 %v4929, %v4930
    %v4932 = vrot.slane %v4931, 1
    %v4933 = vmax.f32 %v4931, %v4932
    %v4934 = vpack.i.bf16 %v4933, %v4933
    %v4936 = vsel %vm2515, %v2119, 4286644096
    %v4938 = vunpack.i.l.bf16 %v4936
    %v4939 = vunpack.i.h.bf16 %v4936
    %v4940 = vmax.f32 %v4938, %v4939
    %v4941 = vrot.slane %v4940, 4
    %v4942 = vmax.f32 %v4940, %v4941
    %v4943 = vrot.slane %v4942, 2
    %v4944 = vmax.f32 %v4942, %v4943
    %v4945 = vrot.slane %v4944, 1
    %v4946 = vmax.f32 %v4944, %v4945
    %v4947 = vpack.i.bf16 %v4946, %v4946
    %v4949 = vsel %vm2515, %v2121, 4286644096
    %v4951 = vunpack.i.l.bf16 %v4949
    %v4952 = vunpack.i.h.bf16 %v4949
    %v4953 = vmax.f32 %v4951, %v4952
    %v4954 = vrot.slane %v4953, 4
    %v4955 = vmax.f32 %v4953, %v4954
    %v4956 = vrot.slane %v4955, 2
    %v4957 = vmax.f32 %v4955, %v4956
    %v4958 = vrot.slane %v4957, 1
    %v4959 = vmax.f32 %v4957, %v4958
    %v4960 = vpack.i.bf16 %v4959, %v4959
    %v4962 = vsel %vm2515, %v2104, 4286644096
    %v4964 = vunpack.i.l.bf16 %v4962
    %v4965 = vunpack.i.h.bf16 %v4962
    %v4966 = vmax.f32 %v4964, %v4965
    %v4967 = vrot.slane %v4966, 4
    %v4968 = vmax.f32 %v4966, %v4967
    %v4969 = vrot.slane %v4968, 2
    %v4970 = vmax.f32 %v4968, %v4969
    %v4971 = vrot.slane %v4970, 1
    %v4972 = vmax.f32 %v4970, %v4971
    %v4973 = vpack.i.bf16 %v4972, %v4972
    %v4975 = vsel %vm2515, %v2118, 4286644096
    %v4977 = vunpack.i.l.bf16 %v4975
    %v4978 = vunpack.i.h.bf16 %v4975
    %v4979 = vmax.f32 %v4977, %v4978
    %v4980 = vrot.slane %v4979, 4
    %v4981 = vmax.f32 %v4979, %v4980
    %v4982 = vrot.slane %v4981, 2
    %v4983 = vmax.f32 %v4981, %v4982
    %v4984 = vrot.slane %v4983, 1
    %v4985 = vmax.f32 %v4983, %v4984
    %v4986 = vpack.i.bf16 %v4985, %v4985
    %v4988 = vsel %vm2515, %v2120, 4286644096
    %v4990 = vunpack.i.l.bf16 %v4988
    %v4991 = vunpack.i.h.bf16 %v4988
    %v4992 = vmax.f32 %v4990, %v4991
    %v4993 = vrot.slane %v4992, 4
    %v4994 = vmax.f32 %v4992, %v4993
    %v4995 = vrot.slane %v4994, 2
    %v4996 = vmax.f32 %v4994, %v4995
    %v4997 = vrot.slane %v4996, 1
    %v4998 = vmax.f32 %v4996, %v4997
    %v4999 = vpack.i.bf16 %v4998, %v4998
    %v5001 = vsel %vm2515, %v2122, 4286644096
    %v5003 = vunpack.i.l.bf16 %v5001
    %v5004 = vunpack.i.h.bf16 %v5001
    %v5005 = vmax.f32 %v5003, %v5004
    %v5006 = vrot.slane %v5005, 4
    %v5007 = vmax.f32 %v5005, %v5006
    %v5008 = vrot.slane %v5007, 2
    %v5009 = vmax.f32 %v5007, %v5008
    %v5010 = vrot.slane %v5009, 1
    %v5011 = vmax.f32 %v5009, %v5010
    %v5012 = vpack.i.bf16 %v5011, %v5011
    %v5014 = vsel %vm2515, %v2146, 4286644096
    %v5016 = vunpack.i.l.bf16 %v5014
    %v5017 = vunpack.i.h.bf16 %v5014
    %v5018 = vmax.f32 %v5016, %v5017
    %v5019 = vrot.slane %v5018, 4
    %v5020 = vmax.f32 %v5018, %v5019
    %v5021 = vrot.slane %v5020, 2
    %v5022 = vmax.f32 %v5020, %v5021
    %v5023 = vrot.slane %v5022, 1
    %v5024 = vmax.f32 %v5022, %v5023
    %v5025 = vpack.i.bf16 %v5024, %v5024
    %v5027 = vsel %vm2515, %v2160, 4286644096
    %v5029 = vunpack.i.l.bf16 %v5027
    %v5030 = vunpack.i.h.bf16 %v5027
    %v5031 = vmax.f32 %v5029, %v5030
    %v5032 = vrot.slane %v5031, 4
    %v5033 = vmax.f32 %v5031, %v5032
    %v5034 = vrot.slane %v5033, 2
    %v5035 = vmax.f32 %v5033, %v5034
    %v5036 = vrot.slane %v5035, 1
    %v5037 = vmax.f32 %v5035, %v5036
    %v5038 = vpack.i.bf16 %v5037, %v5037
    %v5040 = vsel %vm2515, %v2168, 4286644096
    %v5042 = vunpack.i.l.bf16 %v5040
    %v5043 = vunpack.i.h.bf16 %v5040
    %v5044 = vmax.f32 %v5042, %v5043
    %v5045 = vrot.slane %v5044, 4
    %v5046 = vmax.f32 %v5044, %v5045
    %v5047 = vrot.slane %v5046, 2
    %v5048 = vmax.f32 %v5046, %v5047
    %v5049 = vrot.slane %v5048, 1
    %v5050 = vmax.f32 %v5048, %v5049
    %v5051 = vpack.i.bf16 %v5050, %v5050
    %v5053 = vsel %vm2515, %v2170, 4286644096
    %v5055 = vunpack.i.l.bf16 %v5053
    %v5056 = vunpack.i.h.bf16 %v5053
    %v5057 = vmax.f32 %v5055, %v5056
    %v5058 = vrot.slane %v5057, 4
    %v5059 = vmax.f32 %v5057, %v5058
    %v5060 = vrot.slane %v5059, 2
    %v5061 = vmax.f32 %v5059, %v5060
    %v5062 = vrot.slane %v5061, 1
    %v5063 = vmax.f32 %v5061, %v5062
    %v5064 = vpack.i.bf16 %v5063, %v5063
    %v5066 = vsel %vm2515, %v2153, 4286644096
    %v5068 = vunpack.i.l.bf16 %v5066
    %v5069 = vunpack.i.h.bf16 %v5066
    %v5070 = vmax.f32 %v5068, %v5069
    %v5071 = vrot.slane %v5070, 4
    %v5072 = vmax.f32 %v5070, %v5071
    %v5073 = vrot.slane %v5072, 2
    %v5074 = vmax.f32 %v5072, %v5073
    %v5075 = vrot.slane %v5074, 1
    %v5076 = vmax.f32 %v5074, %v5075
    %v5077 = vpack.i.bf16 %v5076, %v5076
    %v5079 = vsel %vm2515, %v2167, 4286644096
    %v5081 = vunpack.i.l.bf16 %v5079
    %v5082 = vunpack.i.h.bf16 %v5079
    %v5083 = vmax.f32 %v5081, %v5082
    %v5084 = vrot.slane %v5083, 4
    %v5085 = vmax.f32 %v5083, %v5084
    %v5086 = vrot.slane %v5085, 2
    %v5087 = vmax.f32 %v5085, %v5086
    %v5088 = vrot.slane %v5087, 1
    %v5089 = vmax.f32 %v5087, %v5088
    %v5090 = vpack.i.bf16 %v5089, %v5089
    %v5092 = vsel %vm2515, %v2169, 4286644096
    %v5094 = vunpack.i.l.bf16 %v5092
    %v5095 = vunpack.i.h.bf16 %v5092
    %v5096 = vmax.f32 %v5094, %v5095
    %v5097 = vrot.slane %v5096, 4
    %v5098 = vmax.f32 %v5096, %v5097
    %v5099 = vrot.slane %v5098, 2
    %v5100 = vmax.f32 %v5098, %v5099
    %v5101 = vrot.slane %v5100, 1
    %v5102 = vmax.f32 %v5100, %v5101
    %v5103 = vpack.i.bf16 %v5102, %v5102
    %v5105 = vsel %vm2515, %v2171, 4286644096
    %v5107 = vunpack.i.l.bf16 %v5105
    %v5108 = vunpack.i.h.bf16 %v5105
    %v5109 = vmax.f32 %v5107, %v5108
    %v5110 = vrot.slane %v5109, 4
    %v5111 = vmax.f32 %v5109, %v5110
    %v5112 = vrot.slane %v5111, 2
    %v5113 = vmax.f32 %v5111, %v5112
    %v5114 = vrot.slane %v5113, 1
    %v5115 = vmax.f32 %v5113, %v5114
    %v5116 = vpack.i.bf16 %v5115, %v5115
    %v5118 = vsel %vm2515, %v2195, 4286644096
    %v5120 = vunpack.i.l.bf16 %v5118
    %v5121 = vunpack.i.h.bf16 %v5118
    %v5122 = vmax.f32 %v5120, %v5121
    %v5123 = vrot.slane %v5122, 4
    %v5124 = vmax.f32 %v5122, %v5123
    %v5125 = vrot.slane %v5124, 2
    %v5126 = vmax.f32 %v5124, %v5125
    %v5127 = vrot.slane %v5126, 1
    %v5128 = vmax.f32 %v5126, %v5127
    %v5129 = vpack.i.bf16 %v5128, %v5128
    %v5131 = vsel %vm2515, %v2209, 4286644096
    %v5133 = vunpack.i.l.bf16 %v5131
    %v5134 = vunpack.i.h.bf16 %v5131
    %v5135 = vmax.f32 %v5133, %v5134
    %v5136 = vrot.slane %v5135, 4
    %v5137 = vmax.f32 %v5135, %v5136
    %v5138 = vrot.slane %v5137, 2
    %v5139 = vmax.f32 %v5137, %v5138
    %v5140 = vrot.slane %v5139, 1
    %v5141 = vmax.f32 %v5139, %v5140
    %v5142 = vpack.i.bf16 %v5141, %v5141
    %v5144 = vsel %vm2515, %v2217, 4286644096
    %v5146 = vunpack.i.l.bf16 %v5144
    %v5147 = vunpack.i.h.bf16 %v5144
    %v5148 = vmax.f32 %v5146, %v5147
    %v5149 = vrot.slane %v5148, 4
    %v5150 = vmax.f32 %v5148, %v5149
    %v5151 = vrot.slane %v5150, 2
    %v5152 = vmax.f32 %v5150, %v5151
    %v5153 = vrot.slane %v5152, 1
    %v5154 = vmax.f32 %v5152, %v5153
    %v5155 = vpack.i.bf16 %v5154, %v5154
    %v5157 = vsel %vm2515, %v2219, 4286644096
    %v5159 = vunpack.i.l.bf16 %v5157
    %v5160 = vunpack.i.h.bf16 %v5157
    %v5161 = vmax.f32 %v5159, %v5160
    %v5162 = vrot.slane %v5161, 4
    %v5163 = vmax.f32 %v5161, %v5162
    %v5164 = vrot.slane %v5163, 2
    %v5165 = vmax.f32 %v5163, %v5164
    %v5166 = vrot.slane %v5165, 1
    %v5167 = vmax.f32 %v5165, %v5166
    %v5168 = vpack.i.bf16 %v5167, %v5167
    %v5170 = vsel %vm2515, %v2202, 4286644096
    %v5172 = vunpack.i.l.bf16 %v5170
    %v5173 = vunpack.i.h.bf16 %v5170
    %v5174 = vmax.f32 %v5172, %v5173
    %v5175 = vrot.slane %v5174, 4
    %v5176 = vmax.f32 %v5174, %v5175
    %v5177 = vrot.slane %v5176, 2
    %v5178 = vmax.f32 %v5176, %v5177
    %v5179 = vrot.slane %v5178, 1
    %v5180 = vmax.f32 %v5178, %v5179
    %v5181 = vpack.i.bf16 %v5180, %v5180
    %v5183 = vsel %vm2515, %v2216, 4286644096
    %v5185 = vunpack.i.l.bf16 %v5183
    %v5186 = vunpack.i.h.bf16 %v5183
    %v5187 = vmax.f32 %v5185, %v5186
    %v5188 = vrot.slane %v5187, 4
    %v5189 = vmax.f32 %v5187, %v5188
    %v5190 = vrot.slane %v5189, 2
    %v5191 = vmax.f32 %v5189, %v5190
    %v5192 = vrot.slane %v5191, 1
    %v5193 = vmax.f32 %v5191, %v5192
    %v5194 = vpack.i.bf16 %v5193, %v5193
    %v5196 = vsel %vm2515, %v2218, 4286644096
    %v5198 = vunpack.i.l.bf16 %v5196
    %v5199 = vunpack.i.h.bf16 %v5196
    %v5200 = vmax.f32 %v5198, %v5199
    %v5201 = vrot.slane %v5200, 4
    %v5202 = vmax.f32 %v5200, %v5201
    %v5203 = vrot.slane %v5202, 2
    %v5204 = vmax.f32 %v5202, %v5203
    %v5205 = vrot.slane %v5204, 1
    %v5206 = vmax.f32 %v5204, %v5205
    %v5207 = vpack.i.bf16 %v5206, %v5206
    %v5209 = vsel %vm2515, %v2220, 4286644096
    %v5211 = vunpack.i.l.bf16 %v5209
    %v5212 = vunpack.i.h.bf16 %v5209
    %v5213 = vmax.f32 %v5211, %v5212
    %v5214 = vrot.slane %v5213, 4
    %v5215 = vmax.f32 %v5213, %v5214
    %v5216 = vrot.slane %v5215, 2
    %v5217 = vmax.f32 %v5215, %v5216
    %v5218 = vrot.slane %v5217, 1
    %v5219 = vmax.f32 %v5217, %v5218
    %v5220 = vpack.i.bf16 %v5219, %v5219
    %v5222 = vsel %vm2515, %v2244, 4286644096
    %v5224 = vunpack.i.l.bf16 %v5222
    %v5225 = vunpack.i.h.bf16 %v5222
    %v5226 = vmax.f32 %v5224, %v5225
    %v5227 = vrot.slane %v5226, 4
    %v5228 = vmax.f32 %v5226, %v5227
    %v5229 = vrot.slane %v5228, 2
    %v5230 = vmax.f32 %v5228, %v5229
    %v5231 = vrot.slane %v5230, 1
    %v5232 = vmax.f32 %v5230, %v5231
    %v5233 = vpack.i.bf16 %v5232, %v5232
    %v5235 = vsel %vm2515, %v2258, 4286644096
    %v5237 = vunpack.i.l.bf16 %v5235
    %v5238 = vunpack.i.h.bf16 %v5235
    %v5239 = vmax.f32 %v5237, %v5238
    %v5240 = vrot.slane %v5239, 4
    %v5241 = vmax.f32 %v5239, %v5240
    %v5242 = vrot.slane %v5241, 2
    %v5243 = vmax.f32 %v5241, %v5242
    %v5244 = vrot.slane %v5243, 1
    %v5245 = vmax.f32 %v5243, %v5244
    %v5246 = vpack.i.bf16 %v5245, %v5245
    %v5248 = vsel %vm2515, %v2266, 4286644096
    %v5250 = vunpack.i.l.bf16 %v5248
    %v5251 = vunpack.i.h.bf16 %v5248
    %v5252 = vmax.f32 %v5250, %v5251
    %v5253 = vrot.slane %v5252, 4
    %v5254 = vmax.f32 %v5252, %v5253
    %v5255 = vrot.slane %v5254, 2
    %v5256 = vmax.f32 %v5254, %v5255
    %v5257 = vrot.slane %v5256, 1
    %v5258 = vmax.f32 %v5256, %v5257
    %v5259 = vpack.i.bf16 %v5258, %v5258
    %v5261 = vsel %vm2515, %v2268, 4286644096
    %v5263 = vunpack.i.l.bf16 %v5261
    %v5264 = vunpack.i.h.bf16 %v5261
    %v5265 = vmax.f32 %v5263, %v5264
    %v5266 = vrot.slane %v5265, 4
    %v5267 = vmax.f32 %v5265, %v5266
    %v5268 = vrot.slane %v5267, 2
    %v5269 = vmax.f32 %v5267, %v5268
    %v5270 = vrot.slane %v5269, 1
    %v5271 = vmax.f32 %v5269, %v5270
    %v5272 = vpack.i.bf16 %v5271, %v5271
    %v5274 = vsel %vm2515, %v2251, 4286644096
    %v5276 = vunpack.i.l.bf16 %v5274
    %v5277 = vunpack.i.h.bf16 %v5274
    %v5278 = vmax.f32 %v5276, %v5277
    %v5279 = vrot.slane %v5278, 4
    %v5280 = vmax.f32 %v5278, %v5279
    %v5281 = vrot.slane %v5280, 2
    %v5282 = vmax.f32 %v5280, %v5281
    %v5283 = vrot.slane %v5282, 1
    %v5284 = vmax.f32 %v5282, %v5283
    %v5285 = vpack.i.bf16 %v5284, %v5284
    %v5287 = vsel %vm2515, %v2265, 4286644096
    %v5289 = vunpack.i.l.bf16 %v5287
    %v5290 = vunpack.i.h.bf16 %v5287
    %v5291 = vmax.f32 %v5289, %v5290
    %v5292 = vrot.slane %v5291, 4
    %v5293 = vmax.f32 %v5291, %v5292
    %v5294 = vrot.slane %v5293, 2
    %v5295 = vmax.f32 %v5293, %v5294
    %v5296 = vrot.slane %v5295, 1
    %v5297 = vmax.f32 %v5295, %v5296
    %v5298 = vpack.i.bf16 %v5297, %v5297
    %v5300 = vsel %vm2515, %v2267, 4286644096
    %v5302 = vunpack.i.l.bf16 %v5300
    %v5303 = vunpack.i.h.bf16 %v5300
    %v5304 = vmax.f32 %v5302, %v5303
    %v5305 = vrot.slane %v5304, 4
    %v5306 = vmax.f32 %v5304, %v5305
    %v5307 = vrot.slane %v5306, 2
    %v5308 = vmax.f32 %v5306, %v5307
    %v5309 = vrot.slane %v5308, 1
    %v5310 = vmax.f32 %v5308, %v5309
    %v5311 = vpack.i.bf16 %v5310, %v5310
    %v5313 = vsel %vm2515, %v2269, 4286644096
    %v5315 = vunpack.i.l.bf16 %v5313
    %v5316 = vunpack.i.h.bf16 %v5313
    %v5317 = vmax.f32 %v5315, %v5316
    %v5318 = vrot.slane %v5317, 4
    %v5319 = vmax.f32 %v5317, %v5318
    %v5320 = vrot.slane %v5319, 2
    %v5321 = vmax.f32 %v5319, %v5320
    %v5322 = vrot.slane %v5321, 1
    %v5323 = vmax.f32 %v5321, %v5322
    %v5324 = vpack.i.bf16 %v5323, %v5323
    %v5326 = vsel %vm2515, %v2293, 4286644096
    %v5328 = vunpack.i.l.bf16 %v5326
    %v5329 = vunpack.i.h.bf16 %v5326
    %v5330 = vmax.f32 %v5328, %v5329
    %v5331 = vrot.slane %v5330, 4
    %v5332 = vmax.f32 %v5330, %v5331
    %v5333 = vrot.slane %v5332, 2
    %v5334 = vmax.f32 %v5332, %v5333
    %v5335 = vrot.slane %v5334, 1
    %v5336 = vmax.f32 %v5334, %v5335
    %v5337 = vpack.i.bf16 %v5336, %v5336
    %v5339 = vsel %vm2515, %v2307, 4286644096
    %v5341 = vunpack.i.l.bf16 %v5339
    %v5342 = vunpack.i.h.bf16 %v5339
    %v5343 = vmax.f32 %v5341, %v5342
    %v5344 = vrot.slane %v5343, 4
    %v5345 = vmax.f32 %v5343, %v5344
    %v5346 = vrot.slane %v5345, 2
    %v5347 = vmax.f32 %v5345, %v5346
    %v5348 = vrot.slane %v5347, 1
    %v5349 = vmax.f32 %v5347, %v5348
    %v5350 = vpack.i.bf16 %v5349, %v5349
    %v5352 = vsel %vm2515, %v2315, 4286644096
    %v5354 = vunpack.i.l.bf16 %v5352
    %v5355 = vunpack.i.h.bf16 %v5352
    %v5356 = vmax.f32 %v5354, %v5355
    %v5357 = vrot.slane %v5356, 4
    %v5358 = vmax.f32 %v5356, %v5357
    %v5359 = vrot.slane %v5358, 2
    %v5360 = vmax.f32 %v5358, %v5359
    %v5361 = vrot.slane %v5360, 1
    %v5362 = vmax.f32 %v5360, %v5361
    %v5363 = vpack.i.bf16 %v5362, %v5362
    %v5365 = vsel %vm2515, %v2317, 4286644096
    %v5367 = vunpack.i.l.bf16 %v5365
    %v5368 = vunpack.i.h.bf16 %v5365
    %v5369 = vmax.f32 %v5367, %v5368
    %v5370 = vrot.slane %v5369, 4
    %v5371 = vmax.f32 %v5369, %v5370
    %v5372 = vrot.slane %v5371, 2
    %v5373 = vmax.f32 %v5371, %v5372
    %v5374 = vrot.slane %v5373, 1
    %v5375 = vmax.f32 %v5373, %v5374
    %v5376 = vpack.i.bf16 %v5375, %v5375
    %v5378 = vsel %vm2515, %v2300, 4286644096
    %v5380 = vunpack.i.l.bf16 %v5378
    %v5381 = vunpack.i.h.bf16 %v5378
    %v5382 = vmax.f32 %v5380, %v5381
    %v5383 = vrot.slane %v5382, 4
    %v5384 = vmax.f32 %v5382, %v5383
    %v5385 = vrot.slane %v5384, 2
    %v5386 = vmax.f32 %v5384, %v5385
    %v5387 = vrot.slane %v5386, 1
    %v5388 = vmax.f32 %v5386, %v5387
    %v5389 = vpack.i.bf16 %v5388, %v5388
    %v5391 = vsel %vm2515, %v2314, 4286644096
    %v5393 = vunpack.i.l.bf16 %v5391
    %v5394 = vunpack.i.h.bf16 %v5391
    %v5395 = vmax.f32 %v5393, %v5394
    %v5396 = vrot.slane %v5395, 4
    %v5397 = vmax.f32 %v5395, %v5396
    %v5398 = vrot.slane %v5397, 2
    %v5399 = vmax.f32 %v5397, %v5398
    %v5400 = vrot.slane %v5399, 1
    %v5401 = vmax.f32 %v5399, %v5400
    %v5402 = vpack.i.bf16 %v5401, %v5401
    %v5404 = vsel %vm2515, %v2316, 4286644096
    %v5406 = vunpack.i.l.bf16 %v5404
    %v5407 = vunpack.i.h.bf16 %v5404
    %v5408 = vmax.f32 %v5406, %v5407
    %v5409 = vrot.slane %v5408, 4
    %v5410 = vmax.f32 %v5408, %v5409
    %v5411 = vrot.slane %v5410, 2
    %v5412 = vmax.f32 %v5410, %v5411
    %v5413 = vrot.slane %v5412, 1
    %v5414 = vmax.f32 %v5412, %v5413
    %v5415 = vpack.i.bf16 %v5414, %v5414
    %v5417 = vsel %vm2515, %v2318, 4286644096
    %v5419 = vunpack.i.l.bf16 %v5417
    %v5420 = vunpack.i.h.bf16 %v5417
    %v5421 = vmax.f32 %v5419, %v5420
    %v5422 = vrot.slane %v5421, 4
    %v5423 = vmax.f32 %v5421, %v5422
    %v5424 = vrot.slane %v5423, 2
    %v5425 = vmax.f32 %v5423, %v5424
    %v5426 = vrot.slane %v5425, 1
    %v5427 = vmax.f32 %v5425, %v5426
    %v5428 = vpack.i.bf16 %v5427, %v5427
    %v5430 = vsel %vm2515, %v2342, 4286644096
    %v5432 = vunpack.i.l.bf16 %v5430
    %v5433 = vunpack.i.h.bf16 %v5430
    %v5434 = vmax.f32 %v5432, %v5433
    %v5435 = vrot.slane %v5434, 4
    %v5436 = vmax.f32 %v5434, %v5435
    %v5437 = vrot.slane %v5436, 2
    %v5438 = vmax.f32 %v5436, %v5437
    %v5439 = vrot.slane %v5438, 1
    %v5440 = vmax.f32 %v5438, %v5439
    %v5441 = vpack.i.bf16 %v5440, %v5440
    %v5443 = vsel %vm2515, %v2356, 4286644096
    %v5445 = vunpack.i.l.bf16 %v5443
    %v5446 = vunpack.i.h.bf16 %v5443
    %v5447 = vmax.f32 %v5445, %v5446
    %v5448 = vrot.slane %v5447, 4
    %v5449 = vmax.f32 %v5447, %v5448
    %v5450 = vrot.slane %v5449, 2
    %v5451 = vmax.f32 %v5449, %v5450
    %v5452 = vrot.slane %v5451, 1
    %v5453 = vmax.f32 %v5451, %v5452
    %v5454 = vpack.i.bf16 %v5453, %v5453
    %v5456 = vsel %vm2515, %v2364, 4286644096
    %v5458 = vunpack.i.l.bf16 %v5456
    %v5459 = vunpack.i.h.bf16 %v5456
    %v5460 = vmax.f32 %v5458, %v5459
    %v5461 = vrot.slane %v5460, 4
    %v5462 = vmax.f32 %v5460, %v5461
    %v5463 = vrot.slane %v5462, 2
    %v5464 = vmax.f32 %v5462, %v5463
    %v5465 = vrot.slane %v5464, 1
    %v5466 = vmax.f32 %v5464, %v5465
    %v5467 = vpack.i.bf16 %v5466, %v5466
    %v5469 = vsel %vm2515, %v2366, 4286644096
    %v5471 = vunpack.i.l.bf16 %v5469
    %v5472 = vunpack.i.h.bf16 %v5469
    %v5473 = vmax.f32 %v5471, %v5472
    %v5474 = vrot.slane %v5473, 4
    %v5475 = vmax.f32 %v5473, %v5474
    %v5476 = vrot.slane %v5475, 2
    %v5477 = vmax.f32 %v5475, %v5476
    %v5478 = vrot.slane %v5477, 1
    %v5479 = vmax.f32 %v5477, %v5478
    %v5480 = vpack.i.bf16 %v5479, %v5479
    %v5482 = vsel %vm2515, %v2349, 4286644096
    %v5484 = vunpack.i.l.bf16 %v5482
    %v5485 = vunpack.i.h.bf16 %v5482
    %v5486 = vmax.f32 %v5484, %v5485
    %v5487 = vrot.slane %v5486, 4
    %v5488 = vmax.f32 %v5486, %v5487
    %v5489 = vrot.slane %v5488, 2
    %v5490 = vmax.f32 %v5488, %v5489
    %v5491 = vrot.slane %v5490, 1
    %v5492 = vmax.f32 %v5490, %v5491
    %v5493 = vpack.i.bf16 %v5492, %v5492
    %v5495 = vsel %vm2515, %v2363, 4286644096
    %v5497 = vunpack.i.l.bf16 %v5495
    %v5498 = vunpack.i.h.bf16 %v5495
    %v5499 = vmax.f32 %v5497, %v5498
    %v5500 = vrot.slane %v5499, 4
    %v5501 = vmax.f32 %v5499, %v5500
    %v5502 = vrot.slane %v5501, 2
    %v5503 = vmax.f32 %v5501, %v5502
    %v5504 = vrot.slane %v5503, 1
    %v5505 = vmax.f32 %v5503, %v5504
    %v5506 = vpack.i.bf16 %v5505, %v5505
    %v5508 = vsel %vm2515, %v2365, 4286644096
    %v5510 = vunpack.i.l.bf16 %v5508
    %v5511 = vunpack.i.h.bf16 %v5508
    %v5512 = vmax.f32 %v5510, %v5511
    %v5513 = vrot.slane %v5512, 4
    %v5514 = vmax.f32 %v5512, %v5513
    %v5515 = vrot.slane %v5514, 2
    %v5516 = vmax.f32 %v5514, %v5515
    %v5517 = vrot.slane %v5516, 1
    %v5518 = vmax.f32 %v5516, %v5517
    %v5519 = vpack.i.bf16 %v5518, %v5518
    %v5521 = vsel %vm2515, %v2367, 4286644096
    %v5523 = vunpack.i.l.bf16 %v5521
    %v5524 = vunpack.i.h.bf16 %v5521
    %v5525 = vmax.f32 %v5523, %v5524
    %v5526 = vrot.slane %v5525, 4
    %v5527 = vmax.f32 %v5525, %v5526
    %v5528 = vrot.slane %v5527, 2
    %v5529 = vmax.f32 %v5527, %v5528
    %v5530 = vrot.slane %v5529, 1
    %v5531 = vmax.f32 %v5529, %v5530
    %v5532 = vpack.i.bf16 %v5531, %v5531
    %v5534 = vsel %vm2515, %v2391, 4286644096
    %v5536 = vunpack.i.l.bf16 %v5534
    %v5537 = vunpack.i.h.bf16 %v5534
    %v5538 = vmax.f32 %v5536, %v5537
    %v5539 = vrot.slane %v5538, 4
    %v5540 = vmax.f32 %v5538, %v5539
    %v5541 = vrot.slane %v5540, 2
    %v5542 = vmax.f32 %v5540, %v5541
    %v5543 = vrot.slane %v5542, 1
    %v5544 = vmax.f32 %v5542, %v5543
    %v5545 = vpack.i.bf16 %v5544, %v5544
    %v5547 = vsel %vm2515, %v2405, 4286644096
    %v5549 = vunpack.i.l.bf16 %v5547
    %v5550 = vunpack.i.h.bf16 %v5547
    %v5551 = vmax.f32 %v5549, %v5550
    %v5552 = vrot.slane %v5551, 4
    %v5553 = vmax.f32 %v5551, %v5552
    %v5554 = vrot.slane %v5553, 2
    %v5555 = vmax.f32 %v5553, %v5554
    %v5556 = vrot.slane %v5555, 1
    %v5557 = vmax.f32 %v5555, %v5556
    %v5558 = vpack.i.bf16 %v5557, %v5557
    %v5560 = vsel %vm2515, %v2413, 4286644096
    %v5562 = vunpack.i.l.bf16 %v5560
    %v5563 = vunpack.i.h.bf16 %v5560
    %v5564 = vmax.f32 %v5562, %v5563
    %v5565 = vrot.slane %v5564, 4
    %v5566 = vmax.f32 %v5564, %v5565
    %v5567 = vrot.slane %v5566, 2
    %v5568 = vmax.f32 %v5566, %v5567
    %v5569 = vrot.slane %v5568, 1
    %v5570 = vmax.f32 %v5568, %v5569
    %v5571 = vpack.i.bf16 %v5570, %v5570
    %v5573 = vsel %vm2515, %v2415, 4286644096
    %v5575 = vunpack.i.l.bf16 %v5573
    %v5576 = vunpack.i.h.bf16 %v5573
    %v5577 = vmax.f32 %v5575, %v5576
    %v5578 = vrot.slane %v5577, 4
    %v5579 = vmax.f32 %v5577, %v5578
    %v5580 = vrot.slane %v5579, 2
    %v5581 = vmax.f32 %v5579, %v5580
    %v5582 = vrot.slane %v5581, 1
    %v5583 = vmax.f32 %v5581, %v5582
    %v5584 = vpack.i.bf16 %v5583, %v5583
    %v5586 = vsel %vm2515, %v2398, 4286644096
    %v5588 = vunpack.i.l.bf16 %v5586
    %v5589 = vunpack.i.h.bf16 %v5586
    %v5590 = vmax.f32 %v5588, %v5589
    %v5591 = vrot.slane %v5590, 4
    %v5592 = vmax.f32 %v5590, %v5591
    %v5593 = vrot.slane %v5592, 2
    %v5594 = vmax.f32 %v5592, %v5593
    %v5595 = vrot.slane %v5594, 1
    %v5596 = vmax.f32 %v5594, %v5595
    %v5597 = vpack.i.bf16 %v5596, %v5596
    %v5599 = vsel %vm2515, %v2412, 4286644096
    %v5601 = vunpack.i.l.bf16 %v5599
    %v5602 = vunpack.i.h.bf16 %v5599
    %v5603 = vmax.f32 %v5601, %v5602
    %v5604 = vrot.slane %v5603, 4
    %v5605 = vmax.f32 %v5603, %v5604
    %v5606 = vrot.slane %v5605, 2
    %v5607 = vmax.f32 %v5605, %v5606
    %v5608 = vrot.slane %v5607, 1
    %v5609 = vmax.f32 %v5607, %v5608
    %v5610 = vpack.i.bf16 %v5609, %v5609
    %v5612 = vsel %vm2515, %v2414, 4286644096
    %v5614 = vunpack.i.l.bf16 %v5612
    %v5615 = vunpack.i.h.bf16 %v5612
    %v5616 = vmax.f32 %v5614, %v5615
    %v5617 = vrot.slane %v5616, 4
    %v5618 = vmax.f32 %v5616, %v5617
    %v5619 = vrot.slane %v5618, 2
    %v5620 = vmax.f32 %v5618, %v5619
    %v5621 = vrot.slane %v5620, 1
    %v5622 = vmax.f32 %v5620, %v5621
    %v5623 = vpack.i.bf16 %v5622, %v5622
    %v5625 = vsel %vm2515, %v2416, 4286644096
    %v5627 = vunpack.i.l.bf16 %v5625
    %v5628 = vunpack.i.h.bf16 %v5625
    %v5629 = vmax.f32 %v5627, %v5628
    %v5630 = vrot.slane %v5629, 4
    %v5631 = vmax.f32 %v5629, %v5630
    %v5632 = vrot.slane %v5631, 2
    %v5633 = vmax.f32 %v5631, %v5632
    %v5634 = vrot.slane %v5633, 1
    %v5635 = vmax.f32 %v5633, %v5634
    %v5636 = vpack.i.bf16 %v5635, %v5635
    %v5638 = vsel %vm2515, %v2440, 4286644096
    %v5640 = vunpack.i.l.bf16 %v5638
    %v5641 = vunpack.i.h.bf16 %v5638
    %v5642 = vmax.f32 %v5640, %v5641
    %v5643 = vrot.slane %v5642, 4
    %v5644 = vmax.f32 %v5642, %v5643
    %v5645 = vrot.slane %v5644, 2
    %v5646 = vmax.f32 %v5644, %v5645
    %v5647 = vrot.slane %v5646, 1
    %v5648 = vmax.f32 %v5646, %v5647
    %v5649 = vpack.i.bf16 %v5648, %v5648
    %v5651 = vsel %vm2515, %v2454, 4286644096
    %v5653 = vunpack.i.l.bf16 %v5651
    %v5654 = vunpack.i.h.bf16 %v5651
    %v5655 = vmax.f32 %v5653, %v5654
    %v5656 = vrot.slane %v5655, 4
    %v5657 = vmax.f32 %v5655, %v5656
    %v5658 = vrot.slane %v5657, 2
    %v5659 = vmax.f32 %v5657, %v5658
    %v5660 = vrot.slane %v5659, 1
    %v5661 = vmax.f32 %v5659, %v5660
    %v5662 = vpack.i.bf16 %v5661, %v5661
    %v5664 = vsel %vm2515, %v2462, 4286644096
    %v5666 = vunpack.i.l.bf16 %v5664
    %v5667 = vunpack.i.h.bf16 %v5664
    %v5668 = vmax.f32 %v5666, %v5667
    %v5669 = vrot.slane %v5668, 4
    %v5670 = vmax.f32 %v5668, %v5669
    %v5671 = vrot.slane %v5670, 2
    %v5672 = vmax.f32 %v5670, %v5671
    %v5673 = vrot.slane %v5672, 1
    %v5674 = vmax.f32 %v5672, %v5673
    %v5675 = vpack.i.bf16 %v5674, %v5674
    %v5677 = vsel %vm2515, %v2464, 4286644096
    %v5679 = vunpack.i.l.bf16 %v5677
    %v5680 = vunpack.i.h.bf16 %v5677
    %v5681 = vmax.f32 %v5679, %v5680
    %v5682 = vrot.slane %v5681, 4
    %v5683 = vmax.f32 %v5681, %v5682
    %v5684 = vrot.slane %v5683, 2
    %v5685 = vmax.f32 %v5683, %v5684
    %v5686 = vrot.slane %v5685, 1
    %v5687 = vmax.f32 %v5685, %v5686
    %v5688 = vpack.i.bf16 %v5687, %v5687
    %v5690 = vsel %vm2515, %v2447, 4286644096
    %v5692 = vunpack.i.l.bf16 %v5690
    %v5693 = vunpack.i.h.bf16 %v5690
    %v5694 = vmax.f32 %v5692, %v5693
    %v5695 = vrot.slane %v5694, 4
    %v5696 = vmax.f32 %v5694, %v5695
    %v5697 = vrot.slane %v5696, 2
    %v5698 = vmax.f32 %v5696, %v5697
    %v5699 = vrot.slane %v5698, 1
    %v5700 = vmax.f32 %v5698, %v5699
    %v5701 = vpack.i.bf16 %v5700, %v5700
    %v5703 = vsel %vm2515, %v2461, 4286644096
    %v5705 = vunpack.i.l.bf16 %v5703
    %v5706 = vunpack.i.h.bf16 %v5703
    %v5707 = vmax.f32 %v5705, %v5706
    %v5708 = vrot.slane %v5707, 4
    %v5709 = vmax.f32 %v5707, %v5708
    %v5710 = vrot.slane %v5709, 2
    %v5711 = vmax.f32 %v5709, %v5710
    %v5712 = vrot.slane %v5711, 1
    %v5713 = vmax.f32 %v5711, %v5712
    %v5714 = vpack.i.bf16 %v5713, %v5713
    %v5716 = vsel %vm2515, %v2463, 4286644096
    %v5718 = vunpack.i.l.bf16 %v5716
    %v5719 = vunpack.i.h.bf16 %v5716
    %v5720 = vmax.f32 %v5718, %v5719
    %v5721 = vrot.slane %v5720, 4
    %v5722 = vmax.f32 %v5720, %v5721
    %v5723 = vrot.slane %v5722, 2
    %v5724 = vmax.f32 %v5722, %v5723
    %v5725 = vrot.slane %v5724, 1
    %v5726 = vmax.f32 %v5724, %v5725
    %v5727 = vpack.i.bf16 %v5726, %v5726
    %v5729 = vsel %vm2515, %v2465, 4286644096
    %v5731 = vunpack.i.l.bf16 %v5729
    %v5732 = vunpack.i.h.bf16 %v5729
    %v5733 = vmax.f32 %v5731, %v5732
    %v5734 = vrot.slane %v5733, 4
    %v5735 = vmax.f32 %v5733, %v5734
    %v5736 = vrot.slane %v5735, 2
    %v5737 = vmax.f32 %v5735, %v5736
    %v5738 = vrot.slane %v5737, 1
    %v5739 = vmax.f32 %v5737, %v5738
    %v5740 = vpack.i.bf16 %v5739, %v5739
    %v5742 = vsel %vm2515, %v2489, 4286644096
    %v5744 = vunpack.i.l.bf16 %v5742
    %v5745 = vunpack.i.h.bf16 %v5742
    %v5746 = vmax.f32 %v5744, %v5745
    %v5747 = vrot.slane %v5746, 4
    %v5748 = vmax.f32 %v5746, %v5747
    %v5749 = vrot.slane %v5748, 2
    %v5750 = vmax.f32 %v5748, %v5749
    %v5751 = vrot.slane %v5750, 1
    %v5752 = vmax.f32 %v5750, %v5751
    %v5753 = vpack.i.bf16 %v5752, %v5752
    %v5755 = vsel %vm2515, %v2503, 4286644096
    %v5757 = vunpack.i.l.bf16 %v5755
    %v5758 = vunpack.i.h.bf16 %v5755
    %v5759 = vmax.f32 %v5757, %v5758
    %v5760 = vrot.slane %v5759, 4
    %v5761 = vmax.f32 %v5759, %v5760
    %v5762 = vrot.slane %v5761, 2
    %v5763 = vmax.f32 %v5761, %v5762
    %v5764 = vrot.slane %v5763, 1
    %v5765 = vmax.f32 %v5763, %v5764
    %v5766 = vpack.i.bf16 %v5765, %v5765
    %v5768 = vsel %vm2515, %v2511, 4286644096
    %v5770 = vunpack.i.l.bf16 %v5768
    %v5771 = vunpack.i.h.bf16 %v5768
    %v5772 = vmax.f32 %v5770, %v5771
    %v5773 = vrot.slane %v5772, 4
    %v5774 = vmax.f32 %v5772, %v5773
    %v5775 = vrot.slane %v5774, 2
    %v5776 = vmax.f32 %v5774, %v5775
    %v5777 = vrot.slane %v5776, 1
    %v5778 = vmax.f32 %v5776, %v5777
    %v5779 = vpack.i.bf16 %v5778, %v5778
    %v5781 = vsel %vm2515, %v2513, 4286644096
    %v5783 = vunpack.i.l.bf16 %v5781
    %v5784 = vunpack.i.h.bf16 %v5781
    %v5785 = vmax.f32 %v5783, %v5784
    %v5786 = vrot.slane %v5785, 4
    %v5787 = vmax.f32 %v5785, %v5786
    %v5788 = vrot.slane %v5787, 2
    %v5789 = vmax.f32 %v5787, %v5788
    %v5790 = vrot.slane %v5789, 1
    %v5791 = vmax.f32 %v5789, %v5790
    %v5792 = vpack.i.bf16 %v5791, %v5791
    %v5794 = vsel %vm2515, %v2496, 4286644096
    %v5796 = vunpack.i.l.bf16 %v5794
    %v5797 = vunpack.i.h.bf16 %v5794
    %v5798 = vmax.f32 %v5796, %v5797
    %v5799 = vrot.slane %v5798, 4
    %v5800 = vmax.f32 %v5798, %v5799
    %v5801 = vrot.slane %v5800, 2
    %v5802 = vmax.f32 %v5800, %v5801
    %v5803 = vrot.slane %v5802, 1
    %v5804 = vmax.f32 %v5802, %v5803
    %v5805 = vpack.i.bf16 %v5804, %v5804
    %v5807 = vsel %vm2515, %v2510, 4286644096
    %v5809 = vunpack.i.l.bf16 %v5807
    %v5810 = vunpack.i.h.bf16 %v5807
    %v5811 = vmax.f32 %v5809, %v5810
    %v5812 = vrot.slane %v5811, 4
    %v5813 = vmax.f32 %v5811, %v5812
    %v5814 = vrot.slane %v5813, 2
    %v5815 = vmax.f32 %v5813, %v5814
    %v5816 = vrot.slane %v5815, 1
    %v5817 = vmax.f32 %v5815, %v5816
    %v5818 = vpack.i.bf16 %v5817, %v5817
    %v5820 = vsel %vm2515, %v2512, 4286644096
    %v5822 = vunpack.i.l.bf16 %v5820
    %v5823 = vunpack.i.h.bf16 %v5820
    %v5824 = vmax.f32 %v5822, %v5823
    %v5825 = vrot.slane %v5824, 4
    %v5826 = vmax.f32 %v5824, %v5825
    %v5827 = vrot.slane %v5826, 2
    %v5828 = vmax.f32 %v5826, %v5827
    %v5829 = vrot.slane %v5828, 1
    %v5830 = vmax.f32 %v5828, %v5829
    %v5831 = vpack.i.bf16 %v5830, %v5830
    %v5833 = vsel %vm2515, %v2514, 4286644096
    %v5835 = vunpack.i.l.bf16 %v5833
    %v5836 = vunpack.i.h.bf16 %v5833
    %v5837 = vmax.f32 %v5835, %v5836
    %v5838 = vrot.slane %v5837, 4
    %v5839 = vmax.f32 %v5837, %v5838
    %v5840 = vrot.slane %v5839, 2
    %v5841 = vmax.f32 %v5839, %v5840
    %v5842 = vrot.slane %v5841, 1
    %v5843 = vmax.f32 %v5841, %v5842
    %v5844 = vpack.i.bf16 %v5843, %v5843
    %v5845 = vmax.bf16 %v2529, %v2633
    %v5846 = vmax.bf16 %v2542, %v2646
    %v5847 = vmax.bf16 %v2555, %v2659
    %v5848 = vmax.bf16 %v2568, %v2672
    %v5849 = vmax.bf16 %v2581, %v2685
    %v5850 = vmax.bf16 %v2594, %v2698
    %v5851 = vmax.bf16 %v2607, %v2711
    %v5852 = vmax.bf16 %v2620, %v2724
    %v5853 = vmax.bf16 %v2737, %v2841
    %v5854 = vmax.bf16 %v2750, %v2854
    %v5855 = vmax.bf16 %v2763, %v2867
    %v5856 = vmax.bf16 %v2776, %v2880
    %v5857 = vmax.bf16 %v2789, %v2893
    %v5858 = vmax.bf16 %v2802, %v2906
    %v5859 = vmax.bf16 %v2815, %v2919
    %v5860 = vmax.bf16 %v2828, %v2932
    %v5861 = vmax.bf16 %v2945, %v3049
    %v5862 = vmax.bf16 %v2958, %v3062
    %v5863 = vmax.bf16 %v2971, %v3075
    %v5864 = vmax.bf16 %v2984, %v3088
    %v5865 = vmax.bf16 %v2997, %v3101
    %v5866 = vmax.bf16 %v3010, %v3114
    %v5867 = vmax.bf16 %v3023, %v3127
    %v5868 = vmax.bf16 %v3036, %v3140
    %v5869 = vmax.bf16 %v3153, %v3257
    %v5870 = vmax.bf16 %v3166, %v3270
    %v5871 = vmax.bf16 %v3179, %v3283
    %v5872 = vmax.bf16 %v3192, %v3296
    %v5873 = vmax.bf16 %v3205, %v3309
    %v5874 = vmax.bf16 %v3218, %v3322
    %v5875 = vmax.bf16 %v3231, %v3335
    %v5876 = vmax.bf16 %v3244, %v3348
    %v5877 = vmax.bf16 %v3361, %v3465
    %v5878 = vmax.bf16 %v3374, %v3478
    %v5879 = vmax.bf16 %v3387, %v3491
    %v5880 = vmax.bf16 %v3400, %v3504
    %v5881 = vmax.bf16 %v3413, %v3517
    %v5882 = vmax.bf16 %v3426, %v3530
    %v5883 = vmax.bf16 %v3439, %v3543
    %v5884 = vmax.bf16 %v3452, %v3556
    %v5885 = vmax.bf16 %v3569, %v3673
    %v5886 = vmax.bf16 %v3582, %v3686
    %v5887 = vmax.bf16 %v3595, %v3699
    %v5888 = vmax.bf16 %v3608, %v3712
    %v5889 = vmax.bf16 %v3621, %v3725
    %v5890 = vmax.bf16 %v3634, %v3738
    %v5891 = vmax.bf16 %v3647, %v3751
    %v5892 = vmax.bf16 %v3660, %v3764
    %v5893 = vmax.bf16 %v3777, %v3881
    %v5894 = vmax.bf16 %v3790, %v3894
    %v5895 = vmax.bf16 %v3803, %v3907
    %v5896 = vmax.bf16 %v3816, %v3920
    %v5897 = vmax.bf16 %v3829, %v3933
    %v5898 = vmax.bf16 %v3842, %v3946
    %v5899 = vmax.bf16 %v3855, %v3959
    %v5900 = vmax.bf16 %v3868, %v3972
    %v5901 = vmax.bf16 %v3985, %v4089
    %v5902 = vmax.bf16 %v3998, %v4102
    %v5903 = vmax.bf16 %v4011, %v4115
    %v5904 = vmax.bf16 %v4024, %v4128
    %v5905 = vmax.bf16 %v4037, %v4141
    %v5906 = vmax.bf16 %v4050, %v4154
    %v5907 = vmax.bf16 %v4063, %v4167
    %v5908 = vmax.bf16 %v4076, %v4180
    %v5909 = vmax.bf16 %v4193, %v4297
    %v5910 = vmax.bf16 %v4206, %v4310
    %v5911 = vmax.bf16 %v4219, %v4323
    %v5912 = vmax.bf16 %v4232, %v4336
    %v5913 = vmax.bf16 %v4245, %v4349
    %v5914 = vmax.bf16 %v4258, %v4362
    %v5915 = vmax.bf16 %v4271, %v4375
    %v5916 = vmax.bf16 %v4284, %v4388
    %v5917 = vmax.bf16 %v4401, %v4505
    %v5918 = vmax.bf16 %v4414, %v4518
    %v5919 = vmax.bf16 %v4427, %v4531
    %v5920 = vmax.bf16 %v4440, %v4544
    %v5921 = vmax.bf16 %v4453, %v4557
    %v5922 = vmax.bf16 %v4466, %v4570
    %v5923 = vmax.bf16 %v4479, %v4583
    %v5924 = vmax.bf16 %v4492, %v4596
    %v5925 = vmax.bf16 %v4609, %v4713
    %v5926 = vmax.bf16 %v4622, %v4726
    %v5927 = vmax.bf16 %v4635, %v4739
    %v5928 = vmax.bf16 %v4648, %v4752
    %v5929 = vmax.bf16 %v4661, %v4765
    %v5930 = vmax.bf16 %v4674, %v4778
    %v5931 = vmax.bf16 %v4687, %v4791
    %v5932 = vmax.bf16 %v4700, %v4804
    %v5933 = vmax.bf16 %v4817, %v4921
    %v5934 = vmax.bf16 %v4830, %v4934
    %v5935 = vmax.bf16 %v4843, %v4947
    %v5936 = vmax.bf16 %v4856, %v4960
    %v5937 = vmax.bf16 %v4869, %v4973
    %v5938 = vmax.bf16 %v4882, %v4986
    %v5939 = vmax.bf16 %v4895, %v4999
    %v5940 = vmax.bf16 %v4908, %v5012
    %v5941 = vmax.bf16 %v5025, %v5129
    %v5942 = vmax.bf16 %v5038, %v5142
    %v5943 = vmax.bf16 %v5051, %v5155
    %v5944 = vmax.bf16 %v5064, %v5168
    %v5945 = vmax.bf16 %v5077, %v5181
    %v5946 = vmax.bf16 %v5090, %v5194
    %v5947 = vmax.bf16 %v5103, %v5207
    %v5948 = vmax.bf16 %v5116, %v5220
    %v5949 = vmax.bf16 %v5233, %v5337
    %v5950 = vmax.bf16 %v5246, %v5350
    %v5951 = vmax.bf16 %v5259, %v5363
    %v5952 = vmax.bf16 %v5272, %v5376
    %v5953 = vmax.bf16 %v5285, %v5389
    %v5954 = vmax.bf16 %v5298, %v5402
    %v5955 = vmax.bf16 %v5311, %v5415
    %v5956 = vmax.bf16 %v5324, %v5428
    %v5957 = vmax.bf16 %v5441, %v5545
    %v5958 = vmax.bf16 %v5454, %v5558
    %v5959 = vmax.bf16 %v5467, %v5571
    %v5960 = vmax.bf16 %v5480, %v5584
    %v5961 = vmax.bf16 %v5493, %v5597
    %v5962 = vmax.bf16 %v5506, %v5610
    %v5963 = vmax.bf16 %v5519, %v5623
    %v5964 = vmax.bf16 %v5532, %v5636
    %v5965 = vmax.bf16 %v5649, %v5753
    %v5966 = vmax.bf16 %v5662, %v5766
    %v5967 = vmax.bf16 %v5675, %v5779
    %v5968 = vmax.bf16 %v5688, %v5792
    %v5969 = vmax.bf16 %v5701, %v5805
    %v5970 = vmax.bf16 %v5714, %v5818
    %v5971 = vmax.bf16 %v5727, %v5831
    %v5972 = vmax.bf16 %v5740, %v5844
    %vm5973 = vcmask 523264
    %5974 = vst.msk [vmem:[#allocation2] sm:$0xff] %vm5973, 0.0
    %vm5975 = vcmask 517120
    %5976 = vst.msk [vmem:[#allocation2 + $0x8] sm:$0x3] %vm5975, 0.0
    %5977 = vst.msk [vmem:[#allocation2 + $0xa0] sm:$0xff] %vm5973, 0.0
    %5978 = vst.msk [vmem:[#allocation2 + $0xa8] sm:$0x3] %vm5975, 0.0
    %s5979 = scalar_lea.vmem [#allocation2], 144
    %5980 = vst.msk [vmem:[%s5979] sm:$0xff] %vm5973, 0.0
    %5981 = vst.msk [vmem:[%s5979 + $0x8] sm:$0x3] %vm5975, 0.0
    %5982 = vst.msk [vmem:[%s5979 + $0xa0] sm:$0xff] %vm5973, 0.0
    %5983 = vst.msk [vmem:[%s5979 + $0xa8] sm:$0x3] %vm5975, 0.0
    %v5984 = vunpack.c.l.bf16 %v5845
    %v5985 = vunpack.c.l.bf16 %v5846
    %v5986 = vunpack.c.l.bf16 %v5847
    %v5987 = vunpack.c.l.bf16 %v5848
    %v5988 = vunpack.c.l.bf16 %v5849
    %v5989 = vunpack.c.l.bf16 %v5850
    %v5990 = vunpack.c.l.bf16 %v5851
    %v5991 = vunpack.c.l.bf16 %v5852
    %v5992 = vunpack.c.l.bf16 %v5853
    %v5993 = vunpack.c.l.bf16 %v5854
    %v5994 = vunpack.c.l.bf16 %v5855
    %v5995 = vunpack.c.l.bf16 %v5856
    %v5996 = vunpack.c.l.bf16 %v5857
    %v5997 = vunpack.c.l.bf16 %v5858
    %v5998 = vunpack.c.l.bf16 %v5859
    %v5999 = vunpack.c.l.bf16 %v5860
    %v6000 = vunpack.c.l.bf16 %v5861
    %v6001 = vunpack.c.l.bf16 %v5862
    %v6002 = vunpack.c.l.bf16 %v5863
    %v6003 = vunpack.c.l.bf16 %v5864
    %v6004 = vunpack.c.l.bf16 %v5865
    %v6005 = vunpack.c.l.bf16 %v5866
    %v6006 = vunpack.c.l.bf16 %v5867
    %v6007 = vunpack.c.l.bf16 %v5868
    %v6008 = vunpack.c.l.bf16 %v5869
    %v6009 = vunpack.c.l.bf16 %v5870
    %v6010 = vunpack.c.l.bf16 %v5871
    %v6011 = vunpack.c.l.bf16 %v5872
    %v6012 = vunpack.c.l.bf16 %v5873
    %v6013 = vunpack.c.l.bf16 %v5874
    %v6014 = vunpack.c.l.bf16 %v5875
    %v6015 = vunpack.c.l.bf16 %v5876
    %v6016 = vunpack.c.l.bf16 %v5877
    %v6017 = vunpack.c.l.bf16 %v5878
    %v6018 = vunpack.c.l.bf16 %v5879
    %v6019 = vunpack.c.l.bf16 %v5880
    %v6020 = vunpack.c.l.bf16 %v5881
    %v6021 = vunpack.c.l.bf16 %v5882
    %v6022 = vunpack.c.l.bf16 %v5883
    %v6023 = vunpack.c.l.bf16 %v5884
    %v6024 = vunpack.c.l.bf16 %v5885
    %v6025 = vunpack.c.l.bf16 %v5886
    %v6026 = vunpack.c.l.bf16 %v5887
    %v6027 = vunpack.c.l.bf16 %v5888
    %v6028 = vunpack.c.l.bf16 %v5889
    %v6029 = vunpack.c.l.bf16 %v5890
    %v6030 = vunpack.c.l.bf16 %v5891
    %v6031 = vunpack.c.l.bf16 %v5892
    %v6032 = vunpack.c.l.bf16 %v5893
    %v6033 = vunpack.c.l.bf16 %v5894
    %v6034 = vunpack.c.l.bf16 %v5895
    %v6035 = vunpack.c.l.bf16 %v5896
    %v6036 = vunpack.c.l.bf16 %v5897
    %v6037 = vunpack.c.l.bf16 %v5898
    %v6038 = vunpack.c.l.bf16 %v5899
    %v6039 = vunpack.c.l.bf16 %v5900
    %v6040 = vunpack.c.l.bf16 %v5901
    %v6041 = vunpack.c.l.bf16 %v5902
    %v6042 = vunpack.c.l.bf16 %v5903
    %v6043 = vunpack.c.l.bf16 %v5904
    %v6044 = vunpack.c.l.bf16 %v5905
    %v6045 = vunpack.c.l.bf16 %v5906
    %v6046 = vunpack.c.l.bf16 %v5907
    %v6047 = vunpack.c.l.bf16 %v5908
    %v6048 = vunpack.c.l.bf16 %v5909
    %v6049 = vunpack.c.l.bf16 %v5910
    %v6050 = vunpack.c.l.bf16 %v5911
    %v6051 = vunpack.c.l.bf16 %v5912
    %v6052 = vunpack.c.l.bf16 %v5913
    %v6053 = vunpack.c.l.bf16 %v5914
    %v6054 = vunpack.c.l.bf16 %v5915
    %v6055 = vunpack.c.l.bf16 %v5916
    %v6056 = vunpack.c.l.bf16 %v5917
    %v6057 = vunpack.c.l.bf16 %v5918
    %v6058 = vunpack.c.l.bf16 %v5919
    %v6059 = vunpack.c.l.bf16 %v5920
    %v6060 = vunpack.c.l.bf16 %v5921
    %v6061 = vunpack.c.l.bf16 %v5922
    %v6062 = vunpack.c.l.bf16 %v5923
    %v6063 = vunpack.c.l.bf16 %v5924
    %v6064 = vunpack.c.l.bf16 %v5925
    %v6065 = vunpack.c.l.bf16 %v5926
    %v6066 = vunpack.c.l.bf16 %v5927
    %v6067 = vunpack.c.l.bf16 %v5928
    %v6068 = vunpack.c.l.bf16 %v5929
    %v6069 = vunpack.c.l.bf16 %v5930
    %v6070 = vunpack.c.l.bf16 %v5931
    %v6071 = vunpack.c.l.bf16 %v5932
    %v6072 = vunpack.c.l.bf16 %v5933
    %v6073 = vunpack.c.l.bf16 %v5934
    %v6074 = vunpack.c.l.bf16 %v5935
    %v6075 = vunpack.c.l.bf16 %v5936
    %v6076 = vunpack.c.l.bf16 %v5937
    %v6077 = vunpack.c.l.bf16 %v5938
    %v6078 = vunpack.c.l.bf16 %v5939
    %v6079 = vunpack.c.l.bf16 %v5940
    %v6080 = vunpack.c.l.bf16 %v5941
    %v6081 = vunpack.c.l.bf16 %v5942
    %v6082 = vunpack.c.l.bf16 %v5943
    %v6083 = vunpack.c.l.bf16 %v5944
    %v6084 = vunpack.c.l.bf16 %v5945
    %v6085 = vunpack.c.l.bf16 %v5946
    %v6086 = vunpack.c.l.bf16 %v5947
    %v6087 = vunpack.c.l.bf16 %v5948
    %v6088 = vunpack.c.l.bf16 %v5949
    %v6089 = vunpack.c.l.bf16 %v5950
    %v6090 = vunpack.c.l.bf16 %v5951
    %v6091 = vunpack.c.l.bf16 %v5952
    %v6092 = vunpack.c.l.bf16 %v5953
    %v6093 = vunpack.c.l.bf16 %v5954
    %v6094 = vunpack.c.l.bf16 %v5955
    %v6095 = vunpack.c.l.bf16 %v5956
    %v6096 = vunpack.c.l.bf16 %v5957
    %v6097 = vunpack.c.l.bf16 %v5958
    %v6098 = vunpack.c.l.bf16 %v5959
    %v6099 = vunpack.c.l.bf16 %v5960
    %v6100 = vunpack.c.l.bf16 %v5961
    %v6101 = vunpack.c.l.bf16 %v5962
    %v6102 = vunpack.c.l.bf16 %v5963
    %v6103 = vunpack.c.l.bf16 %v5964
    %v6104 = vunpack.c.l.bf16 %v5965
    %v6105 = vunpack.c.l.bf16 %v5966
    %v6106 = vunpack.c.l.bf16 %v5967
    %v6107 = vunpack.c.l.bf16 %v5968
    %v6108 = vunpack.c.l.bf16 %v5969
    %v6109 = vunpack.c.l.bf16 %v5970
    %v6110 = vunpack.c.l.bf16 %v5971
    %v6111 = vunpack.c.l.bf16 %v5972
    %vm6240 = vcmask 1042434
    %v6241 = vsel %vm6240, %v5985, %v5984
    %vm6242 = vcmask 1043459
    %v6243 = vsel %vm6242, %v5986, %v6241
    %vm6244 = vcmask 1044484
    %v6245 = vsel %vm6244, %v5987, %v6243
    %vm6246 = vcmask 1045509
    %v6247 = vsel %vm6246, %v5988, %v6245
    %vm6248 = vcmask 1046534
    %v6249 = vsel %vm6248, %v5989, %v6247
    %vm6250 = vcmask 1047559
    %v6251 = vsel %vm6250, %v5990, %v6249
    %v6252 = vsel %vm6240, %v5993, %v5992
    %v6253 = vsel %vm6242, %v5994, %v6252
    %v6254 = vsel %vm6244, %v5995, %v6253
    %v6255 = vsel %vm6246, %v5996, %v6254
    %v6256 = vsel %vm6248, %v5997, %v6255
    %v6257 = vsel %vm6250, %v5998, %v6256
    %v6258 = vsel %vm6240, %v6001, %v6000
    %v6259 = vsel %vm6242, %v6002, %v6258
    %v6260 = vsel %vm6244, %v6003, %v6259
    %v6261 = vsel %vm6246, %v6004, %v6260
    %v6262 = vsel %vm6248, %v6005, %v6261
    %v6263 = vsel %vm6250, %v6006, %v6262
    %v6264 = vsel %vm6240, %v6009, %v6008
    %v6265 = vsel %vm6242, %v6010, %v6264
    %v6266 = vsel %vm6244, %v6011, %v6265
    %v6267 = vsel %vm6246, %v6012, %v6266
    %v6268 = vsel %vm6248, %v6013, %v6267
    %v6269 = vsel %vm6250, %v6014, %v6268
    %v6270 = vsel %vm6240, %v6017, %v6016
    %v6271 = vsel %vm6242, %v6018, %v6270
    %v6272 = vsel %vm6244, %v6019, %v6271
    %v6273 = vsel %vm6246, %v6020, %v6272
    %v6274 = vsel %vm6248, %v6021, %v6273
    %v6275 = vsel %vm6250, %v6022, %v6274
    %v6276 = vsel %vm6240, %v6025, %v6024
    %v6277 = vsel %vm6242, %v6026, %v6276
    %v6278 = vsel %vm6244, %v6027, %v6277
    %v6279 = vsel %vm6246, %v6028, %v6278
    %v6280 = vsel %vm6248, %v6029, %v6279
    %v6281 = vsel %vm6250, %v6030, %v6280
    %v6282 = vsel %vm6240, %v6033, %v6032
    %v6283 = vsel %vm6242, %v6034, %v6282
    %v6284 = vsel %vm6244, %v6035, %v6283
    %v6285 = vsel %vm6246, %v6036, %v6284
    %v6286 = vsel %vm6248, %v6037, %v6285
    %v6287 = vsel %vm6250, %v6038, %v6286
    %v6288 = vsel %vm6240, %v6041, %v6040
    %v6289 = vsel %vm6242, %v6042, %v6288
    %v6290 = vsel %vm6244, %v6043, %v6289
    %v6291 = vsel %vm6246, %v6044, %v6290
    %v6292 = vsel %vm6248, %v6045, %v6291
    %v6293 = vsel %vm6250, %v6046, %v6292
    %v6294 = vsel %vm6240, %v6049, %v6048
    %v6295 = vsel %vm6242, %v6050, %v6294
    %v6296 = vsel %vm6244, %v6051, %v6295
    %v6297 = vsel %vm6246, %v6052, %v6296
    %v6298 = vsel %vm6248, %v6053, %v6297
    %v6299 = vsel %vm6250, %v6054, %v6298
    %v6300 = vsel %vm6240, %v6057, %v6056
    %v6301 = vsel %vm6242, %v6058, %v6300
    %v6302 = vsel %vm6244, %v6059, %v6301
    %v6303 = vsel %vm6246, %v6060, %v6302
    %v6304 = vsel %vm6248, %v6061, %v6303
    %v6305 = vsel %vm6250, %v6062, %v6304
    %v6306 = vsel %vm6240, %v6065, %v6064
    %v6307 = vsel %vm6242, %v6066, %v6306
    %v6308 = vsel %vm6244, %v6067, %v6307
    %v6309 = vsel %vm6246, %v6068, %v6308
    %v6310 = vsel %vm6248, %v6069, %v6309
    %v6311 = vsel %vm6250, %v6070, %v6310
    %v6312 = vsel %vm6240, %v6073, %v6072
    %v6313 = vsel %vm6242, %v6074, %v6312
    %v6314 = vsel %vm6244, %v6075, %v6313
    %v6315 = vsel %vm6246, %v6076, %v6314
    %v6316 = vsel %vm6248, %v6077, %v6315
    %v6317 = vsel %vm6250, %v6078, %v6316
    %v6318 = vsel %vm6240, %v6081, %v6080
    %v6319 = vsel %vm6242, %v6082, %v6318
    %v6320 = vsel %vm6244, %v6083, %v6319
    %v6321 = vsel %vm6246, %v6084, %v6320
    %v6322 = vsel %vm6248, %v6085, %v6321
    %v6323 = vsel %vm6250, %v6086, %v6322
    %v6324 = vsel %vm6240, %v6089, %v6088
    %v6325 = vsel %vm6242, %v6090, %v6324
    %v6326 = vsel %vm6244, %v6091, %v6325
    %v6327 = vsel %vm6246, %v6092, %v6326
    %v6328 = vsel %vm6248, %v6093, %v6327
    %v6329 = vsel %vm6250, %v6094, %v6328
    %v6330 = vsel %vm6240, %v6097, %v6096
    %v6331 = vsel %vm6242, %v6098, %v6330
    %v6332 = vsel %vm6244, %v6099, %v6331
    %v6333 = vsel %vm6246, %v6100, %v6332
    %v6334 = vsel %vm6248, %v6101, %v6333
    %v6335 = vsel %vm6250, %v6102, %v6334
    %v6336 = vsel %vm6240, %v6105, %v6104
    %v6337 = vsel %vm6242, %v6106, %v6336
    %v6338 = vsel %vm6244, %v6107, %v6337
    %v6339 = vsel %vm6246, %v6108, %v6338
    %v6340 = vsel %vm6248, %v6109, %v6339
    %v6341 = vsel %vm6250, %v6110, %v6340
    %vm6374 = vcmask 1040384
    %v6375 = vsel %vm6374, 0.0, %v6251
    %v6376 = vsel %vm6374, 0.0, %v6257
    %v6377 = vsel %vm6374, 0.0, %v6263
    %v6378 = vsel %vm6374, 0.0, %v6269
    %v6379 = vsel %vm6374, 0.0, %v6275
    %v6380 = vsel %vm6374, 0.0, %v6281
    %v6381 = vsel %vm6374, 0.0, %v6287
    %v6382 = vsel %vm6374, 0.0, %v6293
    %v6383 = vsel %vm6374, 0.0, %v6299
    %v6384 = vsel %vm6374, 0.0, %v6305
    %v6385 = vsel %vm6374, 0.0, %v6311
    %v6386 = vsel %vm6374, 0.0, %v6317
    %v6387 = vsel %vm6374, 0.0, %v6323
    %v6388 = vsel %vm6374, 0.0, %v6329
    %v6389 = vsel %vm6374, 0.0, %v6335
    %v6390 = vsel %vm6374, 0.0, %v6341
    %v6391 = vsel %vm6374, %v5991, 0.0
    %v6392 = vsel %vm6374, %v5999, 0.0
    %v6393 = vsel %vm6374, %v6007, 0.0
    %v6394 = vsel %vm6374, %v6015, 0.0
    %v6395 = vsel %vm6374, %v6023, 0.0
    %v6396 = vsel %vm6374, %v6031, 0.0
    %v6397 = vsel %vm6374, %v6039, 0.0
    %v6398 = vsel %vm6374, %v6047, 0.0
    %v6399 = vsel %vm6374, %v6055, 0.0
    %v6400 = vsel %vm6374, %v6063, 0.0
    %v6401 = vsel %vm6374, %v6071, 0.0
    %v6402 = vsel %vm6374, %v6079, 0.0
    %v6403 = vsel %vm6374, %v6087, 0.0
    %v6404 = vsel %vm6374, %v6095, 0.0
    %v6405 = vsel %vm6374, %v6103, 0.0
    %v6406 = vsel %vm6374, %v6111, 0.0
    %s6407 = scalar_lea.vmem [#allocation2], 16
    %6408 = vst.msk [vmem:[%s6407] sm:$0xff] %vm5973, %v6375
    %6409 = vst.msk [vmem:[%s6407 + $0x8] sm:$0x3] %vm5975, %v6391
    %6410 = vst.msk [vmem:[%s6407 + $0x10] sm:$0xff] %vm5973, %v6376
    %6411 = vst.msk [vmem:[%s6407 + $0x18] sm:$0x3] %vm5975, %v6392
    %6412 = vst.msk [vmem:[%s6407 + $0x20] sm:$0xff] %vm5973, %v6377
    %6413 = vst.msk [vmem:[%s6407 + $0x28] sm:$0x3] %vm5975, %v6393
    %6414 = vst.msk [vmem:[%s6407 + $0x30] sm:$0xff] %vm5973, %v6378
    %6415 = vst.msk [vmem:[%s6407 + $0x38] sm:$0x3] %vm5975, %v6394
    %6416 = vst.msk [vmem:[%s6407 + $0x40] sm:$0xff] %vm5973, %v6379
    %6417 = vst.msk [vmem:[%s6407 + $0x48] sm:$0x3] %vm5975, %v6395
    %6418 = vst.msk [vmem:[%s6407 + $0x50] sm:$0xff] %vm5973, %v6380
    %6419 = vst.msk [vmem:[%s6407 + $0x58] sm:$0x3] %vm5975, %v6396
    %6420 = vst.msk [vmem:[%s6407 + $0x60] sm:$0xff] %vm5973, %v6381
    %6421 = vst.msk [vmem:[%s6407 + $0x68] sm:$0x3] %vm5975, %v6397
    %6422 = vst.msk [vmem:[%s6407 + $0x70] sm:$0xff] %vm5973, %v6382
    %6423 = vst.msk [vmem:[%s6407 + $0x78] sm:$0x3] %vm5975, %v6398
    %6424 = vst.msk [vmem:[%s6407 + $0xa0] sm:$0xff] %vm5973, %v6383
    %6425 = vst.msk [vmem:[%s6407 + $0xa8] sm:$0x3] %vm5975, %v6399
    %6426 = vst.msk [vmem:[%s6407 + $0xb0] sm:$0xff] %vm5973, %v6384
    %6427 = vst.msk [vmem:[%s6407 + $0xb8] sm:$0x3] %vm5975, %v6400
    %6428 = vst.msk [vmem:[%s6407 + $0xc0] sm:$0xff] %vm5973, %v6385
    %6429 = vst.msk [vmem:[%s6407 + $0xc8] sm:$0x3] %vm5975, %v6401
    %6430 = vst.msk [vmem:[%s6407 + $0xd0] sm:$0xff] %vm5973, %v6386
    %6431 = vst.msk [vmem:[%s6407 + $0xd8] sm:$0x3] %vm5975, %v6402
    %6432 = vst.msk [vmem:[%s6407 + $0xe0] sm:$0xff] %vm5973, %v6387
    %6433 = vst.msk [vmem:[%s6407 + $0xe8] sm:$0x3] %vm5975, %v6403
    %6434 = vst.msk [vmem:[%s6407 + $0xf0] sm:$0xff] %vm5973, %v6388
    %6435 = vst.msk [vmem:[%s6407 + $0xf8] sm:$0x3] %vm5975, %v6404
    %6436 = vst.msk [vmem:[%s6407 + $0x100] sm:$0xff] %vm5973, %v6389
    %6437 = vst.msk [vmem:[%s6407 + $0x108] sm:$0x3] %vm5975, %v6405
    %6438 = vst.msk [vmem:[%s6407 + $0x110] sm:$0xff] %vm5973, %v6390
    %6439 = vst.msk [vmem:[%s6407 + $0x118] sm:$0x3] %vm5975, %v6406
    %v6440 = vld [vmem:[#allocation2] sm:$0xff]
    %v6441 = vld [vmem:[#allocation2 + $0x10] sm:$0xff]
    %v6442 = vld [vmem:[#allocation2 + $0x20] sm:$0xff]
    %v6443 = vld [vmem:[#allocation2 + $0x30] sm:$0xff]
    %v6444 = vld [vmem:[#allocation2 + $0x40] sm:$0xff]
    %v6445 = vld [vmem:[#allocation2 + $0x50] sm:$0xff]
    %v6446 = vld [vmem:[#allocation2 + $0x60] sm:$0xff]
    %v6447 = vld [vmem:[#allocation2 + $0x70] sm:$0xff]
    %v6448 = vld [vmem:[#allocation2 + $0xa0] sm:$0xff]
    %v6449 = vld [vmem:[#allocation2 + $0xb0] sm:$0xff]
    %v6450 = vld [vmem:[#allocation2 + $0xc0] sm:$0xff]
    %v6451 = vld [vmem:[#allocation2 + $0xd0] sm:$0xff]
    %v6452 = vld [vmem:[#allocation2 + $0xe0] sm:$0xff]
    %v6453 = vld [vmem:[#allocation2 + $0xf0] sm:$0xff]
    %v6454 = vld [vmem:[#allocation2 + $0x100] sm:$0xff]
    %v6455 = vld [vmem:[#allocation2 + $0x110] sm:$0xff]
    %v6456 = vpack.c.bf16 %v6441, %v6440
    %v6457 = vpack.c.bf16 %v6443, %v6442
    %v6458 = vpack.c.bf16 %v6445, %v6444
    %v6459 = vpack.c.bf16 %v6447, %v6446
    %v6460 = vpack.c.bf16 %v6449, %v6448
    %v6461 = vpack.c.bf16 %v6451, %v6450
    %v6462 = vpack.c.bf16 %v6453, %v6452
    %v6463 = vpack.c.bf16 %v6455, %v6454
    %v6464 = vld [vmem:[#allocation10] sm:$0xf]
    %v6465 = vld [vmem:[#allocation10 + $0x4] sm:$0xf]
    %v6466 = vld [vmem:[#allocation10 + $0x8] sm:$0xf]
    %v6467 = vld [vmem:[#allocation10 + $0xc] sm:$0xf]
    %v6468 = vld [vmem:[#allocation10 + $0x10] sm:$0xf]
    %v6469 = vld [vmem:[#allocation10 + $0x14] sm:$0xf]
    %v6470 = vld [vmem:[#allocation10 + $0x18] sm:$0xf]
    %v6471 = vld [vmem:[#allocation10 + $0x1c] sm:$0xf]
    %v6472 = vld [vmem:[#allocation2 + $0x1] sm:$0xff]
    %v6473 = vld [vmem:[#allocation2 + $0x11] sm:$0xff]
    %v6474 = vld [vmem:[#allocation2 + $0x21] sm:$0xff]
    %v6475 = vld [vmem:[#allocation2 + $0x31] sm:$0xff]
    %v6476 = vld [vmem:[#allocation2 + $0x41] sm:$0xff]
    %v6477 = vld [vmem:[#allocation2 + $0x51] sm:$0xff]
    %v6478 = vld [vmem:[#allocation2 + $0x61] sm:$0xff]
    %v6479 = vld [vmem:[#allocation2 + $0x71] sm:$0xff]
    %v6480 = vld [vmem:[#allocation2 + $0xa1] sm:$0xff]
    %v6481 = vld [vmem:[#allocation2 + $0xb1] sm:$0xff]
    %v6482 = vld [vmem:[#allocation2 + $0xc1] sm:$0xff]
    %v6483 = vld [vmem:[#allocation2 + $0xd1] sm:$0xff]
    %v6484 = vld [vmem:[#allocation2 + $0xe1] sm:$0xff]
    %v6485 = vld [vmem:[#allocation2 + $0xf1] sm:$0xff]
    %v6486 = vld [vmem:[#allocation2 + $0x101] sm:$0xff]
    %v6487 = vld [vmem:[#allocation2 + $0x111] sm:$0xff]
    %v6488 = vpack.c.bf16 %v6473, %v6472
    %v6489 = vpack.c.bf16 %v6475, %v6474
    %v6490 = vpack.c.bf16 %v6477, %v6476
    %v6491 = vpack.c.bf16 %v6479, %v6478
    %v6492 = vpack.c.bf16 %v6481, %v6480
    %v6493 = vpack.c.bf16 %v6483, %v6482
    %v6494 = vpack.c.bf16 %v6485, %v6484
    %v6495 = vpack.c.bf16 %v6487, %v6486
    %s6496 = scalar_lea.vmem [#allocation10], 32
    %v6497 = vld [vmem:[%s6496] sm:$0xf]
    %v6498 = vld [vmem:[%s6496 + $0x4] sm:$0xf]
    %v6499 = vld [vmem:[%s6496 + $0x8] sm:$0xf]
    %v6500 = vld [vmem:[%s6496 + $0xc] sm:$0xf]
    %v6501 = vld [vmem:[%s6496 + $0x10] sm:$0xf]
    %v6502 = vld [vmem:[%s6496 + $0x14] sm:$0xf]
    %v6503 = vld [vmem:[%s6496 + $0x18] sm:$0xf]
    %v6504 = vld [vmem:[%s6496 + $0x1c] sm:$0xf]
    %v6513 = vunpack.c.l.b16 %v6497
    %v6514 = vunpack.c.l.b16 %v6498
    %v6515 = vunpack.c.l.b16 %v6499
    %v6516 = vunpack.c.l.b16 %v6500
    %v6517 = vunpack.c.l.b16 %v6501
    %v6518 = vunpack.c.l.b16 %v6502
    %v6519 = vunpack.c.l.b16 %v6503
    %v6520 = vunpack.c.l.b16 %v6504
    %v6521 = vpack.c.b16 %v6514, %v6513
    %v6522 = vpack.c.b16 %v6516, %v6515
    %v6523 = vpack.c.b16 %v6518, %v6517
    %v6524 = vpack.c.b16 %v6520, %v6519
    %v6530 = vsel %vm5973, %v6488, 0
    %v6533 = vsel %vm5973, %v6489, 0
    %v6536 = vsel %vm5973, %v6490, 0
    %v6539 = vsel %vm5973, %v6491, 0
    %v6542 = vsel %vm5973, %v6492, 0
    %v6545 = vsel %vm5973, %v6493, 0
    %v6548 = vsel %vm5973, %v6494, 0
    %v6551 = vsel %vm5973, %v6495, 0
    %6553 = vmatprep.subr.bf16.mxu0 0
    %6554 = vmatpush1.bf16.msra.mxu0 %v6521
    %6555 = vmatprep.subr.bf16.mxu0 0
    %6556 = vmatpush1.bf16.msra.mxu0 %v6522
    %6557 = vmatprep.subr.bf16.mxu0 0
    %6558 = vmatpush1.bf16.msra.mxu0 %v6523
    %6559 = vmatprep.subr.bf16.mxu0 0
    %6560 = vmatpush1.bf16.msra.mxu0 %v6524
    %6561 = vmatprep.subr.bf16.mxu0 0
    %6562 = vmatpush1.bf16.msra.mxu0 0
    %6563 = vmatprep.subr.bf16.mxu0 0
    %6564 = vmatpush1.bf16.msra.mxu0 0
    %6565 = vmatprep.subr.bf16.mxu0 0
    %6566 = vmatpush1.bf16.msra.mxu0 0
    %6567 = vmatprep.subr.bf16.mxu0 0
    %6568 = vmatpush1.bf16.msra.mxu0 0
    %6569 = vmatprep.subr.bf16.mxu0 0
    %6570 = vmatpush1.bf16.msra.mxu0 0
    %6571 = vmatprep.subr.bf16.mxu0 0
    %6572 = vmatpush1.bf16.msra.mxu0 0
    %6573 = vmatprep.subr.bf16.mxu0 0
    %6574 = vmatpush1.bf16.msra.mxu0 0
    %6575 = vmatprep.subr.bf16.mxu0 0
    %6576 = vmatpush1.bf16.msra.mxu0 0
    %6577 = vmatprep.subr.bf16.mxu0 0
    %6578 = vmatpush1.bf16.msra.mxu0 0
    %6579 = vmatprep.subr.bf16.mxu0 0
    %6580 = vmatpush1.bf16.msra.mxu0 0
    %6581 = vmatprep.subr.bf16.mxu0 0
    %6582 = vmatpush1.bf16.msra.mxu0 0
    %6583 = vmatprep.subr.bf16.mxu0 0
    %6584 = vmatpush1.bf16.msra.mxu0 0
    %6585 = vmatprep.mubr.bf16.mxu0 0
    %6586 = vmatmul.mubr.bf16.gmra.mrb[0].mxu0 %v6530
    %v6587 = vpop.f32.mrb[0].mxu0
    %v6588 = vadd.f32 0.0, %v6587
    %v6589 = vpop.f32.mrb[0].mxu0
    %v6590 = vpop.f32.mrb[0].mxu0
    %v6591 = vadd.f32 0.0, %v6590
    %v6592 = vpop.f32.mrb[0].mxu0
    %6593 = vmatprep.mubr.bf16.mxu0 0
    %6594 = vmatmul.mubr.bf16.gmra.mrb[0].mxu0 %v6533
    %v6595 = vpop.f32.mrb[0].mxu0
    %v6596 = vadd.f32 0.0, %v6595
    %v6597 = vpop.f32.mrb[0].mxu0
    %v6598 = vpop.f32.mrb[0].mxu0
    %v6599 = vadd.f32 0.0, %v6598
    %v6600 = vpop.f32.mrb[0].mxu0
    %6601 = vmatprep.mubr.bf16.mxu0 0
    %6602 = vmatmul.mubr.bf16.gmra.mrb[0].mxu0 %v6536
    %v6603 = vpop.f32.mrb[0].mxu0
    %v6604 = vadd.f32 0.0, %v6603
    %v6605 = vpop.f32.mrb[0].mxu0
    %v6606 = vpop.f32.mrb[0].mxu0
    %v6607 = vadd.f32 0.0, %v6606
    %v6608 = vpop.f32.mrb[0].mxu0
    %6609 = vmatprep.mubr.bf16.mxu0 0
    %6610 = vmatmul.mubr.bf16.gmra.mrb[0].mxu0 %v6539
    %v6611 = vpop.f32.mrb[0].mxu0
    %v6612 = vadd.f32 0.0, %v6611
    %v6613 = vpop.f32.mrb[0].mxu0
    %v6614 = vpop.f32.mrb[0].mxu0
    %v6615 = vadd.f32 0.0, %v6614
    %v6616 = vpop.f32.mrb[0].mxu0
    %6617 = vmatprep.mubr.bf16.mxu0 0
    %6618 = vmatmul.mubr.bf16.gmra.mrb[0].mxu0 %v6542
    %v6619 = vpop.f32.mrb[0].mxu0
    %v6620 = vadd.f32 0.0, %v6619
    %v6621 = vpop.f32.mrb[0].mxu0
    %v6622 = vpop.f32.mrb[0].mxu0
    %v6623 = vadd.f32 0.0, %v6622
    %v6624 = vpop.f32.mrb[0].mxu0
    %6625 = vmatprep.mubr.bf16.mxu0 0
    %6626 = vmatmul.mubr.bf16.gmra.mrb[0].mxu0 %v6545
    %v6627 = vpop.f32.mrb[0].mxu0
    %v6628 = vadd.f32 0.0, %v6627
    %v6629 = vpop.f32.mrb[0].mxu0
    %v6630 = vpop.f32.mrb[0].mxu0
    %v6631 = vadd.f32 0.0, %v6630
    %v6632 = vpop.f32.mrb[0].mxu0
    %6633 = vmatprep.mubr.bf16.mxu0 0
    %6634 = vmatmul.mubr.bf16.gmra.mrb[0].mxu0 %v6548
    %v6635 = vpop.f32.mrb[0].mxu0
    %v6636 = vadd.f32 0.0, %v6635
    %v6637 = vpop.f32.mrb[0].mxu0
    %v6638 = vpop.f32.mrb[0].mxu0
    %v6639 = vadd.f32 0.0, %v6638
    %v6640 = vpop.f32.mrb[0].mxu0
    %6641 = vmatprep.mubr.bf16.mxu0 0
    %6642 = vmatmul.mubr.bf16.gmra.mrb[0].mxu0 %v6551
    %v6643 = vpop.f32.mrb[0].mxu0
    %v6644 = vadd.f32 0.0, %v6643
    %v6645 = vpop.f32.mrb[0].mxu0
    %v6646 = vpop.f32.mrb[0].mxu0
    %v6647 = vadd.f32 0.0, %v6646
    %v6648 = vpop.f32.mrb[0].mxu0
    %6649 = vdwg.mxu0
    %v6658 = vunpack.c.l.b16 %v6464
    %v6659 = vunpack.c.l.b16 %v6465
    %v6660 = vunpack.c.l.b16 %v6466
    %v6661 = vunpack.c.l.b16 %v6467
    %v6662 = vunpack.c.l.b16 %v6468
    %v6663 = vunpack.c.l.b16 %v6469
    %v6664 = vunpack.c.l.b16 %v6470
    %v6665 = vunpack.c.l.b16 %v6471
    %v6666 = vpack.c.b16 %v6659, %v6658
    %v6667 = vpack.c.b16 %v6661, %v6660
    %v6668 = vpack.c.b16 %v6663, %v6662
    %v6669 = vpack.c.b16 %v6665, %v6664
    %v6675 = vsel %vm5973, %v6456, 0
    %v6678 = vsel %vm5973, %v6457, 0
    %v6681 = vsel %vm5973, %v6458, 0
    %v6684 = vsel %vm5973, %v6459, 0
    %v6687 = vsel %vm5973, %v6460, 0
    %v6690 = vsel %vm5973, %v6461, 0
    %v6693 = vsel %vm5973, %v6462, 0
    %v6696 = vsel %vm5973, %v6463, 0
    %6698 = vmatprep.subr.bf16.mxu0 0
    %6699 = vmatpush1.bf16.msra.mxu0 %v6666
    %6700 = vmatprep.subr.bf16.mxu0 0
    %6701 = vmatpush1.bf16.msra.mxu0 %v6667
    %6702 = vmatprep.subr.bf16.mxu0 0
    %6703 = vmatpush1.bf16.msra.mxu0 %v6668
    %6704 = vmatprep.subr.bf16.mxu0 0
    %6705 = vmatpush1.bf16.msra.mxu0 %v6669
    %6706 = vmatprep.subr.bf16.mxu0 0
    %6707 = vmatpush1.bf16.msra.mxu0 0
    %6708 = vmatprep.subr.bf16.mxu0 0
    %6709 = vmatpush1.bf16.msra.mxu0 0
    %6710 = vmatprep.subr.bf16.mxu0 0
    %6711 = vmatpush1.bf16.msra.mxu0 0
    %6712 = vmatprep.subr.bf16.mxu0 0
    %6713 = vmatpush1.bf16.msra.mxu0 0
    %6714 = vmatprep.subr.bf16.mxu0 0
    %6715 = vmatpush1.bf16.msra.mxu0 0
    %6716 = vmatprep.subr.bf16.mxu0 0
    %6717 = vmatpush1.bf16.msra.mxu0 0
    %6718 = vmatprep.subr.bf16.mxu0 0
    %6719 = vmatpush1.bf16.msra.mxu0 0
    %6720 = vmatprep.subr.bf16.mxu0 0
    %6721 = vmatpush1.bf16.msra.mxu0 0
    %6722 = vmatprep.subr.bf16.mxu0 0
    %6723 = vmatpush1.bf16.msra.mxu0 0
    %6724 = vmatprep.subr.bf16.mxu0 0
    %6725 = vmatpush1.bf16.msra.mxu0 0
    %6726 = vmatprep.subr.bf16.mxu0 0
    %6727 = vmatpush1.bf16.msra.mxu0 0
    %6728 = vmatprep.subr.bf16.mxu0 0
    %6729 = vmatpush1.bf16.msra.mxu0 0
    %6730 = vmatprep.mubr.bf16.mxu0 0
    %6731 = vmatmul.mubr.bf16.gmra.mrb[0].mxu0 %v6675
    %v6732 = vpop.f32.mrb[0].mxu0
    %v6733 = vadd.f32 %v6588, %v6732
    %v6734 = vpop.f32.mrb[0].mxu0
    %v6735 = vpop.f32.mrb[0].mxu0
    %v6736 = vadd.f32 %v6591, %v6735
    %v6737 = vpop.f32.mrb[0].mxu0
    %6738 = vmatprep.mubr.bf16.mxu0 0
    %6739 = vmatmul.mubr.bf16.gmra.mrb[0].mxu0 %v6678
    %v6740 = vpop.f32.mrb[0].mxu0
    %v6741 = vadd.f32 %v6596, %v6740
    %v6742 = vpop.f32.mrb[0].mxu0
    %v6743 = vpop.f32.mrb[0].mxu0
    %v6744 = vadd.f32 %v6599, %v6743
    %v6745 = vpop.f32.mrb[0].mxu0
    %6746 = vmatprep.mubr.bf16.mxu0 0
    %6747 = vmatmul.mubr.bf16.gmra.mrb[0].mxu0 %v6681
    %v6748 = vpop.f32.mrb[0].mxu0
    %v6749 = vadd.f32 %v6604, %v6748
    %v6750 = vpop.f32.mrb[0].mxu0
    %v6751 = vpop.f32.mrb[0].mxu0
    %v6752 = vadd.f32 %v6607, %v6751
    %v6753 = vpop.f32.mrb[0].mxu0
    %6754 = vmatprep.mubr.bf16.mxu0 0
    %6755 = vmatmul.mubr.bf16.gmra.mrb[0].mxu0 %v6684
    %v6756 = vpop.f32.mrb[0].mxu0
    %v6757 = vadd.f32 %v6612, %v6756
    %v6758 = vpop.f32.mrb[0].mxu0
    %v6759 = vpop.f32.mrb[0].mxu0
    %v6760 = vadd.f32 %v6615, %v6759
    %v6761 = vpop.f32.mrb[0].mxu0
    %6762 = vmatprep.mubr.bf16.mxu0 0
    %6763 = vmatmul.mubr.bf16.gmra.mrb[0].mxu0 %v6687
    %v6764 = vpop.f32.mrb[0].mxu0
    %v6765 = vadd.f32 %v6620, %v6764
    %v6766 = vpop.f32.mrb[0].mxu0
    %v6767 = vpop.f32.mrb[0].mxu0
    %v6768 = vadd.f32 %v6623, %v6767
    %v6769 = vpop.f32.mrb[0].mxu0
    %6770 = vmatprep.mubr.bf16.mxu0 0
    %6771 = vmatmul.mubr.bf16.gmra.mrb[0].mxu0 %v6690
    %v6772 = vpop.f32.mrb[0].mxu0
    %v6773 = vadd.f32 %v6628, %v6772
    %v6774 = vpop.f32.mrb[0].mxu0
    %v6775 = vpop.f32.mrb[0].mxu0
    %v6776 = vadd.f32 %v6631, %v6775
    %v6777 = vpop.f32.mrb[0].mxu0
    %6778 = vmatprep.mubr.bf16.mxu0 0
    %6779 = vmatmul.mubr.bf16.gmra.mrb[0].mxu0 %v6693
    %v6780 = vpop.f32.mrb[0].mxu0
    %v6781 = vadd.f32 %v6636, %v6780
    %v6782 = vpop.f32.mrb[0].mxu0
    %v6783 = vpop.f32.mrb[0].mxu0
    %v6784 = vadd.f32 %v6639, %v6783
    %v6785 = vpop.f32.mrb[0].mxu0
    %6786 = vmatprep.mubr.bf16.mxu0 0
    %6787 = vmatmul.mubr.bf16.gmra.mrb[0].mxu0 %v6696
    %v6788 = vpop.f32.mrb[0].mxu0
    %v6789 = vadd.f32 %v6644, %v6788
    %v6790 = vpop.f32.mrb[0].mxu0
    %v6791 = vpop.f32.mrb[0].mxu0
    %v6792 = vadd.f32 %v6647, %v6791
    %v6793 = vpop.f32.mrb[0].mxu0
    %6794 = vdwg.mxu0
    %v6795 = vld [vmem:[#allocation2 + $0x2] sm:$0xff]
    %v6796 = vld [vmem:[#allocation2 + $0x12] sm:$0xff]
    %v6797 = vld [vmem:[#allocation2 + $0x22] sm:$0xff]
    %v6798 = vld [vmem:[#allocation2 + $0x32] sm:$0xff]
    %v6799 = vld [vmem:[#allocation2 + $0x42] sm:$0xff]
    %v6800 = vld [vmem:[#allocation2 + $0x52] sm:$0xff]
    %v6801 = vld [vmem:[#allocation2 + $0x62] sm:$0xff]
    %v6802 = vld [vmem:[#allocation2 + $0x72] sm:$0xff]
    %v6803 = vld [vmem:[#allocation2 + $0xa2] sm:$0xff]
    %v6804 = vld [vmem:[#allocation2 + $0xb2] sm:$0xff]
    %v6805 = vld [vmem:[#allocation2 + $0xc2] sm:$0xff]
    %v6806 = vld [vmem:[#allocation2 + $0xd2] sm:$0xff]
    %v6807 = vld [vmem:[#allocation2 + $0xe2] sm:$0xff]
    %v6808 = vld [vmem:[#allocation2 + $0xf2] sm:$0xff]
    %v6809 = vld [vmem:[#allocation2 + $0x102] sm:$0xff]
    %v6810 = vld [vmem:[#allocation2 + $0x112] sm:$0xff]
    %v6811 = vpack.c.bf16 %v6796, %v6795
    %v6812 = vpack.c.bf16 %v6798, %v6797
    %v6813 = vpack.c.bf16 %v6800, %v6799
    %v6814 = vpack.c.bf16 %v6802, %v6801
    %v6815 = vpack.c.bf16 %v6804, %v6803
    %v6816 = vpack.c.bf16 %v6806, %v6805
    %v6817 = vpack.c.bf16 %v6808, %v6807
    %v6818 = vpack.c.bf16 %v6810, %v6809
    %s6819 = scalar_lea.vmem [#allocation10], 64
    %v6820 = vld [vmem:[%s6819] sm:$0xf]
    %v6821 = vld [vmem:[%s6819 + $0x4] sm:$0xf]
    %v6822 = vld [vmem:[%s6819 + $0x8] sm:$0xf]
    %v6823 = vld [vmem:[%s6819 + $0xc] sm:$0xf]
    %v6824 = vld [vmem:[%s6819 + $0x10] sm:$0xf]
    %v6825 = vld [vmem:[%s6819 + $0x14] sm:$0xf]
    %v6826 = vld [vmem:[%s6819 + $0x18] sm:$0xf]
    %v6827 = vld [vmem:[%s6819 + $0x1c] sm:$0xf]
    %v6836 = vunpack.c.l.b16 %v6820
    %v6837 = vunpack.c.l.b16 %v6821
    %v6838 = vunpack.c.l.b16 %v6822
    %v6839 = vunpack.c.l.b16 %v6823
    %v6840 = vunpack.c.l.b16 %v6824
    %v6841 = vunpack.c.l.b16 %v6825
    %v6842 = vunpack.c.l.b16 %v6826
    %v6843 = vunpack.c.l.b16 %v6827
    %v6844 = vpack.c.b16 %v6837, %v6836
    %v6845 = vpack.c.b16 %v6839, %v6838
    %v6846 = vpack.c.b16 %v6841, %v6840
    %v6847 = vpack.c.b16 %v6843, %v6842
    %v6853 = vsel %vm5973, %v6811, 0
    %v6856 = vsel %vm5973, %v6812, 0
    %v6859 = vsel %vm5973, %v6813, 0
    %v6862 = vsel %vm5973, %v6814, 0
    %v6865 = vsel %vm5973, %v6815, 0
    %v6868 = vsel %vm5973, %v6816, 0
    %v6871 = vsel %vm5973, %v6817, 0
    %v6874 = vsel %vm5973, %v6818, 0
    %6876 = vmatprep.subr.bf16.mxu0 0
    %6877 = vmatpush1.bf16.msra.mxu0 %v6844
    %6878 = vmatprep.subr.bf16.mxu0 0
    %6879 = vmatpush1.bf16.msra.mxu0 %v6845
    %6880 = vmatprep.subr.bf16.mxu0 0
    %6881 = vmatpush1.bf16.msra.mxu0 %v6846
    %6882 = vmatprep.subr.bf16.mxu0 0
    %6883 = vmatpush1.bf16.msra.mxu0 %v6847
    %6884 = vmatprep.subr.bf16.mxu0 0
    %6885 = vmatpush1.bf16.msra.mxu0 0
    %6886 = vmatprep.subr.bf16.mxu0 0
    %6887 = vmatpush1.bf16.msra.mxu0 0
    %6888 = vmatprep.subr.bf16.mxu0 0
    %6889 = vmatpush1.bf16.msra.mxu0 0
    %6890 = vmatprep.subr.bf16.mxu0 0
    %6891 = vmatpush1.bf16.msra.mxu0 0
    %6892 = vmatprep.subr.bf16.mxu0 0
    %6893 = vmatpush1.bf16.msra.mxu0 0
    %6894 = vmatprep.subr.bf16.mxu0 0
    %6895 = vmatpush1.bf16.msra.mxu0 0
    %6896 = vmatprep.subr.bf16.mxu0 0
    %6897 = vmatpush1.bf16.msra.mxu0 0
    %6898 = vmatprep.subr.bf16.mxu0 0
    %6899 = vmatpush1.bf16.msra.mxu0 0
    %6900 = vmatprep.subr.bf16.mxu0 0
    %6901 = vmatpush1.bf16.msra.mxu0 0
    %6902 = vmatprep.subr.bf16.mxu0 0
    %6903 = vmatpush1.bf16.msra.mxu0 0
    %6904 = vmatprep.subr.bf16.mxu0 0
    %6905 = vmatpush1.bf16.msra.mxu0 0
    %6906 = vmatprep.subr.bf16.mxu0 0
    %6907 = vmatpush1.bf16.msra.mxu0 0
    %6908 = vmatprep.mubr.bf16.mxu0 0
    %6909 = vmatmul.mubr.bf16.gmra.mrb[0].mxu0 %v6853
    %v6910 = vpop.f32.mrb[0].mxu0
    %v6911 = vadd.f32 0.0, %v6910
    %v6912 = vpop.f32.mrb[0].mxu0
    %v6913 = vpop.f32.mrb[0].mxu0
    %v6914 = vadd.f32 0.0, %v6913
    %v6915 = vpop.f32.mrb[0].mxu0
    %6916 = vmatprep.mubr.bf16.mxu0 0
    %6917 = vmatmul.mubr.bf16.gmra.mrb[0].mxu0 %v6856
    %v6918 = vpop.f32.mrb[0].mxu0
    %v6919 = vadd.f32 0.0, %v6918
    %v6920 = vpop.f32.mrb[0].mxu0
    %v6921 = vpop.f32.mrb[0].mxu0
    %v6922 = vadd.f32 0.0, %v6921
    %v6923 = vpop.f32.mrb[0].mxu0
    %6924 = vmatprep.mubr.bf16.mxu0 0
    %6925 = vmatmul.mubr.bf16.gmra.mrb[0].mxu0 %v6859
    %v6926 = vpop.f32.mrb[0].mxu0
    %v6927 = vadd.f32 0.0, %v6926
    %v6928 = vpop.f32.mrb[0].mxu0
    %v6929 = vpop.f32.mrb[0].mxu0
    %v6930 = vadd.f32 0.0, %v6929
    %v6931 = vpop.f32.mrb[0].mxu0
    %6932 = vmatprep.mubr.bf16.mxu0 0
    %6933 = vmatmul.mubr.bf16.gmra.mrb[0].mxu0 %v6862
    %v6934 = vpop.f32.mrb[0].mxu0
    %v6935 = vadd.f32 0.0, %v6934
    %v6936 = vpop.f32.mrb[0].mxu0
    %v6937 = vpop.f32.mrb[0].mxu0
    %v6938 = vadd.f32 0.0, %v6937
    %v6939 = vpop.f32.mrb[0].mxu0
    %6940 = vmatprep.mubr.bf16.mxu0 0
    %6941 = vmatmul.mubr.bf16.gmra.mrb[0].mxu0 %v6865
    %v6942 = vpop.f32.mrb[0].mxu0
    %v6943 = vadd.f32 0.0, %v6942
    %v6944 = vpop.f32.mrb[0].mxu0
    %v6945 = vpop.f32.mrb[0].mxu0
    %v6946 = vadd.f32 0.0, %v6945
    %v6947 = vpop.f32.mrb[0].mxu0
    %6948 = vmatprep.mubr.bf16.mxu0 0
    %6949 = vmatmul.mubr.bf16.gmra.mrb[0].mxu0 %v6868
    %v6950 = vpop.f32.mrb[0].mxu0
    %v6951 = vadd.f32 0.0, %v6950
    %v6952 = vpop.f32.mrb[0].mxu0
    %v6953 = vpop.f32.mrb[0].mxu0
    %v6954 = vadd.f32 0.0, %v6953
    %v6955 = vpop.f32.mrb[0].mxu0
    %6956 = vmatprep.mubr.bf16.mxu0 0
    %6957 = vmatmul.mubr.bf16.gmra.mrb[0].mxu0 %v6871
    %v6958 = vpop.f32.mrb[0].mxu0
    %v6959 = vadd.f32 0.0, %v6958
    %v6960 = vpop.f32.mrb[0].mxu0
    %v6961 = vpop.f32.mrb[0].mxu0
    %v6962 = vadd.f32 0.0, %v6961
    %v6963 = vpop.f32.mrb[0].mxu0
    %6964 = vmatprep.mubr.bf16.mxu0 0
    %6965 = vmatmul.mubr.bf16.gmra.mrb[0].mxu0 %v6874
    %v6966 = vpop.f32.mrb[0].mxu0
    %v6967 = vadd.f32 0.0, %v6966
    %v6968 = vpop.f32.mrb[0].mxu0
    %v6969 = vpop.f32.mrb[0].mxu0
    %v6970 = vadd.f32 0.0, %v6969
    %v6971 = vpop.f32.mrb[0].mxu0
    %6972 = vdwg.mxu0
    %v6973 = vadd.f32 %v6733, %v6911
    %v6974 = vadd.f32 %v6736, %v6914
    %v6975 = vadd.f32 %v6741, %v6919
    %v6976 = vadd.f32 %v6744, %v6922
    %v6977 = vadd.f32 %v6749, %v6927
    %v6978 = vadd.f32 %v6752, %v6930
    %v6979 = vadd.f32 %v6757, %v6935
    %v6980 = vadd.f32 %v6760, %v6938
    %v6981 = vadd.f32 %v6765, %v6943
    %v6982 = vadd.f32 %v6768, %v6946
    %v6983 = vadd.f32 %v6773, %v6951
    %v6984 = vadd.f32 %v6776, %v6954
    %v6985 = vadd.f32 %v6781, %v6959
    %v6986 = vadd.f32 %v6784, %v6962
    %v6987 = vadd.f32 %v6789, %v6967
    %v6988 = vadd.f32 %v6792, %v6970
    %v6989 = vld [vmem:[%s6407] sm:$0xff]
    %v6990 = vld [vmem:[%s6407 + $0x10] sm:$0xff]
    %v6991 = vld [vmem:[%s6407 + $0x20] sm:$0xff]
    %v6992 = vld [vmem:[%s6407 + $0x30] sm:$0xff]
    %v6993 = vld [vmem:[%s6407 + $0x40] sm:$0xff]
    %v6994 = vld [vmem:[%s6407 + $0x50] sm:$0xff]
    %v6995 = vld [vmem:[%s6407 + $0x60] sm:$0xff]
    %v6996 = vld [vmem:[%s6407 + $0x70] sm:$0xff]
    %v6997 = vld [vmem:[%s6407 + $0xa0] sm:$0xff]
    %v6998 = vld [vmem:[%s6407 + $0xb0] sm:$0xff]
    %v6999 = vld [vmem:[%s6407 + $0xc0] sm:$0xff]
    %v7000 = vld [vmem:[%s6407 + $0xd0] sm:$0xff]
    %v7001 = vld [vmem:[%s6407 + $0xe0] sm:$0xff]
    %v7002 = vld [vmem:[%s6407 + $0xf0] sm:$0xff]
    %v7003 = vld [vmem:[%s6407 + $0x100] sm:$0xff]
    %v7004 = vld [vmem:[%s6407 + $0x110] sm:$0xff]
    %v7005 = vpack.c.bf16 %v6990, %v6989
    %v7006 = vpack.c.bf16 %v6992, %v6991
    %v7007 = vpack.c.bf16 %v6994, %v6993
    %v7008 = vpack.c.bf16 %v6996, %v6995
    %v7009 = vpack.c.bf16 %v6998, %v6997
    %v7010 = vpack.c.bf16 %v7000, %v6999
    %v7011 = vpack.c.bf16 %v7002, %v7001
    %v7012 = vpack.c.bf16 %v7004, %v7003
    %s7013 = scalar_lea.vmem [#allocation10], 96
    %v7014 = vld [vmem:[%s7013] sm:$0xf]
    %v7015 = vld [vmem:[%s7013 + $0x4] sm:$0xf]
    %v7016 = vld [vmem:[%s7013 + $0x8] sm:$0xf]
    %v7017 = vld [vmem:[%s7013 + $0xc] sm:$0xf]
    %v7018 = vld [vmem:[%s7013 + $0x10] sm:$0xf]
    %v7019 = vld [vmem:[%s7013 + $0x14] sm:$0xf]
    %v7020 = vld [vmem:[%s7013 + $0x18] sm:$0xf]
    %v7021 = vld [vmem:[%s7013 + $0x1c] sm:$0xf]
    %v7030 = vunpack.c.l.b16 %v7014
    %v7031 = vunpack.c.l.b16 %v7015
    %v7032 = vunpack.c.l.b16 %v7016
    %v7033 = vunpack.c.l.b16 %v7017
    %v7034 = vunpack.c.l.b16 %v7018
    %v7035 = vunpack.c.l.b16 %v7019
    %v7036 = vunpack.c.l.b16 %v7020
    %v7037 = vunpack.c.l.b16 %v7021
    %v7038 = vpack.c.b16 %v7031, %v7030
    %v7039 = vpack.c.b16 %v7033, %v7032
    %v7040 = vpack.c.b16 %v7035, %v7034
    %v7041 = vpack.c.b16 %v7037, %v7036
    %v7047 = vsel %vm5973, %v7005, 0
    %v7050 = vsel %vm5973, %v7006, 0
    %v7053 = vsel %vm5973, %v7007, 0
    %v7056 = vsel %vm5973, %v7008, 0
    %v7059 = vsel %vm5973, %v7009, 0
    %v7062 = vsel %vm5973, %v7010, 0
    %v7065 = vsel %vm5973, %v7011, 0
    %v7068 = vsel %vm5973, %v7012, 0
    %7070 = vmatprep.subr.bf16.mxu0 0
    %7071 = vmatpush1.bf16.msra.mxu0 %v7038
    %7072 = vmatprep.subr.bf16.mxu0 0
    %7073 = vmatpush1.bf16.msra.mxu0 %v7039
    %7074 = vmatprep.subr.bf16.mxu0 0
    %7075 = vmatpush1.bf16.msra.mxu0 %v7040
    %7076 = vmatprep.subr.bf16.mxu0 0
    %7077 = vmatpush1.bf16.msra.mxu0 %v7041
    %7078 = vmatprep.subr.bf16.mxu0 0
    %7079 = vmatpush1.bf16.msra.mxu0 0
    %7080 = vmatprep.subr.bf16.mxu0 0
    %7081 = vmatpush1.bf16.msra.mxu0 0
    %7082 = vmatprep.subr.bf16.mxu0 0
    %7083 = vmatpush1.bf16.msra.mxu0 0
    %7084 = vmatprep.subr.bf16.mxu0 0
    %7085 = vmatpush1.bf16.msra.mxu0 0
    %7086 = vmatprep.subr.bf16.mxu0 0
    %7087 = vmatpush1.bf16.msra.mxu0 0
    %7088 = vmatprep.subr.bf16.mxu0 0
    %7089 = vmatpush1.bf16.msra.mxu0 0
    %7090 = vmatprep.subr.bf16.mxu0 0
    %7091 = vmatpush1.bf16.msra.mxu0 0
    %7092 = vmatprep.subr.bf16.mxu0 0
    %7093 = vmatpush1.bf16.msra.mxu0 0
    %7094 = vmatprep.subr.bf16.mxu0 0
    %7095 = vmatpush1.bf16.msra.mxu0 0
    %7096 = vmatprep.subr.bf16.mxu0 0
    %7097 = vmatpush1.bf16.msra.mxu0 0
    %7098 = vmatprep.subr.bf16.mxu0 0
    %7099 = vmatpush1.bf16.msra.mxu0 0
    %7100 = vmatprep.subr.bf16.mxu0 0
    %7101 = vmatpush1.bf16.msra.mxu0 0
    %7102 = vmatprep.mubr.bf16.mxu0 0
    %7103 = vmatmul.mubr.bf16.gmra.mrb[0].mxu0 %v7047
    %v7104 = vpop.f32.mrb[0].mxu0
    %v7105 = vadd.f32 0.0, %v7104
    %v7106 = vpop.f32.mrb[0].mxu0
    %v7107 = vpop.f32.mrb[0].mxu0
    %v7108 = vadd.f32 0.0, %v7107
    %v7109 = vpop.f32.mrb[0].mxu0
    %7110 = vmatprep.mubr.bf16.mxu0 0
    %7111 = vmatmul.mubr.bf16.gmra.mrb[0].mxu0 %v7050
    %v7112 = vpop.f32.mrb[0].mxu0
    %v7113 = vadd.f32 0.0, %v7112
    %v7114 = vpop.f32.mrb[0].mxu0
    %v7115 = vpop.f32.mrb[0].mxu0
    %v7116 = vadd.f32 0.0, %v7115
    %v7117 = vpop.f32.mrb[0].mxu0
    %7118 = vmatprep.mubr.bf16.mxu0 0
    %7119 = vmatmul.mubr.bf16.gmra.mrb[0].mxu0 %v7053
    %v7120 = vpop.f32.mrb[0].mxu0
    %v7121 = vadd.f32 0.0, %v7120
    %v7122 = vpop.f32.mrb[0].mxu0
    %v7123 = vpop.f32.mrb[0].mxu0
    %v7124 = vadd.f32 0.0, %v7123
    %v7125 = vpop.f32.mrb[0].mxu0
    %7126 = vmatprep.mubr.bf16.mxu0 0
    %7127 = vmatmul.mubr.bf16.gmra.mrb[0].mxu0 %v7056
    %v7128 = vpop.f32.mrb[0].mxu0
    %v7129 = vadd.f32 0.0, %v7128
    %v7130 = vpop.f32.mrb[0].mxu0
    %v7131 = vpop.f32.mrb[0].mxu0
    %v7132 = vadd.f32 0.0, %v7131
    %v7133 = vpop.f32.mrb[0].mxu0
    %7134 = vmatprep.mubr.bf16.mxu0 0
    %7135 = vmatmul.mubr.bf16.gmra.mrb[0].mxu0 %v7059
    %v7136 = vpop.f32.mrb[0].mxu0
    %v7137 = vadd.f32 0.0, %v7136
    %v7138 = vpop.f32.mrb[0].mxu0
    %v7139 = vpop.f32.mrb[0].mxu0
    %v7140 = vadd.f32 0.0, %v7139
    %v7141 = vpop.f32.mrb[0].mxu0
    %7142 = vmatprep.mubr.bf16.mxu0 0
    %7143 = vmatmul.mubr.bf16.gmra.mrb[0].mxu0 %v7062
    %v7144 = vpop.f32.mrb[0].mxu0
    %v7145 = vadd.f32 0.0, %v7144
    %v7146 = vpop.f32.mrb[0].mxu0
    %v7147 = vpop.f32.mrb[0].mxu0
    %v7148 = vadd.f32 0.0, %v7147
    %v7149 = vpop.f32.mrb[0].mxu0
    %7150 = vmatprep.mubr.bf16.mxu0 0
    %7151 = vmatmul.mubr.bf16.gmra.mrb[0].mxu0 %v7065
    %v7152 = vpop.f32.mrb[0].mxu0
    %v7153 = vadd.f32 0.0, %v7152
    %v7154 = vpop.f32.mrb[0].mxu0
    %v7155 = vpop.f32.mrb[0].mxu0
    %v7156 = vadd.f32 0.0, %v7155
    %v7157 = vpop.f32.mrb[0].mxu0
    %7158 = vmatprep.mubr.bf16.mxu0 0
    %7159 = vmatmul.mubr.bf16.gmra.mrb[0].mxu0 %v7068
    %v7160 = vpop.f32.mrb[0].mxu0
    %v7161 = vadd.f32 0.0, %v7160
    %v7162 = vpop.f32.mrb[0].mxu0
    %v7163 = vpop.f32.mrb[0].mxu0
    %v7164 = vadd.f32 0.0, %v7163
    %v7165 = vpop.f32.mrb[0].mxu0
    %7166 = vdwg.mxu0
    %v7167 = vadd.f32 %v6973, %v7105
    %v7168 = vadd.f32 %v6974, %v7108
    %v7169 = vadd.f32 %v6975, %v7113
    %v7170 = vadd.f32 %v6976, %v7116
    %v7171 = vadd.f32 %v6977, %v7121
    %v7172 = vadd.f32 %v6978, %v7124
    %v7173 = vadd.f32 %v6979, %v7129
    %v7174 = vadd.f32 %v6980, %v7132
    %v7175 = vadd.f32 %v6981, %v7137
    %v7176 = vadd.f32 %v6982, %v7140
    %v7177 = vadd.f32 %v6983, %v7145
    %v7178 = vadd.f32 %v6984, %v7148
    %v7179 = vadd.f32 %v6985, %v7153
    %v7180 = vadd.f32 %v6986, %v7156
    %v7181 = vadd.f32 %v6987, %v7161
    %v7182 = vadd.f32 %v6988, %v7164
    %v7183 = vld [vmem:[%s6407 + $0x1] sm:$0xff]
    %v7184 = vld [vmem:[%s6407 + $0x11] sm:$0xff]
    %v7185 = vld [vmem:[%s6407 + $0x21] sm:$0xff]
    %v7186 = vld [vmem:[%s6407 + $0x31] sm:$0xff]
    %v7187 = vld [vmem:[%s6407 + $0x41] sm:$0xff]
    %v7188 = vld [vmem:[%s6407 + $0x51] sm:$0xff]
    %v7189 = vld [vmem:[%s6407 + $0x61] sm:$0xff]
    %v7190 = vld [vmem:[%s6407 + $0x71] sm:$0xff]
    %v7191 = vld [vmem:[%s6407 + $0xa1] sm:$0xff]
    %v7192 = vld [vmem:[%s6407 + $0xb1] sm:$0xff]
    %v7193 = vld [vmem:[%s6407 + $0xc1] sm:$0xff]
    %v7194 = vld [vmem:[%s6407 + $0xd1] sm:$0xff]
    %v7195 = vld [vmem:[%s6407 + $0xe1] sm:$0xff]
    %v7196 = vld [vmem:[%s6407 + $0xf1] sm:$0xff]
    %v7197 = vld [vmem:[%s6407 + $0x101] sm:$0xff]
    %v7198 = vld [vmem:[%s6407 + $0x111] sm:$0xff]
    %v7199 = vpack.c.bf16 %v7184, %v7183
    %v7200 = vpack.c.bf16 %v7186, %v7185
    %v7201 = vpack.c.bf16 %v7188, %v7187
    %v7202 = vpack.c.bf16 %v7190, %v7189
    %v7203 = vpack.c.bf16 %v7192, %v7191
    %v7204 = vpack.c.bf16 %v7194, %v7193
    %v7205 = vpack.c.bf16 %v7196, %v7195
    %v7206 = vpack.c.bf16 %v7198, %v7197
    %s7207 = scalar_lea.vmem [#allocation10], 128
    %v7208 = vld [vmem:[%s7207] sm:$0xf]
    %v7209 = vld [vmem:[%s7207 + $0x4] sm:$0xf]
    %v7210 = vld [vmem:[%s7207 + $0x8] sm:$0xf]
    %v7211 = vld [vmem:[%s7207 + $0xc] sm:$0xf]
    %v7212 = vld [vmem:[%s7207 + $0x10] sm:$0xf]
    %v7213 = vld [vmem:[%s7207 + $0x14] sm:$0xf]
    %v7214 = vld [vmem:[%s7207 + $0x18] sm:$0xf]
    %v7215 = vld [vmem:[%s7207 + $0x1c] sm:$0xf]
    %v7224 = vunpack.c.l.b16 %v7208
    %v7225 = vunpack.c.l.b16 %v7209
    %v7226 = vunpack.c.l.b16 %v7210
    %v7227 = vunpack.c.l.b16 %v7211
    %v7228 = vunpack.c.l.b16 %v7212
    %v7229 = vunpack.c.l.b16 %v7213
    %v7230 = vunpack.c.l.b16 %v7214
    %v7231 = vunpack.c.l.b16 %v7215
    %v7232 = vpack.c.b16 %v7225, %v7224
    %v7233 = vpack.c.b16 %v7227, %v7226
    %v7234 = vpack.c.b16 %v7229, %v7228
    %v7235 = vpack.c.b16 %v7231, %v7230
    %v7241 = vsel %vm5973, %v7199, 0
    %v7244 = vsel %vm5973, %v7200, 0
    %v7247 = vsel %vm5973, %v7201, 0
    %v7250 = vsel %vm5973, %v7202, 0
    %v7253 = vsel %vm5973, %v7203, 0
    %v7256 = vsel %vm5973, %v7204, 0
    %v7259 = vsel %vm5973, %v7205, 0
    %v7262 = vsel %vm5973, %v7206, 0
    %7264 = vmatprep.subr.bf16.mxu0 0
    %7265 = vmatpush1.bf16.msra.mxu0 %v7232
    %7266 = vmatprep.subr.bf16.mxu0 0
    %7267 = vmatpush1.bf16.msra.mxu0 %v7233
    %7268 = vmatprep.subr.bf16.mxu0 0
    %7269 = vmatpush1.bf16.msra.mxu0 %v7234
    %7270 = vmatprep.subr.bf16.mxu0 0
    %7271 = vmatpush1.bf16.msra.mxu0 %v7235
    %7272 = vmatprep.subr.bf16.mxu0 0
    %7273 = vmatpush1.bf16.msra.mxu0 0
    %7274 = vmatprep.subr.bf16.mxu0 0
    %7275 = vmatpush1.bf16.msra.mxu0 0
    %7276 = vmatprep.subr.bf16.mxu0 0
    %7277 = vmatpush1.bf16.msra.mxu0 0
    %7278 = vmatprep.subr.bf16.mxu0 0
    %7279 = vmatpush1.bf16.msra.mxu0 0
    %7280 = vmatprep.subr.bf16.mxu0 0
    %7281 = vmatpush1.bf16.msra.mxu0 0
    %7282 = vmatprep.subr.bf16.mxu0 0
    %7283 = vmatpush1.bf16.msra.mxu0 0
    %7284 = vmatprep.subr.bf16.mxu0 0
    %7285 = vmatpush1.bf16.msra.mxu0 0
    %7286 = vmatprep.subr.bf16.mxu0 0
    %7287 = vmatpush1.bf16.msra.mxu0 0
    %7288 = vmatprep.subr.bf16.mxu0 0
    %7289 = vmatpush1.bf16.msra.mxu0 0
    %7290 = vmatprep.subr.bf16.mxu0 0
    %7291 = vmatpush1.bf16.msra.mxu0 0
    %7292 = vmatprep.subr.bf16.mxu0 0
    %7293 = vmatpush1.bf16.msra.mxu0 0
    %7294 = vmatprep.subr.bf16.mxu0 0
    %7295 = vmatpush1.bf16.msra.mxu0 0
    %7296 = vmatprep.mubr.bf16.mxu0 0
    %7297 = vmatmul.mubr.bf16.gmra.mrb[0].mxu0 %v7241
    %v7298 = vpop.f32.mrb[0].mxu0
    %v7299 = vadd.f32 0.0, %v7298
    %v7300 = vpop.f32.mrb[0].mxu0
    %v7301 = vpop.f32.mrb[0].mxu0
    %v7302 = vadd.f32 0.0, %v7301
    %v7303 = vpop.f32.mrb[0].mxu0
    %7304 = vmatprep.mubr.bf16.mxu0 0
    %7305 = vmatmul.mubr.bf16.gmra.mrb[0].mxu0 %v7244
    %v7306 = vpop.f32.mrb[0].mxu0
    %v7307 = vadd.f32 0.0, %v7306
    %v7308 = vpop.f32.mrb[0].mxu0
    %v7309 = vpop.f32.mrb[0].mxu0
    %v7310 = vadd.f32 0.0, %v7309
    %v7311 = vpop.f32.mrb[0].mxu0
    %7312 = vmatprep.mubr.bf16.mxu0 0
    %7313 = vmatmul.mubr.bf16.gmra.mrb[0].mxu0 %v7247
    %v7314 = vpop.f32.mrb[0].mxu0
    %v7315 = vadd.f32 0.0, %v7314
    %v7316 = vpop.f32.mrb[0].mxu0
    %v7317 = vpop.f32.mrb[0].mxu0
    %v7318 = vadd.f32 0.0, %v7317
    %v7319 = vpop.f32.mrb[0].mxu0
    %7320 = vmatprep.mubr.bf16.mxu0 0
    %7321 = vmatmul.mubr.bf16.gmra.mrb[0].mxu0 %v7250
    %v7322 = vpop.f32.mrb[0].mxu0
    %v7323 = vadd.f32 0.0, %v7322
    %v7324 = vpop.f32.mrb[0].mxu0
    %v7325 = vpop.f32.mrb[0].mxu0
    %v7326 = vadd.f32 0.0, %v7325
    %v7327 = vpop.f32.mrb[0].mxu0
    %7328 = vmatprep.mubr.bf16.mxu0 0
    %7329 = vmatmul.mubr.bf16.gmra.mrb[0].mxu0 %v7253
    %v7330 = vpop.f32.mrb[0].mxu0
    %v7331 = vadd.f32 0.0, %v7330
    %v7332 = vpop.f32.mrb[0].mxu0
    %v7333 = vpop.f32.mrb[0].mxu0
    %v7334 = vadd.f32 0.0, %v7333
    %v7335 = vpop.f32.mrb[0].mxu0
    %7336 = vmatprep.mubr.bf16.mxu0 0
    %7337 = vmatmul.mubr.bf16.gmra.mrb[0].mxu0 %v7256
    %v7338 = vpop.f32.mrb[0].mxu0
    %v7339 = vadd.f32 0.0, %v7338
    %v7340 = vpop.f32.mrb[0].mxu0
    %v7341 = vpop.f32.mrb[0].mxu0
    %v7342 = vadd.f32 0.0, %v7341
    %v7343 = vpop.f32.mrb[0].mxu0
    %7344 = vmatprep.mubr.bf16.mxu0 0
    %7345 = vmatmul.mubr.bf16.gmra.mrb[0].mxu0 %v7259
    %v7346 = vpop.f32.mrb[0].mxu0
    %v7347 = vadd.f32 0.0, %v7346
    %v7348 = vpop.f32.mrb[0].mxu0
    %v7349 = vpop.f32.mrb[0].mxu0
    %v7350 = vadd.f32 0.0, %v7349
    %v7351 = vpop.f32.mrb[0].mxu0
    %7352 = vmatprep.mubr.bf16.mxu0 0
    %7353 = vmatmul.mubr.bf16.gmra.mrb[0].mxu0 %v7262
    %v7354 = vpop.f32.mrb[0].mxu0
    %v7355 = vadd.f32 0.0, %v7354
    %v7356 = vpop.f32.mrb[0].mxu0
    %v7357 = vpop.f32.mrb[0].mxu0
    %v7358 = vadd.f32 0.0, %v7357
    %v7359 = vpop.f32.mrb[0].mxu0
    %7360 = vdwg.mxu0
    %v7361 = vadd.f32 %v7167, %v7299
    %v7362 = vadd.f32 %v7168, %v7302
    %v7363 = vadd.f32 %v7169, %v7307
    %v7364 = vadd.f32 %v7170, %v7310
    %v7365 = vadd.f32 %v7171, %v7315
    %v7366 = vadd.f32 %v7172, %v7318
    %v7367 = vadd.f32 %v7173, %v7323
    %v7368 = vadd.f32 %v7174, %v7326
    %v7369 = vadd.f32 %v7175, %v7331
    %v7370 = vadd.f32 %v7176, %v7334
    %v7371 = vadd.f32 %v7177, %v7339
    %v7372 = vadd.f32 %v7178, %v7342
    %v7373 = vadd.f32 %v7179, %v7347
    %v7374 = vadd.f32 %v7180, %v7350
    %v7375 = vadd.f32 %v7181, %v7355
    %v7376 = vadd.f32 %v7182, %v7358
    %v7377 = vld [vmem:[%s6407 + $0x2] sm:$0xff]
    %v7378 = vld [vmem:[%s6407 + $0x12] sm:$0xff]
    %v7379 = vld [vmem:[%s6407 + $0x22] sm:$0xff]
    %v7380 = vld [vmem:[%s6407 + $0x32] sm:$0xff]
    %v7381 = vld [vmem:[%s6407 + $0x42] sm:$0xff]
    %v7382 = vld [vmem:[%s6407 + $0x52] sm:$0xff]
    %v7383 = vld [vmem:[%s6407 + $0x62] sm:$0xff]
    %v7384 = vld [vmem:[%s6407 + $0x72] sm:$0xff]
    %v7385 = vld [vmem:[%s6407 + $0xa2] sm:$0xff]
    %v7386 = vld [vmem:[%s6407 + $0xb2] sm:$0xff]
    %v7387 = vld [vmem:[%s6407 + $0xc2] sm:$0xff]
    %v7388 = vld [vmem:[%s6407 + $0xd2] sm:$0xff]
    %v7389 = vld [vmem:[%s6407 + $0xe2] sm:$0xff]
    %v7390 = vld [vmem:[%s6407 + $0xf2] sm:$0xff]
    %v7391 = vld [vmem:[%s6407 + $0x102] sm:$0xff]
    %v7392 = vld [vmem:[%s6407 + $0x112] sm:$0xff]
    %v7393 = vpack.c.bf16 %v7378, %v7377
    %v7394 = vpack.c.bf16 %v7380, %v7379
    %v7395 = vpack.c.bf16 %v7382, %v7381
    %v7396 = vpack.c.bf16 %v7384, %v7383
    %v7397 = vpack.c.bf16 %v7386, %v7385
    %v7398 = vpack.c.bf16 %v7388, %v7387
    %v7399 = vpack.c.bf16 %v7390, %v7389
    %v7400 = vpack.c.bf16 %v7392, %v7391
    %s7401 = scalar_lea.vmem [#allocation10], 160
    %v7402 = vld [vmem:[%s7401] sm:$0xf]
    %v7403 = vld [vmem:[%s7401 + $0x4] sm:$0xf]
    %v7404 = vld [vmem:[%s7401 + $0x8] sm:$0xf]
    %v7405 = vld [vmem:[%s7401 + $0xc] sm:$0xf]
    %v7406 = vld [vmem:[%s7401 + $0x10] sm:$0xf]
    %v7407 = vld [vmem:[%s7401 + $0x14] sm:$0xf]
    %v7408 = vld [vmem:[%s7401 + $0x18] sm:$0xf]
    %v7409 = vld [vmem:[%s7401 + $0x1c] sm:$0xf]
    %v7418 = vunpack.c.l.b16 %v7402
    %v7419 = vunpack.c.l.b16 %v7403
    %v7420 = vunpack.c.l.b16 %v7404
    %v7421 = vunpack.c.l.b16 %v7405
    %v7422 = vunpack.c.l.b16 %v7406
    %v7423 = vunpack.c.l.b16 %v7407
    %v7424 = vunpack.c.l.b16 %v7408
    %v7425 = vunpack.c.l.b16 %v7409
    %v7426 = vpack.c.b16 %v7419, %v7418
    %v7427 = vpack.c.b16 %v7421, %v7420
    %v7428 = vpack.c.b16 %v7423, %v7422
    %v7429 = vpack.c.b16 %v7425, %v7424
    %v7435 = vsel %vm5973, %v7393, 0
    %v7438 = vsel %vm5973, %v7394, 0
    %v7441 = vsel %vm5973, %v7395, 0
    %v7444 = vsel %vm5973, %v7396, 0
    %v7447 = vsel %vm5973, %v7397, 0
    %v7450 = vsel %vm5973, %v7398, 0
    %v7453 = vsel %vm5973, %v7399, 0
    %v7456 = vsel %vm5973, %v7400, 0
    %7458 = vmatprep.subr.bf16.mxu0 0
    %7459 = vmatpush1.bf16.msra.mxu0 %v7426
    %7460 = vmatprep.subr.bf16.mxu0 0
    %7461 = vmatpush1.bf16.msra.mxu0 %v7427
    %7462 = vmatprep.subr.bf16.mxu0 0
    %7463 = vmatpush1.bf16.msra.mxu0 %v7428
    %7464 = vmatprep.subr.bf16.mxu0 0
    %7465 = vmatpush1.bf16.msra.mxu0 %v7429
    %7466 = vmatprep.subr.bf16.mxu0 0
    %7467 = vmatpush1.bf16.msra.mxu0 0
    %7468 = vmatprep.subr.bf16.mxu0 0
    %7469 = vmatpush1.bf16.msra.mxu0 0
    %7470 = vmatprep.subr.bf16.mxu0 0
    %7471 = vmatpush1.bf16.msra.mxu0 0
    %7472 = vmatprep.subr.bf16.mxu0 0
    %7473 = vmatpush1.bf16.msra.mxu0 0
    %7474 = vmatprep.subr.bf16.mxu0 0
    %7475 = vmatpush1.bf16.msra.mxu0 0
    %7476 = vmatprep.subr.bf16.mxu0 0
    %7477 = vmatpush1.bf16.msra.mxu0 0
    %7478 = vmatprep.subr.bf16.mxu0 0
    %7479 = vmatpush1.bf16.msra.mxu0 0
    %7480 = vmatprep.subr.bf16.mxu0 0
    %7481 = vmatpush1.bf16.msra.mxu0 0
    %7482 = vmatprep.subr.bf16.mxu0 0
    %7483 = vmatpush1.bf16.msra.mxu0 0
    %7484 = vmatprep.subr.bf16.mxu0 0
    %7485 = vmatpush1.bf16.msra.mxu0 0
    %7486 = vmatprep.subr.bf16.mxu0 0
    %7487 = vmatpush1.bf16.msra.mxu0 0
    %7488 = vmatprep.subr.bf16.mxu0 0
    %7489 = vmatpush1.bf16.msra.mxu0 0
    %7490 = vmatprep.mubr.bf16.mxu0 0
    %7491 = vmatmul.mubr.bf16.gmra.mrb[0].mxu0 %v7435
    %v7492 = vpop.f32.mrb[0].mxu0
    %v7493 = vadd.f32 0.0, %v7492
    %v7494 = vpop.f32.mrb[0].mxu0
    %v7495 = vpop.f32.mrb[0].mxu0
    %v7496 = vadd.f32 0.0, %v7495
    %v7497 = vpop.f32.mrb[0].mxu0
    %7498 = vmatprep.mubr.bf16.mxu0 0
    %7499 = vmatmul.mubr.bf16.gmra.mrb[0].mxu0 %v7438
    %v7500 = vpop.f32.mrb[0].mxu0
    %v7501 = vadd.f32 0.0, %v7500
    %v7502 = vpop.f32.mrb[0].mxu0
    %v7503 = vpop.f32.mrb[0].mxu0
    %v7504 = vadd.f32 0.0, %v7503
    %v7505 = vpop.f32.mrb[0].mxu0
    %7506 = vmatprep.mubr.bf16.mxu0 0
    %7507 = vmatmul.mubr.bf16.gmra.mrb[0].mxu0 %v7441
    %v7508 = vpop.f32.mrb[0].mxu0
    %v7509 = vadd.f32 0.0, %v7508
    %v7510 = vpop.f32.mrb[0].mxu0
    %v7511 = vpop.f32.mrb[0].mxu0
    %v7512 = vadd.f32 0.0, %v7511
    %v7513 = vpop.f32.mrb[0].mxu0
    %7514 = vmatprep.mubr.bf16.mxu0 0
    %7515 = vmatmul.mubr.bf16.gmra.mrb[0].mxu0 %v7444
    %v7516 = vpop.f32.mrb[0].mxu0
    %v7517 = vadd.f32 0.0, %v7516
    %v7518 = vpop.f32.mrb[0].mxu0
    %v7519 = vpop.f32.mrb[0].mxu0
    %v7520 = vadd.f32 0.0, %v7519
    %v7521 = vpop.f32.mrb[0].mxu0
    %7522 = vmatprep.mubr.bf16.mxu0 0
    %7523 = vmatmul.mubr.bf16.gmra.mrb[0].mxu0 %v7447
    %v7524 = vpop.f32.mrb[0].mxu0
    %v7525 = vadd.f32 0.0, %v7524
    %v7526 = vpop.f32.mrb[0].mxu0
    %v7527 = vpop.f32.mrb[0].mxu0
    %v7528 = vadd.f32 0.0, %v7527
    %v7529 = vpop.f32.mrb[0].mxu0
    %7530 = vmatprep.mubr.bf16.mxu0 0
    %7531 = vmatmul.mubr.bf16.gmra.mrb[0].mxu0 %v7450
    %v7532 = vpop.f32.mrb[0].mxu0
    %v7533 = vadd.f32 0.0, %v7532
    %v7534 = vpop.f32.mrb[0].mxu0
    %v7535 = vpop.f32.mrb[0].mxu0
    %v7536 = vadd.f32 0.0, %v7535
    %v7537 = vpop.f32.mrb[0].mxu0
    %7538 = vmatprep.mubr.bf16.mxu0 0
    %7539 = vmatmul.mubr.bf16.gmra.mrb[0].mxu0 %v7453
    %v7540 = vpop.f32.mrb[0].mxu0
    %v7541 = vadd.f32 0.0, %v7540
    %v7542 = vpop.f32.mrb[0].mxu0
    %v7543 = vpop.f32.mrb[0].mxu0
    %v7544 = vadd.f32 0.0, %v7543
    %v7545 = vpop.f32.mrb[0].mxu0
    %7546 = vmatprep.mubr.bf16.mxu0 0
    %7547 = vmatmul.mubr.bf16.gmra.mrb[0].mxu0 %v7456
    %v7548 = vpop.f32.mrb[0].mxu0
    %v7549 = vadd.f32 0.0, %v7548
    %v7550 = vpop.f32.mrb[0].mxu0
    %v7551 = vpop.f32.mrb[0].mxu0
    %v7552 = vadd.f32 0.0, %v7551
    %v7553 = vpop.f32.mrb[0].mxu0
    %7554 = vdwg.mxu0
    %v7555 = vadd.f32 %v7361, %v7493
    %v7556 = vadd.f32 %v7362, %v7496
    %v7557 = vadd.f32 %v7363, %v7501
    %v7558 = vadd.f32 %v7364, %v7504
    %v7559 = vadd.f32 %v7365, %v7509
    %v7560 = vadd.f32 %v7366, %v7512
    %v7561 = vadd.f32 %v7367, %v7517
    %v7562 = vadd.f32 %v7368, %v7520
    %v7563 = vadd.f32 %v7369, %v7525
    %v7564 = vadd.f32 %v7370, %v7528
    %v7565 = vadd.f32 %v7371, %v7533
    %v7566 = vadd.f32 %v7372, %v7536
    %v7567 = vadd.f32 %v7373, %v7541
    %v7568 = vadd.f32 %v7374, %v7544
    %v7569 = vadd.f32 %v7375, %v7549
    %v7570 = vadd.f32 %v7376, %v7552
    %s7571 = scalar_lea.vmem [#allocation2], 32
    %v7572 = vld [vmem:[%s7571] sm:$0xff]
    %v7573 = vld [vmem:[%s7571 + $0x10] sm:$0xff]
    %v7574 = vld [vmem:[%s7571 + $0x20] sm:$0xff]
    %v7575 = vld [vmem:[%s7571 + $0x30] sm:$0xff]
    %v7576 = vld [vmem:[%s7571 + $0x40] sm:$0xff]
    %v7577 = vld [vmem:[%s7571 + $0x50] sm:$0xff]
    %v7578 = vld [vmem:[%s7571 + $0x60] sm:$0xff]
    %v7579 = vld [vmem:[%s7571 + $0x70] sm:$0xff]
    %v7580 = vld [vmem:[%s7571 + $0xa0] sm:$0xff]
    %v7581 = vld [vmem:[%s7571 + $0xb0] sm:$0xff]
    %v7582 = vld [vmem:[%s7571 + $0xc0] sm:$0xff]
    %v7583 = vld [vmem:[%s7571 + $0xd0] sm:$0xff]
    %v7584 = vld [vmem:[%s7571 + $0xe0] sm:$0xff]
    %v7585 = vld [vmem:[%s7571 + $0xf0] sm:$0xff]
    %v7586 = vld [vmem:[%s7571 + $0x100] sm:$0xff]
    %v7587 = vld [vmem:[%s7571 + $0x110] sm:$0xff]
    %v7588 = vpack.c.bf16 %v7573, %v7572
    %v7589 = vpack.c.bf16 %v7575, %v7574
    %v7590 = vpack.c.bf16 %v7577, %v7576
    %v7591 = vpack.c.bf16 %v7579, %v7578
    %v7592 = vpack.c.bf16 %v7581, %v7580
    %v7593 = vpack.c.bf16 %v7583, %v7582
    %v7594 = vpack.c.bf16 %v7585, %v7584
    %v7595 = vpack.c.bf16 %v7587, %v7586
    %s7596 = scalar_lea.vmem [#allocation10], 192
    %v7597 = vld [vmem:[%s7596] sm:$0xf]
    %v7598 = vld [vmem:[%s7596 + $0x4] sm:$0xf]
    %v7599 = vld [vmem:[%s7596 + $0x8] sm:$0xf]
    %v7600 = vld [vmem:[%s7596 + $0xc] sm:$0xf]
    %v7601 = vld [vmem:[%s7596 + $0x10] sm:$0xf]
    %v7602 = vld [vmem:[%s7596 + $0x14] sm:$0xf]
    %v7603 = vld [vmem:[%s7596 + $0x18] sm:$0xf]
    %v7604 = vld [vmem:[%s7596 + $0x1c] sm:$0xf]
    %v7613 = vunpack.c.l.b16 %v7597
    %v7614 = vunpack.c.l.b16 %v7598
    %v7615 = vunpack.c.l.b16 %v7599
    %v7616 = vunpack.c.l.b16 %v7600
    %v7617 = vunpack.c.l.b16 %v7601
    %v7618 = vunpack.c.l.b16 %v7602
    %v7619 = vunpack.c.l.b16 %v7603
    %v7620 = vunpack.c.l.b16 %v7604
    %v7621 = vpack.c.b16 %v7614, %v7613
    %v7622 = vpack.c.b16 %v7616, %v7615
    %v7623 = vpack.c.b16 %v7618, %v7617
    %v7624 = vpack.c.b16 %v7620, %v7619
    %v7630 = vsel %vm5973, %v7588, 0
    %v7633 = vsel %vm5973, %v7589, 0
    %v7636 = vsel %vm5973, %v7590, 0
    %v7639 = vsel %vm5973, %v7591, 0
    %v7642 = vsel %vm5973, %v7592, 0
    %v7645 = vsel %vm5973, %v7593, 0
    %v7648 = vsel %vm5973, %v7594, 0
    %v7651 = vsel %vm5973, %v7595, 0
    %7653 = vmatprep.subr.bf16.mxu0 0
    %7654 = vmatpush1.bf16.msra.mxu0 %v7621
    %7655 = vmatprep.subr.bf16.mxu0 0
    %7656 = vmatpush1.bf16.msra.mxu0 %v7622
    %7657 = vmatprep.subr.bf16.mxu0 0
    %7658 = vmatpush1.bf16.msra.mxu0 %v7623
    %7659 = vmatprep.subr.bf16.mxu0 0
    %7660 = vmatpush1.bf16.msra.mxu0 %v7624
    %7661 = vmatprep.subr.bf16.mxu0 0
    %7662 = vmatpush1.bf16.msra.mxu0 0
    %7663 = vmatprep.subr.bf16.mxu0 0
    %7664 = vmatpush1.bf16.msra.mxu0 0
    %7665 = vmatprep.subr.bf16.mxu0 0
    %7666 = vmatpush1.bf16.msra.mxu0 0
    %7667 = vmatprep.subr.bf16.mxu0 0
    %7668 = vmatpush1.bf16.msra.mxu0 0
    %7669 = vmatprep.subr.bf16.mxu0 0
    %7670 = vmatpush1.bf16.msra.mxu0 0
    %7671 = vmatprep.subr.bf16.mxu0 0
    %7672 = vmatpush1.bf16.msra.mxu0 0
    %7673 = vmatprep.subr.bf16.mxu0 0
    %7674 = vmatpush1.bf16.msra.mxu0 0
    %7675 = vmatprep.subr.bf16.mxu0 0
    %7676 = vmatpush1.bf16.msra.mxu0 0
    %7677 = vmatprep.subr.bf16.mxu0 0
    %7678 = vmatpush1.bf16.msra.mxu0 0
    %7679 = vmatprep.subr.bf16.mxu0 0
    %7680 = vmatpush1.bf16.msra.mxu0 0
    %7681 = vmatprep.subr.bf16.mxu0 0
    %7682 = vmatpush1.bf16.msra.mxu0 0
    %7683 = vmatprep.subr.bf16.mxu0 0
    %7684 = vmatpush1.bf16.msra.mxu0 0
    %7685 = vmatprep.mubr.bf16.mxu0 0
    %7686 = vmatmul.mubr.bf16.gmra.mrb[0].mxu0 %v7630
    %v7687 = vpop.f32.mrb[0].mxu0
    %v7688 = vadd.f32 0.0, %v7687
    %v7689 = vpop.f32.mrb[0].mxu0
    %v7690 = vpop.f32.mrb[0].mxu0
    %v7691 = vadd.f32 0.0, %v7690
    %v7692 = vpop.f32.mrb[0].mxu0
    %7693 = vmatprep.mubr.bf16.mxu0 0
    %7694 = vmatmul.mubr.bf16.gmra.mrb[0].mxu0 %v7633
    %v7695 = vpop.f32.mrb[0].mxu0
    %v7696 = vadd.f32 0.0, %v7695
    %v7697 = vpop.f32.mrb[0].mxu0
    %v7698 = vpop.f32.mrb[0].mxu0
    %v7699 = vadd.f32 0.0, %v7698
    %v7700 = vpop.f32.mrb[0].mxu0
    %7701 = vmatprep.mubr.bf16.mxu0 0
    %7702 = vmatmul.mubr.bf16.gmra.mrb[0].mxu0 %v7636
    %v7703 = vpop.f32.mrb[0].mxu0
    %v7704 = vadd.f32 0.0, %v7703
    %v7705 = vpop.f32.mrb[0].mxu0
    %v7706 = vpop.f32.mrb[0].mxu0
    %v7707 = vadd.f32 0.0, %v7706
    %v7708 = vpop.f32.mrb[0].mxu0
    %7709 = vmatprep.mubr.bf16.mxu0 0
    %7710 = vmatmul.mubr.bf16.gmra.mrb[0].mxu0 %v7639
    %v7711 = vpop.f32.mrb[0].mxu0
    %v7712 = vadd.f32 0.0, %v7711
    %v7713 = vpop.f32.mrb[0].mxu0
    %v7714 = vpop.f32.mrb[0].mxu0
    %v7715 = vadd.f32 0.0, %v7714
    %v7716 = vpop.f32.mrb[0].mxu0
    %7717 = vmatprep.mubr.bf16.mxu0 0
    %7718 = vmatmul.mubr.bf16.gmra.mrb[0].mxu0 %v7642
    %v7719 = vpop.f32.mrb[0].mxu0
    %v7720 = vadd.f32 0.0, %v7719
    %v7721 = vpop.f32.mrb[0].mxu0
    %v7722 = vpop.f32.mrb[0].mxu0
    %v7723 = vadd.f32 0.0, %v7722
    %v7724 = vpop.f32.mrb[0].mxu0
    %7725 = vmatprep.mubr.bf16.mxu0 0
    %7726 = vmatmul.mubr.bf16.gmra.mrb[0].mxu0 %v7645
    %v7727 = vpop.f32.mrb[0].mxu0
    %v7728 = vadd.f32 0.0, %v7727
    %v7729 = vpop.f32.mrb[0].mxu0
    %v7730 = vpop.f32.mrb[0].mxu0
    %v7731 = vadd.f32 0.0, %v7730
    %v7732 = vpop.f32.mrb[0].mxu0
    %7733 = vmatprep.mubr.bf16.mxu0 0
    %7734 = vmatmul.mubr.bf16.gmra.mrb[0].mxu0 %v7648
    %v7735 = vpop.f32.mrb[0].mxu0
    %v7736 = vadd.f32 0.0, %v7735
    %v7737 = vpop.f32.mrb[0].mxu0
    %v7738 = vpop.f32.mrb[0].mxu0
    %v7739 = vadd.f32 0.0, %v7738
    %v7740 = vpop.f32.mrb[0].mxu0
    %7741 = vmatprep.mubr.bf16.mxu0 0
    %7742 = vmatmul.mubr.bf16.gmra.mrb[0].mxu0 %v7651
    %v7743 = vpop.f32.mrb[0].mxu0
    %v7744 = vadd.f32 0.0, %v7743
    %v7745 = vpop.f32.mrb[0].mxu0
    %v7746 = vpop.f32.mrb[0].mxu0
    %v7747 = vadd.f32 0.0, %v7746
    %v7748 = vpop.f32.mrb[0].mxu0
    %7749 = vdwg.mxu0
    %v7750 = vadd.f32 %v7555, %v7688
    %v7751 = vadd.f32 %v7556, %v7691
    %v7752 = vadd.f32 %v7557, %v7696
    %v7753 = vadd.f32 %v7558, %v7699
    %v7754 = vadd.f32 %v7559, %v7704
    %v7755 = vadd.f32 %v7560, %v7707
    %v7756 = vadd.f32 %v7561, %v7712
    %v7757 = vadd.f32 %v7562, %v7715
    %v7758 = vadd.f32 %v7563, %v7720
    %v7759 = vadd.f32 %v7564, %v7723
    %v7760 = vadd.f32 %v7565, %v7728
    %v7761 = vadd.f32 %v7566, %v7731
    %v7762 = vadd.f32 %v7567, %v7736
    %v7763 = vadd.f32 %v7568, %v7739
    %v7764 = vadd.f32 %v7569, %v7744
    %v7765 = vadd.f32 %v7570, %v7747
    %v7766 = vld [vmem:[%s7571 + $0x1] sm:$0xff]
    %v7767 = vld [vmem:[%s7571 + $0x11] sm:$0xff]
    %v7768 = vld [vmem:[%s7571 + $0x21] sm:$0xff]
    %v7769 = vld [vmem:[%s7571 + $0x31] sm:$0xff]
    %v7770 = vld [vmem:[%s7571 + $0x41] sm:$0xff]
    %v7771 = vld [vmem:[%s7571 + $0x51] sm:$0xff]
    %v7772 = vld [vmem:[%s7571 + $0x61] sm:$0xff]
    %v7773 = vld [vmem:[%s7571 + $0x71] sm:$0xff]
    %v7774 = vld [vmem:[%s7571 + $0xa1] sm:$0xff]
    %v7775 = vld [vmem:[%s7571 + $0xb1] sm:$0xff]
    %v7776 = vld [vmem:[%s7571 + $0xc1] sm:$0xff]
    %v7777 = vld [vmem:[%s7571 + $0xd1] sm:$0xff]
    %v7778 = vld [vmem:[%s7571 + $0xe1] sm:$0xff]
    %v7779 = vld [vmem:[%s7571 + $0xf1] sm:$0xff]
    %v7780 = vld [vmem:[%s7571 + $0x101] sm:$0xff]
    %v7781 = vld [vmem:[%s7571 + $0x111] sm:$0xff]
    %v7782 = vpack.c.bf16 %v7767, %v7766
    %v7783 = vpack.c.bf16 %v7769, %v7768
    %v7784 = vpack.c.bf16 %v7771, %v7770
    %v7785 = vpack.c.bf16 %v7773, %v7772
    %v7786 = vpack.c.bf16 %v7775, %v7774
    %v7787 = vpack.c.bf16 %v7777, %v7776
    %v7788 = vpack.c.bf16 %v7779, %v7778
    %v7789 = vpack.c.bf16 %v7781, %v7780
    %s7790 = scalar_lea.vmem [#allocation10], 224
    %v7791 = vld [vmem:[%s7790] sm:$0xf]
    %v7792 = vld [vmem:[%s7790 + $0x4] sm:$0xf]
    %v7793 = vld [vmem:[%s7790 + $0x8] sm:$0xf]
    %v7794 = vld [vmem:[%s7790 + $0xc] sm:$0xf]
    %v7795 = vld [vmem:[%s7790 + $0x10] sm:$0xf]
    %v7796 = vld [vmem:[%s7790 + $0x14] sm:$0xf]
    %v7797 = vld [vmem:[%s7790 + $0x18] sm:$0xf]
    %v7798 = vld [vmem:[%s7790 + $0x1c] sm:$0xf]
    %v7807 = vunpack.c.l.b16 %v7791
    %v7808 = vunpack.c.l.b16 %v7792
    %v7809 = vunpack.c.l.b16 %v7793
    %v7810 = vunpack.c.l.b16 %v7794
    %v7811 = vunpack.c.l.b16 %v7795
    %v7812 = vunpack.c.l.b16 %v7796
    %v7813 = vunpack.c.l.b16 %v7797
    %v7814 = vunpack.c.l.b16 %v7798
    %v7815 = vpack.c.b16 %v7808, %v7807
    %v7816 = vpack.c.b16 %v7810, %v7809
    %v7817 = vpack.c.b16 %v7812, %v7811
    %v7818 = vpack.c.b16 %v7814, %v7813
    %v7824 = vsel %vm5973, %v7782, 0
    %v7827 = vsel %vm5973, %v7783, 0
    %v7830 = vsel %vm5973, %v7784, 0
    %v7833 = vsel %vm5973, %v7785, 0
    %v7836 = vsel %vm5973, %v7786, 0
    %v7839 = vsel %vm5973, %v7787, 0
    %v7842 = vsel %vm5973, %v7788, 0
    %v7845 = vsel %vm5973, %v7789, 0
    %7847 = vmatprep.subr.bf16.mxu0 0
    %7848 = vmatpush1.bf16.msra.mxu0 %v7815
    %7849 = vmatprep.subr.bf16.mxu0 0
    %7850 = vmatpush1.bf16.msra.mxu0 %v7816
    %7851 = vmatprep.subr.bf16.mxu0 0
    %7852 = vmatpush1.bf16.msra.mxu0 %v7817
    %7853 = vmatprep.subr.bf16.mxu0 0
    %7854 = vmatpush1.bf16.msra.mxu0 %v7818
    %7855 = vmatprep.subr.bf16.mxu0 0
    %7856 = vmatpush1.bf16.msra.mxu0 0
    %7857 = vmatprep.subr.bf16.mxu0 0
    %7858 = vmatpush1.bf16.msra.mxu0 0
    %7859 = vmatprep.subr.bf16.mxu0 0
    %7860 = vmatpush1.bf16.msra.mxu0 0
    %7861 = vmatprep.subr.bf16.mxu0 0
    %7862 = vmatpush1.bf16.msra.mxu0 0
    %7863 = vmatprep.subr.bf16.mxu0 0
    %7864 = vmatpush1.bf16.msra.mxu0 0
    %7865 = vmatprep.subr.bf16.mxu0 0
    %7866 = vmatpush1.bf16.msra.mxu0 0
    %7867 = vmatprep.subr.bf16.mxu0 0
    %7868 = vmatpush1.bf16.msra.mxu0 0
    %7869 = vmatprep.subr.bf16.mxu0 0
    %7870 = vmatpush1.bf16.msra.mxu0 0
    %7871 = vmatprep.subr.bf16.mxu0 0
    %7872 = vmatpush1.bf16.msra.mxu0 0
    %7873 = vmatprep.subr.bf16.mxu0 0
    %7874 = vmatpush1.bf16.msra.mxu0 0
    %7875 = vmatprep.subr.bf16.mxu0 0
    %7876 = vmatpush1.bf16.msra.mxu0 0
    %7877 = vmatprep.subr.bf16.mxu0 0
    %7878 = vmatpush1.bf16.msra.mxu0 0
    %7879 = vmatprep.mubr.bf16.mxu0 0
    %7880 = vmatmul.mubr.bf16.gmra.mrb[0].mxu0 %v7824
    %v7881 = vpop.f32.mrb[0].mxu0
    %v7882 = vadd.f32 0.0, %v7881
    %v7883 = vpop.f32.mrb[0].mxu0
    %v7884 = vpop.f32.mrb[0].mxu0
    %v7885 = vadd.f32 0.0, %v7884
    %v7886 = vpop.f32.mrb[0].mxu0
    %7887 = vmatprep.mubr.bf16.mxu0 0
    %7888 = vmatmul.mubr.bf16.gmra.mrb[0].mxu0 %v7827
    %v7889 = vpop.f32.mrb[0].mxu0
    %v7890 = vadd.f32 0.0, %v7889
    %v7891 = vpop.f32.mrb[0].mxu0
    %v7892 = vpop.f32.mrb[0].mxu0
    %v7893 = vadd.f32 0.0, %v7892
    %v7894 = vpop.f32.mrb[0].mxu0
    %7895 = vmatprep.mubr.bf16.mxu0 0
    %7896 = vmatmul.mubr.bf16.gmra.mrb[0].mxu0 %v7830
    %v7897 = vpop.f32.mrb[0].mxu0
    %v7898 = vadd.f32 0.0, %v7897
    %v7899 = vpop.f32.mrb[0].mxu0
    %v7900 = vpop.f32.mrb[0].mxu0
    %v7901 = vadd.f32 0.0, %v7900
    %v7902 = vpop.f32.mrb[0].mxu0
    %7903 = vmatprep.mubr.bf16.mxu0 0
    %7904 = vmatmul.mubr.bf16.gmra.mrb[0].mxu0 %v7833
    %v7905 = vpop.f32.mrb[0].mxu0
    %v7906 = vadd.f32 0.0, %v7905
    %v7907 = vpop.f32.mrb[0].mxu0
    %v7908 = vpop.f32.mrb[0].mxu0
    %v7909 = vadd.f32 0.0, %v7908
    %v7910 = vpop.f32.mrb[0].mxu0
    %7911 = vmatprep.mubr.bf16.mxu0 0
    %7912 = vmatmul.mubr.bf16.gmra.mrb[0].mxu0 %v7836
    %v7913 = vpop.f32.mrb[0].mxu0
    %v7914 = vadd.f32 0.0, %v7913
    %v7915 = vpop.f32.mrb[0].mxu0
    %v7916 = vpop.f32.mrb[0].mxu0
    %v7917 = vadd.f32 0.0, %v7916
    %v7918 = vpop.f32.mrb[0].mxu0
    %7919 = vmatprep.mubr.bf16.mxu0 0
    %7920 = vmatmul.mubr.bf16.gmra.mrb[0].mxu0 %v7839
    %v7921 = vpop.f32.mrb[0].mxu0
    %v7922 = vadd.f32 0.0, %v7921
    %v7923 = vpop.f32.mrb[0].mxu0
    %v7924 = vpop.f32.mrb[0].mxu0
    %v7925 = vadd.f32 0.0, %v7924
    %v7926 = vpop.f32.mrb[0].mxu0
    %7927 = vmatprep.mubr.bf16.mxu0 0
    %7928 = vmatmul.mubr.bf16.gmra.mrb[0].mxu0 %v7842
    %v7929 = vpop.f32.mrb[0].mxu0
    %v7930 = vadd.f32 0.0, %v7929
    %v7931 = vpop.f32.mrb[0].mxu0
    %v7932 = vpop.f32.mrb[0].mxu0
    %v7933 = vadd.f32 0.0, %v7932
    %v7934 = vpop.f32.mrb[0].mxu0
    %7935 = vmatprep.mubr.bf16.mxu0 0
    %7936 = vmatmul.mubr.bf16.gmra.mrb[0].mxu0 %v7845
    %v7937 = vpop.f32.mrb[0].mxu0
    %v7938 = vadd.f32 0.0, %v7937
    %v7939 = vpop.f32.mrb[0].mxu0
    %v7940 = vpop.f32.mrb[0].mxu0
    %v7941 = vadd.f32 0.0, %v7940
    %v7942 = vpop.f32.mrb[0].mxu0
    %7943 = vdwg.mxu0
    %v7944 = vadd.f32 %v7750, %v7882
    %v7945 = vadd.f32 %v7751, %v7885
    %v7946 = vadd.f32 %v7752, %v7890
    %v7947 = vadd.f32 %v7753, %v7893
    %v7948 = vadd.f32 %v7754, %v7898
    %v7949 = vadd.f32 %v7755, %v7901
    %v7950 = vadd.f32 %v7756, %v7906
    %v7951 = vadd.f32 %v7757, %v7909
    %v7952 = vadd.f32 %v7758, %v7914
    %v7953 = vadd.f32 %v7759, %v7917
    %v7954 = vadd.f32 %v7760, %v7922
    %v7955 = vadd.f32 %v7761, %v7925
    %v7956 = vadd.f32 %v7762, %v7930
    %v7957 = vadd.f32 %v7763, %v7933
    %v7958 = vadd.f32 %v7764, %v7938
    %v7959 = vadd.f32 %v7765, %v7941
    %v7960 = vld [vmem:[%s7571 + $0x2] sm:$0xff]
    %v7961 = vld [vmem:[%s7571 + $0x12] sm:$0xff]
    %v7962 = vld [vmem:[%s7571 + $0x22] sm:$0xff]
    %v7963 = vld [vmem:[%s7571 + $0x32] sm:$0xff]
    %v7964 = vld [vmem:[%s7571 + $0x42] sm:$0xff]
    %v7965 = vld [vmem:[%s7571 + $0x52] sm:$0xff]
    %v7966 = vld [vmem:[%s7571 + $0x62] sm:$0xff]
    %v7967 = vld [vmem:[%s7571 + $0x72] sm:$0xff]
    %v7968 = vld [vmem:[%s7571 + $0xa2] sm:$0xff]
    %v7969 = vld [vmem:[%s7571 + $0xb2] sm:$0xff]
    %v7970 = vld [vmem:[%s7571 + $0xc2] sm:$0xff]
    %v7971 = vld [vmem:[%s7571 + $0xd2] sm:$0xff]
    %v7972 = vld [vmem:[%s7571 + $0xe2] sm:$0xff]
    %v7973 = vld [vmem:[%s7571 + $0xf2] sm:$0xff]
    %v7974 = vld [vmem:[%s7571 + $0x102] sm:$0xff]
    %v7975 = vld [vmem:[%s7571 + $0x112] sm:$0xff]
    %v7976 = vpack.c.bf16 %v7961, %v7960
    %v7977 = vpack.c.bf16 %v7963, %v7962
    %v7978 = vpack.c.bf16 %v7965, %v7964
    %v7979 = vpack.c.bf16 %v7967, %v7966
    %v7980 = vpack.c.bf16 %v7969, %v7968
    %v7981 = vpack.c.bf16 %v7971, %v7970
    %v7982 = vpack.c.bf16 %v7973, %v7972
    %v7983 = vpack.c.bf16 %v7975, %v7974
    %s7984 = scalar_lea.vmem [#allocation10], 256
    %v7985 = vld [vmem:[%s7984] sm:$0xf]
    %v7986 = vld [vmem:[%s7984 + $0x4] sm:$0xf]
    %v7987 = vld [vmem:[%s7984 + $0x8] sm:$0xf]
    %v7988 = vld [vmem:[%s7984 + $0xc] sm:$0xf]
    %v7989 = vld [vmem:[%s7984 + $0x10] sm:$0xf]
    %v7990 = vld [vmem:[%s7984 + $0x14] sm:$0xf]
    %v7991 = vld [vmem:[%s7984 + $0x18] sm:$0xf]
    %v7992 = vld [vmem:[%s7984 + $0x1c] sm:$0xf]
    %v8001 = vunpack.c.l.b16 %v7985
    %v8002 = vunpack.c.l.b16 %v7986
    %v8003 = vunpack.c.l.b16 %v7987
    %v8004 = vunpack.c.l.b16 %v7988
    %v8005 = vunpack.c.l.b16 %v7989
    %v8006 = vunpack.c.l.b16 %v7990
    %v8007 = vunpack.c.l.b16 %v7991
    %v8008 = vunpack.c.l.b16 %v7992
    %v8009 = vpack.c.b16 %v8002, %v8001
    %v8010 = vpack.c.b16 %v8004, %v8003
    %v8011 = vpack.c.b16 %v8006, %v8005
    %v8012 = vpack.c.b16 %v8008, %v8007
    %v8018 = vsel %vm5973, %v7976, 0
    %v8021 = vsel %vm5973, %v7977, 0
    %v8024 = vsel %vm5973, %v7978, 0
    %v8027 = vsel %vm5973, %v7979, 0
    %v8030 = vsel %vm5973, %v7980, 0
    %v8033 = vsel %vm5973, %v7981, 0
    %v8036 = vsel %vm5973, %v7982, 0
    %v8039 = vsel %vm5973, %v7983, 0
    %8041 = vmatprep.subr.bf16.mxu0 0
    %8042 = vmatpush1.bf16.msra.mxu0 %v8009
    %8043 = vmatprep.subr.bf16.mxu0 0
    %8044 = vmatpush1.bf16.msra.mxu0 %v8010
    %8045 = vmatprep.subr.bf16.mxu0 0
    %8046 = vmatpush1.bf16.msra.mxu0 %v8011
    %8047 = vmatprep.subr.bf16.mxu0 0
    %8048 = vmatpush1.bf16.msra.mxu0 %v8012
    %8049 = vmatprep.subr.bf16.mxu0 0
    %8050 = vmatpush1.bf16.msra.mxu0 0
    %8051 = vmatprep.subr.bf16.mxu0 0
    %8052 = vmatpush1.bf16.msra.mxu0 0
    %8053 = vmatprep.subr.bf16.mxu0 0
    %8054 = vmatpush1.bf16.msra.mxu0 0
    %8055 = vmatprep.subr.bf16.mxu0 0
    %8056 = vmatpush1.bf16.msra.mxu0 0
    %8057 = vmatprep.subr.bf16.mxu0 0
    %8058 = vmatpush1.bf16.msra.mxu0 0
    %8059 = vmatprep.subr.bf16.mxu0 0
    %8060 = vmatpush1.bf16.msra.mxu0 0
    %8061 = vmatprep.subr.bf16.mxu0 0
    %8062 = vmatpush1.bf16.msra.mxu0 0
    %8063 = vmatprep.subr.bf16.mxu0 0
    %8064 = vmatpush1.bf16.msra.mxu0 0
    %8065 = vmatprep.subr.bf16.mxu0 0
    %8066 = vmatpush1.bf16.msra.mxu0 0
    %8067 = vmatprep.subr.bf16.mxu0 0
    %8068 = vmatpush1.bf16.msra.mxu0 0
    %8069 = vmatprep.subr.bf16.mxu0 0
    %8070 = vmatpush1.bf16.msra.mxu0 0
    %8071 = vmatprep.subr.bf16.mxu0 0
    %8072 = vmatpush1.bf16.msra.mxu0 0
    %8073 = vmatprep.mubr.bf16.mxu0 0
    %8074 = vmatmul.mubr.bf16.gmra.mrb[0].mxu0 %v8018
    %v8075 = vpop.f32.mrb[0].mxu0
    %v8076 = vadd.f32 0.0, %v8075
    %v8077 = vpop.f32.mrb[0].mxu0
    %v8078 = vpop.f32.mrb[0].mxu0
    %v8079 = vadd.f32 0.0, %v8078
    %v8080 = vpop.f32.mrb[0].mxu0
    %8081 = vmatprep.mubr.bf16.mxu0 0
    %8082 = vmatmul.mubr.bf16.gmra.mrb[0].mxu0 %v8021
    %v8083 = vpop.f32.mrb[0].mxu0
    %v8084 = vadd.f32 0.0, %v8083
    %v8085 = vpop.f32.mrb[0].mxu0
    %v8086 = vpop.f32.mrb[0].mxu0
    %v8087 = vadd.f32 0.0, %v8086
    %v8088 = vpop.f32.mrb[0].mxu0
    %8089 = vmatprep.mubr.bf16.mxu0 0
    %8090 = vmatmul.mubr.bf16.gmra.mrb[0].mxu0 %v8024
    %v8091 = vpop.f32.mrb[0].mxu0
    %v8092 = vadd.f32 0.0, %v8091
    %v8093 = vpop.f32.mrb[0].mxu0
    %v8094 = vpop.f32.mrb[0].mxu0
    %v8095 = vadd.f32 0.0, %v8094
    %v8096 = vpop.f32.mrb[0].mxu0
    %8097 = vmatprep.mubr.bf16.mxu0 0
    %8098 = vmatmul.mubr.bf16.gmra.mrb[0].mxu0 %v8027
    %v8099 = vpop.f32.mrb[0].mxu0
    %v8100 = vadd.f32 0.0, %v8099
    %v8101 = vpop.f32.mrb[0].mxu0
    %v8102 = vpop.f32.mrb[0].mxu0
    %v8103 = vadd.f32 0.0, %v8102
    %v8104 = vpop.f32.mrb[0].mxu0
    %8105 = vmatprep.mubr.bf16.mxu0 0
    %8106 = vmatmul.mubr.bf16.gmra.mrb[0].mxu0 %v8030
    %v8107 = vpop.f32.mrb[0].mxu0
    %v8108 = vadd.f32 0.0, %v8107
    %v8109 = vpop.f32.mrb[0].mxu0
    %v8110 = vpop.f32.mrb[0].mxu0
    %v8111 = vadd.f32 0.0, %v8110
    %v8112 = vpop.f32.mrb[0].mxu0
    %8113 = vmatprep.mubr.bf16.mxu0 0
    %8114 = vmatmul.mubr.bf16.gmra.mrb[0].mxu0 %v8033
    %v8115 = vpop.f32.mrb[0].mxu0
    %v8116 = vadd.f32 0.0, %v8115
    %v8117 = vpop.f32.mrb[0].mxu0
    %v8118 = vpop.f32.mrb[0].mxu0
    %v8119 = vadd.f32 0.0, %v8118
    %v8120 = vpop.f32.mrb[0].mxu0
    %8121 = vmatprep.mubr.bf16.mxu0 0
    %8122 = vmatmul.mubr.bf16.gmra.mrb[0].mxu0 %v8036
    %v8123 = vpop.f32.mrb[0].mxu0
    %v8124 = vadd.f32 0.0, %v8123
    %v8125 = vpop.f32.mrb[0].mxu0
    %v8126 = vpop.f32.mrb[0].mxu0
    %v8127 = vadd.f32 0.0, %v8126
    %v8128 = vpop.f32.mrb[0].mxu0
    %8129 = vmatprep.mubr.bf16.mxu0 0
    %8130 = vmatmul.mubr.bf16.gmra.mrb[0].mxu0 %v8039
    %v8131 = vpop.f32.mrb[0].mxu0
    %v8132 = vadd.f32 0.0, %v8131
    %v8133 = vpop.f32.mrb[0].mxu0
    %v8134 = vpop.f32.mrb[0].mxu0
    %v8135 = vadd.f32 0.0, %v8134
    %v8136 = vpop.f32.mrb[0].mxu0
    %8137 = vdwg.mxu0
    %v8138 = vadd.f32 %v7944, %v8076
    %v8139 = vadd.f32 %v7945, %v8079
    %v8140 = vadd.f32 %v7946, %v8084
    %v8141 = vadd.f32 %v7947, %v8087
    %v8142 = vadd.f32 %v7948, %v8092
    %v8143 = vadd.f32 %v7949, %v8095
    %v8144 = vadd.f32 %v7950, %v8100
    %v8145 = vadd.f32 %v7951, %v8103
    %v8146 = vadd.f32 %v7952, %v8108
    %v8147 = vadd.f32 %v7953, %v8111
    %v8148 = vadd.f32 %v7954, %v8116
    %v8149 = vadd.f32 %v7955, %v8119
    %v8150 = vadd.f32 %v7956, %v8124
    %v8151 = vadd.f32 %v7957, %v8127
    %v8152 = vadd.f32 %v7958, %v8132
    %v8153 = vadd.f32 %v7959, %v8135
    %v8154 = vld [vmem:[#allocation12] sm:$0x1]
    %v8156 = vlaneseq
    %v8157 = vshrl.u32 %v8156, 7
    %v8158 = vsub.s32 0, %v8157
    %v8159 = vrot.slane %v8154, %v8158
    %v8161 = vadd.f32 %v8138, %v8159
    %v8162 = vadd.f32 %v8139, %v8159
    %v8163 = vadd.f32 %v8140, %v8159
    %v8164 = vadd.f32 %v8141, %v8159
    %v8165 = vadd.f32 %v8142, %v8159
    %v8166 = vadd.f32 %v8143, %v8159
    %v8167 = vadd.f32 %v8144, %v8159
    %v8168 = vadd.f32 %v8145, %v8159
    %v8169 = vadd.f32 %v8146, %v8159
    %v8170 = vadd.f32 %v8147, %v8159
    %v8171 = vadd.f32 %v8148, %v8159
    %v8172 = vadd.f32 %v8149, %v8159
    %v8173 = vadd.f32 %v8150, %v8159
    %v8174 = vadd.f32 %v8151, %v8159
    %v8175 = vadd.f32 %v8152, %v8159
    %v8176 = vadd.f32 %v8153, %v8159
    %v8177 = vmax.f32 %v8161, 0.0
    %v8178 = vmax.f32 %v8162, 0.0
    %v8179 = vmax.f32 %v8163, 0.0
    %v8180 = vmax.f32 %v8164, 0.0
    %v8181 = vmax.f32 %v8165, 0.0
    %v8182 = vmax.f32 %v8166, 0.0
    %v8183 = vmax.f32 %v8167, 0.0
    %v8184 = vmax.f32 %v8168, 0.0
    %v8185 = vmax.f32 %v8169, 0.0
    %v8186 = vmax.f32 %v8170, 0.0
    %v8187 = vmax.f32 %v8171, 0.0
    %v8188 = vmax.f32 %v8172, 0.0
    %v8189 = vmax.f32 %v8173, 0.0
    %v8190 = vmax.f32 %v8174, 0.0
    %v8191 = vmax.f32 %v8175, 0.0
    %v8192 = vmax.f32 %v8176, 0.0
    %v8193 = vpack.c.bf16 %v8178, %v8177
    %v8194 = vpack.c.bf16 %v8180, %v8179
    %v8195 = vpack.c.bf16 %v8182, %v8181
    %v8196 = vpack.c.bf16 %v8184, %v8183
    %v8197 = vpack.c.bf16 %v8186, %v8185
    %v8198 = vpack.c.bf16 %v8188, %v8187
    %v8199 = vpack.c.bf16 %v8190, %v8189
    %v8200 = vpack.c.bf16 %v8192, %v8191
    %v8209 = vcombine.high %v8193, %v8193
    %v8211 = vunpack.c.l.s4 1966171168
    %v8212 = vunpack.c.0.s8 %v8211
    %v8213 = vlaneseq
    %v8214 = vshrl.u32 %v8213, 7
    %v8215 = vsub.s32 %v8212, %v8214
    %v8216 = vrot.slane %v8193, %v8215
    %v8218 = vunpack.c.l.s4 1966171168
    %v8219 = vunpack.c.0.s8 %v8218
    %v8220 = vlaneseq
    %v8221 = vshrl.u32 %v8220, 7
    %v8222 = vsub.s32 %v8219, %v8221
    %v8223 = vrot.slane %v8209, %v8222
    %v8224 = vcombine.high %v8216, %v8216
    %v8225 = vcombine.high %v8223, %v8223
    %v8227 = vunpack.c.l.s4 1966171168
    %v8228 = vunpack.c.0.s8 %v8227
    %v8229 = vlaneseq
    %v8230 = vshrl.u32 %v8229, 7
    %v8231 = vsub.s32 %v8228, %v8230
    %v8232 = vrot.slane %v8216, %v8231
    %v8234 = vunpack.c.l.s4 1966171168
    %v8235 = vunpack.c.0.s8 %v8234
    %v8236 = vlaneseq
    %v8237 = vshrl.u32 %v8236, 7
    %v8238 = vsub.s32 %v8235, %v8237
    %v8239 = vrot.slane %v8223, %v8238
    %v8241 = vunpack.c.l.s4 1966171168
    %v8242 = vunpack.c.0.s8 %v8241
    %v8243 = vlaneseq
    %v8244 = vshrl.u32 %v8243, 7
    %v8245 = vsub.s32 %v8242, %v8244
    %v8246 = vrot.slane %v8224, %v8245
    %v8248 = vunpack.c.l.s4 1966171168
    %v8249 = vunpack.c.0.s8 %v8248
    %v8250 = vlaneseq
    %v8251 = vshrl.u32 %v8250, 7
    %v8252 = vsub.s32 %v8249, %v8251
    %v8253 = vrot.slane %v8225, %v8252
    %v8254 = vcombine.high %v8232, %v8232
    %v8255 = vcombine.high %v8239, %v8239
    %v8256 = vcombine.high %v8246, %v8246
    %v8257 = vcombine.high %v8253, %v8253
    %v8258 = vcombine.high %v8194, %v8194
    %v8260 = vunpack.c.l.s4 1966171168
    %v8261 = vunpack.c.0.s8 %v8260
    %v8262 = vlaneseq
    %v8263 = vshrl.u32 %v8262, 7
    %v8264 = vsub.s32 %v8261, %v8263
    %v8265 = vrot.slane %v8194, %v8264
    %v8267 = vunpack.c.l.s4 1966171168
    %v8268 = vunpack.c.0.s8 %v8267
    %v8269 = vlaneseq
    %v8270 = vshrl.u32 %v8269, 7
    %v8271 = vsub.s32 %v8268, %v8270
    %v8272 = vrot.slane %v8258, %v8271
    %v8273 = vcombine.high %v8265, %v8265
    %v8274 = vcombine.high %v8272, %v8272
    %v8276 = vunpack.c.l.s4 1966171168
    %v8277 = vunpack.c.0.s8 %v8276
    %v8278 = vlaneseq
    %v8279 = vshrl.u32 %v8278, 7
    %v8280 = vsub.s32 %v8277, %v8279
    %v8281 = vrot.slane %v8265, %v8280
    %v8283 = vunpack.c.l.s4 1966171168
    %v8284 = vunpack.c.0.s8 %v8283
    %v8285 = vlaneseq
    %v8286 = vshrl.u32 %v8285, 7
    %v8287 = vsub.s32 %v8284, %v8286
    %v8288 = vrot.slane %v8272, %v8287
    %v8290 = vunpack.c.l.s4 1966171168
    %v8291 = vunpack.c.0.s8 %v8290
    %v8292 = vlaneseq
    %v8293 = vshrl.u32 %v8292, 7
    %v8294 = vsub.s32 %v8291, %v8293
    %v8295 = vrot.slane %v8273, %v8294
    %v8297 = vunpack.c.l.s4 1966171168
    %v8298 = vunpack.c.0.s8 %v8297
    %v8299 = vlaneseq
    %v8300 = vshrl.u32 %v8299, 7
    %v8301 = vsub.s32 %v8298, %v8300
    %v8302 = vrot.slane %v8274, %v8301
    %v8303 = vcombine.high %v8281, %v8281
    %v8304 = vcombine.high %v8288, %v8288
    %v8305 = vcombine.high %v8295, %v8295
    %v8306 = vcombine.high %v8302, %v8302
    %v8307 = vcombine.high %v8195, %v8195
    %v8309 = vunpack.c.l.s4 1966171168
    %v8310 = vunpack.c.0.s8 %v8309
    %v8311 = vlaneseq
    %v8312 = vshrl.u32 %v8311, 7
    %v8313 = vsub.s32 %v8310, %v8312
    %v8314 = vrot.slane %v8195, %v8313
    %v8316 = vunpack.c.l.s4 1966171168
    %v8317 = vunpack.c.0.s8 %v8316
    %v8318 = vlaneseq
    %v8319 = vshrl.u32 %v8318, 7
    %v8320 = vsub.s32 %v8317, %v8319
    %v8321 = vrot.slane %v8307, %v8320
    %v8322 = vcombine.high %v8314, %v8314
    %v8323 = vcombine.high %v8321, %v8321
    %v8325 = vunpack.c.l.s4 1966171168
    %v8326 = vunpack.c.0.s8 %v8325
    %v8327 = vlaneseq
    %v8328 = vshrl.u32 %v8327, 7
    %v8329 = vsub.s32 %v8326, %v8328
    %v8330 = vrot.slane %v8314, %v8329
    %v8332 = vunpack.c.l.s4 1966171168
    %v8333 = vunpack.c.0.s8 %v8332
    %v8334 = vlaneseq
    %v8335 = vshrl.u32 %v8334, 7
    %v8336 = vsub.s32 %v8333, %v8335
    %v8337 = vrot.slane %v8321, %v8336
    %v8339 = vunpack.c.l.s4 1966171168
    %v8340 = vunpack.c.0.s8 %v8339
    %v8341 = vlaneseq
    %v8342 = vshrl.u32 %v8341, 7
    %v8343 = vsub.s32 %v8340, %v8342
    %v8344 = vrot.slane %v8322, %v8343
    %v8346 = vunpack.c.l.s4 1966171168
    %v8347 = vunpack.c.0.s8 %v8346
    %v8348 = vlaneseq
    %v8349 = vshrl.u32 %v8348, 7
    %v8350 = vsub.s32 %v8347, %v8349
    %v8351 = vrot.slane %v8323, %v8350
    %v8352 = vcombine.high %v8330, %v8330
    %v8353 = vcombine.high %v8337, %v8337
    %v8354 = vcombine.high %v8344, %v8344
    %v8355 = vcombine.high %v8351, %v8351
    %v8356 = vcombine.high %v8196, %v8196
    %v8358 = vunpack.c.l.s4 1966171168
    %v8359 = vunpack.c.0.s8 %v8358
    %v8360 = vlaneseq
    %v8361 = vshrl.u32 %v8360, 7
    %v8362 = vsub.s32 %v8359, %v8361
    %v8363 = vrot.slane %v8196, %v8362
    %v8365 = vunpack.c.l.s4 1966171168
    %v8366 = vunpack.c.0.s8 %v8365
    %v8367 = vlaneseq
    %v8368 = vshrl.u32 %v8367, 7
    %v8369 = vsub.s32 %v8366, %v8368
    %v8370 = vrot.slane %v8356, %v8369
    %v8371 = vcombine.high %v8363, %v8363
    %v8372 = vcombine.high %v8370, %v8370
    %v8374 = vunpack.c.l.s4 1966171168
    %v8375 = vunpack.c.0.s8 %v8374
    %v8376 = vlaneseq
    %v8377 = vshrl.u32 %v8376, 7
    %v8378 = vsub.s32 %v8375, %v8377
    %v8379 = vrot.slane %v8363, %v8378
    %v8381 = vunpack.c.l.s4 1966171168
    %v8382 = vunpack.c.0.s8 %v8381
    %v8383 = vlaneseq
    %v8384 = vshrl.u32 %v8383, 7
    %v8385 = vsub.s32 %v8382, %v8384
    %v8386 = vrot.slane %v8370, %v8385
    %v8388 = vunpack.c.l.s4 1966171168
    %v8389 = vunpack.c.0.s8 %v8388
    %v8390 = vlaneseq
    %v8391 = vshrl.u32 %v8390, 7
    %v8392 = vsub.s32 %v8389, %v8391
    %v8393 = vrot.slane %v8371, %v8392
    %v8395 = vunpack.c.l.s4 1966171168
    %v8396 = vunpack.c.0.s8 %v8395
    %v8397 = vlaneseq
    %v8398 = vshrl.u32 %v8397, 7
    %v8399 = vsub.s32 %v8396, %v8398
    %v8400 = vrot.slane %v8372, %v8399
    %v8401 = vcombine.high %v8379, %v8379
    %v8402 = vcombine.high %v8386, %v8386
    %v8403 = vcombine.high %v8393, %v8393
    %v8404 = vcombine.high %v8400, %v8400
    %v8405 = vcombine.high %v8197, %v8197
    %v8407 = vunpack.c.l.s4 1966171168
    %v8408 = vunpack.c.0.s8 %v8407
    %v8409 = vlaneseq
    %v8410 = vshrl.u32 %v8409, 7
    %v8411 = vsub.s32 %v8408, %v8410
    %v8412 = vrot.slane %v8197, %v8411
    %v8414 = vunpack.c.l.s4 1966171168
    %v8415 = vunpack.c.0.s8 %v8414
    %v8416 = vlaneseq
    %v8417 = vshrl.u32 %v8416, 7
    %v8418 = vsub.s32 %v8415, %v8417
    %v8419 = vrot.slane %v8405, %v8418
    %v8420 = vcombine.high %v8412, %v8412
    %v8421 = vcombine.high %v8419, %v8419
    %v8423 = vunpack.c.l.s4 1966171168
    %v8424 = vunpack.c.0.s8 %v8423
    %v8425 = vlaneseq
    %v8426 = vshrl.u32 %v8425, 7
    %v8427 = vsub.s32 %v8424, %v8426
    %v8428 = vrot.slane %v8412, %v8427
    %v8430 = vunpack.c.l.s4 1966171168
    %v8431 = vunpack.c.0.s8 %v8430
    %v8432 = vlaneseq
    %v8433 = vshrl.u32 %v8432, 7
    %v8434 = vsub.s32 %v8431, %v8433
    %v8435 = vrot.slane %v8419, %v8434
    %v8437 = vunpack.c.l.s4 1966171168
    %v8438 = vunpack.c.0.s8 %v8437
    %v8439 = vlaneseq
    %v8440 = vshrl.u32 %v8439, 7
    %v8441 = vsub.s32 %v8438, %v8440
    %v8442 = vrot.slane %v8420, %v8441
    %v8444 = vunpack.c.l.s4 1966171168
    %v8445 = vunpack.c.0.s8 %v8444
    %v8446 = vlaneseq
    %v8447 = vshrl.u32 %v8446, 7
    %v8448 = vsub.s32 %v8445, %v8447
    %v8449 = vrot.slane %v8421, %v8448
    %v8450 = vcombine.high %v8428, %v8428
    %v8451 = vcombine.high %v8435, %v8435
    %v8452 = vcombine.high %v8442, %v8442
    %v8453 = vcombine.high %v8449, %v8449
    %v8454 = vcombine.high %v8198, %v8198
    %v8456 = vunpack.c.l.s4 1966171168
    %v8457 = vunpack.c.0.s8 %v8456
    %v8458 = vlaneseq
    %v8459 = vshrl.u32 %v8458, 7
    %v8460 = vsub.s32 %v8457, %v8459
    %v8461 = vrot.slane %v8198, %v8460
    %v8463 = vunpack.c.l.s4 1966171168
    %v8464 = vunpack.c.0.s8 %v8463
    %v8465 = vlaneseq
    %v8466 = vshrl.u32 %v8465, 7
    %v8467 = vsub.s32 %v8464, %v8466
    %v8468 = vrot.slane %v8454, %v8467
    %v8469 = vcombine.high %v8461, %v8461
    %v8470 = vcombine.high %v8468, %v8468
    %v8472 = vunpack.c.l.s4 1966171168
    %v8473 = vunpack.c.0.s8 %v8472
    %v8474 = vlaneseq
    %v8475 = vshrl.u32 %v8474, 7
    %v8476 = vsub.s32 %v8473, %v8475
    %v8477 = vrot.slane %v8461, %v8476
    %v8479 = vunpack.c.l.s4 1966171168
    %v8480 = vunpack.c.0.s8 %v8479
    %v8481 = vlaneseq
    %v8482 = vshrl.u32 %v8481, 7
    %v8483 = vsub.s32 %v8480, %v8482
    %v8484 = vrot.slane %v8468, %v8483
    %v8486 = vunpack.c.l.s4 1966171168
    %v8487 = vunpack.c.0.s8 %v8486
    %v8488 = vlaneseq
    %v8489 = vshrl.u32 %v8488, 7
    %v8490 = vsub.s32 %v8487, %v8489
    %v8491 = vrot.slane %v8469, %v8490
    %v8493 = vunpack.c.l.s4 1966171168
    %v8494 = vunpack.c.0.s8 %v8493
    %v8495 = vlaneseq
    %v8496 = vshrl.u32 %v8495, 7
    %v8497 = vsub.s32 %v8494, %v8496
    %v8498 = vrot.slane %v8470, %v8497
    %v8499 = vcombine.high %v8477, %v8477
    %v8500 = vcombine.high %v8484, %v8484
    %v8501 = vcombine.high %v8491, %v8491
    %v8502 = vcombine.high %v8498, %v8498
    %v8503 = vcombine.high %v8199, %v8199
    %v8505 = vunpack.c.l.s4 1966171168
    %v8506 = vunpack.c.0.s8 %v8505
    %v8507 = vlaneseq
    %v8508 = vshrl.u32 %v8507, 7
    %v8509 = vsub.s32 %v8506, %v8508
    %v8510 = vrot.slane %v8199, %v8509
    %v8512 = vunpack.c.l.s4 1966171168
    %v8513 = vunpack.c.0.s8 %v8512
    %v8514 = vlaneseq
    %v8515 = vshrl.u32 %v8514, 7
    %v8516 = vsub.s32 %v8513, %v8515
    %v8517 = vrot.slane %v8503, %v8516
    %v8518 = vcombine.high %v8510, %v8510
    %v8519 = vcombine.high %v8517, %v8517
    %v8521 = vunpack.c.l.s4 1966171168
    %v8522 = vunpack.c.0.s8 %v8521
    %v8523 = vlaneseq
    %v8524 = vshrl.u32 %v8523, 7
    %v8525 = vsub.s32 %v8522, %v8524
    %v8526 = vrot.slane %v8510, %v8525
    %v8528 = vunpack.c.l.s4 1966171168
    %v8529 = vunpack.c.0.s8 %v8528
    %v8530 = vlaneseq
    %v8531 = vshrl.u32 %v8530, 7
    %v8532 = vsub.s32 %v8529, %v8531
    %v8533 = vrot.slane %v8517, %v8532
    %v8535 = vunpack.c.l.s4 1966171168
    %v8536 = vunpack.c.0.s8 %v8535
    %v8537 = vlaneseq
    %v8538 = vshrl.u32 %v8537, 7
    %v8539 = vsub.s32 %v8536, %v8538
    %v8540 = vrot.slane %v8518, %v8539
    %v8542 = vunpack.c.l.s4 1966171168
    %v8543 = vunpack.c.0.s8 %v8542
    %v8544 = vlaneseq
    %v8545 = vshrl.u32 %v8544, 7
    %v8546 = vsub.s32 %v8543, %v8545
    %v8547 = vrot.slane %v8519, %v8546
    %v8548 = vcombine.high %v8526, %v8526
    %v8549 = vcombine.high %v8533, %v8533
    %v8550 = vcombine.high %v8540, %v8540
    %v8551 = vcombine.high %v8547, %v8547
    %v8552 = vcombine.high %v8200, %v8200
    %v8554 = vunpack.c.l.s4 1966171168
    %v8555 = vunpack.c.0.s8 %v8554
    %v8556 = vlaneseq
    %v8557 = vshrl.u32 %v8556, 7
    %v8558 = vsub.s32 %v8555, %v8557
    %v8559 = vrot.slane %v8200, %v8558
    %v8561 = vunpack.c.l.s4 1966171168
    %v8562 = vunpack.c.0.s8 %v8561
    %v8563 = vlaneseq
    %v8564 = vshrl.u32 %v8563, 7
    %v8565 = vsub.s32 %v8562, %v8564
    %v8566 = vrot.slane %v8552, %v8565
    %v8567 = vcombine.high %v8559, %v8559
    %v8568 = vcombine.high %v8566, %v8566
    %v8570 = vunpack.c.l.s4 1966171168
    %v8571 = vunpack.c.0.s8 %v8570
    %v8572 = vlaneseq
    %v8573 = vshrl.u32 %v8572, 7
    %v8574 = vsub.s32 %v8571, %v8573
    %v8575 = vrot.slane %v8559, %v8574
    %v8577 = vunpack.c.l.s4 1966171168
    %v8578 = vunpack.c.0.s8 %v8577
    %v8579 = vlaneseq
    %v8580 = vshrl.u32 %v8579, 7
    %v8581 = vsub.s32 %v8578, %v8580
    %v8582 = vrot.slane %v8566, %v8581
    %v8584 = vunpack.c.l.s4 1966171168
    %v8585 = vunpack.c.0.s8 %v8584
    %v8586 = vlaneseq
    %v8587 = vshrl.u32 %v8586, 7
    %v8588 = vsub.s32 %v8585, %v8587
    %v8589 = vrot.slane %v8567, %v8588
    %v8591 = vunpack.c.l.s4 1966171168
    %v8592 = vunpack.c.0.s8 %v8591
    %v8593 = vlaneseq
    %v8594 = vshrl.u32 %v8593, 7
    %v8595 = vsub.s32 %v8592, %v8594
    %v8596 = vrot.slane %v8568, %v8595
    %v8597 = vcombine.high %v8575, %v8575
    %v8598 = vcombine.high %v8582, %v8582
    %v8599 = vcombine.high %v8589, %v8589
    %v8600 = vcombine.high %v8596, %v8596
    %v8602 = vsel %vm6374, %v8232, 4286644096
    %v8604 = vunpack.i.l.bf16 %v8602
    %v8605 = vunpack.i.h.bf16 %v8602
    %v8606 = vmax.f32 %v8604, %v8605
    %v8607 = vrot.slane %v8606, 4
    %v8608 = vmax.f32 %v8606, %v8607
    %v8609 = vrot.slane %v8608, 2
    %v8610 = vmax.f32 %v8608, %v8609
    %v8611 = vrot.slane %v8610, 1
    %v8612 = vmax.f32 %v8610, %v8611
    %v8613 = vpack.i.bf16 %v8612, %v8612
    %v8615 = vsel %vm6374, %v8246, 4286644096
    %v8617 = vunpack.i.l.bf16 %v8615
    %v8618 = vunpack.i.h.bf16 %v8615
    %v8619 = vmax.f32 %v8617, %v8618
    %v8620 = vrot.slane %v8619, 4
    %v8621 = vmax.f32 %v8619, %v8620
    %v8622 = vrot.slane %v8621, 2
    %v8623 = vmax.f32 %v8621, %v8622
    %v8624 = vrot.slane %v8623, 1
    %v8625 = vmax.f32 %v8623, %v8624
    %v8626 = vpack.i.bf16 %v8625, %v8625
    %v8628 = vsel %vm6374, %v8254, 4286644096
    %v8630 = vunpack.i.l.bf16 %v8628
    %v8631 = vunpack.i.h.bf16 %v8628
    %v8632 = vmax.f32 %v8630, %v8631
    %v8633 = vrot.slane %v8632, 4
    %v8634 = vmax.f32 %v8632, %v8633
    %v8635 = vrot.slane %v8634, 2
    %v8636 = vmax.f32 %v8634, %v8635
    %v8637 = vrot.slane %v8636, 1
    %v8638 = vmax.f32 %v8636, %v8637
    %v8639 = vpack.i.bf16 %v8638, %v8638
    %v8641 = vsel %vm6374, %v8256, 4286644096
    %v8643 = vunpack.i.l.bf16 %v8641
    %v8644 = vunpack.i.h.bf16 %v8641
    %v8645 = vmax.f32 %v8643, %v8644
    %v8646 = vrot.slane %v8645, 4
    %v8647 = vmax.f32 %v8645, %v8646
    %v8648 = vrot.slane %v8647, 2
    %v8649 = vmax.f32 %v8647, %v8648
    %v8650 = vrot.slane %v8649, 1
    %v8651 = vmax.f32 %v8649, %v8650
    %v8652 = vpack.i.bf16 %v8651, %v8651
    %v8654 = vsel %vm6374, %v8239, 4286644096
    %v8656 = vunpack.i.l.bf16 %v8654
    %v8657 = vunpack.i.h.bf16 %v8654
    %v8658 = vmax.f32 %v8656, %v8657
    %v8659 = vrot.slane %v8658, 4
    %v8660 = vmax.f32 %v8658, %v8659
    %v8661 = vrot.slane %v8660, 2
    %v8662 = vmax.f32 %v8660, %v8661
    %v8663 = vrot.slane %v8662, 1
    %v8664 = vmax.f32 %v8662, %v8663
    %v8665 = vpack.i.bf16 %v8664, %v8664
    %v8667 = vsel %vm6374, %v8253, 4286644096
    %v8669 = vunpack.i.l.bf16 %v8667
    %v8670 = vunpack.i.h.bf16 %v8667
    %v8671 = vmax.f32 %v8669, %v8670
    %v8672 = vrot.slane %v8671, 4
    %v8673 = vmax.f32 %v8671, %v8672
    %v8674 = vrot.slane %v8673, 2
    %v8675 = vmax.f32 %v8673, %v8674
    %v8676 = vrot.slane %v8675, 1
    %v8677 = vmax.f32 %v8675, %v8676
    %v8678 = vpack.i.bf16 %v8677, %v8677
    %v8680 = vsel %vm6374, %v8255, 4286644096
    %v8682 = vunpack.i.l.bf16 %v8680
    %v8683 = vunpack.i.h.bf16 %v8680
    %v8684 = vmax.f32 %v8682, %v8683
    %v8685 = vrot.slane %v8684, 4
    %v8686 = vmax.f32 %v8684, %v8685
    %v8687 = vrot.slane %v8686, 2
    %v8688 = vmax.f32 %v8686, %v8687
    %v8689 = vrot.slane %v8688, 1
    %v8690 = vmax.f32 %v8688, %v8689
    %v8691 = vpack.i.bf16 %v8690, %v8690
    %v8693 = vsel %vm6374, %v8257, 4286644096
    %v8695 = vunpack.i.l.bf16 %v8693
    %v8696 = vunpack.i.h.bf16 %v8693
    %v8697 = vmax.f32 %v8695, %v8696
    %v8698 = vrot.slane %v8697, 4
    %v8699 = vmax.f32 %v8697, %v8698
    %v8700 = vrot.slane %v8699, 2
    %v8701 = vmax.f32 %v8699, %v8700
    %v8702 = vrot.slane %v8701, 1
    %v8703 = vmax.f32 %v8701, %v8702
    %v8704 = vpack.i.bf16 %v8703, %v8703
    %v8706 = vsel %vm6374, %v8281, 4286644096
    %v8708 = vunpack.i.l.bf16 %v8706
    %v8709 = vunpack.i.h.bf16 %v8706
    %v8710 = vmax.f32 %v8708, %v8709
    %v8711 = vrot.slane %v8710, 4
    %v8712 = vmax.f32 %v8710, %v8711
    %v8713 = vrot.slane %v8712, 2
    %v8714 = vmax.f32 %v8712, %v8713
    %v8715 = vrot.slane %v8714, 1
    %v8716 = vmax.f32 %v8714, %v8715
    %v8717 = vpack.i.bf16 %v8716, %v8716
    %v8719 = vsel %vm6374, %v8295, 4286644096
    %v8721 = vunpack.i.l.bf16 %v8719
    %v8722 = vunpack.i.h.bf16 %v8719
    %v8723 = vmax.f32 %v8721, %v8722
    %v8724 = vrot.slane %v8723, 4
    %v8725 = vmax.f32 %v8723, %v8724
    %v8726 = vrot.slane %v8725, 2
    %v8727 = vmax.f32 %v8725, %v8726
    %v8728 = vrot.slane %v8727, 1
    %v8729 = vmax.f32 %v8727, %v8728
    %v8730 = vpack.i.bf16 %v8729, %v8729
    %v8732 = vsel %vm6374, %v8303, 4286644096
    %v8734 = vunpack.i.l.bf16 %v8732
    %v8735 = vunpack.i.h.bf16 %v8732
    %v8736 = vmax.f32 %v8734, %v8735
    %v8737 = vrot.slane %v8736, 4
    %v8738 = vmax.f32 %v8736, %v8737
    %v8739 = vrot.slane %v8738, 2
    %v8740 = vmax.f32 %v8738, %v8739
    %v8741 = vrot.slane %v8740, 1
    %v8742 = vmax.f32 %v8740, %v8741
    %v8743 = vpack.i.bf16 %v8742, %v8742
    %v8745 = vsel %vm6374, %v8305, 4286644096
    %v8747 = vunpack.i.l.bf16 %v8745
    %v8748 = vunpack.i.h.bf16 %v8745
    %v8749 = vmax.f32 %v8747, %v8748
    %v8750 = vrot.slane %v8749, 4
    %v8751 = vmax.f32 %v8749, %v8750
    %v8752 = vrot.slane %v8751, 2
    %v8753 = vmax.f32 %v8751, %v8752
    %v8754 = vrot.slane %v8753, 1
    %v8755 = vmax.f32 %v8753, %v8754
    %v8756 = vpack.i.bf16 %v8755, %v8755
    %v8758 = vsel %vm6374, %v8288, 4286644096
    %v8760 = vunpack.i.l.bf16 %v8758
    %v8761 = vunpack.i.h.bf16 %v8758
    %v8762 = vmax.f32 %v8760, %v8761
    %v8763 = vrot.slane %v8762, 4
    %v8764 = vmax.f32 %v8762, %v8763
    %v8765 = vrot.slane %v8764, 2
    %v8766 = vmax.f32 %v8764, %v8765
    %v8767 = vrot.slane %v8766, 1
    %v8768 = vmax.f32 %v8766, %v8767
    %v8769 = vpack.i.bf16 %v8768, %v8768
    %v8771 = vsel %vm6374, %v8302, 4286644096
    %v8773 = vunpack.i.l.bf16 %v8771
    %v8774 = vunpack.i.h.bf16 %v8771
    %v8775 = vmax.f32 %v8773, %v8774
    %v8776 = vrot.slane %v8775, 4
    %v8777 = vmax.f32 %v8775, %v8776
    %v8778 = vrot.slane %v8777, 2
    %v8779 = vmax.f32 %v8777, %v8778
    %v8780 = vrot.slane %v8779, 1
    %v8781 = vmax.f32 %v8779, %v8780
    %v8782 = vpack.i.bf16 %v8781, %v8781
    %v8784 = vsel %vm6374, %v8304, 4286644096
    %v8786 = vunpack.i.l.bf16 %v8784
    %v8787 = vunpack.i.h.bf16 %v8784
    %v8788 = vmax.f32 %v8786, %v8787
    %v8789 = vrot.slane %v8788, 4
    %v8790 = vmax.f32 %v8788, %v8789
    %v8791 = vrot.slane %v8790, 2
    %v8792 = vmax.f32 %v8790, %v8791
    %v8793 = vrot.slane %v8792, 1
    %v8794 = vmax.f32 %v8792, %v8793
    %v8795 = vpack.i.bf16 %v8794, %v8794
    %v8797 = vsel %vm6374, %v8306, 4286644096
    %v8799 = vunpack.i.l.bf16 %v8797
    %v8800 = vunpack.i.h.bf16 %v8797
    %v8801 = vmax.f32 %v8799, %v8800
    %v8802 = vrot.slane %v8801, 4
    %v8803 = vmax.f32 %v8801, %v8802
    %v8804 = vrot.slane %v8803, 2
    %v8805 = vmax.f32 %v8803, %v8804
    %v8806 = vrot.slane %v8805, 1
    %v8807 = vmax.f32 %v8805, %v8806
    %v8808 = vpack.i.bf16 %v8807, %v8807
    %v8810 = vsel %vm6374, %v8330, 4286644096
    %v8812 = vunpack.i.l.bf16 %v8810
    %v8813 = vunpack.i.h.bf16 %v8810
    %v8814 = vmax.f32 %v8812, %v8813
    %v8815 = vrot.slane %v8814, 4
    %v8816 = vmax.f32 %v8814, %v8815
    %v8817 = vrot.slane %v8816, 2
    %v8818 = vmax.f32 %v8816, %v8817
    %v8819 = vrot.slane %v8818, 1
    %v8820 = vmax.f32 %v8818, %v8819
    %v8821 = vpack.i.bf16 %v8820, %v8820
    %v8823 = vsel %vm6374, %v8344, 4286644096
    %v8825 = vunpack.i.l.bf16 %v8823
    %v8826 = vunpack.i.h.bf16 %v8823
    %v8827 = vmax.f32 %v8825, %v8826
    %v8828 = vrot.slane %v8827, 4
    %v8829 = vmax.f32 %v8827, %v8828
    %v8830 = vrot.slane %v8829, 2
    %v8831 = vmax.f32 %v8829, %v8830
    %v8832 = vrot.slane %v8831, 1
    %v8833 = vmax.f32 %v8831, %v8832
    %v8834 = vpack.i.bf16 %v8833, %v8833
    %v8836 = vsel %vm6374, %v8352, 4286644096
    %v8838 = vunpack.i.l.bf16 %v8836
    %v8839 = vunpack.i.h.bf16 %v8836
    %v8840 = vmax.f32 %v8838, %v8839
    %v8841 = vrot.slane %v8840, 4
    %v8842 = vmax.f32 %v8840, %v8841
    %v8843 = vrot.slane %v8842, 2
    %v8844 = vmax.f32 %v8842, %v8843
    %v8845 = vrot.slane %v8844, 1
    %v8846 = vmax.f32 %v8844, %v8845
    %v8847 = vpack.i.bf16 %v8846, %v8846
    %v8849 = vsel %vm6374, %v8354, 4286644096
    %v8851 = vunpack.i.l.bf16 %v8849
    %v8852 = vunpack.i.h.bf16 %v8849
    %v8853 = vmax.f32 %v8851, %v8852
    %v8854 = vrot.slane %v8853, 4
    %v8855 = vmax.f32 %v8853, %v8854
    %v8856 = vrot.slane %v8855, 2
    %v8857 = vmax.f32 %v8855, %v8856
    %v8858 = vrot.slane %v8857, 1
    %v8859 = vmax.f32 %v8857, %v8858
    %v8860 = vpack.i.bf16 %v8859, %v8859
    %v8862 = vsel %vm6374, %v8337, 4286644096
    %v8864 = vunpack.i.l.bf16 %v8862
    %v8865 = vunpack.i.h.bf16 %v8862
    %v8866 = vmax.f32 %v8864, %v8865
    %v8867 = vrot.slane %v8866, 4
    %v8868 = vmax.f32 %v8866, %v8867
    %v8869 = vrot.slane %v8868, 2
    %v8870 = vmax.f32 %v8868, %v8869
    %v8871 = vrot.slane %v8870, 1
    %v8872 = vmax.f32 %v8870, %v8871
    %v8873 = vpack.i.bf16 %v8872, %v8872
    %v8875 = vsel %vm6374, %v8351, 4286644096
    %v8877 = vunpack.i.l.bf16 %v8875
    %v8878 = vunpack.i.h.bf16 %v8875
    %v8879 = vmax.f32 %v8877, %v8878
    %v8880 = vrot.slane %v8879, 4
    %v8881 = vmax.f32 %v8879, %v8880
    %v8882 = vrot.slane %v8881, 2
    %v8883 = vmax.f32 %v8881, %v8882
    %v8884 = vrot.slane %v8883, 1
    %v8885 = vmax.f32 %v8883, %v8884
    %v8886 = vpack.i.bf16 %v8885, %v8885
    %v8888 = vsel %vm6374, %v8353, 4286644096
    %v8890 = vunpack.i.l.bf16 %v8888
    %v8891 = vunpack.i.h.bf16 %v8888
    %v8892 = vmax.f32 %v8890, %v8891
    %v8893 = vrot.slane %v8892, 4
    %v8894 = vmax.f32 %v8892, %v8893
    %v8895 = vrot.slane %v8894, 2
    %v8896 = vmax.f32 %v8894, %v8895
    %v8897 = vrot.slane %v8896, 1
    %v8898 = vmax.f32 %v8896, %v8897
    %v8899 = vpack.i.bf16 %v8898, %v8898
    %v8901 = vsel %vm6374, %v8355, 4286644096
    %v8903 = vunpack.i.l.bf16 %v8901
    %v8904 = vunpack.i.h.bf16 %v8901
    %v8905 = vmax.f32 %v8903, %v8904
    %v8906 = vrot.slane %v8905, 4
    %v8907 = vmax.f32 %v8905, %v8906
    %v8908 = vrot.slane %v8907, 2
    %v8909 = vmax.f32 %v8907, %v8908
    %v8910 = vrot.slane %v8909, 1
    %v8911 = vmax.f32 %v8909, %v8910
    %v8912 = vpack.i.bf16 %v8911, %v8911
    %v8914 = vsel %vm6374, %v8379, 4286644096
    %v8916 = vunpack.i.l.bf16 %v8914
    %v8917 = vunpack.i.h.bf16 %v8914
    %v8918 = vmax.f32 %v8916, %v8917
    %v8919 = vrot.slane %v8918, 4
    %v8920 = vmax.f32 %v8918, %v8919
    %v8921 = vrot.slane %v8920, 2
    %v8922 = vmax.f32 %v8920, %v8921
    %v8923 = vrot.slane %v8922, 1
    %v8924 = vmax.f32 %v8922, %v8923
    %v8925 = vpack.i.bf16 %v8924, %v8924
    %v8927 = vsel %vm6374, %v8393, 4286644096
    %v8929 = vunpack.i.l.bf16 %v8927
    %v8930 = vunpack.i.h.bf16 %v8927
    %v8931 = vmax.f32 %v8929, %v8930
    %v8932 = vrot.slane %v8931, 4
    %v8933 = vmax.f32 %v8931, %v8932
    %v8934 = vrot.slane %v8933, 2
    %v8935 = vmax.f32 %v8933, %v8934
    %v8936 = vrot.slane %v8935, 1
    %v8937 = vmax.f32 %v8935, %v8936
    %v8938 = vpack.i.bf16 %v8937, %v8937
    %v8940 = vsel %vm6374, %v8401, 4286644096
    %v8942 = vunpack.i.l.bf16 %v8940
    %v8943 = vunpack.i.h.bf16 %v8940
    %v8944 = vmax.f32 %v8942, %v8943
    %v8945 = vrot.slane %v8944, 4
    %v8946 = vmax.f32 %v8944, %v8945
    %v8947 = vrot.slane %v8946, 2
    %v8948 = vmax.f32 %v8946, %v8947
    %v8949 = vrot.slane %v8948, 1
    %v8950 = vmax.f32 %v8948, %v8949
    %v8951 = vpack.i.bf16 %v8950, %v8950
    %v8953 = vsel %vm6374, %v8403, 4286644096
    %v8955 = vunpack.i.l.bf16 %v8953
    %v8956 = vunpack.i.h.bf16 %v8953
    %v8957 = vmax.f32 %v8955, %v8956
    %v8958 = vrot.slane %v8957, 4
    %v8959 = vmax.f32 %v8957, %v8958
    %v8960 = vrot.slane %v8959, 2
    %v8961 = vmax.f32 %v8959, %v8960
    %v8962 = vrot.slane %v8961, 1
    %v8963 = vmax.f32 %v8961, %v8962
    %v8964 = vpack.i.bf16 %v8963, %v8963
    %v8966 = vsel %vm6374, %v8386, 4286644096
    %v8968 = vunpack.i.l.bf16 %v8966
    %v8969 = vunpack.i.h.bf16 %v8966
    %v8970 = vmax.f32 %v8968, %v8969
    %v8971 = vrot.slane %v8970, 4
    %v8972 = vmax.f32 %v8970, %v8971
    %v8973 = vrot.slane %v8972, 2
    %v8974 = vmax.f32 %v8972, %v8973
    %v8975 = vrot.slane %v8974, 1
    %v8976 = vmax.f32 %v8974, %v8975
    %v8977 = vpack.i.bf16 %v8976, %v8976
    %v8979 = vsel %vm6374, %v8400, 4286644096
    %v8981 = vunpack.i.l.bf16 %v8979
    %v8982 = vunpack.i.h.bf16 %v8979
    %v8983 = vmax.f32 %v8981, %v8982
    %v8984 = vrot.slane %v8983, 4
    %v8985 = vmax.f32 %v8983, %v8984
    %v8986 = vrot.slane %v8985, 2
    %v8987 = vmax.f32 %v8985, %v8986
    %v8988 = vrot.slane %v8987, 1
    %v8989 = vmax.f32 %v8987, %v8988
    %v8990 = vpack.i.bf16 %v8989, %v8989
    %v8992 = vsel %vm6374, %v8402, 4286644096
    %v8994 = vunpack.i.l.bf16 %v8992
    %v8995 = vunpack.i.h.bf16 %v8992
    %v8996 = vmax.f32 %v8994, %v8995
    %v8997 = vrot.slane %v8996, 4
    %v8998 = vmax.f32 %v8996, %v8997
    %v8999 = vrot.slane %v8998, 2
    %v9000 = vmax.f32 %v8998, %v8999
    %v9001 = vrot.slane %v9000, 1
    %v9002 = vmax.f32 %v9000, %v9001
    %v9003 = vpack.i.bf16 %v9002, %v9002
    %v9005 = vsel %vm6374, %v8404, 4286644096
    %v9007 = vunpack.i.l.bf16 %v9005
    %v9008 = vunpack.i.h.bf16 %v9005
    %v9009 = vmax.f32 %v9007, %v9008
    %v9010 = vrot.slane %v9009, 4
    %v9011 = vmax.f32 %v9009, %v9010
    %v9012 = vrot.slane %v9011, 2
    %v9013 = vmax.f32 %v9011, %v9012
    %v9014 = vrot.slane %v9013, 1
    %v9015 = vmax.f32 %v9013, %v9014
    %v9016 = vpack.i.bf16 %v9015, %v9015
    %v9018 = vsel %vm6374, %v8428, 4286644096
    %v9020 = vunpack.i.l.bf16 %v9018
    %v9021 = vunpack.i.h.bf16 %v9018
    %v9022 = vmax.f32 %v9020, %v9021
    %v9023 = vrot.slane %v9022, 4
    %v9024 = vmax.f32 %v9022, %v9023
    %v9025 = vrot.slane %v9024, 2
    %v9026 = vmax.f32 %v9024, %v9025
    %v9027 = vrot.slane %v9026, 1
    %v9028 = vmax.f32 %v9026, %v9027
    %v9029 = vpack.i.bf16 %v9028, %v9028
    %v9031 = vsel %vm6374, %v8442, 4286644096
    %v9033 = vunpack.i.l.bf16 %v9031
    %v9034 = vunpack.i.h.bf16 %v9031
    %v9035 = vmax.f32 %v9033, %v9034
    %v9036 = vrot.slane %v9035, 4
    %v9037 = vmax.f32 %v9035, %v9036
    %v9038 = vrot.slane %v9037, 2
    %v9039 = vmax.f32 %v9037, %v9038
    %v9040 = vrot.slane %v9039, 1
    %v9041 = vmax.f32 %v9039, %v9040
    %v9042 = vpack.i.bf16 %v9041, %v9041
    %v9044 = vsel %vm6374, %v8450, 4286644096
    %v9046 = vunpack.i.l.bf16 %v9044
    %v9047 = vunpack.i.h.bf16 %v9044
    %v9048 = vmax.f32 %v9046, %v9047
    %v9049 = vrot.slane %v9048, 4
    %v9050 = vmax.f32 %v9048, %v9049
    %v9051 = vrot.slane %v9050, 2
    %v9052 = vmax.f32 %v9050, %v9051
    %v9053 = vrot.slane %v9052, 1
    %v9054 = vmax.f32 %v9052, %v9053
    %v9055 = vpack.i.bf16 %v9054, %v9054
    %v9057 = vsel %vm6374, %v8452, 4286644096
    %v9059 = vunpack.i.l.bf16 %v9057
    %v9060 = vunpack.i.h.bf16 %v9057
    %v9061 = vmax.f32 %v9059, %v9060
    %v9062 = vrot.slane %v9061, 4
    %v9063 = vmax.f32 %v9061, %v9062
    %v9064 = vrot.slane %v9063, 2
    %v9065 = vmax.f32 %v9063, %v9064
    %v9066 = vrot.slane %v9065, 1
    %v9067 = vmax.f32 %v9065, %v9066
    %v9068 = vpack.i.bf16 %v9067, %v9067
    %v9070 = vsel %vm6374, %v8435, 4286644096
    %v9072 = vunpack.i.l.bf16 %v9070
    %v9073 = vunpack.i.h.bf16 %v9070
    %v9074 = vmax.f32 %v9072, %v9073
    %v9075 = vrot.slane %v9074, 4
    %v9076 = vmax.f32 %v9074, %v9075
    %v9077 = vrot.slane %v9076, 2
    %v9078 = vmax.f32 %v9076, %v9077
    %v9079 = vrot.slane %v9078, 1
    %v9080 = vmax.f32 %v9078, %v9079
    %v9081 = vpack.i.bf16 %v9080, %v9080
    %v9083 = vsel %vm6374, %v8449, 4286644096
    %v9085 = vunpack.i.l.bf16 %v9083
    %v9086 = vunpack.i.h.bf16 %v9083
    %v9087 = vmax.f32 %v9085, %v9086
    %v9088 = vrot.slane %v9087, 4
    %v9089 = vmax.f32 %v9087, %v9088
    %v9090 = vrot.slane %v9089, 2
    %v9091 = vmax.f32 %v9089, %v9090
    %v9092 = vrot.slane %v9091, 1
    %v9093 = vmax.f32 %v9091, %v9092
    %v9094 = vpack.i.bf16 %v9093, %v9093
    %v9096 = vsel %vm6374, %v8451, 4286644096
    %v9098 = vunpack.i.l.bf16 %v9096
    %v9099 = vunpack.i.h.bf16 %v9096
    %v9100 = vmax.f32 %v9098, %v9099
    %v9101 = vrot.slane %v9100, 4
    %v9102 = vmax.f32 %v9100, %v9101
    %v9103 = vrot.slane %v9102, 2
    %v9104 = vmax.f32 %v9102, %v9103
    %v9105 = vrot.slane %v9104, 1
    %v9106 = vmax.f32 %v9104, %v9105
    %v9107 = vpack.i.bf16 %v9106, %v9106
    %v9109 = vsel %vm6374, %v8453, 4286644096
    %v9111 = vunpack.i.l.bf16 %v9109
    %v9112 = vunpack.i.h.bf16 %v9109
    %v9113 = vmax.f32 %v9111, %v9112
    %v9114 = vrot.slane %v9113, 4
    %v9115 = vmax.f32 %v9113, %v9114
    %v9116 = vrot.slane %v9115, 2
    %v9117 = vmax.f32 %v9115, %v9116
    %v9118 = vrot.slane %v9117, 1
    %v9119 = vmax.f32 %v9117, %v9118
    %v9120 = vpack.i.bf16 %v9119, %v9119
    %v9122 = vsel %vm6374, %v8477, 4286644096
    %v9124 = vunpack.i.l.bf16 %v9122
    %v9125 = vunpack.i.h.bf16 %v9122
    %v9126 = vmax.f32 %v9124, %v9125
    %v9127 = vrot.slane %v9126, 4
    %v9128 = vmax.f32 %v9126, %v9127
    %v9129 = vrot.slane %v9128, 2
    %v9130 = vmax.f32 %v9128, %v9129
    %v9131 = vrot.slane %v9130, 1
    %v9132 = vmax.f32 %v9130, %v9131
    %v9133 = vpack.i.bf16 %v9132, %v9132
    %v9135 = vsel %vm6374, %v8491, 4286644096
    %v9137 = vunpack.i.l.bf16 %v9135
    %v9138 = vunpack.i.h.bf16 %v9135
    %v9139 = vmax.f32 %v9137, %v9138
    %v9140 = vrot.slane %v9139, 4
    %v9141 = vmax.f32 %v9139, %v9140
    %v9142 = vrot.slane %v9141, 2
    %v9143 = vmax.f32 %v9141, %v9142
    %v9144 = vrot.slane %v9143, 1
    %v9145 = vmax.f32 %v9143, %v9144
    %v9146 = vpack.i.bf16 %v9145, %v9145
    %v9148 = vsel %vm6374, %v8499, 4286644096
    %v9150 = vunpack.i.l.bf16 %v9148
    %v9151 = vunpack.i.h.bf16 %v9148
    %v9152 = vmax.f32 %v9150, %v9151
    %v9153 = vrot.slane %v9152, 4
    %v9154 = vmax.f32 %v9152, %v9153
    %v9155 = vrot.slane %v9154, 2
    %v9156 = vmax.f32 %v9154, %v9155
    %v9157 = vrot.slane %v9156, 1
    %v9158 = vmax.f32 %v9156, %v9157
    %v9159 = vpack.i.bf16 %v9158, %v9158
    %v9161 = vsel %vm6374, %v8501, 4286644096
    %v9163 = vunpack.i.l.bf16 %v9161
    %v9164 = vunpack.i.h.bf16 %v9161
    %v9165 = vmax.f32 %v9163, %v9164
    %v9166 = vrot.slane %v9165, 4
    %v9167 = vmax.f32 %v9165, %v9166
    %v9168 = vrot.slane %v9167, 2
    %v9169 = vmax.f32 %v9167, %v9168
    %v9170 = vrot.slane %v9169, 1
    %v9171 = vmax.f32 %v9169, %v9170
    %v9172 = vpack.i.bf16 %v9171, %v9171
    %v9174 = vsel %vm6374, %v8484, 4286644096
    %v9176 = vunpack.i.l.bf16 %v9174
    %v9177 = vunpack.i.h.bf16 %v9174
    %v9178 = vmax.f32 %v9176, %v9177
    %v9179 = vrot.slane %v9178, 4
    %v9180 = vmax.f32 %v9178, %v9179
    %v9181 = vrot.slane %v9180, 2
    %v9182 = vmax.f32 %v9180, %v9181
    %v9183 = vrot.slane %v9182, 1
    %v9184 = vmax.f32 %v9182, %v9183
    %v9185 = vpack.i.bf16 %v9184, %v9184
    %v9187 = vsel %vm6374, %v8498, 4286644096
    %v9189 = vunpack.i.l.bf16 %v9187
    %v9190 = vunpack.i.h.bf16 %v9187
    %v9191 = vmax.f32 %v9189, %v9190
    %v9192 = vrot.slane %v9191, 4
    %v9193 = vmax.f32 %v9191, %v9192
    %v9194 = vrot.slane %v9193, 2
    %v9195 = vmax.f32 %v9193, %v9194
    %v9196 = vrot.slane %v9195, 1
    %v9197 = vmax.f32 %v9195, %v9196
    %v9198 = vpack.i.bf16 %v9197, %v9197
    %v9200 = vsel %vm6374, %v8500, 4286644096
    %v9202 = vunpack.i.l.bf16 %v9200
    %v9203 = vunpack.i.h.bf16 %v9200
    %v9204 = vmax.f32 %v9202, %v9203
    %v9205 = vrot.slane %v9204, 4
    %v9206 = vmax.f32 %v9204, %v9205
    %v9207 = vrot.slane %v9206, 2
    %v9208 = vmax.f32 %v9206, %v9207
    %v9209 = vrot.slane %v9208, 1
    %v9210 = vmax.f32 %v9208, %v9209
    %v9211 = vpack.i.bf16 %v9210, %v9210
    %v9213 = vsel %vm6374, %v8502, 4286644096
    %v9215 = vunpack.i.l.bf16 %v9213
    %v9216 = vunpack.i.h.bf16 %v9213
    %v9217 = vmax.f32 %v9215, %v9216
    %v9218 = vrot.slane %v9217, 4
    %v9219 = vmax.f32 %v9217, %v9218
    %v9220 = vrot.slane %v9219, 2
    %v9221 = vmax.f32 %v9219, %v9220
    %v9222 = vrot.slane %v9221, 1
    %v9223 = vmax.f32 %v9221, %v9222
    %v9224 = vpack.i.bf16 %v9223, %v9223
    %v9226 = vsel %vm6374, %v8526, 4286644096
    %v9228 = vunpack.i.l.bf16 %v9226
    %v9229 = vunpack.i.h.bf16 %v9226
    %v9230 = vmax.f32 %v9228, %v9229
    %v9231 = vrot.slane %v9230, 4
    %v9232 = vmax.f32 %v9230, %v9231
    %v9233 = vrot.slane %v9232, 2
    %v9234 = vmax.f32 %v9232, %v9233
    %v9235 = vrot.slane %v9234, 1
    %v9236 = vmax.f32 %v9234, %v9235
    %v9237 = vpack.i.bf16 %v9236, %v9236
    %v9239 = vsel %vm6374, %v8540, 4286644096
    %v9241 = vunpack.i.l.bf16 %v9239
    %v9242 = vunpack.i.h.bf16 %v9239
    %v9243 = vmax.f32 %v9241, %v9242
    %v9244 = vrot.slane %v9243, 4
    %v9245 = vmax.f32 %v9243, %v9244
    %v9246 = vrot.slane %v9245, 2
    %v9247 = vmax.f32 %v9245, %v9246
    %v9248 = vrot.slane %v9247, 1
    %v9249 = vmax.f32 %v9247, %v9248
    %v9250 = vpack.i.bf16 %v9249, %v9249
    %v9252 = vsel %vm6374, %v8548, 4286644096
    %v9254 = vunpack.i.l.bf16 %v9252
    %v9255 = vunpack.i.h.bf16 %v9252
    %v9256 = vmax.f32 %v9254, %v9255
    %v9257 = vrot.slane %v9256, 4
    %v9258 = vmax.f32 %v9256, %v9257
    %v9259 = vrot.slane %v9258, 2
    %v9260 = vmax.f32 %v9258, %v9259
    %v9261 = vrot.slane %v9260, 1
    %v9262 = vmax.f32 %v9260, %v9261
    %v9263 = vpack.i.bf16 %v9262, %v9262
    %v9265 = vsel %vm6374, %v8550, 4286644096
    %v9267 = vunpack.i.l.bf16 %v9265
    %v9268 = vunpack.i.h.bf16 %v9265
    %v9269 = vmax.f32 %v9267, %v9268
    %v9270 = vrot.slane %v9269, 4
    %v9271 = vmax.f32 %v9269, %v9270
    %v9272 = vrot.slane %v9271, 2
    %v9273 = vmax.f32 %v9271, %v9272
    %v9274 = vrot.slane %v9273, 1
    %v9275 = vmax.f32 %v9273, %v9274
    %v9276 = vpack.i.bf16 %v9275, %v9275
    %v9278 = vsel %vm6374, %v8533, 4286644096
    %v9280 = vunpack.i.l.bf16 %v9278
    %v9281 = vunpack.i.h.bf16 %v9278
    %v9282 = vmax.f32 %v9280, %v9281
    %v9283 = vrot.slane %v9282, 4
    %v9284 = vmax.f32 %v9282, %v9283
    %v9285 = vrot.slane %v9284, 2
    %v9286 = vmax.f32 %v9284, %v9285
    %v9287 = vrot.slane %v9286, 1
    %v9288 = vmax.f32 %v9286, %v9287
    %v9289 = vpack.i.bf16 %v9288, %v9288
    %v9291 = vsel %vm6374, %v8547, 4286644096
    %v9293 = vunpack.i.l.bf16 %v9291
    %v9294 = vunpack.i.h.bf16 %v9291
    %v9295 = vmax.f32 %v9293, %v9294
    %v9296 = vrot.slane %v9295, 4
    %v9297 = vmax.f32 %v9295, %v9296
    %v9298 = vrot.slane %v9297, 2
    %v9299 = vmax.f32 %v9297, %v9298
    %v9300 = vrot.slane %v9299, 1
    %v9301 = vmax.f32 %v9299, %v9300
    %v9302 = vpack.i.bf16 %v9301, %v9301
    %v9304 = vsel %vm6374, %v8549, 4286644096
    %v9306 = vunpack.i.l.bf16 %v9304
    %v9307 = vunpack.i.h.bf16 %v9304
    %v9308 = vmax.f32 %v9306, %v9307
    %v9309 = vrot.slane %v9308, 4
    %v9310 = vmax.f32 %v9308, %v9309
    %v9311 = vrot.slane %v9310, 2
    %v9312 = vmax.f32 %v9310, %v9311
    %v9313 = vrot.slane %v9312, 1
    %v9314 = vmax.f32 %v9312, %v9313
    %v9315 = vpack.i.bf16 %v9314, %v9314
    %v9317 = vsel %vm6374, %v8551, 4286644096
    %v9319 = vunpack.i.l.bf16 %v9317
    %v9320 = vunpack.i.h.bf16 %v9317
    %v9321 = vmax.f32 %v9319, %v9320
    %v9322 = vrot.slane %v9321, 4
    %v9323 = vmax.f32 %v9321, %v9322
    %v9324 = vrot.slane %v9323, 2
    %v9325 = vmax.f32 %v9323, %v9324
    %v9326 = vrot.slane %v9325, 1
    %v9327 = vmax.f32 %v9325, %v9326
    %v9328 = vpack.i.bf16 %v9327, %v9327
    %v9330 = vsel %vm6374, %v8575, 4286644096
    %v9332 = vunpack.i.l.bf16 %v9330
    %v9333 = vunpack.i.h.bf16 %v9330
    %v9334 = vmax.f32 %v9332, %v9333
    %v9335 = vrot.slane %v9334, 4
    %v9336 = vmax.f32 %v9334, %v9335
    %v9337 = vrot.slane %v9336, 2
    %v9338 = vmax.f32 %v9336, %v9337
    %v9339 = vrot.slane %v9338, 1
    %v9340 = vmax.f32 %v9338, %v9339
    %v9341 = vpack.i.bf16 %v9340, %v9340
    %v9343 = vsel %vm6374, %v8589, 4286644096
    %v9345 = vunpack.i.l.bf16 %v9343
    %v9346 = vunpack.i.h.bf16 %v9343
    %v9347 = vmax.f32 %v9345, %v9346
    %v9348 = vrot.slane %v9347, 4
    %v9349 = vmax.f32 %v9347, %v9348
    %v9350 = vrot.slane %v9349, 2
    %v9351 = vmax.f32 %v9349, %v9350
    %v9352 = vrot.slane %v9351, 1
    %v9353 = vmax.f32 %v9351, %v9352
    %v9354 = vpack.i.bf16 %v9353, %v9353
    %v9356 = vsel %vm6374, %v8597, 4286644096
    %v9358 = vunpack.i.l.bf16 %v9356
    %v9359 = vunpack.i.h.bf16 %v9356
    %v9360 = vmax.f32 %v9358, %v9359
    %v9361 = vrot.slane %v9360, 4
    %v9362 = vmax.f32 %v9360, %v9361
    %v9363 = vrot.slane %v9362, 2
    %v9364 = vmax.f32 %v9362, %v9363
    %v9365 = vrot.slane %v9364, 1
    %v9366 = vmax.f32 %v9364, %v9365
    %v9367 = vpack.i.bf16 %v9366, %v9366
    %v9369 = vsel %vm6374, %v8599, 4286644096
    %v9371 = vunpack.i.l.bf16 %v9369
    %v9372 = vunpack.i.h.bf16 %v9369
    %v9373 = vmax.f32 %v9371, %v9372
    %v9374 = vrot.slane %v9373, 4
    %v9375 = vmax.f32 %v9373, %v9374
    %v9376 = vrot.slane %v9375, 2
    %v9377 = vmax.f32 %v9375, %v9376
    %v9378 = vrot.slane %v9377, 1
    %v9379 = vmax.f32 %v9377, %v9378
    %v9380 = vpack.i.bf16 %v9379, %v9379
    %v9382 = vsel %vm6374, %v8582, 4286644096
    %v9384 = vunpack.i.l.bf16 %v9382
    %v9385 = vunpack.i.h.bf16 %v9382
    %v9386 = vmax.f32 %v9384, %v9385
    %v9387 = vrot.slane %v9386, 4
    %v9388 = vmax.f32 %v9386, %v9387
    %v9389 = vrot.slane %v9388, 2
    %v9390 = vmax.f32 %v9388, %v9389
    %v9391 = vrot.slane %v9390, 1
    %v9392 = vmax.f32 %v9390, %v9391
    %v9393 = vpack.i.bf16 %v9392, %v9392
    %v9395 = vsel %vm6374, %v8596, 4286644096
    %v9397 = vunpack.i.l.bf16 %v9395
    %v9398 = vunpack.i.h.bf16 %v9395
    %v9399 = vmax.f32 %v9397, %v9398
    %v9400 = vrot.slane %v9399, 4
    %v9401 = vmax.f32 %v9399, %v9400
    %v9402 = vrot.slane %v9401, 2
    %v9403 = vmax.f32 %v9401, %v9402
    %v9404 = vrot.slane %v9403, 1
    %v9405 = vmax.f32 %v9403, %v9404
    %v9406 = vpack.i.bf16 %v9405, %v9405
    %v9408 = vsel %vm6374, %v8598, 4286644096
    %v9410 = vunpack.i.l.bf16 %v9408
    %v9411 = vunpack.i.h.bf16 %v9408
    %v9412 = vmax.f32 %v9410, %v9411
    %v9413 = vrot.slane %v9412, 4
    %v9414 = vmax.f32 %v9412, %v9413
    %v9415 = vrot.slane %v9414, 2
    %v9416 = vmax.f32 %v9414, %v9415
    %v9417 = vrot.slane %v9416, 1
    %v9418 = vmax.f32 %v9416, %v9417
    %v9419 = vpack.i.bf16 %v9418, %v9418
    %v9421 = vsel %vm6374, %v8600, 4286644096
    %v9423 = vunpack.i.l.bf16 %v9421
    %v9424 = vunpack.i.h.bf16 %v9421
    %v9425 = vmax.f32 %v9423, %v9424
    %v9426 = vrot.slane %v9425, 4
    %v9427 = vmax.f32 %v9425, %v9426
    %v9428 = vrot.slane %v9427, 2
    %v9429 = vmax.f32 %v9427, %v9428
    %v9430 = vrot.slane %v9429, 1
    %v9431 = vmax.f32 %v9429, %v9430
    %v9432 = vpack.i.bf16 %v9431, %v9431
    %v9433 = vmax.bf16 %v8613, %v8665
    %v9434 = vmax.bf16 %v8626, %v8678
    %v9435 = vmax.bf16 %v8639, %v8691
    %v9436 = vmax.bf16 %v8652, %v8704
    %v9437 = vmax.bf16 %v8717, %v8769
    %v9438 = vmax.bf16 %v8730, %v8782
    %v9439 = vmax.bf16 %v8743, %v8795
    %v9440 = vmax.bf16 %v8756, %v8808
    %v9441 = vmax.bf16 %v8821, %v8873
    %v9442 = vmax.bf16 %v8834, %v8886
    %v9443 = vmax.bf16 %v8847, %v8899
    %v9444 = vmax.bf16 %v8860, %v8912
    %v9445 = vmax.bf16 %v8925, %v8977
    %v9446 = vmax.bf16 %v8938, %v8990
    %v9447 = vmax.bf16 %v8951, %v9003
    %v9448 = vmax.bf16 %v8964, %v9016
    %v9449 = vmax.bf16 %v9029, %v9081
    %v9450 = vmax.bf16 %v9042, %v9094
    %v9451 = vmax.bf16 %v9055, %v9107
    %v9452 = vmax.bf16 %v9068, %v9120
    %v9453 = vmax.bf16 %v9133, %v9185
    %v9454 = vmax.bf16 %v9146, %v9198
    %v9455 = vmax.bf16 %v9159, %v9211
    %v9456 = vmax.bf16 %v9172, %v9224
    %v9457 = vmax.bf16 %v9237, %v9289
    %v9458 = vmax.bf16 %v9250, %v9302
    %v9459 = vmax.bf16 %v9263, %v9315
    %v9460 = vmax.bf16 %v9276, %v9328
    %v9461 = vmax.bf16 %v9341, %v9393
    %v9462 = vmax.bf16 %v9354, %v9406
    %v9463 = vmax.bf16 %v9367, %v9419
    %v9464 = vmax.bf16 %v9380, %v9432
    %9465 = vst [vmem:[#allocation3] sm:$0x3f] 0.0
    %9466 = vst [vmem:[#allocation3 + $0x30] sm:$0x3f] 0.0
    %s9467 = scalar_lea.vmem [#allocation3], 40
    %9468 = vst [vmem:[%s9467] sm:$0x3f] 0.0
    %9469 = vst [vmem:[%s9467 + $0x30] sm:$0x3f] 0.0
    %v9470 = vunpack.c.l.bf16 %v9433
    %v9471 = vunpack.c.l.bf16 %v9434
    %v9472 = vunpack.c.l.bf16 %v9435
    %v9473 = vunpack.c.l.bf16 %v9436
    %v9474 = vunpack.c.l.bf16 %v9437
    %v9475 = vunpack.c.l.bf16 %v9438
    %v9476 = vunpack.c.l.bf16 %v9439
    %v9477 = vunpack.c.l.bf16 %v9440
    %v9478 = vunpack.c.l.bf16 %v9441
    %v9479 = vunpack.c.l.bf16 %v9442
    %v9480 = vunpack.c.l.bf16 %v9443
    %v9481 = vunpack.c.l.bf16 %v9444
    %v9482 = vunpack.c.l.bf16 %v9445
    %v9483 = vunpack.c.l.bf16 %v9446
    %v9484 = vunpack.c.l.bf16 %v9447
    %v9485 = vunpack.c.l.bf16 %v9448
    %v9486 = vunpack.c.l.bf16 %v9449
    %v9487 = vunpack.c.l.bf16 %v9450
    %v9488 = vunpack.c.l.bf16 %v9451
    %v9489 = vunpack.c.l.bf16 %v9452
    %v9490 = vunpack.c.l.bf16 %v9453
    %v9491 = vunpack.c.l.bf16 %v9454
    %v9492 = vunpack.c.l.bf16 %v9455
    %v9493 = vunpack.c.l.bf16 %v9456
    %v9494 = vunpack.c.l.bf16 %v9457
    %v9495 = vunpack.c.l.bf16 %v9458
    %v9496 = vunpack.c.l.bf16 %v9459
    %v9497 = vunpack.c.l.bf16 %v9460
    %v9498 = vunpack.c.l.bf16 %v9461
    %v9499 = vunpack.c.l.bf16 %v9462
    %v9500 = vunpack.c.l.bf16 %v9463
    %v9501 = vunpack.c.l.bf16 %v9464
    %v9534 = vsel %vm6240, %v9471, %v9470
    %v9535 = vsel %vm6242, %v9472, %v9534
    %v9536 = vsel %vm6244, %v9473, %v9535
    %v9537 = vsel %vm6240, %v9475, %v9474
    %v9538 = vsel %vm6242, %v9476, %v9537
    %v9539 = vsel %vm6244, %v9477, %v9538
    %v9540 = vsel %vm6240, %v9479, %v9478
    %v9541 = vsel %vm6242, %v9480, %v9540
    %v9542 = vsel %vm6244, %v9481, %v9541
    %v9543 = vsel %vm6240, %v9483, %v9482
    %v9544 = vsel %vm6242, %v9484, %v9543
    %v9545 = vsel %vm6244, %v9485, %v9544
    %v9546 = vsel %vm6240, %v9487, %v9486
    %v9547 = vsel %vm6242, %v9488, %v9546
    %v9548 = vsel %vm6244, %v9489, %v9547
    %v9549 = vsel %vm6240, %v9491, %v9490
    %v9550 = vsel %vm6242, %v9492, %v9549
    %v9551 = vsel %vm6244, %v9493, %v9550
    %v9552 = vsel %vm6240, %v9495, %v9494
    %v9553 = vsel %vm6242, %v9496, %v9552
    %v9554 = vsel %vm6244, %v9497, %v9553
    %v9555 = vsel %vm6240, %v9499, %v9498
    %v9556 = vsel %vm6242, %v9500, %v9555
    %v9557 = vsel %vm6244, %v9501, %v9556
    %v9566 = vsel %vm6374, 0.0, %v9536
    %v9567 = vsel %vm6374, 0.0, %v9539
    %v9568 = vsel %vm6374, 0.0, %v9542
    %v9569 = vsel %vm6374, 0.0, %v9545
    %v9570 = vsel %vm6374, 0.0, %v9548
    %v9571 = vsel %vm6374, 0.0, %v9551
    %v9572 = vsel %vm6374, 0.0, %v9554
    %v9573 = vsel %vm6374, 0.0, %v9557
    %v9574 = vsel %vm523, %v9566, 0.0
    %v9575 = vsel %vm523, %v9567, 0.0
    %v9576 = vsel %vm523, %v9568, 0.0
    %v9577 = vsel %vm523, %v9569, 0.0
    %v9578 = vsel %vm523, %v9570, 0.0
    %v9579 = vsel %vm523, %v9571, 0.0
    %v9580 = vsel %vm523, %v9572, 0.0
    %v9581 = vsel %vm523, %v9573, 0.0
    %s9582 = scalar_lea.vmem [#allocation3], 8
    %9583 = vst [vmem:[%s9582] sm:$0x3f] %v9574
    %9584 = vst [vmem:[%s9582 + $0x8] sm:$0x3f] %v9575
    %9585 = vst [vmem:[%s9582 + $0x10] sm:$0x3f] %v9576
    %9586 = vst [vmem:[%s9582 + $0x18] sm:$0x3f] %v9577
    %9587 = vst [vmem:[%s9582 + $0x30] sm:$0x3f] %v9578
    %9588 = vst [vmem:[%s9582 + $0x38] sm:$0x3f] %v9579
    %9589 = vst [vmem:[%s9582 + $0x40] sm:$0x3f] %v9580
    %9590 = vst [vmem:[%s9582 + $0x48] sm:$0x3f] %v9581
    %v9591 = vld [vmem:[#allocation3] sm:$0xf]
    %v9592 = vld [vmem:[#allocation3 + $0x8] sm:$0xf]
    %v9593 = vld [vmem:[#allocation3 + $0x10] sm:$0xf]
    %v9594 = vld [vmem:[#allocation3 + $0x18] sm:$0xf]
    %v9595 = vld [vmem:[#allocation3 + $0x30] sm:$0xf]
    %v9596 = vld [vmem:[#allocation3 + $0x38] sm:$0xf]
    %v9597 = vld [vmem:[#allocation3 + $0x40] sm:$0xf]
    %v9598 = vld [vmem:[#allocation3 + $0x48] sm:$0xf]
    %v9607 = vcombine.low %v9591, %v9592
    %v9608 = vcombine.low %v9593, %v9594
    %v9609 = vcombine.low %v9595, %v9596
    %v9610 = vcombine.low %v9597, %v9598
    %v9615 = vpack.c.bf16 %v9608, %v9607
    %v9616 = vpack.c.bf16 %v9610, %v9609
    %v9617 = vld [vmem:[#allocation13] sm:$0xff]
    %v9618 = vld [vmem:[#allocation13 + $0x8] sm:$0xff]
    %v9619 = vld [vmem:[#allocation13 + $0x10] sm:$0xff]
    %v9620 = vld [vmem:[#allocation13 + $0x18] sm:$0xff]
    %v9621 = vld [vmem:[#allocation13 + $0x20] sm:$0xff]
    %v9622 = vld [vmem:[#allocation13 + $0x28] sm:$0xff]
    %v9623 = vld [vmem:[#allocation13 + $0x30] sm:$0xff]
    %v9624 = vld [vmem:[#allocation13 + $0x38] sm:$0xff]
    %v9625 = vld [vmem:[#allocation13 + $0x40] sm:$0xff]
    %v9626 = vld [vmem:[#allocation13 + $0x48] sm:$0xff]
    %v9627 = vld [vmem:[#allocation13 + $0x50] sm:$0xff]
    %v9628 = vld [vmem:[#allocation13 + $0x58] sm:$0xff]
    %v9629 = vld [vmem:[#allocation13 + $0x60] sm:$0xff]
    %v9630 = vld [vmem:[#allocation13 + $0x68] sm:$0xff]
    %v9631 = vld [vmem:[#allocation13 + $0x70] sm:$0xff]
    %v9632 = vld [vmem:[#allocation13 + $0x78] sm:$0xff]
    %v9633 = vld [vmem:[#allocation3 + $0x1] sm:$0xf]
    %v9634 = vld [vmem:[#allocation3 + $0x9] sm:$0xf]
    %v9635 = vld [vmem:[#allocation3 + $0x11] sm:$0xf]
    %v9636 = vld [vmem:[#allocation3 + $0x19] sm:$0xf]
    %v9637 = vld [vmem:[#allocation3 + $0x31] sm:$0xf]
    %v9638 = vld [vmem:[#allocation3 + $0x39] sm:$0xf]
    %v9639 = vld [vmem:[#allocation3 + $0x41] sm:$0xf]
    %v9640 = vld [vmem:[#allocation3 + $0x49] sm:$0xf]
    %v9649 = vcombine.low %v9633, %v9634
    %v9650 = vcombine.low %v9635, %v9636
    %v9651 = vcombine.low %v9637, %v9638
    %v9652 = vcombine.low %v9639, %v9640
    %v9657 = vpack.c.bf16 %v9650, %v9649
    %v9658 = vpack.c.bf16 %v9652, %v9651
    %s9659 = scalar_lea.vmem [#allocation13], 128
    %v9660 = vld [vmem:[%s9659] sm:$0xff]
    %v9661 = vld [vmem:[%s9659 + $0x8] sm:$0xff]
    %v9662 = vld [vmem:[%s9659 + $0x10] sm:$0xff]
    %v9663 = vld [vmem:[%s9659 + $0x18] sm:$0xff]
    %v9664 = vld [vmem:[%s9659 + $0x20] sm:$0xff]
    %v9665 = vld [vmem:[%s9659 + $0x28] sm:$0xff]
    %v9666 = vld [vmem:[%s9659 + $0x30] sm:$0xff]
    %v9667 = vld [vmem:[%s9659 + $0x38] sm:$0xff]
    %v9668 = vld [vmem:[%s9659 + $0x40] sm:$0xff]
    %v9669 = vld [vmem:[%s9659 + $0x48] sm:$0xff]
    %v9670 = vld [vmem:[%s9659 + $0x50] sm:$0xff]
    %v9671 = vld [vmem:[%s9659 + $0x58] sm:$0xff]
    %v9672 = vld [vmem:[%s9659 + $0x60] sm:$0xff]
    %v9673 = vld [vmem:[%s9659 + $0x68] sm:$0xff]
    %v9674 = vld [vmem:[%s9659 + $0x70] sm:$0xff]
    %v9675 = vld [vmem:[%s9659 + $0x78] sm:$0xff]
    %v9692 = vunpack.c.l.b16 %v9660
    %v9693 = vunpack.c.h.b16 %v9660
    %v9694 = vunpack.c.l.b16 %v9661
    %v9695 = vunpack.c.h.b16 %v9661
    %v9696 = vunpack.c.l.b16 %v9662
    %v9697 = vunpack.c.h.b16 %v9662
    %v9698 = vunpack.c.l.b16 %v9663
    %v9699 = vunpack.c.h.b16 %v9663
    %v9700 = vunpack.c.l.b16 %v9664
    %v9701 = vunpack.c.h.b16 %v9664
    %v9702 = vunpack.c.l.b16 %v9665
    %v9703 = vunpack.c.h.b16 %v9665
    %v9704 = vunpack.c.l.b16 %v9666
    %v9705 = vunpack.c.h.b16 %v9666
    %v9706 = vunpack.c.l.b16 %v9667
    %v9707 = vunpack.c.h.b16 %v9667
    %v9708 = vunpack.c.l.b16 %v9668
    %v9709 = vunpack.c.h.b16 %v9668
    %v9710 = vunpack.c.l.b16 %v9669
    %v9711 = vunpack.c.h.b16 %v9669
    %v9712 = vunpack.c.l.b16 %v9670
    %v9713 = vunpack.c.h.b16 %v9670
    %v9714 = vunpack.c.l.b16 %v9671
    %v9715 = vunpack.c.h.b16 %v9671
    %v9716 = vunpack.c.l.b16 %v9672
    %v9717 = vunpack.c.h.b16 %v9672
    %v9718 = vunpack.c.l.b16 %v9673
    %v9719 = vunpack.c.h.b16 %v9673
    %v9720 = vunpack.c.l.b16 %v9674
    %v9721 = vunpack.c.h.b16 %v9674
    %v9722 = vunpack.c.l.b16 %v9675
    %v9723 = vunpack.c.h.b16 %v9675
    %v9724 = vpack.c.b16 %v9694, %v9692
    %v9725 = vpack.c.b16 %v9695, %v9693
    %v9726 = vpack.c.b16 %v9698, %v9696
    %v9727 = vpack.c.b16 %v9699, %v9697
    %v9728 = vpack.c.b16 %v9702, %v9700
    %v9729 = vpack.c.b16 %v9703, %v9701
    %v9730 = vpack.c.b16 %v9706, %v9704
    %v9731 = vpack.c.b16 %v9707, %v9705
    %v9732 = vpack.c.b16 %v9710, %v9708
    %v9733 = vpack.c.b16 %v9711, %v9709
    %v9734 = vpack.c.b16 %v9714, %v9712
    %v9735 = vpack.c.b16 %v9715, %v9713
    %v9736 = vpack.c.b16 %v9718, %v9716
    %v9737 = vpack.c.b16 %v9719, %v9717
    %v9738 = vpack.c.b16 %v9722, %v9720
    %v9739 = vpack.c.b16 %v9723, %v9721
    %9756 = vmatprep.subr.bf16.mxu0 %v9725
    %9757 = vmatpush1.bf16.msra.mxu0 %v9724
    %9758 = vmatprep.subr.bf16.mxu0 %v9727
    %9759 = vmatpush1.bf16.msra.mxu0 %v9726
    %9760 = vmatprep.subr.bf16.mxu0 %v9729
    %9761 = vmatpush1.bf16.msra.mxu0 %v9728
    %9762 = vmatprep.subr.bf16.mxu0 %v9731
    %9763 = vmatpush1.bf16.msra.mxu0 %v9730
    %9764 = vmatprep.subr.bf16.mxu0 %v9733
    %9765 = vmatpush1.bf16.msra.mxu0 %v9732
    %9766 = vmatprep.subr.bf16.mxu0 %v9735
    %9767 = vmatpush1.bf16.msra.mxu0 %v9734
    %9768 = vmatprep.subr.bf16.mxu0 %v9737
    %9769 = vmatpush1.bf16.msra.mxu0 %v9736
    %9770 = vmatprep.subr.bf16.mxu0 %v9739
    %9771 = vmatpush1.bf16.msra.mxu0 %v9738
    %9772 = vmatprep.subr.bf16.mxu0 0
    %9773 = vmatpush1.bf16.msra.mxu0 0
    %9774 = vmatprep.subr.bf16.mxu0 0
    %9775 = vmatpush1.bf16.msra.mxu0 0
    %9776 = vmatprep.subr.bf16.mxu0 0
    %9777 = vmatpush1.bf16.msra.mxu0 0
    %9778 = vmatprep.subr.bf16.mxu0 0
    %9779 = vmatpush1.bf16.msra.mxu0 0
    %9780 = vmatprep.subr.bf16.mxu0 0
    %9781 = vmatpush1.bf16.msra.mxu0 0
    %9782 = vmatprep.subr.bf16.mxu0 0
    %9783 = vmatpush1.bf16.msra.mxu0 0
    %9784 = vmatprep.subr.bf16.mxu0 0
    %9785 = vmatpush1.bf16.msra.mxu0 0
    %9786 = vmatprep.subr.bf16.mxu0 0
    %9787 = vmatpush1.bf16.msra.mxu0 0
    %9788 = vmatprep.mubr.bf16.mxu0 0
    %9789 = vmatmul.mubr.bf16.gmra.mrb[0].mxu0 %v9657
    %v9790 = vpop.f32.mrb[0].mxu0
    %v9791 = vadd.f32 0.0, %v9790
    %v9792 = vpop.f32.mrb[0].mxu0
    %v9793 = vadd.f32 0.0, %v9792
    %v9794 = vpop.f32.mrb[0].mxu0
    %v9795 = vadd.f32 0.0, %v9794
    %v9796 = vpop.f32.mrb[0].mxu0
    %v9797 = vadd.f32 0.0, %v9796
    %9798 = vmatprep.mubr.bf16.mxu0 0
    %9799 = vmatmul.mubr.bf16.gmra.mrb[0].mxu0 %v9658
    %v9800 = vpop.f32.mrb[0].mxu0
    %v9801 = vadd.f32 0.0, %v9800
    %v9802 = vpop.f32.mrb[0].mxu0
    %v9803 = vadd.f32 0.0, %v9802
    %v9804 = vpop.f32.mrb[0].mxu0
    %v9805 = vadd.f32 0.0, %v9804
    %v9806 = vpop.f32.mrb[0].mxu0
    %v9807 = vadd.f32 0.0, %v9806
    %9808 = vdwg.mxu0
    %v9825 = vunpack.c.l.b16 %v9617
    %v9826 = vunpack.c.h.b16 %v9617
    %v9827 = vunpack.c.l.b16 %v9618
    %v9828 = vunpack.c.h.b16 %v9618
    %v9829 = vunpack.c.l.b16 %v9619
    %v9830 = vunpack.c.h.b16 %v9619
    %v9831 = vunpack.c.l.b16 %v9620
    %v9832 = vunpack.c.h.b16 %v9620
    %v9833 = vunpack.c.l.b16 %v9621
    %v9834 = vunpack.c.h.b16 %v9621
    %v9835 = vunpack.c.l.b16 %v9622
    %v9836 = vunpack.c.h.b16 %v9622
    %v9837 = vunpack.c.l.b16 %v9623
    %v9838 = vunpack.c.h.b16 %v9623
    %v9839 = vunpack.c.l.b16 %v9624
    %v9840 = vunpack.c.h.b16 %v9624
    %v9841 = vunpack.c.l.b16 %v9625
    %v9842 = vunpack.c.h.b16 %v9625
    %v9843 = vunpack.c.l.b16 %v9626
    %v9844 = vunpack.c.h.b16 %v9626
    %v9845 = vunpack.c.l.b16 %v9627
    %v9846 = vunpack.c.h.b16 %v9627
    %v9847 = vunpack.c.l.b16 %v9628
    %v9848 = vunpack.c.h.b16 %v9628
    %v9849 = vunpack.c.l.b16 %v9629
    %v9850 = vunpack.c.h.b16 %v9629
    %v9851 = vunpack.c.l.b16 %v9630
    %v9852 = vunpack.c.h.b16 %v9630
    %v9853 = vunpack.c.l.b16 %v9631
    %v9854 = vunpack.c.h.b16 %v9631
    %v9855 = vunpack.c.l.b16 %v9632
    %v9856 = vunpack.c.h.b16 %v9632
    %v9857 = vpack.c.b16 %v9827, %v9825
    %v9858 = vpack.c.b16 %v9828, %v9826
    %v9859 = vpack.c.b16 %v9831, %v9829
    %v9860 = vpack.c.b16 %v9832, %v9830
    %v9861 = vpack.c.b16 %v9835, %v9833
    %v9862 = vpack.c.b16 %v9836, %v9834
    %v9863 = vpack.c.b16 %v9839, %v9837
    %v9864 = vpack.c.b16 %v9840, %v9838
    %v9865 = vpack.c.b16 %v9843, %v9841
    %v9866 = vpack.c.b16 %v9844, %v9842
    %v9867 = vpack.c.b16 %v9847, %v9845
    %v9868 = vpack.c.b16 %v9848, %v9846
    %v9869 = vpack.c.b16 %v9851, %v9849
    %v9870 = vpack.c.b16 %v9852, %v9850
    %v9871 = vpack.c.b16 %v9855, %v9853
    %v9872 = vpack.c.b16 %v9856, %v9854
    %9889 = vmatprep.subr.bf16.mxu0 %v9858
    %9890 = vmatpush1.bf16.msra.mxu0 %v9857
    %9891 = vmatprep.subr.bf16.mxu0 %v9860
    %9892 = vmatpush1.bf16.msra.mxu0 %v9859
    %9893 = vmatprep.subr.bf16.mxu0 %v9862
    %9894 = vmatpush1.bf16.msra.mxu0 %v9861
    %9895 = vmatprep.subr.bf16.mxu0 %v9864
    %9896 = vmatpush1.bf16.msra.mxu0 %v9863
    %9897 = vmatprep.subr.bf16.mxu0 %v9866
    %9898 = vmatpush1.bf16.msra.mxu0 %v9865
    %9899 = vmatprep.subr.bf16.mxu0 %v9868
    %9900 = vmatpush1.bf16.msra.mxu0 %v9867
    %9901 = vmatprep.subr.bf16.mxu0 %v9870
    %9902 = vmatpush1.bf16.msra.mxu0 %v9869
    %9903 = vmatprep.subr.bf16.mxu0 %v9872
    %9904 = vmatpush1.bf16.msra.mxu0 %v9871
    %9905 = vmatprep.subr.bf16.mxu0 0
    %9906 = vmatpush1.bf16.msra.mxu0 0
    %9907 = vmatprep.subr.bf16.mxu0 0
    %9908 = vmatpush1.bf16.msra.mxu0 0
    %9909 = vmatprep.subr.bf16.mxu0 0
    %9910 = vmatpush1.bf16.msra.mxu0 0
    %9911 = vmatprep.subr.bf16.mxu0 0
    %9912 = vmatpush1.bf16.msra.mxu0 0
    %9913 = vmatprep.subr.bf16.mxu0 0
    %9914 = vmatpush1.bf16.msra.mxu0 0
    %9915 = vmatprep.subr.bf16.mxu0 0
    %9916 = vmatpush1.bf16.msra.mxu0 0
    %9917 = vmatprep.subr.bf16.mxu0 0
    %9918 = vmatpush1.bf16.msra.mxu0 0
    %9919 = vmatprep.subr.bf16.mxu0 0
    %9920 = vmatpush1.bf16.msra.mxu0 0
    %9921 = vmatprep.mubr.bf16.mxu0 0
    %9922 = vmatmul.mubr.bf16.gmra.mrb[0].mxu0 %v9615
    %v9923 = vpop.f32.mrb[0].mxu0
    %v9924 = vadd.f32 %v9791, %v9923
    %v9925 = vpop.f32.mrb[0].mxu0
    %v9926 = vadd.f32 %v9793, %v9925
    %v9927 = vpop.f32.mrb[0].mxu0
    %v9928 = vadd.f32 %v9795, %v9927
    %v9929 = vpop.f32.mrb[0].mxu0
    %v9930 = vadd.f32 %v9797, %v9929
    %9931 = vmatprep.mubr.bf16.mxu0 0
    %9932 = vmatmul.mubr.bf16.gmra.mrb[0].mxu0 %v9616
    %v9933 = vpop.f32.mrb[0].mxu0
    %v9934 = vadd.f32 %v9801, %v9933
    %v9935 = vpop.f32.mrb[0].mxu0
    %v9936 = vadd.f32 %v9803, %v9935
    %v9937 = vpop.f32.mrb[0].mxu0
    %v9938 = vadd.f32 %v9805, %v9937
    %v9939 = vpop.f32.mrb[0].mxu0
    %v9940 = vadd.f32 %v9807, %v9939
    %9941 = vdwg.mxu0
    %v9942 = vld [vmem:[#allocation3 + $0x2] sm:$0xf]
    %v9943 = vld [vmem:[#allocation3 + $0xa] sm:$0xf]
    %v9944 = vld [vmem:[#allocation3 + $0x12] sm:$0xf]
    %v9945 = vld [vmem:[#allocation3 + $0x1a] sm:$0xf]
    %v9946 = vld [vmem:[#allocation3 + $0x32] sm:$0xf]
    %v9947 = vld [vmem:[#allocation3 + $0x3a] sm:$0xf]
    %v9948 = vld [vmem:[#allocation3 + $0x42] sm:$0xf]
    %v9949 = vld [vmem:[#allocation3 + $0x4a] sm:$0xf]
    %v9958 = vcombine.low %v9942, %v9943
    %v9959 = vcombine.low %v9944, %v9945
    %v9960 = vcombine.low %v9946, %v9947
    %v9961 = vcombine.low %v9948, %v9949
    %v9966 = vpack.c.bf16 %v9959, %v9958
    %v9967 = vpack.c.bf16 %v9961, %v9960
    %s9968 = scalar_lea.vmem [#allocation13], 256
    %v9969 = vld [vmem:[%s9968] sm:$0xff]
    %v9970 = vld [vmem:[%s9968 + $0x8] sm:$0xff]
    %v9971 = vld [vmem:[%s9968 + $0x10] sm:$0xff]
    %v9972 = vld [vmem:[%s9968 + $0x18] sm:$0xff]
    %v9973 = vld [vmem:[%s9968 + $0x20] sm:$0xff]
    %v9974 = vld [vmem:[%s9968 + $0x28] sm:$0xff]
    %v9975 = vld [vmem:[%s9968 + $0x30] sm:$0xff]
    %v9976 = vld [vmem:[%s9968 + $0x38] sm:$0xff]
    %v9977 = vld [vmem:[%s9968 + $0x40] sm:$0xff]
    %v9978 = vld [vmem:[%s9968 + $0x48] sm:$0xff]
    %v9979 = vld [vmem:[%s9968 + $0x50] sm:$0xff]
    %v9980 = vld [vmem:[%s9968 + $0x58] sm:$0xff]
    %v9981 = vld [vmem:[%s9968 + $0x60] sm:$0xff]
    %v9982 = vld [vmem:[%s9968 + $0x68] sm:$0xff]
    %v9983 = vld [vmem:[%s9968 + $0x70] sm:$0xff]
    %v9984 = vld [vmem:[%s9968 + $0x78] sm:$0xff]
    %v10001 = vunpack.c.l.b16 %v9969
    %v10002 = vunpack.c.h.b16 %v9969
    %v10003 = vunpack.c.l.b16 %v9970
    %v10004 = vunpack.c.h.b16 %v9970
    %v10005 = vunpack.c.l.b16 %v9971
    %v10006 = vunpack.c.h.b16 %v9971
    %v10007 = vunpack.c.l.b16 %v9972
    %v10008 = vunpack.c.h.b16 %v9972
    %v10009 = vunpack.c.l.b16 %v9973
    %v10010 = vunpack.c.h.b16 %v9973
    %v10011 = vunpack.c.l.b16 %v9974
    %v10012 = vunpack.c.h.b16 %v9974
    %v10013 = vunpack.c.l.b16 %v9975
    %v10014 = vunpack.c.h.b16 %v9975
    %v10015 = vunpack.c.l.b16 %v9976
    %v10016 = vunpack.c.h.b16 %v9976
    %v10017 = vunpack.c.l.b16 %v9977
    %v10018 = vunpack.c.h.b16 %v9977
    %v10019 = vunpack.c.l.b16 %v9978
    %v10020 = vunpack.c.h.b16 %v9978
    %v10021 = vunpack.c.l.b16 %v9979
    %v10022 = vunpack.c.h.b16 %v9979
    %v10023 = vunpack.c.l.b16 %v9980
    %v10024 = vunpack.c.h.b16 %v9980
    %v10025 = vunpack.c.l.b16 %v9981
    %v10026 = vunpack.c.h.b16 %v9981
    %v10027 = vunpack.c.l.b16 %v9982
    %v10028 = vunpack.c.h.b16 %v9982
    %v10029 = vunpack.c.l.b16 %v9983
    %v10030 = vunpack.c.h.b16 %v9983
    %v10031 = vunpack.c.l.b16 %v9984
    %v10032 = vunpack.c.h.b16 %v9984
    %v10033 = vpack.c.b16 %v10003, %v10001
    %v10034 = vpack.c.b16 %v10004, %v10002
    %v10035 = vpack.c.b16 %v10007, %v10005
    %v10036 = vpack.c.b16 %v10008, %v10006
    %v10037 = vpack.c.b16 %v10011, %v10009
    %v10038 = vpack.c.b16 %v10012, %v10010
    %v10039 = vpack.c.b16 %v10015, %v10013
    %v10040 = vpack.c.b16 %v10016, %v10014
    %v10041 = vpack.c.b16 %v10019, %v10017
    %v10042 = vpack.c.b16 %v10020, %v10018
    %v10043 = vpack.c.b16 %v10023, %v10021
    %v10044 = vpack.c.b16 %v10024, %v10022
    %v10045 = vpack.c.b16 %v10027, %v10025
    %v10046 = vpack.c.b16 %v10028, %v10026
    %v10047 = vpack.c.b16 %v10031, %v10029
    %v10048 = vpack.c.b16 %v10032, %v10030
    %10065 = vmatprep.subr.bf16.mxu0 %v10034
    %10066 = vmatpush1.bf16.msra.mxu0 %v10033
    %10067 = vmatprep.subr.bf16.mxu0 %v10036
    %10068 = vmatpush1.bf16.msra.mxu0 %v10035
    %10069 = vmatprep.subr.bf16.mxu0 %v10038
    %10070 = vmatpush1.bf16.msra.mxu0 %v10037
    %10071 = vmatprep.subr.bf16.mxu0 %v10040
    %10072 = vmatpush1.bf16.msra.mxu0 %v10039
    %10073 = vmatprep.subr.bf16.mxu0 %v10042
    %10074 = vmatpush1.bf16.msra.mxu0 %v10041
    %10075 = vmatprep.subr.bf16.mxu0 %v10044
    %10076 = vmatpush1.bf16.msra.mxu0 %v10043
    %10077 = vmatprep.subr.bf16.mxu0 %v10046
    %10078 = vmatpush1.bf16.msra.mxu0 %v10045
    %10079 = vmatprep.subr.bf16.mxu0 %v10048
    %10080 = vmatpush1.bf16.msra.mxu0 %v10047
    %10081 = vmatprep.subr.bf16.mxu0 0
    %10082 = vmatpush1.bf16.msra.mxu0 0
    %10083 = vmatprep.subr.bf16.mxu0 0
    %10084 = vmatpush1.bf16.msra.mxu0 0
    %10085 = vmatprep.subr.bf16.mxu0 0
    %10086 = vmatpush1.bf16.msra.mxu0 0
    %10087 = vmatprep.subr.bf16.mxu0 0
    %10088 = vmatpush1.bf16.msra.mxu0 0
    %10089 = vmatprep.subr.bf16.mxu0 0
    %10090 = vmatpush1.bf16.msra.mxu0 0
    %10091 = vmatprep.subr.bf16.mxu0 0
    %10092 = vmatpush1.bf16.msra.mxu0 0
    %10093 = vmatprep.subr.bf16.mxu0 0
    %10094 = vmatpush1.bf16.msra.mxu0 0
    %10095 = vmatprep.subr.bf16.mxu0 0
    %10096 = vmatpush1.bf16.msra.mxu0 0
    %10097 = vmatprep.mubr.bf16.mxu0 0
    %10098 = vmatmul.mubr.bf16.gmra.mrb[0].mxu0 %v9966
    %v10099 = vpop.f32.mrb[0].mxu0
    %v10100 = vadd.f32 0.0, %v10099
    %v10101 = vpop.f32.mrb[0].mxu0
    %v10102 = vadd.f32 0.0, %v10101
    %v10103 = vpop.f32.mrb[0].mxu0
    %v10104 = vadd.f32 0.0, %v10103
    %v10105 = vpop.f32.mrb[0].mxu0
    %v10106 = vadd.f32 0.0, %v10105
    %10107 = vmatprep.mubr.bf16.mxu0 0
    %10108 = vmatmul.mubr.bf16.gmra.mrb[0].mxu0 %v9967
    %v10109 = vpop.f32.mrb[0].mxu0
    %v10110 = vadd.f32 0.0, %v10109
    %v10111 = vpop.f32.mrb[0].mxu0
    %v10112 = vadd.f32 0.0, %v10111
    %v10113 = vpop.f32.mrb[0].mxu0
    %v10114 = vadd.f32 0.0, %v10113
    %v10115 = vpop.f32.mrb[0].mxu0
    %v10116 = vadd.f32 0.0, %v10115
    %10117 = vdwg.mxu0
    %v10118 = vadd.f32 %v9924, %v10100
    %v10119 = vadd.f32 %v9926, %v10102
    %v10120 = vadd.f32 %v9928, %v10104
    %v10121 = vadd.f32 %v9930, %v10106
    %v10122 = vadd.f32 %v9934, %v10110
    %v10123 = vadd.f32 %v9936, %v10112
    %v10124 = vadd.f32 %v9938, %v10114
    %v10125 = vadd.f32 %v9940, %v10116
    %v10126 = vld [vmem:[%s9582] sm:$0xf]
    %v10127 = vld [vmem:[%s9582 + $0x8] sm:$0xf]
    %v10128 = vld [vmem:[%s9582 + $0x10] sm:$0xf]
    %v10129 = vld [vmem:[%s9582 + $0x18] sm:$0xf]
    %v10130 = vld [vmem:[%s9582 + $0x30] sm:$0xf]
    %v10131 = vld [vmem:[%s9582 + $0x38] sm:$0xf]
    %v10132 = vld [vmem:[%s9582 + $0x40] sm:$0xf]
    %v10133 = vld [vmem:[%s9582 + $0x48] sm:$0xf]
    %v10142 = vcombine.low %v10126, %v10127
    %v10143 = vcombine.low %v10128, %v10129
    %v10144 = vcombine.low %v10130, %v10131
    %v10145 = vcombine.low %v10132, %v10133
    %v10150 = vpack.c.bf16 %v10143, %v10142
    %v10151 = vpack.c.bf16 %v10145, %v10144
    %s10152 = scalar_lea.vmem [#allocation13], 384
    %v10153 = vld [vmem:[%s10152] sm:$0xff]
    %v10154 = vld [vmem:[%s10152 + $0x8] sm:$0xff]
    %v10155 = vld [vmem:[%s10152 + $0x10] sm:$0xff]
    %v10156 = vld [vmem:[%s10152 + $0x18] sm:$0xff]
    %v10157 = vld [vmem:[%s10152 + $0x20] sm:$0xff]
    %v10158 = vld [vmem:[%s10152 + $0x28] sm:$0xff]
    %v10159 = vld [vmem:[%s10152 + $0x30] sm:$0xff]
    %v10160 = vld [vmem:[%s10152 + $0x38] sm:$0xff]
    %v10161 = vld [vmem:[%s10152 + $0x40] sm:$0xff]
    %v10162 = vld [vmem:[%s10152 + $0x48] sm:$0xff]
    %v10163 = vld [vmem:[%s10152 + $0x50] sm:$0xff]
    %v10164 = vld [vmem:[%s10152 + $0x58] sm:$0xff]
    %v10165 = vld [vmem:[%s10152 + $0x60] sm:$0xff]
    %v10166 = vld [vmem:[%s10152 + $0x68] sm:$0xff]
    %v10167 = vld [vmem:[%s10152 + $0x70] sm:$0xff]
    %v10168 = vld [vmem:[%s10152 + $0x78] sm:$0xff]
    %v10185 = vunpack.c.l.b16 %v10153
    %v10186 = vunpack.c.h.b16 %v10153
    %v10187 = vunpack.c.l.b16 %v10154
    %v10188 = vunpack.c.h.b16 %v10154
    %v10189 = vunpack.c.l.b16 %v10155
    %v10190 = vunpack.c.h.b16 %v10155
    %v10191 = vunpack.c.l.b16 %v10156
    %v10192 = vunpack.c.h.b16 %v10156
    %v10193 = vunpack.c.l.b16 %v10157
    %v10194 = vunpack.c.h.b16 %v10157
    %v10195 = vunpack.c.l.b16 %v10158
    %v10196 = vunpack.c.h.b16 %v10158
    %v10197 = vunpack.c.l.b16 %v10159
    %v10198 = vunpack.c.h.b16 %v10159
    %v10199 = vunpack.c.l.b16 %v10160
    %v10200 = vunpack.c.h.b16 %v10160
    %v10201 = vunpack.c.l.b16 %v10161
    %v10202 = vunpack.c.h.b16 %v10161
    %v10203 = vunpack.c.l.b16 %v10162
    %v10204 = vunpack.c.h.b16 %v10162
    %v10205 = vunpack.c.l.b16 %v10163
    %v10206 = vunpack.c.h.b16 %v10163
    %v10207 = vunpack.c.l.b16 %v10164
    %v10208 = vunpack.c.h.b16 %v10164
    %v10209 = vunpack.c.l.b16 %v10165
    %v10210 = vunpack.c.h.b16 %v10165
    %v10211 = vunpack.c.l.b16 %v10166
    %v10212 = vunpack.c.h.b16 %v10166
    %v10213 = vunpack.c.l.b16 %v10167
    %v10214 = vunpack.c.h.b16 %v10167
    %v10215 = vunpack.c.l.b16 %v10168
    %v10216 = vunpack.c.h.b16 %v10168
    %v10217 = vpack.c.b16 %v10187, %v10185
    %v10218 = vpack.c.b16 %v10188, %v10186
    %v10219 = vpack.c.b16 %v10191, %v10189
    %v10220 = vpack.c.b16 %v10192, %v10190
    %v10221 = vpack.c.b16 %v10195, %v10193
    %v10222 = vpack.c.b16 %v10196, %v10194
    %v10223 = vpack.c.b16 %v10199, %v10197
    %v10224 = vpack.c.b16 %v10200, %v10198
    %v10225 = vpack.c.b16 %v10203, %v10201
    %v10226 = vpack.c.b16 %v10204, %v10202
    %v10227 = vpack.c.b16 %v10207, %v10205
    %v10228 = vpack.c.b16 %v10208, %v10206
    %v10229 = vpack.c.b16 %v10211, %v10209
    %v10230 = vpack.c.b16 %v10212, %v10210
    %v10231 = vpack.c.b16 %v10215, %v10213
    %v10232 = vpack.c.b16 %v10216, %v10214
    %10249 = vmatprep.subr.bf16.mxu0 %v10218
    %10250 = vmatpush1.bf16.msra.mxu0 %v10217
    %10251 = vmatprep.subr.bf16.mxu0 %v10220
    %10252 = vmatpush1.bf16.msra.mxu0 %v10219
    %10253 = vmatprep.subr.bf16.mxu0 %v10222
    %10254 = vmatpush1.bf16.msra.mxu0 %v10221
    %10255 = vmatprep.subr.bf16.mxu0 %v10224
    %10256 = vmatpush1.bf16.msra.mxu0 %v10223
    %10257 = vmatprep.subr.bf16.mxu0 %v10226
    %10258 = vmatpush1.bf16.msra.mxu0 %v10225
    %10259 = vmatprep.subr.bf16.mxu0 %v10228
    %10260 = vmatpush1.bf16.msra.mxu0 %v10227
    %10261 = vmatprep.subr.bf16.mxu0 %v10230
    %10262 = vmatpush1.bf16.msra.mxu0 %v10229
    %10263 = vmatprep.subr.bf16.mxu0 %v10232
    %10264 = vmatpush1.bf16.msra.mxu0 %v10231
    %10265 = vmatprep.subr.bf16.mxu0 0
    %10266 = vmatpush1.bf16.msra.mxu0 0
    %10267 = vmatprep.subr.bf16.mxu0 0
    %10268 = vmatpush1.bf16.msra.mxu0 0
    %10269 = vmatprep.subr.bf16.mxu0 0
    %10270 = vmatpush1.bf16.msra.mxu0 0
    %10271 = vmatprep.subr.bf16.mxu0 0
    %10272 = vmatpush1.bf16.msra.mxu0 0
    %10273 = vmatprep.subr.bf16.mxu0 0
    %10274 = vmatpush1.bf16.msra.mxu0 0
    %10275 = vmatprep.subr.bf16.mxu0 0
    %10276 = vmatpush1.bf16.msra.mxu0 0
    %10277 = vmatprep.subr.bf16.mxu0 0
    %10278 = vmatpush1.bf16.msra.mxu0 0
    %10279 = vmatprep.subr.bf16.mxu0 0
    %10280 = vmatpush1.bf16.msra.mxu0 0
    %10281 = vmatprep.mubr.bf16.mxu0 0
    %10282 = vmatmul.mubr.bf16.gmra.mrb[0].mxu0 %v10150
    %v10283 = vpop.f32.mrb[0].mxu0
    %v10284 = vadd.f32 0.0, %v10283
    %v10285 = vpop.f32.mrb[0].mxu0
    %v10286 = vadd.f32 0.0, %v10285
    %v10287 = vpop.f32.mrb[0].mxu0
    %v10288 = vadd.f32 0.0, %v10287
    %v10289 = vpop.f32.mrb[0].mxu0
    %v10290 = vadd.f32 0.0, %v10289
    %10291 = vmatprep.mubr.bf16.mxu0 0
    %10292 = vmatmul.mubr.bf16.gmra.mrb[0].mxu0 %v10151
    %v10293 = vpop.f32.mrb[0].mxu0
    %v10294 = vadd.f32 0.0, %v10293
    %v10295 = vpop.f32.mrb[0].mxu0
    %v10296 = vadd.f32 0.0, %v10295
    %v10297 = vpop.f32.mrb[0].mxu0
    %v10298 = vadd.f32 0.0, %v10297
    %v10299 = vpop.f32.mrb[0].mxu0
    %v10300 = vadd.f32 0.0, %v10299
    %10301 = vdwg.mxu0
    %v10302 = vadd.f32 %v10118, %v10284
    %v10303 = vadd.f32 %v10119, %v10286
    %v10304 = vadd.f32 %v10120, %v10288
    %v10305 = vadd.f32 %v10121, %v10290
    %v10306 = vadd.f32 %v10122, %v10294
    %v10307 = vadd.f32 %v10123, %v10296
    %v10308 = vadd.f32 %v10124, %v10298
    %v10309 = vadd.f32 %v10125, %v10300
    %v10310 = vld [vmem:[%s9582 + $0x1] sm:$0xf]
    %v10311 = vld [vmem:[%s9582 + $0x9] sm:$0xf]
    %v10312 = vld [vmem:[%s9582 + $0x11] sm:$0xf]
    %v10313 = vld [vmem:[%s9582 + $0x19] sm:$0xf]
    %v10314 = vld [vmem:[%s9582 + $0x31] sm:$0xf]
    %v10315 = vld [vmem:[%s9582 + $0x39] sm:$0xf]
    %v10316 = vld [vmem:[%s9582 + $0x41] sm:$0xf]
    %v10317 = vld [vmem:[%s9582 + $0x49] sm:$0xf]
    %v10326 = vcombine.low %v10310, %v10311
    %v10327 = vcombine.low %v10312, %v10313
    %v10328 = vcombine.low %v10314, %v10315
    %v10329 = vcombine.low %v10316, %v10317
    %v10334 = vpack.c.bf16 %v10327, %v10326
    %v10335 = vpack.c.bf16 %v10329, %v10328
    %s10336 = scalar_lea.vmem [#allocation13], 512
    %v10337 = vld [vmem:[%s10336] sm:$0xff]
    %v10338 = vld [vmem:[%s10336 + $0x8] sm:$0xff]
    %v10339 = vld [vmem:[%s10336 + $0x10] sm:$0xff]
    %v10340 = vld [vmem:[%s10336 + $0x18] sm:$0xff]
    %v10341 = vld [vmem:[%s10336 + $0x20] sm:$0xff]
    %v10342 = vld [vmem:[%s10336 + $0x28] sm:$0xff]
    %v10343 = vld [vmem:[%s10336 + $0x30] sm:$0xff]
    %v10344 = vld [vmem:[%s10336 + $0x38] sm:$0xff]
    %v10345 = vld [vmem:[%s10336 + $0x40] sm:$0xff]
    %v10346 = vld [vmem:[%s10336 + $0x48] sm:$0xff]
    %v10347 = vld [vmem:[%s10336 + $0x50] sm:$0xff]
    %v10348 = vld [vmem:[%s10336 + $0x58] sm:$0xff]
    %v10349 = vld [vmem:[%s10336 + $0x60] sm:$0xff]
    %v10350 = vld [vmem:[%s10336 + $0x68] sm:$0xff]
    %v10351 = vld [vmem:[%s10336 + $0x70] sm:$0xff]
    %v10352 = vld [vmem:[%s10336 + $0x78] sm:$0xff]
    %v10369 = vunpack.c.l.b16 %v10337
    %v10370 = vunpack.c.h.b16 %v10337
    %v10371 = vunpack.c.l.b16 %v10338
    %v10372 = vunpack.c.h.b16 %v10338
    %v10373 = vunpack.c.l.b16 %v10339
    %v10374 = vunpack.c.h.b16 %v10339
    %v10375 = vunpack.c.l.b16 %v10340
    %v10376 = vunpack.c.h.b16 %v10340
    %v10377 = vunpack.c.l.b16 %v10341
    %v10378 = vunpack.c.h.b16 %v10341
    %v10379 = vunpack.c.l.b16 %v10342
    %v10380 = vunpack.c.h.b16 %v10342
    %v10381 = vunpack.c.l.b16 %v10343
    %v10382 = vunpack.c.h.b16 %v10343
    %v10383 = vunpack.c.l.b16 %v10344
    %v10384 = vunpack.c.h.b16 %v10344
    %v10385 = vunpack.c.l.b16 %v10345
    %v10386 = vunpack.c.h.b16 %v10345
    %v10387 = vunpack.c.l.b16 %v10346
    %v10388 = vunpack.c.h.b16 %v10346
    %v10389 = vunpack.c.l.b16 %v10347
    %v10390 = vunpack.c.h.b16 %v10347
    %v10391 = vunpack.c.l.b16 %v10348
    %v10392 = vunpack.c.h.b16 %v10348
    %v10393 = vunpack.c.l.b16 %v10349
    %v10394 = vunpack.c.h.b16 %v10349
    %v10395 = vunpack.c.l.b16 %v10350
    %v10396 = vunpack.c.h.b16 %v10350
    %v10397 = vunpack.c.l.b16 %v10351
    %v10398 = vunpack.c.h.b16 %v10351
    %v10399 = vunpack.c.l.b16 %v10352
    %v10400 = vunpack.c.h.b16 %v10352
    %v10401 = vpack.c.b16 %v10371, %v10369
    %v10402 = vpack.c.b16 %v10372, %v10370
    %v10403 = vpack.c.b16 %v10375, %v10373
    %v10404 = vpack.c.b16 %v10376, %v10374
    %v10405 = vpack.c.b16 %v10379, %v10377
    %v10406 = vpack.c.b16 %v10380, %v10378
    %v10407 = vpack.c.b16 %v10383, %v10381
    %v10408 = vpack.c.b16 %v10384, %v10382
    %v10409 = vpack.c.b16 %v10387, %v10385
    %v10410 = vpack.c.b16 %v10388, %v10386
    %v10411 = vpack.c.b16 %v10391, %v10389
    %v10412 = vpack.c.b16 %v10392, %v10390
    %v10413 = vpack.c.b16 %v10395, %v10393
    %v10414 = vpack.c.b16 %v10396, %v10394
    %v10415 = vpack.c.b16 %v10399, %v10397
    %v10416 = vpack.c.b16 %v10400, %v10398
    %10433 = vmatprep.subr.bf16.mxu0 %v10402
    %10434 = vmatpush1.bf16.msra.mxu0 %v10401
    %10435 = vmatprep.subr.bf16.mxu0 %v10404
    %10436 = vmatpush1.bf16.msra.mxu0 %v10403
    %10437 = vmatprep.subr.bf16.mxu0 %v10406
    %10438 = vmatpush1.bf16.msra.mxu0 %v10405
    %10439 = vmatprep.subr.bf16.mxu0 %v10408
    %10440 = vmatpush1.bf16.msra.mxu0 %v10407
    %10441 = vmatprep.subr.bf16.mxu0 %v10410
    %10442 = vmatpush1.bf16.msra.mxu0 %v10409
    %10443 = vmatprep.subr.bf16.mxu0 %v10412
    %10444 = vmatpush1.bf16.msra.mxu0 %v10411
    %10445 = vmatprep.subr.bf16.mxu0 %v10414
    %10446 = vmatpush1.bf16.msra.mxu0 %v10413
    %10447 = vmatprep.subr.bf16.mxu0 %v10416
    %10448 = vmatpush1.bf16.msra.mxu0 %v10415
    %10449 = vmatprep.subr.bf16.mxu0 0
    %10450 = vmatpush1.bf16.msra.mxu0 0
    %10451 = vmatprep.subr.bf16.mxu0 0
    %10452 = vmatpush1.bf16.msra.mxu0 0
    %10453 = vmatprep.subr.bf16.mxu0 0
    %10454 = vmatpush1.bf16.msra.mxu0 0
    %10455 = vmatprep.subr.bf16.mxu0 0
    %10456 = vmatpush1.bf16.msra.mxu0 0
    %10457 = vmatprep.subr.bf16.mxu0 0
    %10458 = vmatpush1.bf16.msra.mxu0 0
    %10459 = vmatprep.subr.bf16.mxu0 0
    %10460 = vmatpush1.bf16.msra.mxu0 0
    %10461 = vmatprep.subr.bf16.mxu0 0
    %10462 = vmatpush1.bf16.msra.mxu0 0
    %10463 = vmatprep.subr.bf16.mxu0 0
    %10464 = vmatpush1.bf16.msra.mxu0 0
    %10465 = vmatprep.mubr.bf16.mxu0 0
    %10466 = vmatmul.mubr.bf16.gmra.mrb[0].mxu0 %v10334
    %v10467 = vpop.f32.mrb[0].mxu0
    %v10468 = vadd.f32 0.0, %v10467
    %v10469 = vpop.f32.mrb[0].mxu0
    %v10470 = vadd.f32 0.0, %v10469
    %v10471 = vpop.f32.mrb[0].mxu0
    %v10472 = vadd.f32 0.0, %v10471
    %v10473 = vpop.f32.mrb[0].mxu0
    %v10474 = vadd.f32 0.0, %v10473
    %10475 = vmatprep.mubr.bf16.mxu0 0
    %10476 = vmatmul.mubr.bf16.gmra.mrb[0].mxu0 %v10335
    %v10477 = vpop.f32.mrb[0].mxu0
    %v10478 = vadd.f32 0.0, %v10477
    %v10479 = vpop.f32.mrb[0].mxu0
    %v10480 = vadd.f32 0.0, %v10479
    %v10481 = vpop.f32.mrb[0].mxu0
    %v10482 = vadd.f32 0.0, %v10481
    %v10483 = vpop.f32.mrb[0].mxu0
    %v10484 = vadd.f32 0.0, %v10483
    %10485 = vdwg.mxu0
    %v10486 = vadd.f32 %v10302, %v10468
    %v10487 = vadd.f32 %v10303, %v10470
    %v10488 = vadd.f32 %v10304, %v10472
    %v10489 = vadd.f32 %v10305, %v10474
    %v10490 = vadd.f32 %v10306, %v10478
    %v10491 = vadd.f32 %v10307, %v10480
    %v10492 = vadd.f32 %v10308, %v10482
    %v10493 = vadd.f32 %v10309, %v10484
    %v10494 = vld [vmem:[%s9582 + $0x2] sm:$0xf]
    %v10495 = vld [vmem:[%s9582 + $0xa] sm:$0xf]
    %v10496 = vld [vmem:[%s9582 + $0x12] sm:$0xf]
    %v10497 = vld [vmem:[%s9582 + $0x1a] sm:$0xf]
    %v10498 = vld [vmem:[%s9582 + $0x32] sm:$0xf]
    %v10499 = vld [vmem:[%s9582 + $0x3a] sm:$0xf]
    %v10500 = vld [vmem:[%s9582 + $0x42] sm:$0xf]
    %v10501 = vld [vmem:[%s9582 + $0x4a] sm:$0xf]
    %v10510 = vcombine.low %v10494, %v10495
    %v10511 = vcombine.low %v10496, %v10497
    %v10512 = vcombine.low %v10498, %v10499
    %v10513 = vcombine.low %v10500, %v10501
    %v10518 = vpack.c.bf16 %v10511, %v10510
    %v10519 = vpack.c.bf16 %v10513, %v10512
    %s10520 = scalar_lea.vmem [#allocation13], 640
    %v10521 = vld [vmem:[%s10520] sm:$0xff]
    %v10522 = vld [vmem:[%s10520 + $0x8] sm:$0xff]
    %v10523 = vld [vmem:[%s10520 + $0x10] sm:$0xff]
    %v10524 = vld [vmem:[%s10520 + $0x18] sm:$0xff]
    %v10525 = vld [vmem:[%s10520 + $0x20] sm:$0xff]
    %v10526 = vld [vmem:[%s10520 + $0x28] sm:$0xff]
    %v10527 = vld [vmem:[%s10520 + $0x30] sm:$0xff]
    %v10528 = vld [vmem:[%s10520 + $0x38] sm:$0xff]
    %v10529 = vld [vmem:[%s10520 + $0x40] sm:$0xff]
    %v10530 = vld [vmem:[%s10520 + $0x48] sm:$0xff]
    %v10531 = vld [vmem:[%s10520 + $0x50] sm:$0xff]
    %v10532 = vld [vmem:[%s10520 + $0x58] sm:$0xff]
    %v10533 = vld [vmem:[%s10520 + $0x60] sm:$0xff]
    %v10534 = vld [vmem:[%s10520 + $0x68] sm:$0xff]
    %v10535 = vld [vmem:[%s10520 + $0x70] sm:$0xff]
    %v10536 = vld [vmem:[%s10520 + $0x78] sm:$0xff]
    %v10553 = vunpack.c.l.b16 %v10521
    %v10554 = vunpack.c.h.b16 %v10521
    %v10555 = vunpack.c.l.b16 %v10522
    %v10556 = vunpack.c.h.b16 %v10522
    %v10557 = vunpack.c.l.b16 %v10523
    %v10558 = vunpack.c.h.b16 %v10523
    %v10559 = vunpack.c.l.b16 %v10524
    %v10560 = vunpack.c.h.b16 %v10524
    %v10561 = vunpack.c.l.b16 %v10525
    %v10562 = vunpack.c.h.b16 %v10525
    %v10563 = vunpack.c.l.b16 %v10526
    %v10564 = vunpack.c.h.b16 %v10526
    %v10565 = vunpack.c.l.b16 %v10527
    %v10566 = vunpack.c.h.b16 %v10527
    %v10567 = vunpack.c.l.b16 %v10528
    %v10568 = vunpack.c.h.b16 %v10528
    %v10569 = vunpack.c.l.b16 %v10529
    %v10570 = vunpack.c.h.b16 %v10529
    %v10571 = vunpack.c.l.b16 %v10530
    %v10572 = vunpack.c.h.b16 %v10530
    %v10573 = vunpack.c.l.b16 %v10531
    %v10574 = vunpack.c.h.b16 %v10531
    %v10575 = vunpack.c.l.b16 %v10532
    %v10576 = vunpack.c.h.b16 %v10532
    %v10577 = vunpack.c.l.b16 %v10533
    %v10578 = vunpack.c.h.b16 %v10533
    %v10579 = vunpack.c.l.b16 %v10534
    %v10580 = vunpack.c.h.b16 %v10534
    %v10581 = vunpack.c.l.b16 %v10535
    %v10582 = vunpack.c.h.b16 %v10535
    %v10583 = vunpack.c.l.b16 %v10536
    %v10584 = vunpack.c.h.b16 %v10536
    %v10585 = vpack.c.b16 %v10555, %v10553
    %v10586 = vpack.c.b16 %v10556, %v10554
    %v10587 = vpack.c.b16 %v10559, %v10557
    %v10588 = vpack.c.b16 %v10560, %v10558
    %v10589 = vpack.c.b16 %v10563, %v10561
    %v10590 = vpack.c.b16 %v10564, %v10562
    %v10591 = vpack.c.b16 %v10567, %v10565
    %v10592 = vpack.c.b16 %v10568, %v10566
    %v10593 = vpack.c.b16 %v10571, %v10569
    %v10594 = vpack.c.b16 %v10572, %v10570
    %v10595 = vpack.c.b16 %v10575, %v10573
    %v10596 = vpack.c.b16 %v10576, %v10574
    %v10597 = vpack.c.b16 %v10579, %v10577
    %v10598 = vpack.c.b16 %v10580, %v10578
    %v10599 = vpack.c.b16 %v10583, %v10581
    %v10600 = vpack.c.b16 %v10584, %v10582
    %10617 = vmatprep.subr.bf16.mxu0 %v10586
    %10618 = vmatpush1.bf16.msra.mxu0 %v10585
    %10619 = vmatprep.subr.bf16.mxu0 %v10588
    %10620 = vmatpush1.bf16.msra.mxu0 %v10587
    %10621 = vmatprep.subr.bf16.mxu0 %v10590
    %10622 = vmatpush1.bf16.msra.mxu0 %v10589
    %10623 = vmatprep.subr.bf16.mxu0 %v10592
    %10624 = vmatpush1.bf16.msra.mxu0 %v10591
    %10625 = vmatprep.subr.bf16.mxu0 %v10594
    %10626 = vmatpush1.bf16.msra.mxu0 %v10593
    %10627 = vmatprep.subr.bf16.mxu0 %v10596
    %10628 = vmatpush1.bf16.msra.mxu0 %v10595
    %10629 = vmatprep.subr.bf16.mxu0 %v10598
    %10630 = vmatpush1.bf16.msra.mxu0 %v10597
    %10631 = vmatprep.subr.bf16.mxu0 %v10600
    %10632 = vmatpush1.bf16.msra.mxu0 %v10599
    %10633 = vmatprep.subr.bf16.mxu0 0
    %10634 = vmatpush1.bf16.msra.mxu0 0
    %10635 = vmatprep.subr.bf16.mxu0 0
    %10636 = vmatpush1.bf16.msra.mxu0 0
    %10637 = vmatprep.subr.bf16.mxu0 0
    %10638 = vmatpush1.bf16.msra.mxu0 0
    %10639 = vmatprep.subr.bf16.mxu0 0
    %10640 = vmatpush1.bf16.msra.mxu0 0
    %10641 = vmatprep.subr.bf16.mxu0 0
    %10642 = vmatpush1.bf16.msra.mxu0 0
    %10643 = vmatprep.subr.bf16.mxu0 0
    %10644 = vmatpush1.bf16.msra.mxu0 0
    %10645 = vmatprep.subr.bf16.mxu0 0
    %10646 = vmatpush1.bf16.msra.mxu0 0
    %10647 = vmatprep.subr.bf16.mxu0 0
    %10648 = vmatpush1.bf16.msra.mxu0 0
    %10649 = vmatprep.mubr.bf16.mxu0 0
    %10650 = vmatmul.mubr.bf16.gmra.mrb[0].mxu0 %v10518
    %v10651 = vpop.f32.mrb[0].mxu0
    %v10652 = vadd.f32 0.0, %v10651
    %v10653 = vpop.f32.mrb[0].mxu0
    %v10654 = vadd.f32 0.0, %v10653
    %v10655 = vpop.f32.mrb[0].mxu0
    %v10656 = vadd.f32 0.0, %v10655
    %v10657 = vpop.f32.mrb[0].mxu0
    %v10658 = vadd.f32 0.0, %v10657
    %10659 = vmatprep.mubr.bf16.mxu0 0
    %10660 = vmatmul.mubr.bf16.gmra.mrb[0].mxu0 %v10519
    %v10661 = vpop.f32.mrb[0].mxu0
    %v10662 = vadd.f32 0.0, %v10661
    %v10663 = vpop.f32.mrb[0].mxu0
    %v10664 = vadd.f32 0.0, %v10663
    %v10665 = vpop.f32.mrb[0].mxu0
    %v10666 = vadd.f32 0.0, %v10665
    %v10667 = vpop.f32.mrb[0].mxu0
    %v10668 = vadd.f32 0.0, %v10667
    %10669 = vdwg.mxu0
    %v10670 = vadd.f32 %v10486, %v10652
    %v10671 = vadd.f32 %v10487, %v10654
    %v10672 = vadd.f32 %v10488, %v10656
    %v10673 = vadd.f32 %v10489, %v10658
    %v10674 = vadd.f32 %v10490, %v10662
    %v10675 = vadd.f32 %v10491, %v10664
    %v10676 = vadd.f32 %v10492, %v10666
    %v10677 = vadd.f32 %v10493, %v10668
    %s10678 = scalar_lea.vmem [#allocation3], 16
    %v10679 = vld [vmem:[%s10678] sm:$0xf]
    %v10680 = vld [vmem:[%s10678 + $0x8] sm:$0xf]
    %v10681 = vld [vmem:[%s10678 + $0x10] sm:$0xf]
    %v10682 = vld [vmem:[%s10678 + $0x18] sm:$0xf]
    %v10683 = vld [vmem:[%s10678 + $0x30] sm:$0xf]
    %v10684 = vld [vmem:[%s10678 + $0x38] sm:$0xf]
    %v10685 = vld [vmem:[%s10678 + $0x40] sm:$0xf]
    %v10686 = vld [vmem:[%s10678 + $0x48] sm:$0xf]
    %v10695 = vcombine.low %v10679, %v10680
    %v10696 = vcombine.low %v10681, %v10682
    %v10697 = vcombine.low %v10683, %v10684
    %v10698 = vcombine.low %v10685, %v10686
    %v10703 = vpack.c.bf16 %v10696, %v10695
    %v10704 = vpack.c.bf16 %v10698, %v10697
    %s10705 = scalar_lea.vmem [#allocation13], 768
    %v10706 = vld [vmem:[%s10705] sm:$0xff]
    %v10707 = vld [vmem:[%s10705 + $0x8] sm:$0xff]
    %v10708 = vld [vmem:[%s10705 + $0x10] sm:$0xff]
    %v10709 = vld [vmem:[%s10705 + $0x18] sm:$0xff]
    %v10710 = vld [vmem:[%s10705 + $0x20] sm:$0xff]
    %v10711 = vld [vmem:[%s10705 + $0x28] sm:$0xff]
    %v10712 = vld [vmem:[%s10705 + $0x30] sm:$0xff]
    %v10713 = vld [vmem:[%s10705 + $0x38] sm:$0xff]
    %v10714 = vld [vmem:[%s10705 + $0x40] sm:$0xff]
    %v10715 = vld [vmem:[%s10705 + $0x48] sm:$0xff]
    %v10716 = vld [vmem:[%s10705 + $0x50] sm:$0xff]
    %v10717 = vld [vmem:[%s10705 + $0x58] sm:$0xff]
    %v10718 = vld [vmem:[%s10705 + $0x60] sm:$0xff]
    %v10719 = vld [vmem:[%s10705 + $0x68] sm:$0xff]
    %v10720 = vld [vmem:[%s10705 + $0x70] sm:$0xff]
    %v10721 = vld [vmem:[%s10705 + $0x78] sm:$0xff]
    %v10738 = vunpack.c.l.b16 %v10706
    %v10739 = vunpack.c.h.b16 %v10706
    %v10740 = vunpack.c.l.b16 %v10707
    %v10741 = vunpack.c.h.b16 %v10707
    %v10742 = vunpack.c.l.b16 %v10708
    %v10743 = vunpack.c.h.b16 %v10708
    %v10744 = vunpack.c.l.b16 %v10709
    %v10745 = vunpack.c.h.b16 %v10709
    %v10746 = vunpack.c.l.b16 %v10710
    %v10747 = vunpack.c.h.b16 %v10710
    %v10748 = vunpack.c.l.b16 %v10711
    %v10749 = vunpack.c.h.b16 %v10711
    %v10750 = vunpack.c.l.b16 %v10712
    %v10751 = vunpack.c.h.b16 %v10712
    %v10752 = vunpack.c.l.b16 %v10713
    %v10753 = vunpack.c.h.b16 %v10713
    %v10754 = vunpack.c.l.b16 %v10714
    %v10755 = vunpack.c.h.b16 %v10714
    %v10756 = vunpack.c.l.b16 %v10715
    %v10757 = vunpack.c.h.b16 %v10715
    %v10758 = vunpack.c.l.b16 %v10716
    %v10759 = vunpack.c.h.b16 %v10716
    %v10760 = vunpack.c.l.b16 %v10717
    %v10761 = vunpack.c.h.b16 %v10717
    %v10762 = vunpack.c.l.b16 %v10718
    %v10763 = vunpack.c.h.b16 %v10718
    %v10764 = vunpack.c.l.b16 %v10719
    %v10765 = vunpack.c.h.b16 %v10719
    %v10766 = vunpack.c.l.b16 %v10720
    %v10767 = vunpack.c.h.b16 %v10720
    %v10768 = vunpack.c.l.b16 %v10721
    %v10769 = vunpack.c.h.b16 %v10721
    %v10770 = vpack.c.b16 %v10740, %v10738
    %v10771 = vpack.c.b16 %v10741, %v10739
    %v10772 = vpack.c.b16 %v10744, %v10742
    %v10773 = vpack.c.b16 %v10745, %v10743
    %v10774 = vpack.c.b16 %v10748, %v10746
    %v10775 = vpack.c.b16 %v10749, %v10747
    %v10776 = vpack.c.b16 %v10752, %v10750
    %v10777 = vpack.c.b16 %v10753, %v10751
    %v10778 = vpack.c.b16 %v10756, %v10754
    %v10779 = vpack.c.b16 %v10757, %v10755
    %v10780 = vpack.c.b16 %v10760, %v10758
    %v10781 = vpack.c.b16 %v10761, %v10759
    %v10782 = vpack.c.b16 %v10764, %v10762
    %v10783 = vpack.c.b16 %v10765, %v10763
    %v10784 = vpack.c.b16 %v10768, %v10766
    %v10785 = vpack.c.b16 %v10769, %v10767
    %10802 = vmatprep.subr.bf16.mxu0 %v10771
    %10803 = vmatpush1.bf16.msra.mxu0 %v10770
    %10804 = vmatprep.subr.bf16.mxu0 %v10773
    %10805 = vmatpush1.bf16.msra.mxu0 %v10772
    %10806 = vmatprep.subr.bf16.mxu0 %v10775
    %10807 = vmatpush1.bf16.msra.mxu0 %v10774
    %10808 = vmatprep.subr.bf16.mxu0 %v10777
    %10809 = vmatpush1.bf16.msra.mxu0 %v10776
    %10810 = vmatprep.subr.bf16.mxu0 %v10779
    %10811 = vmatpush1.bf16.msra.mxu0 %v10778
    %10812 = vmatprep.subr.bf16.mxu0 %v10781
    %10813 = vmatpush1.bf16.msra.mxu0 %v10780
    %10814 = vmatprep.subr.bf16.mxu0 %v10783
    %10815 = vmatpush1.bf16.msra.mxu0 %v10782
    %10816 = vmatprep.subr.bf16.mxu0 %v10785
    %10817 = vmatpush1.bf16.msra.mxu0 %v10784
    %10818 = vmatprep.subr.bf16.mxu0 0
    %10819 = vmatpush1.bf16.msra.mxu0 0
    %10820 = vmatprep.subr.bf16.mxu0 0
    %10821 = vmatpush1.bf16.msra.mxu0 0
    %10822 = vmatprep.subr.bf16.mxu0 0
    %10823 = vmatpush1.bf16.msra.mxu0 0
    %10824 = vmatprep.subr.bf16.mxu0 0
    %10825 = vmatpush1.bf16.msra.mxu0 0
    %10826 = vmatprep.subr.bf16.mxu0 0
    %10827 = vmatpush1.bf16.msra.mxu0 0
    %10828 = vmatprep.subr.bf16.mxu0 0
    %10829 = vmatpush1.bf16.msra.mxu0 0
    %10830 = vmatprep.subr.bf16.mxu0 0
    %10831 = vmatpush1.bf16.msra.mxu0 0
    %10832 = vmatprep.subr.bf16.mxu0 0
    %10833 = vmatpush1.bf16.msra.mxu0 0
    %10834 = vmatprep.mubr.bf16.mxu0 0
    %10835 = vmatmul.mubr.bf16.gmra.mrb[0].mxu0 %v10703
    %v10836 = vpop.f32.mrb[0].mxu0
    %v10837 = vadd.f32 0.0, %v10836
    %v10838 = vpop.f32.mrb[0].mxu0
    %v10839 = vadd.f32 0.0, %v10838
    %v10840 = vpop.f32.mrb[0].mxu0
    %v10841 = vadd.f32 0.0, %v10840
    %v10842 = vpop.f32.mrb[0].mxu0
    %v10843 = vadd.f32 0.0, %v10842
    %10844 = vmatprep.mubr.bf16.mxu0 0
    %10845 = vmatmul.mubr.bf16.gmra.mrb[0].mxu0 %v10704
    %v10846 = vpop.f32.mrb[0].mxu0
    %v10847 = vadd.f32 0.0, %v10846
    %v10848 = vpop.f32.mrb[0].mxu0
    %v10849 = vadd.f32 0.0, %v10848
    %v10850 = vpop.f32.mrb[0].mxu0
    %v10851 = vadd.f32 0.0, %v10850
    %v10852 = vpop.f32.mrb[0].mxu0
    %v10853 = vadd.f32 0.0, %v10852
    %10854 = vdwg.mxu0
    %v10855 = vadd.f32 %v10670, %v10837
    %v10856 = vadd.f32 %v10671, %v10839
    %v10857 = vadd.f32 %v10672, %v10841
    %v10858 = vadd.f32 %v10673, %v10843
    %v10859 = vadd.f32 %v10674, %v10847
    %v10860 = vadd.f32 %v10675, %v10849
    %v10861 = vadd.f32 %v10676, %v10851
    %v10862 = vadd.f32 %v10677, %v10853
    %v10863 = vld [vmem:[%s10678 + $0x1] sm:$0xf]
    %v10864 = vld [vmem:[%s10678 + $0x9] sm:$0xf]
    %v10865 = vld [vmem:[%s10678 + $0x11] sm:$0xf]
    %v10866 = vld [vmem:[%s10678 + $0x19] sm:$0xf]
    %v10867 = vld [vmem:[%s10678 + $0x31] sm:$0xf]
    %v10868 = vld [vmem:[%s10678 + $0x39] sm:$0xf]
    %v10869 = vld [vmem:[%s10678 + $0x41] sm:$0xf]
    %v10870 = vld [vmem:[%s10678 + $0x49] sm:$0xf]
    %v10879 = vcombine.low %v10863, %v10864
    %v10880 = vcombine.low %v10865, %v10866
    %v10881 = vcombine.low %v10867, %v10868
    %v10882 = vcombine.low %v10869, %v10870
    %v10887 = vpack.c.bf16 %v10880, %v10879
    %v10888 = vpack.c.bf16 %v10882, %v10881
    %s10889 = scalar_lea.vmem [#allocation13], 896
    %v10890 = vld [vmem:[%s10889] sm:$0xff]
    %v10891 = vld [vmem:[%s10889 + $0x8] sm:$0xff]
    %v10892 = vld [vmem:[%s10889 + $0x10] sm:$0xff]
    %v10893 = vld [vmem:[%s10889 + $0x18] sm:$0xff]
    %v10894 = vld [vmem:[%s10889 + $0x20] sm:$0xff]
    %v10895 = vld [vmem:[%s10889 + $0x28] sm:$0xff]
    %v10896 = vld [vmem:[%s10889 + $0x30] sm:$0xff]
    %v10897 = vld [vmem:[%s10889 + $0x38] sm:$0xff]
    %v10898 = vld [vmem:[%s10889 + $0x40] sm:$0xff]
    %v10899 = vld [vmem:[%s10889 + $0x48] sm:$0xff]
    %v10900 = vld [vmem:[%s10889 + $0x50] sm:$0xff]
    %v10901 = vld [vmem:[%s10889 + $0x58] sm:$0xff]
    %v10902 = vld [vmem:[%s10889 + $0x60] sm:$0xff]
    %v10903 = vld [vmem:[%s10889 + $0x68] sm:$0xff]
    %v10904 = vld [vmem:[%s10889 + $0x70] sm:$0xff]
    %v10905 = vld [vmem:[%s10889 + $0x78] sm:$0xff]
    %v10922 = vunpack.c.l.b16 %v10890
    %v10923 = vunpack.c.h.b16 %v10890
    %v10924 = vunpack.c.l.b16 %v10891
    %v10925 = vunpack.c.h.b16 %v10891
    %v10926 = vunpack.c.l.b16 %v10892
    %v10927 = vunpack.c.h.b16 %v10892
    %v10928 = vunpack.c.l.b16 %v10893
    %v10929 = vunpack.c.h.b16 %v10893
    %v10930 = vunpack.c.l.b16 %v10894
    %v10931 = vunpack.c.h.b16 %v10894
    %v10932 = vunpack.c.l.b16 %v10895
    %v10933 = vunpack.c.h.b16 %v10895
    %v10934 = vunpack.c.l.b16 %v10896
    %v10935 = vunpack.c.h.b16 %v10896
    %v10936 = vunpack.c.l.b16 %v10897
    %v10937 = vunpack.c.h.b16 %v10897
    %v10938 = vunpack.c.l.b16 %v10898
    %v10939 = vunpack.c.h.b16 %v10898
    %v10940 = vunpack.c.l.b16 %v10899
    %v10941 = vunpack.c.h.b16 %v10899
    %v10942 = vunpack.c.l.b16 %v10900
    %v10943 = vunpack.c.h.b16 %v10900
    %v10944 = vunpack.c.l.b16 %v10901
    %v10945 = vunpack.c.h.b16 %v10901
    %v10946 = vunpack.c.l.b16 %v10902
    %v10947 = vunpack.c.h.b16 %v10902
    %v10948 = vunpack.c.l.b16 %v10903
    %v10949 = vunpack.c.h.b16 %v10903
    %v10950 = vunpack.c.l.b16 %v10904
    %v10951 = vunpack.c.h.b16 %v10904
    %v10952 = vunpack.c.l.b16 %v10905
    %v10953 = vunpack.c.h.b16 %v10905
    %v10954 = vpack.c.b16 %v10924, %v10922
    %v10955 = vpack.c.b16 %v10925, %v10923
    %v10956 = vpack.c.b16 %v10928, %v10926
    %v10957 = vpack.c.b16 %v10929, %v10927
    %v10958 = vpack.c.b16 %v10932, %v10930
    %v10959 = vpack.c.b16 %v10933, %v10931
    %v10960 = vpack.c.b16 %v10936, %v10934
    %v10961 = vpack.c.b16 %v10937, %v10935
    %v10962 = vpack.c.b16 %v10940, %v10938
    %v10963 = vpack.c.b16 %v10941, %v10939
    %v10964 = vpack.c.b16 %v10944, %v10942
    %v10965 = vpack.c.b16 %v10945, %v10943
    %v10966 = vpack.c.b16 %v10948, %v10946
    %v10967 = vpack.c.b16 %v10949, %v10947
    %v10968 = vpack.c.b16 %v10952, %v10950
    %v10969 = vpack.c.b16 %v10953, %v10951
    %10986 = vmatprep.subr.bf16.mxu0 %v10955
    %10987 = vmatpush1.bf16.msra.mxu0 %v10954
    %10988 = vmatprep.subr.bf16.mxu0 %v10957
    %10989 = vmatpush1.bf16.msra.mxu0 %v10956
    %10990 = vmatprep.subr.bf16.mxu0 %v10959
    %10991 = vmatpush1.bf16.msra.mxu0 %v10958
    %10992 = vmatprep.subr.bf16.mxu0 %v10961
    %10993 = vmatpush1.bf16.msra.mxu0 %v10960
    %10994 = vmatprep.subr.bf16.mxu0 %v10963
    %10995 = vmatpush1.bf16.msra.mxu0 %v10962
    %10996 = vmatprep.subr.bf16.mxu0 %v10965
    %10997 = vmatpush1.bf16.msra.mxu0 %v10964
    %10998 = vmatprep.subr.bf16.mxu0 %v10967
    %10999 = vmatpush1.bf16.msra.mxu0 %v10966
    %11000 = vmatprep.subr.bf16.mxu0 %v10969
    %11001 = vmatpush1.bf16.msra.mxu0 %v10968
    %11002 = vmatprep.subr.bf16.mxu0 0
    %11003 = vmatpush1.bf16.msra.mxu0 0
    %11004 = vmatprep.subr.bf16.mxu0 0
    %11005 = vmatpush1.bf16.msra.mxu0 0
    %11006 = vmatprep.subr.bf16.mxu0 0
    %11007 = vmatpush1.bf16.msra.mxu0 0
    %11008 = vmatprep.subr.bf16.mxu0 0
    %11009 = vmatpush1.bf16.msra.mxu0 0
    %11010 = vmatprep.subr.bf16.mxu0 0
    %11011 = vmatpush1.bf16.msra.mxu0 0
    %11012 = vmatprep.subr.bf16.mxu0 0
    %11013 = vmatpush1.bf16.msra.mxu0 0
    %11014 = vmatprep.subr.bf16.mxu0 0
    %11015 = vmatpush1.bf16.msra.mxu0 0
    %11016 = vmatprep.subr.bf16.mxu0 0
    %11017 = vmatpush1.bf16.msra.mxu0 0
    %11018 = vmatprep.mubr.bf16.mxu0 0
    %11019 = vmatmul.mubr.bf16.gmra.mrb[0].mxu0 %v10887
    %v11020 = vpop.f32.mrb[0].mxu0
    %v11021 = vadd.f32 0.0, %v11020
    %v11022 = vpop.f32.mrb[0].mxu0
    %v11023 = vadd.f32 0.0, %v11022
    %v11024 = vpop.f32.mrb[0].mxu0
    %v11025 = vadd.f32 0.0, %v11024
    %v11026 = vpop.f32.mrb[0].mxu0
    %v11027 = vadd.f32 0.0, %v11026
    %11028 = vmatprep.mubr.bf16.mxu0 0
    %11029 = vmatmul.mubr.bf16.gmra.mrb[0].mxu0 %v10888
    %v11030 = vpop.f32.mrb[0].mxu0
    %v11031 = vadd.f32 0.0, %v11030
    %v11032 = vpop.f32.mrb[0].mxu0
    %v11033 = vadd.f32 0.0, %v11032
    %v11034 = vpop.f32.mrb[0].mxu0
    %v11035 = vadd.f32 0.0, %v11034
    %v11036 = vpop.f32.mrb[0].mxu0
    %v11037 = vadd.f32 0.0, %v11036
    %11038 = vdwg.mxu0
    %v11039 = vadd.f32 %v10855, %v11021
    %v11040 = vadd.f32 %v10856, %v11023
    %v11041 = vadd.f32 %v10857, %v11025
    %v11042 = vadd.f32 %v10858, %v11027
    %v11043 = vadd.f32 %v10859, %v11031
    %v11044 = vadd.f32 %v10860, %v11033
    %v11045 = vadd.f32 %v10861, %v11035
    %v11046 = vadd.f32 %v10862, %v11037
    %v11047 = vld [vmem:[%s10678 + $0x2] sm:$0xf]
    %v11048 = vld [vmem:[%s10678 + $0xa] sm:$0xf]
    %v11049 = vld [vmem:[%s10678 + $0x12] sm:$0xf]
    %v11050 = vld [vmem:[%s10678 + $0x1a] sm:$0xf]
    %v11051 = vld [vmem:[%s10678 + $0x32] sm:$0xf]
    %v11052 = vld [vmem:[%s10678 + $0x3a] sm:$0xf]
    %v11053 = vld [vmem:[%s10678 + $0x42] sm:$0xf]
    %v11054 = vld [vmem:[%s10678 + $0x4a] sm:$0xf]
    %v11063 = vcombine.low %v11047, %v11048
    %v11064 = vcombine.low %v11049, %v11050
    %v11065 = vcombine.low %v11051, %v11052
    %v11066 = vcombine.low %v11053, %v11054
    %v11071 = vpack.c.bf16 %v11064, %v11063
    %v11072 = vpack.c.bf16 %v11066, %v11065
    %s11073 = scalar_lea.vmem [#allocation13], 1024
    %v11074 = vld [vmem:[%s11073] sm:$0xff]
    %v11075 = vld [vmem:[%s11073 + $0x8] sm:$0xff]
    %v11076 = vld [vmem:[%s11073 + $0x10] sm:$0xff]
    %v11077 = vld [vmem:[%s11073 + $0x18] sm:$0xff]
    %v11078 = vld [vmem:[%s11073 + $0x20] sm:$0xff]
    %v11079 = vld [vmem:[%s11073 + $0x28] sm:$0xff]
    %v11080 = vld [vmem:[%s11073 + $0x30] sm:$0xff]
    %v11081 = vld [vmem:[%s11073 + $0x38] sm:$0xff]
    %v11082 = vld [vmem:[%s11073 + $0x40] sm:$0xff]
    %v11083 = vld [vmem:[%s11073 + $0x48] sm:$0xff]
    %v11084 = vld [vmem:[%s11073 + $0x50] sm:$0xff]
    %v11085 = vld [vmem:[%s11073 + $0x58] sm:$0xff]
    %v11086 = vld [vmem:[%s11073 + $0x60] sm:$0xff]
    %v11087 = vld [vmem:[%s11073 + $0x68] sm:$0xff]
    %v11088 = vld [vmem:[%s11073 + $0x70] sm:$0xff]
    %v11089 = vld [vmem:[%s11073 + $0x78] sm:$0xff]
    %v11106 = vunpack.c.l.b16 %v11074
    %v11107 = vunpack.c.h.b16 %v11074
    %v11108 = vunpack.c.l.b16 %v11075
    %v11109 = vunpack.c.h.b16 %v11075
    %v11110 = vunpack.c.l.b16 %v11076
    %v11111 = vunpack.c.h.b16 %v11076
    %v11112 = vunpack.c.l.b16 %v11077
    %v11113 = vunpack.c.h.b16 %v11077
    %v11114 = vunpack.c.l.b16 %v11078
    %v11115 = vunpack.c.h.b16 %v11078
    %v11116 = vunpack.c.l.b16 %v11079
    %v11117 = vunpack.c.h.b16 %v11079
    %v11118 = vunpack.c.l.b16 %v11080
    %v11119 = vunpack.c.h.b16 %v11080
    %v11120 = vunpack.c.l.b16 %v11081
    %v11121 = vunpack.c.h.b16 %v11081
    %v11122 = vunpack.c.l.b16 %v11082
    %v11123 = vunpack.c.h.b16 %v11082
    %v11124 = vunpack.c.l.b16 %v11083
    %v11125 = vunpack.c.h.b16 %v11083
    %v11126 = vunpack.c.l.b16 %v11084
    %v11127 = vunpack.c.h.b16 %v11084
    %v11128 = vunpack.c.l.b16 %v11085
    %v11129 = vunpack.c.h.b16 %v11085
    %v11130 = vunpack.c.l.b16 %v11086
    %v11131 = vunpack.c.h.b16 %v11086
    %v11132 = vunpack.c.l.b16 %v11087
    %v11133 = vunpack.c.h.b16 %v11087
    %v11134 = vunpack.c.l.b16 %v11088
    %v11135 = vunpack.c.h.b16 %v11088
    %v11136 = vunpack.c.l.b16 %v11089
    %v11137 = vunpack.c.h.b16 %v11089
    %v11138 = vpack.c.b16 %v11108, %v11106
    %v11139 = vpack.c.b16 %v11109, %v11107
    %v11140 = vpack.c.b16 %v11112, %v11110
    %v11141 = vpack.c.b16 %v11113, %v11111
    %v11142 = vpack.c.b16 %v11116, %v11114
    %v11143 = vpack.c.b16 %v11117, %v11115
    %v11144 = vpack.c.b16 %v11120, %v11118
    %v11145 = vpack.c.b16 %v11121, %v11119
    %v11146 = vpack.c.b16 %v11124, %v11122
    %v11147 = vpack.c.b16 %v11125, %v11123
    %v11148 = vpack.c.b16 %v11128, %v11126
    %v11149 = vpack.c.b16 %v11129, %v11127
    %v11150 = vpack.c.b16 %v11132, %v11130
    %v11151 = vpack.c.b16 %v11133, %v11131
    %v11152 = vpack.c.b16 %v11136, %v11134
    %v11153 = vpack.c.b16 %v11137, %v11135
    %11170 = vmatprep.subr.bf16.mxu0 %v11139
    %11171 = vmatpush1.bf16.msra.mxu0 %v11138
    %11172 = vmatprep.subr.bf16.mxu0 %v11141
    %11173 = vmatpush1.bf16.msra.mxu0 %v11140
    %11174 = vmatprep.subr.bf16.mxu0 %v11143
    %11175 = vmatpush1.bf16.msra.mxu0 %v11142
    %11176 = vmatprep.subr.bf16.mxu0 %v11145
    %11177 = vmatpush1.bf16.msra.mxu0 %v11144
    %11178 = vmatprep.subr.bf16.mxu0 %v11147
    %11179 = vmatpush1.bf16.msra.mxu0 %v11146
    %11180 = vmatprep.subr.bf16.mxu0 %v11149
    %11181 = vmatpush1.bf16.msra.mxu0 %v11148
    %11182 = vmatprep.subr.bf16.mxu0 %v11151
    %11183 = vmatpush1.bf16.msra.mxu0 %v11150
    %11184 = vmatprep.subr.bf16.mxu0 %v11153
    %11185 = vmatpush1.bf16.msra.mxu0 %v11152
    %11186 = vmatprep.subr.bf16.mxu0 0
    %11187 = vmatpush1.bf16.msra.mxu0 0
    %11188 = vmatprep.subr.bf16.mxu0 0
    %11189 = vmatpush1.bf16.msra.mxu0 0
    %11190 = vmatprep.subr.bf16.mxu0 0
    %11191 = vmatpush1.bf16.msra.mxu0 0
    %11192 = vmatprep.subr.bf16.mxu0 0
    %11193 = vmatpush1.bf16.msra.mxu0 0
    %11194 = vmatprep.subr.bf16.mxu0 0
    %11195 = vmatpush1.bf16.msra.mxu0 0
    %11196 = vmatprep.subr.bf16.mxu0 0
    %11197 = vmatpush1.bf16.msra.mxu0 0
    %11198 = vmatprep.subr.bf16.mxu0 0
    %11199 = vmatpush1.bf16.msra.mxu0 0
    %11200 = vmatprep.subr.bf16.mxu0 0
    %11201 = vmatpush1.bf16.msra.mxu0 0
    %11202 = vmatprep.mubr.bf16.mxu0 0
    %11203 = vmatmul.mubr.bf16.gmra.mrb[0].mxu0 %v11071
    %v11204 = vpop.f32.mrb[0].mxu0
    %v11205 = vadd.f32 0.0, %v11204
    %v11206 = vpop.f32.mrb[0].mxu0
    %v11207 = vadd.f32 0.0, %v11206
    %v11208 = vpop.f32.mrb[0].mxu0
    %v11209 = vadd.f32 0.0, %v11208
    %v11210 = vpop.f32.mrb[0].mxu0
    %v11211 = vadd.f32 0.0, %v11210
    %11212 = vmatprep.mubr.bf16.mxu0 0
    %11213 = vmatmul.mubr.bf16.gmra.mrb[0].mxu0 %v11072
    %v11214 = vpop.f32.mrb[0].mxu0
    %v11215 = vadd.f32 0.0, %v11214
    %v11216 = vpop.f32.mrb[0].mxu0
    %v11217 = vadd.f32 0.0, %v11216
    %v11218 = vpop.f32.mrb[0].mxu0
    %v11219 = vadd.f32 0.0, %v11218
    %v11220 = vpop.f32.mrb[0].mxu0
    %v11221 = vadd.f32 0.0, %v11220
    %11222 = vdwg.mxu0
    %v11223 = vadd.f32 %v11039, %v11205
    %v11224 = vadd.f32 %v11040, %v11207
    %v11225 = vadd.f32 %v11041, %v11209
    %v11226 = vadd.f32 %v11042, %v11211
    %v11227 = vadd.f32 %v11043, %v11215
    %v11228 = vadd.f32 %v11044, %v11217
    %v11229 = vadd.f32 %v11045, %v11219
    %v11230 = vadd.f32 %v11046, %v11221
    %v11231 = vld [vmem:[#allocation15] sm:$0x3]
    %v11233 = vlaneseq
    %v11234 = vshrl.u32 %v11233, 7
    %v11235 = vsub.s32 0, %v11234
    %v11236 = vrot.slane %v11231, %v11235
    %v11237 = vlaneseq
    %v11238 = vshrl.u32 %v11237, 7
    %v11239 = vsub.s32 1, %v11238
    %v11240 = vrot.slane %v11231, %v11239
    %v11243 = vadd.f32 %v11223, %v11236
    %v11244 = vadd.f32 %v11224, %v11240
    %v11245 = vadd.f32 %v11225, %v11236
    %v11246 = vadd.f32 %v11226, %v11240
    %v11247 = vadd.f32 %v11227, %v11236
    %v11248 = vadd.f32 %v11228, %v11240
    %v11249 = vadd.f32 %v11229, %v11236
    %v11250 = vadd.f32 %v11230, %v11240
    %v11251 = vmax.f32 %v11243, 0.0
    %v11252 = vmax.f32 %v11244, 0.0
    %v11253 = vmax.f32 %v11245, 0.0
    %v11254 = vmax.f32 %v11246, 0.0
    %v11255 = vmax.f32 %v11247, 0.0
    %v11256 = vmax.f32 %v11248, 0.0
    %v11257 = vmax.f32 %v11249, 0.0
    %v11258 = vmax.f32 %v11250, 0.0
    %v11259 = vadd.f32 %v11251, %v11253
    %v11260 = vrot.slane %v11259, 4
    %v11261 = vadd.f32 %v11259, %v11260
    %v11262 = vrot.slane %v11261, 2
    %v11263 = vadd.f32 %v11261, %v11262
    %v11264 = vrot.slane %v11263, 1
    %v11265 = vadd.f32 %v11263, %v11264
    %v11266 = vadd.f32 %v11252, %v11254
    %v11267 = vrot.slane %v11266, 4
    %v11268 = vadd.f32 %v11266, %v11267
    %v11269 = vrot.slane %v11268, 2
    %v11270 = vadd.f32 %v11268, %v11269
    %v11271 = vrot.slane %v11270, 1
    %v11272 = vadd.f32 %v11270, %v11271
    %v11273 = vadd.f32 %v11255, %v11257
    %v11274 = vrot.slane %v11273, 4
    %v11275 = vadd.f32 %v11273, %v11274
    %v11276 = vrot.slane %v11275, 2
    %v11277 = vadd.f32 %v11275, %v11276
    %v11278 = vrot.slane %v11277, 1
    %v11279 = vadd.f32 %v11277, %v11278
    %v11280 = vadd.f32 %v11256, %v11258
    %v11281 = vrot.slane %v11280, 4
    %v11282 = vadd.f32 %v11280, %v11281
    %v11283 = vrot.slane %v11282, 2
    %v11284 = vadd.f32 %v11282, %v11283
    %v11285 = vrot.slane %v11284, 1
    %v11286 = vadd.f32 %v11284, %v11285
    %v11287 = vmul.f32 %v11265, 0.0625
    %v11288 = vmul.f32 %v11272, 0.0625
    %v11289 = vmul.f32 %v11279, 0.0625
    %v11290 = vmul.f32 %v11286, 0.0625
    %v11291 = vpack.c.bf16 %v11287, %v11287
    %v11292 = vpack.c.bf16 %v11288, %v11288
    %v11293 = vpack.c.bf16 %v11289, %v11289
    %v11294 = vpack.c.bf16 %v11290, %v11290
    %v11295 = vld [vmem:[#allocation16] sm:$0xf]
    %v11296 = vld [vmem:[#allocation16 + $0x4] sm:$0xf]
    %v11297 = vld [vmem:[#allocation16 + $0x8] sm:$0xf]
    %v11298 = vld [vmem:[#allocation16 + $0xc] sm:$0xf]
    %v11299 = vld [vmem:[#allocation16 + $0x10] sm:$0xf]
    %v11300 = vld [vmem:[#allocation16 + $0x14] sm:$0xf]
    %v11301 = vld [vmem:[#allocation16 + $0x18] sm:$0xf]
    %v11302 = vld [vmem:[#allocation16 + $0x1c] sm:$0xf]
    %v11303 = vld [vmem:[#allocation16 + $0x20] sm:$0xf]
    %v11304 = vld [vmem:[#allocation16 + $0x24] sm:$0xf]
    %v11305 = vld [vmem:[#allocation16 + $0x28] sm:$0xf]
    %v11306 = vld [vmem:[#allocation16 + $0x2c] sm:$0xf]
    %v11307 = vld [vmem:[#allocation16 + $0x30] sm:$0xf]
    %v11308 = vld [vmem:[#allocation16 + $0x34] sm:$0xf]
    %v11309 = vld [vmem:[#allocation16 + $0x38] sm:$0xf]
    %v11310 = vld [vmem:[#allocation16 + $0x3c] sm:$0xf]
    %v11311 = vld [vmem:[#allocation16 + $0x40] sm:$0xf]
    %v11312 = vld [vmem:[#allocation16 + $0x44] sm:$0xf]
    %v11313 = vld [vmem:[#allocation16 + $0x48] sm:$0xf]
    %v11314 = vld [vmem:[#allocation16 + $0x4c] sm:$0xf]
    %v11315 = vld [vmem:[#allocation16 + $0x50] sm:$0xf]
    %v11316 = vld [vmem:[#allocation16 + $0x54] sm:$0xf]
    %v11317 = vld [vmem:[#allocation16 + $0x58] sm:$0xf]
    %v11318 = vld [vmem:[#allocation16 + $0x5c] sm:$0xf]
    %v11319 = vld [vmem:[#allocation16 + $0x60] sm:$0xf]
    %v11320 = vld [vmem:[#allocation16 + $0x64] sm:$0xf]
    %v11321 = vld [vmem:[#allocation16 + $0x68] sm:$0xf]
    %v11322 = vld [vmem:[#allocation16 + $0x6c] sm:$0xf]
    %v11323 = vld [vmem:[#allocation16 + $0x70] sm:$0xf]
    %v11324 = vld [vmem:[#allocation16 + $0x74] sm:$0xf]
    %v11325 = vld [vmem:[#allocation16 + $0x78] sm:$0xf]
    %v11326 = vld [vmem:[#allocation16 + $0x7c] sm:$0xf]
    %v11327 = vld [vmem:[#allocation18] sm:$0x1]
    %v11329 = vlaneseq
    %v11330 = vshrl.u32 %v11329, 7
    %v11331 = vsub.s32 0, %v11330
    %v11332 = vrot.slane %v11327, %v11331
    %v11338 = vunpack.c.l.b16 %v11291
    %v11339 = vunpack.c.l.b16 %v11292
    %v11340 = vunpack.c.l.b16 %v11293
    %v11341 = vunpack.c.l.b16 %v11294
    %vm11342 = vcmask 1041409
    %v11343 = vsel %vm11342, %v11340, %v11338
    %v11344 = vsel %vm11342, %v11341, %v11339
    %v11345 = vpack.c.b16 %v11343, %v11343
    %v11346 = vpack.c.b16 %v11344, %v11344
    %v11381 = vunpack.c.l.b16 %v11295
    %v11382 = vunpack.c.l.b16 %v11296
    %v11383 = vunpack.c.l.b16 %v11297
    %v11384 = vunpack.c.l.b16 %v11298
    %v11385 = vunpack.c.l.b16 %v11299
    %v11386 = vunpack.c.l.b16 %v11300
    %v11387 = vunpack.c.l.b16 %v11301
    %v11388 = vunpack.c.l.b16 %v11302
    %v11389 = vunpack.c.l.b16 %v11303
    %v11390 = vunpack.c.l.b16 %v11304
    %v11391 = vunpack.c.l.b16 %v11305
    %v11392 = vunpack.c.l.b16 %v11306
    %v11393 = vunpack.c.l.b16 %v11307
    %v11394 = vunpack.c.l.b16 %v11308
    %v11395 = vunpack.c.l.b16 %v11309
    %v11396 = vunpack.c.l.b16 %v11310
    %v11397 = vunpack.c.l.b16 %v11311
    %v11398 = vunpack.c.l.b16 %v11312
    %v11399 = vunpack.c.l.b16 %v11313
    %v11400 = vunpack.c.l.b16 %v11314
    %v11401 = vunpack.c.l.b16 %v11315
    %v11402 = vunpack.c.l.b16 %v11316
    %v11403 = vunpack.c.l.b16 %v11317
    %v11404 = vunpack.c.l.b16 %v11318
    %v11405 = vunpack.c.l.b16 %v11319
    %v11406 = vunpack.c.l.b16 %v11320
    %v11407 = vunpack.c.l.b16 %v11321
    %v11408 = vunpack.c.l.b16 %v11322
    %v11409 = vunpack.c.l.b16 %v11323
    %v11410 = vunpack.c.l.b16 %v11324
    %v11411 = vunpack.c.l.b16 %v11325
    %v11412 = vunpack.c.l.b16 %v11326
    %v11413 = vpack.c.b16 %v11382, %v11381
    %v11414 = vpack.c.b16 %v11384, %v11383
    %v11415 = vpack.c.b16 %v11386, %v11385
    %v11416 = vpack.c.b16 %v11388, %v11387
    %v11417 = vpack.c.b16 %v11390, %v11389
    %v11418 = vpack.c.b16 %v11392, %v11391
    %v11419 = vpack.c.b16 %v11394, %v11393
    %v11420 = vpack.c.b16 %v11396, %v11395
    %v11421 = vpack.c.b16 %v11398, %v11397
    %v11422 = vpack.c.b16 %v11400, %v11399
    %v11423 = vpack.c.b16 %v11402, %v11401
    %v11424 = vpack.c.b16 %v11404, %v11403
    %v11425 = vpack.c.b16 %v11406, %v11405
    %v11426 = vpack.c.b16 %v11408, %v11407
    %v11427 = vpack.c.b16 %v11410, %v11409
    %v11428 = vpack.c.b16 %v11412, %v11411
    %11445 = vmatprep.subr.bf16.mxu0 0
    %11446 = vmatpush1.bf16.msra.mxu0 %v11413
    %11447 = vmatprep.subr.bf16.mxu0 0
    %11448 = vmatpush1.bf16.msra.mxu0 %v11414
    %11449 = vmatprep.subr.bf16.mxu0 0
    %11450 = vmatpush1.bf16.msra.mxu0 %v11415
    %11451 = vmatprep.subr.bf16.mxu0 0
    %11452 = vmatpush1.bf16.msra.mxu0 %v11416
    %11453 = vmatprep.subr.bf16.mxu0 0
    %11454 = vmatpush1.bf16.msra.mxu0 %v11417
    %11455 = vmatprep.subr.bf16.mxu0 0
    %11456 = vmatpush1.bf16.msra.mxu0 %v11418
    %11457 = vmatprep.subr.bf16.mxu0 0
    %11458 = vmatpush1.bf16.msra.mxu0 %v11419
    %11459 = vmatprep.subr.bf16.mxu0 0
    %11460 = vmatpush1.bf16.msra.mxu0 %v11420
    %11461 = vmatprep.subr.bf16.mxu0 0
    %11462 = vmatpush1.bf16.msra.mxu0 %v11421
    %11463 = vmatprep.subr.bf16.mxu0 0
    %11464 = vmatpush1.bf16.msra.mxu0 %v11422
    %11465 = vmatprep.subr.bf16.mxu0 0
    %11466 = vmatpush1.bf16.msra.mxu0 %v11423
    %11467 = vmatprep.subr.bf16.mxu0 0
    %11468 = vmatpush1.bf16.msra.mxu0 %v11424
    %11469 = vmatprep.subr.bf16.mxu0 0
    %11470 = vmatpush1.bf16.msra.mxu0 %v11425
    %11471 = vmatprep.subr.bf16.mxu0 0
    %11472 = vmatpush1.bf16.msra.mxu0 %v11426
    %11473 = vmatprep.subr.bf16.mxu0 0
    %11474 = vmatpush1.bf16.msra.mxu0 %v11427
    %11475 = vmatprep.subr.bf16.mxu0 0
    %11476 = vmatpush1.bf16.msra.mxu0 %v11428
    %11477 = vmatprep.mubr.bf16.mxu0 %v11346
    %11478 = vmatmul.mubr.bf16.gmra.mrb[0].mxu0 %v11345
    %v11479 = vpop.f32.mrb[0].mxu0
    %v11480 = vadd.f32 %v11332, %v11479
    %v11481 = vpop.f32.mrb[0].mxu0
    %v11482 = vpop.f32.mrb[0].mxu0
    %v11483 = vpop.f32.mrb[0].mxu0
    %11484 = vdwg.mxu0
    %v11485 = vmax.f32 %v11480, 0.0
    %v11486 = vpack.c.bf16 %v11485, %v11485
    %v11487 = vld [vmem:[#allocation19] sm:$0xff]
    %v11488 = vld [vmem:[#allocation19 + $0x8] sm:$0xff]
    %v11489 = vld [vmem:[#allocation19 + $0x10] sm:$0xff]
    %v11490 = vld [vmem:[#allocation19 + $0x18] sm:$0xff]
    %v11491 = vld [vmem:[#allocation19 + $0x20] sm:$0xff]
    %v11492 = vld [vmem:[#allocation19 + $0x28] sm:$0xff]
    %v11493 = vld [vmem:[#allocation19 + $0x30] sm:$0xff]
    %v11494 = vld [vmem:[#allocation19 + $0x38] sm:$0xff]
    %v11495 = vld [vmem:[#allocation19 + $0x40] sm:$0xff]
    %v11496 = vld [vmem:[#allocation19 + $0x48] sm:$0xff]
    %v11497 = vld [vmem:[#allocation19 + $0x50] sm:$0xff]
    %v11498 = vld [vmem:[#allocation19 + $0x58] sm:$0xff]
    %v11499 = vld [vmem:[#allocation19 + $0x60] sm:$0xff]
    %v11500 = vld [vmem:[#allocation19 + $0x68] sm:$0xff]
    %v11501 = vld [vmem:[#allocation19 + $0x70] sm:$0xff]
    %v11502 = vld [vmem:[#allocation19 + $0x78] sm:$0xff]
    %v11503 = vld [vmem:[#allocation19 + $0x80] sm:$0xff]
    %v11504 = vld [vmem:[#allocation19 + $0x88] sm:$0xff]
    %v11505 = vld [vmem:[#allocation19 + $0x90] sm:$0xff]
    %v11506 = vld [vmem:[#allocation19 + $0x98] sm:$0xff]
    %v11507 = vld [vmem:[#allocation19 + $0xa0] sm:$0xff]
    %v11508 = vld [vmem:[#allocation19 + $0xa8] sm:$0xff]
    %v11509 = vld [vmem:[#allocation19 + $0xb0] sm:$0xff]
    %v11510 = vld [vmem:[#allocation19 + $0xb8] sm:$0xff]
    %v11511 = vld [vmem:[#allocation19 + $0xc0] sm:$0xff]
    %v11512 = vld [vmem:[#allocation19 + $0xc8] sm:$0xff]
    %v11513 = vld [vmem:[#allocation19 + $0xd0] sm:$0xff]
    %v11514 = vld [vmem:[#allocation19 + $0xd8] sm:$0xff]
    %v11515 = vld [vmem:[#allocation19 + $0xe0] sm:$0xff]
    %v11516 = vld [vmem:[#allocation19 + $0xe8] sm:$0xff]
    %v11517 = vld [vmem:[#allocation19 + $0xf0] sm:$0xff]
    %v11518 = vld [vmem:[#allocation19 + $0xf8] sm:$0xff]
    %v11519 = vld [vmem:[#allocation19 + $0x100] sm:$0xff]
    %v11520 = vld [vmem:[#allocation19 + $0x108] sm:$0xff]
    %v11521 = vld [vmem:[#allocation19 + $0x110] sm:$0xff]
    %v11522 = vld [vmem:[#allocation19 + $0x118] sm:$0xff]
    %v11523 = vld [vmem:[#allocation19 + $0x120] sm:$0xff]
    %v11524 = vld [vmem:[#allocation19 + $0x128] sm:$0xff]
    %v11525 = vld [vmem:[#allocation19 + $0x130] sm:$0xff]
    %v11526 = vld [vmem:[#allocation19 + $0x138] sm:$0xff]
    %v11527 = vld [vmem:[#allocation19 + $0x140] sm:$0xff]
    %v11528 = vld [vmem:[#allocation19 + $0x148] sm:$0xff]
    %v11529 = vld [vmem:[#allocation19 + $0x150] sm:$0xff]
    %v11530 = vld [vmem:[#allocation19 + $0x158] sm:$0xff]
    %v11531 = vld [vmem:[#allocation19 + $0x160] sm:$0xff]
    %v11532 = vld [vmem:[#allocation19 + $0x168] sm:$0xff]
    %v11533 = vld [vmem:[#allocation19 + $0x170] sm:$0xff]
    %v11534 = vld [vmem:[#allocation19 + $0x178] sm:$0xff]
    %v11535 = vld [vmem:[#allocation19 + $0x180] sm:$0xff]
    %v11536 = vld [vmem:[#allocation19 + $0x188] sm:$0xff]
    %v11537 = vld [vmem:[#allocation19 + $0x190] sm:$0xff]
    %v11538 = vld [vmem:[#allocation19 + $0x198] sm:$0xff]
    %v11539 = vld [vmem:[#allocation19 + $0x1a0] sm:$0xff]
    %v11540 = vld [vmem:[#allocation19 + $0x1a8] sm:$0xff]
    %v11541 = vld [vmem:[#allocation19 + $0x1b0] sm:$0xff]
    %v11542 = vld [vmem:[#allocation19 + $0x1b8] sm:$0xff]
    %v11543 = vld [vmem:[#allocation19 + $0x1c0] sm:$0xff]
    %v11544 = vld [vmem:[#allocation19 + $0x1c8] sm:$0xff]
    %v11545 = vld [vmem:[#allocation19 + $0x1d0] sm:$0xff]
    %v11546 = vld [vmem:[#allocation19 + $0x1d8] sm:$0xff]
    %v11547 = vld [vmem:[#allocation19 + $0x1e0] sm:$0xff]
    %v11548 = vld [vmem:[#allocation19 + $0x1e8] sm:$0xff]
    %v11549 = vld [vmem:[#allocation19 + $0x1f0] sm:$0xff]
    %v11550 = vld [vmem:[#allocation19 + $0x1f8] sm:$0xff]
    %v11551 = vld [vmem:[#allocation21] sm:$0xff]
    %v11553 = vlaneseq
    %v11554 = vshrl.u32 %v11553, 7
    %v11555 = vsub.s32 0, %v11554
    %v11556 = vrot.slane %v11551, %v11555
    %v11557 = vlaneseq
    %v11558 = vshrl.u32 %v11557, 7
    %v11559 = vsub.s32 1, %v11558
    %v11560 = vrot.slane %v11551, %v11559
    %v11561 = vlaneseq
    %v11562 = vshrl.u32 %v11561, 7
    %v11563 = vsub.s32 2, %v11562
    %v11564 = vrot.slane %v11551, %v11563
    %v11565 = vlaneseq
    %v11566 = vshrl.u32 %v11565, 7
    %v11567 = vsub.s32 3, %v11566
    %v11568 = vrot.slane %v11551, %v11567
    %v11569 = vlaneseq
    %v11570 = vshrl.u32 %v11569, 7
    %v11571 = vsub.s32 4, %v11570
    %v11572 = vrot.slane %v11551, %v11571
    %v11573 = vlaneseq
    %v11574 = vshrl.u32 %v11573, 7
    %v11575 = vsub.s32 5, %v11574
    %v11576 = vrot.slane %v11551, %v11575
    %v11577 = vlaneseq
    %v11578 = vshrl.u32 %v11577, 7
    %v11579 = vsub.s32 6, %v11578
    %v11580 = vrot.slane %v11551, %v11579
    %v11581 = vlaneseq
    %v11582 = vshrl.u32 %v11581, 7
    %v11583 = vsub.s32 7, %v11582
    %v11584 = vrot.slane %v11551, %v11583
    %v11657 = vunpack.c.l.b16 %v11487
    %v11658 = vunpack.c.h.b16 %v11487
    %v11659 = vunpack.c.l.b16 %v11488
    %v11660 = vunpack.c.h.b16 %v11488
    %v11661 = vunpack.c.l.b16 %v11489
    %v11662 = vunpack.c.h.b16 %v11489
    %v11663 = vunpack.c.l.b16 %v11490
    %v11664 = vunpack.c.h.b16 %v11490
    %v11665 = vunpack.c.l.b16 %v11491
    %v11666 = vunpack.c.h.b16 %v11491
    %v11667 = vunpack.c.l.b16 %v11492
    %v11668 = vunpack.c.h.b16 %v11492
    %v11669 = vunpack.c.l.b16 %v11493
    %v11670 = vunpack.c.h.b16 %v11493
    %v11671 = vunpack.c.l.b16 %v11494
    %v11672 = vunpack.c.h.b16 %v11494
    %v11673 = vunpack.c.l.b16 %v11495
    %v11674 = vunpack.c.h.b16 %v11495
    %v11675 = vunpack.c.l.b16 %v11496
    %v11676 = vunpack.c.h.b16 %v11496
    %v11677 = vunpack.c.l.b16 %v11497
    %v11678 = vunpack.c.h.b16 %v11497
    %v11679 = vunpack.c.l.b16 %v11498
    %v11680 = vunpack.c.h.b16 %v11498
    %v11681 = vunpack.c.l.b16 %v11499
    %v11682 = vunpack.c.h.b16 %v11499
    %v11683 = vunpack.c.l.b16 %v11500
    %v11684 = vunpack.c.h.b16 %v11500
    %v11685 = vunpack.c.l.b16 %v11501
    %v11686 = vunpack.c.h.b16 %v11501
    %v11687 = vunpack.c.l.b16 %v11502
    %v11688 = vunpack.c.h.b16 %v11502
    %v11689 = vunpack.c.l.b16 %v11503
    %v11690 = vunpack.c.h.b16 %v11503
    %v11691 = vunpack.c.l.b16 %v11504
    %v11692 = vunpack.c.h.b16 %v11504
    %v11693 = vunpack.c.l.b16 %v11505
    %v11694 = vunpack.c.h.b16 %v11505
    %v11695 = vunpack.c.l.b16 %v11506
    %v11696 = vunpack.c.h.b16 %v11506
    %v11697 = vunpack.c.l.b16 %v11507
    %v11698 = vunpack.c.h.b16 %v11507
    %v11699 = vunpack.c.l.b16 %v11508
    %v11700 = vunpack.c.h.b16 %v11508
    %v11701 = vunpack.c.l.b16 %v11509
    %v11702 = vunpack.c.h.b16 %v11509
    %v11703 = vunpack.c.l.b16 %v11510
    %v11704 = vunpack.c.h.b16 %v11510
    %v11705 = vunpack.c.l.b16 %v11511
    %v11706 = vunpack.c.h.b16 %v11511
    %v11707 = vunpack.c.l.b16 %v11512
    %v11708 = vunpack.c.h.b16 %v11512
    %v11709 = vunpack.c.l.b16 %v11513
    %v11710 = vunpack.c.h.b16 %v11513
    %v11711 = vunpack.c.l.b16 %v11514
    %v11712 = vunpack.c.h.b16 %v11514
    %v11713 = vunpack.c.l.b16 %v11515
    %v11714 = vunpack.c.h.b16 %v11515
    %v11715 = vunpack.c.l.b16 %v11516
    %v11716 = vunpack.c.h.b16 %v11516
    %v11717 = vunpack.c.l.b16 %v11517
    %v11718 = vunpack.c.h.b16 %v11517
    %v11719 = vunpack.c.l.b16 %v11518
    %v11720 = vunpack.c.h.b16 %v11518
    %v11721 = vunpack.c.l.b16 %v11519
    %v11722 = vunpack.c.h.b16 %v11519
    %v11723 = vunpack.c.l.b16 %v11520
    %v11724 = vunpack.c.h.b16 %v11520
    %v11725 = vunpack.c.l.b16 %v11521
    %v11726 = vunpack.c.h.b16 %v11521
    %v11727 = vunpack.c.l.b16 %v11522
    %v11728 = vunpack.c.h.b16 %v11522
    %v11729 = vunpack.c.l.b16 %v11523
    %v11730 = vunpack.c.h.b16 %v11523
    %v11731 = vunpack.c.l.b16 %v11524
    %v11732 = vunpack.c.h.b16 %v11524
    %v11733 = vunpack.c.l.b16 %v11525
    %v11734 = vunpack.c.h.b16 %v11525
    %v11735 = vunpack.c.l.b16 %v11526
    %v11736 = vunpack.c.h.b16 %v11526
    %v11737 = vunpack.c.l.b16 %v11527
    %v11738 = vunpack.c.h.b16 %v11527
    %v11739 = vunpack.c.l.b16 %v11528
    %v11740 = vunpack.c.h.b16 %v11528
    %v11741 = vunpack.c.l.b16 %v11529
    %v11742 = vunpack.c.h.b16 %v11529
    %v11743 = vunpack.c.l.b16 %v11530
    %v11744 = vunpack.c.h.b16 %v11530
    %v11745 = vunpack.c.l.b16 %v11531
    %v11746 = vunpack.c.h.b16 %v11531
    %v11747 = vunpack.c.l.b16 %v11532
    %v11748 = vunpack.c.h.b16 %v11532
    %v11749 = vunpack.c.l.b16 %v11533
    %v11750 = vunpack.c.h.b16 %v11533
    %v11751 = vunpack.c.l.b16 %v11534
    %v11752 = vunpack.c.h.b16 %v11534
    %v11753 = vunpack.c.l.b16 %v11535
    %v11754 = vunpack.c.h.b16 %v11535
    %v11755 = vunpack.c.l.b16 %v11536
    %v11756 = vunpack.c.h.b16 %v11536
    %v11757 = vunpack.c.l.b16 %v11537
    %v11758 = vunpack.c.h.b16 %v11537
    %v11759 = vunpack.c.l.b16 %v11538
    %v11760 = vunpack.c.h.b16 %v11538
    %v11761 = vunpack.c.l.b16 %v11539
    %v11762 = vunpack.c.h.b16 %v11539
    %v11763 = vunpack.c.l.b16 %v11540
    %v11764 = vunpack.c.h.b16 %v11540
    %v11765 = vunpack.c.l.b16 %v11541
    %v11766 = vunpack.c.h.b16 %v11541
    %v11767 = vunpack.c.l.b16 %v11542
    %v11768 = vunpack.c.h.b16 %v11542
    %v11769 = vunpack.c.l.b16 %v11543
    %v11770 = vunpack.c.h.b16 %v11543
    %v11771 = vunpack.c.l.b16 %v11544
    %v11772 = vunpack.c.h.b16 %v11544
    %v11773 = vunpack.c.l.b16 %v11545
    %v11774 = vunpack.c.h.b16 %v11545
    %v11775 = vunpack.c.l.b16 %v11546
    %v11776 = vunpack.c.h.b16 %v11546
    %v11777 = vunpack.c.l.b16 %v11547
    %v11778 = vunpack.c.h.b16 %v11547
    %v11779 = vunpack.c.l.b16 %v11548
    %v11780 = vunpack.c.h.b16 %v11548
    %v11781 = vunpack.c.l.b16 %v11549
    %v11782 = vunpack.c.h.b16 %v11549
    %v11783 = vunpack.c.l.b16 %v11550
    %v11784 = vunpack.c.h.b16 %v11550
    %v11785 = vpack.c.b16 %v11665, %v11657
    %v11786 = vpack.c.b16 %v11666, %v11658
    %v11787 = vpack.c.b16 %v11667, %v11659
    %v11788 = vpack.c.b16 %v11668, %v11660
    %v11789 = vpack.c.b16 %v11669, %v11661
    %v11790 = vpack.c.b16 %v11670, %v11662
    %v11791 = vpack.c.b16 %v11671, %v11663
    %v11792 = vpack.c.b16 %v11672, %v11664
    %v11793 = vpack.c.b16 %v11681, %v11673
    %v11794 = vpack.c.b16 %v11682, %v11674
    %v11795 = vpack.c.b16 %v11683, %v11675
    %v11796 = vpack.c.b16 %v11684, %v11676
    %v11797 = vpack.c.b16 %v11685, %v11677
    %v11798 = vpack.c.b16 %v11686, %v11678
    %v11799 = vpack.c.b16 %v11687, %v11679
    %v11800 = vpack.c.b16 %v11688, %v11680
    %v11801 = vpack.c.b16 %v11697, %v11689
    %v11802 = vpack.c.b16 %v11698, %v11690
    %v11803 = vpack.c.b16 %v11699, %v11691
    %v11804 = vpack.c.b16 %v11700, %v11692
    %v11805 = vpack.c.b16 %v11701, %v11693
    %v11806 = vpack.c.b16 %v11702, %v11694
    %v11807 = vpack.c.b16 %v11703, %v11695
    %v11808 = vpack.c.b16 %v11704, %v11696
    %v11809 = vpack.c.b16 %v11713, %v11705
    %v11810 = vpack.c.b16 %v11714, %v11706
    %v11811 = vpack.c.b16 %v11715, %v11707
    %v11812 = vpack.c.b16 %v11716, %v11708
    %v11813 = vpack.c.b16 %v11717, %v11709
    %v11814 = vpack.c.b16 %v11718, %v11710
    %v11815 = vpack.c.b16 %v11719, %v11711
    %v11816 = vpack.c.b16 %v11720, %v11712
    %v11817 = vpack.c.b16 %v11729, %v11721
    %v11818 = vpack.c.b16 %v11730, %v11722
    %v11819 = vpack.c.b16 %v11731, %v11723
    %v11820 = vpack.c.b16 %v11732, %v11724
    %v11821 = vpack.c.b16 %v11733, %v11725
    %v11822 = vpack.c.b16 %v11734, %v11726
    %v11823 = vpack.c.b16 %v11735, %v11727
    %v11824 = vpack.c.b16 %v11736, %v11728
    %v11825 = vpack.c.b16 %v11745, %v11737
    %v11826 = vpack.c.b16 %v11746, %v11738
    %v11827 = vpack.c.b16 %v11747, %v11739
    %v11828 = vpack.c.b16 %v11748, %v11740
    %v11829 = vpack.c.b16 %v11749, %v11741
    %v11830 = vpack.c.b16 %v11750, %v11742
    %v11831 = vpack.c.b16 %v11751, %v11743
    %v11832 = vpack.c.b16 %v11752, %v11744
    %v11833 = vpack.c.b16 %v11761, %v11753
    %v11834 = vpack.c.b16 %v11762, %v11754
    %v11835 = vpack.c.b16 %v11763, %v11755
    %v11836 = vpack.c.b16 %v11764, %v11756
    %v11837 = vpack.c.b16 %v11765, %v11757
    %v11838 = vpack.c.b16 %v11766, %v11758
    %v11839 = vpack.c.b16 %v11767, %v11759
    %v11840 = vpack.c.b16 %v11768, %v11760
    %v11841 = vpack.c.b16 %v11777, %v11769
    %v11842 = vpack.c.b16 %v11778, %v11770
    %v11843 = vpack.c.b16 %v11779, %v11771
    %v11844 = vpack.c.b16 %v11780, %v11772
    %v11845 = vpack.c.b16 %v11781, %v11773
    %v11846 = vpack.c.b16 %v11782, %v11774
    %v11847 = vpack.c.b16 %v11783, %v11775
    %v11848 = vpack.c.b16 %v11784, %v11776
    %11913 = vmatprep.subr.bf16.mxu0 %v11786
    %11914 = vmatpush1.bf16.msra.mxu0 %v11785
    %11915 = vmatprep.subr.bf16.mxu0 %v11794
    %11916 = vmatpush1.bf16.msra.mxu0 %v11793
    %11917 = vmatprep.subr.bf16.mxu0 %v11802
    %11918 = vmatpush1.bf16.msra.mxu0 %v11801
    %11919 = vmatprep.subr.bf16.mxu0 %v11810
    %11920 = vmatpush1.bf16.msra.mxu0 %v11809
    %11921 = vmatprep.subr.bf16.mxu0 %v11818
    %11922 = vmatpush1.bf16.msra.mxu0 %v11817
    %11923 = vmatprep.subr.bf16.mxu0 %v11826
    %11924 = vmatpush1.bf16.msra.mxu0 %v11825
    %11925 = vmatprep.subr.bf16.mxu0 %v11834
    %11926 = vmatpush1.bf16.msra.mxu0 %v11833
    %11927 = vmatprep.subr.bf16.mxu0 %v11842
    %11928 = vmatpush1.bf16.msra.mxu0 %v11841
    %11929 = vmatprep.subr.bf16.mxu0 0
    %11930 = vmatpush1.bf16.msra.mxu0 0
    %11931 = vmatprep.subr.bf16.mxu0 0
    %11932 = vmatpush1.bf16.msra.mxu0 0
    %11933 = vmatprep.subr.bf16.mxu0 0
    %11934 = vmatpush1.bf16.msra.mxu0 0
    %11935 = vmatprep.subr.bf16.mxu0 0
    %11936 = vmatpush1.bf16.msra.mxu0 0
    %11937 = vmatprep.subr.bf16.mxu0 0
    %11938 = vmatpush1.bf16.msra.mxu0 0
    %11939 = vmatprep.subr.bf16.mxu0 0
    %11940 = vmatpush1.bf16.msra.mxu0 0
    %11941 = vmatprep.subr.bf16.mxu0 0
    %11942 = vmatpush1.bf16.msra.mxu0 0
    %11943 = vmatprep.subr.bf16.mxu0 0
    %11944 = vmatpush1.bf16.msra.mxu0 0
    %11945 = vmatprep.mubr.bf16.mxu0 0
    %11946 = vmatmul.mubr.bf16.gmra.mrb[0].mxu0 %v11486
    %v11947 = vpop.f32.mrb[0].mxu0
    %v11948 = vadd.f32 %v11556, %v11947
    %v11949 = vpop.f32.mrb[0].mxu0
    %v11950 = vadd.f32 %v11560, %v11949
    %v11951 = vpop.f32.mrb[0].mxu0
    %v11952 = vpop.f32.mrb[0].mxu0
    %11953 = vdwg.mxu0
    %11954 = vmatprep.subr.bf16.mxu0 %v11788
    %11955 = vmatpush1.bf16.msra.mxu0 %v11787
    %11956 = vmatprep.subr.bf16.mxu0 %v11796
    %11957 = vmatpush1.bf16.msra.mxu0 %v11795
    %11958 = vmatprep.subr.bf16.mxu0 %v11804
    %11959 = vmatpush1.bf16.msra.mxu0 %v11803
    %11960 = vmatprep.subr.bf16.mxu0 %v11812
    %11961 = vmatpush1.bf16.msra.mxu0 %v11811
    %11962 = vmatprep.subr.bf16.mxu0 %v11820
    %11963 = vmatpush1.bf16.msra.mxu0 %v11819
    %11964 = vmatprep.subr.bf16.mxu0 %v11828
    %11965 = vmatpush1.bf16.msra.mxu0 %v11827
    %11966 = vmatprep.subr.bf16.mxu0 %v11836
    %11967 = vmatpush1.bf16.msra.mxu0 %v11835
    %11968 = vmatprep.subr.bf16.mxu0 %v11844
    %11969 = vmatpush1.bf16.msra.mxu0 %v11843
    %11970 = vmatprep.subr.bf16.mxu0 0
    %11971 = vmatpush1.bf16.msra.mxu0 0
    %11972 = vmatprep.subr.bf16.mxu0 0
    %11973 = vmatpush1.bf16.msra.mxu0 0
    %11974 = vmatprep.subr.bf16.mxu0 0
    %11975 = vmatpush1.bf16.msra.mxu0 0
    %11976 = vmatprep.subr.bf16.mxu0 0
    %11977 = vmatpush1.bf16.msra.mxu0 0
    %11978 = vmatprep.subr.bf16.mxu0 0
    %11979 = vmatpush1.bf16.msra.mxu0 0
    %11980 = vmatprep.subr.bf16.mxu0 0
    %11981 = vmatpush1.bf16.msra.mxu0 0
    %11982 = vmatprep.subr.bf16.mxu0 0
    %11983 = vmatpush1.bf16.msra.mxu0 0
    %11984 = vmatprep.subr.bf16.mxu0 0
    %11985 = vmatpush1.bf16.msra.mxu0 0
    %11986 = vmatprep.mubr.bf16.mxu0 0
    %11987 = vmatmul.mubr.bf16.gmra.mrb[0].mxu0 %v11486
    %v11988 = vpop.f32.mrb[0].mxu0
    %v11989 = vadd.f32 %v11564, %v11988
    %v11990 = vpop.f32.mrb[0].mxu0
    %v11991 = vadd.f32 %v11568, %v11990
    %v11992 = vpop.f32.mrb[0].mxu0
    %v11993 = vpop.f32.mrb[0].mxu0
    %11994 = vdwg.mxu0
    %11995 = vmatprep.subr.bf16.mxu0 %v11790
    %11996 = vmatpush1.bf16.msra.mxu0 %v11789
    %11997 = vmatprep.subr.bf16.mxu0 %v11798
    %11998 = vmatpush1.bf16.msra.mxu0 %v11797
    %11999 = vmatprep.subr.bf16.mxu0 %v11806
    %12000 = vmatpush1.bf16.msra.mxu0 %v11805
    %12001 = vmatprep.subr.bf16.mxu0 %v11814
    %12002 = vmatpush1.bf16.msra.mxu0 %v11813
    %12003 = vmatprep.subr.bf16.mxu0 %v11822
    %12004 = vmatpush1.bf16.msra.mxu0 %v11821
    %12005 = vmatprep.subr.bf16.mxu0 %v11830
    %12006 = vmatpush1.bf16.msra.mxu0 %v11829
    %12007 = vmatprep.subr.bf16.mxu0 %v11838
    %12008 = vmatpush1.bf16.msra.mxu0 %v11837
    %12009 = vmatprep.subr.bf16.mxu0 %v11846
    %12010 = vmatpush1.bf16.msra.mxu0 %v11845
    %12011 = vmatprep.subr.bf16.mxu0 0
    %12012 = vmatpush1.bf16.msra.mxu0 0
    %12013 = vmatprep.subr.bf16.mxu0 0
    %12014 = vmatpush1.bf16.msra.mxu0 0
    %12015 = vmatprep.subr.bf16.mxu0 0
    %12016 = vmatpush1.bf16.msra.mxu0 0
    %12017 = vmatprep.subr.bf16.mxu0 0
    %12018 = vmatpush1.bf16.msra.mxu0 0
    %12019 = vmatprep.subr.bf16.mxu0 0
    %12020 = vmatpush1.bf16.msra.mxu0 0
    %12021 = vmatprep.subr.bf16.mxu0 0
    %12022 = vmatpush1.bf16.msra.mxu0 0
    %12023 = vmatprep.subr.bf16.mxu0 0
    %12024 = vmatpush1.bf16.msra.mxu0 0
    %12025 = vmatprep.subr.bf16.mxu0 0
    %12026 = vmatpush1.bf16.msra.mxu0 0
    %12027 = vmatprep.mubr.bf16.mxu0 0
    %12028 = vmatmul.mubr.bf16.gmra.mrb[0].mxu0 %v11486
    %v12029 = vpop.f32.mrb[0].mxu0
    %v12030 = vadd.f32 %v11572, %v12029
    %v12031 = vpop.f32.mrb[0].mxu0
    %v12032 = vadd.f32 %v11576, %v12031
    %v12033 = vpop.f32.mrb[0].mxu0
    %v12034 = vpop.f32.mrb[0].mxu0
    %12035 = vdwg.mxu0
    %12036 = vmatprep.subr.bf16.mxu0 %v11792
    %12037 = vmatpush1.bf16.msra.mxu0 %v11791
    %12038 = vmatprep.subr.bf16.mxu0 %v11800
    %12039 = vmatpush1.bf16.msra.mxu0 %v11799
    %12040 = vmatprep.subr.bf16.mxu0 %v11808
    %12041 = vmatpush1.bf16.msra.mxu0 %v11807
    %12042 = vmatprep.subr.bf16.mxu0 %v11816
    %12043 = vmatpush1.bf16.msra.mxu0 %v11815
    %12044 = vmatprep.subr.bf16.mxu0 %v11824
    %12045 = vmatpush1.bf16.msra.mxu0 %v11823
    %12046 = vmatprep.subr.bf16.mxu0 %v11832
    %12047 = vmatpush1.bf16.msra.mxu0 %v11831
    %12048 = vmatprep.subr.bf16.mxu0 %v11840
    %12049 = vmatpush1.bf16.msra.mxu0 %v11839
    %12050 = vmatprep.subr.bf16.mxu0 %v11848
    %12051 = vmatpush1.bf16.msra.mxu0 %v11847
    %12052 = vmatprep.subr.bf16.mxu0 0
    %12053 = vmatpush1.bf16.msra.mxu0 0
    %12054 = vmatprep.subr.bf16.mxu0 0
    %12055 = vmatpush1.bf16.msra.mxu0 0
    %12056 = vmatprep.subr.bf16.mxu0 0
    %12057 = vmatpush1.bf16.msra.mxu0 0
    %12058 = vmatprep.subr.bf16.mxu0 0
    %12059 = vmatpush1.bf16.msra.mxu0 0
    %12060 = vmatprep.subr.bf16.mxu0 0
    %12061 = vmatpush1.bf16.msra.mxu0 0
    %12062 = vmatprep.subr.bf16.mxu0 0
    %12063 = vmatpush1.bf16.msra.mxu0 0
    %12064 = vmatprep.subr.bf16.mxu0 0
    %12065 = vmatpush1.bf16.msra.mxu0 0
    %12066 = vmatprep.subr.bf16.mxu0 0
    %12067 = vmatpush1.bf16.msra.mxu0 0
    %12068 = vmatprep.mubr.bf16.mxu0 0
    %12069 = vmatmul.mubr.bf16.gmra.mrb[0].mxu0 %v11486
    %v12070 = vpop.f32.mrb[0].mxu0
    %v12071 = vadd.f32 %v11580, %v12070
    %v12072 = vpop.f32.mrb[0].mxu0
    %v12073 = vadd.f32 %v11584, %v12072
    %v12074 = vpop.f32.mrb[0].mxu0
    %v12075 = vpop.f32.mrb[0].mxu0
    %12076 = vdwg.mxu0
    %v12085 = vcombine.low %v11948, %v11950
    %v12086 = vcombine.low %v11989, %v11991
    %v12088 = vunpack.c.l.s4 1983009808
    %v12089 = vunpack.c.0.s8 %v12088
    %v12090 = vlaneseq
    %v12091 = vshrl.u32 %v12090, 7
    %v12092 = vsub.s32 %v12089, %v12091
    %v12093 = vrot.slane %v12085, %v12092
    %v12095 = vunpack.c.l.s4 1983009808
    %v12096 = vunpack.c.0.s8 %v12095
    %v12097 = vlaneseq
    %v12098 = vshrl.u32 %v12097, 7
    %v12099 = vsub.s32 %v12096, %v12098
    %v12100 = vrot.slane %v12086, %v12099
    %v12101 = vcombine.low %v12093, %v12100
    %v12102 = vcombine.low %v12030, %v12032
    %v12103 = vcombine.low %v12071, %v12073
    %v12105 = vunpack.c.l.s4 1983009808
    %v12106 = vunpack.c.0.s8 %v12105
    %v12107 = vlaneseq
    %v12108 = vshrl.u32 %v12107, 7
    %v12109 = vsub.s32 %v12106, %v12108
    %v12110 = vrot.slane %v12102, %v12109
    %v12112 = vunpack.c.l.s4 1983009808
    %v12113 = vunpack.c.0.s8 %v12112
    %v12114 = vlaneseq
    %v12115 = vshrl.u32 %v12114, 7
    %v12116 = vsub.s32 %v12113, %v12115
    %v12117 = vrot.slane %v12103, %v12116
    %v12118 = vcombine.low %v12110, %v12117
    %12121 = vst [vmem:[#allocation22] sm:$0xff] %v12101
    %12122 = vst [vmem:[#allocation22 + $0x8] sm:$0xff] %v12118
    // Predicated region
    $region90: #{simple_cnn_forward.1} parent=1 // pred_check
      _
    $region91: #{simple_cnn_forward.1} parent=1 // pred_check_branch
      %12124 = sbr.rel (0) target = $region93
    $region92: #{simple_cnn_forward.1} parent=1 // pred_region
      %s12126 = ssub.s32 256, 256
      %12127 = vsyncadd [#allocation6], %s12126
      %s12129 = sshll.u32 [#allocation22], 4
      %s12130 = int_to_ptr.vmem [resolvable:$true] %s12129
      %12132 = dma.vmem_to_hbm [thread:$0]  %s12130, 256, %s11, [#allocation6]
    $region93: #{simple_cnn_forward.1} parent=1 // pred_fallthru
      _
    // Predicated region
    $region94: #{simple_cnn_forward.1} parent=1 // pred_check
      _
    $region95: #{simple_cnn_forward.1} parent=1 // pred_check_branch
      %12134 = sbr.rel (0) target = $region97
    $region96: #{simple_cnn_forward.1} parent=1 // pred_region
      %12135 = dma.done [#allocation6], 256
    $region97: #{simple_cnn_forward.1} parent=1 // pred_fallthru
      _
    %12136 = vsyncpa [#allocation5], 1
    %12137 = vsyncpa [#allocation8], 1
    %12138 = vsyncpa [#allocation11], 1
    %12139 = vsyncpa [#allocation14], 1
    %12140 = vsyncpa [#allocation17], 1
    %12141 = vsyncpa [#allocation20], 1
    %12142 = vsyncpa [#allocation6], 1

</llo_original>
